<compile_context>
chip_gen: v7x
topology: tpu7x:2x2x1
jax: 0.10.0
libtpu: 0.0.40
codegen_flags: <defaults>
</compile_context>

<pallas_src>
import functools
import random

import jax
import jax.numpy as jnp
from jax.experimental import pallas as pl
from jax.experimental.pallas import tpu as pltpu


# ----------------------------------------------------------------------------
# helpers
# ----------------------------------------------------------------------------
def _full(shape):
    """BlockSpec for a full array, resident in VMEM for the whole kernel."""
    zeros = (0,) * len(shape)
    return pl.BlockSpec(shape, lambda i: zeros)


def _gru_cell(gi, gh, h, H):
    """PyTorch GRUCell gate math (gate order r, z, n), fused r/z sigmoid."""
    rz = jax.nn.sigmoid(gi[:, :2 * H] + gh[:, :2 * H])
    r = rz[:, :H]
    z = rz[:, H:]
    n = jnp.tanh(gi[:, 2 * H:] + r * gh[:, 2 * H:])
    return (1.0 - z) * n + z * h


# ----------------------------------------------------------------------------
# single fused kernel: encoder time loop + decoder time loop, all in VMEM
# ----------------------------------------------------------------------------
def seq2seq_kernel(sel_ref, x_ref,
                   ewih_ref, ewhh_ref, ebih_ref, ebhh_ref,
                   demb_ref, dwih_e_ref, dwih_c_ref, dwhh_ref,
                   dbih_ref, dbhh_ref,
                   wout_h_ref, wout_c_ref, bout_ref,
                   logits_ref,
                   enc_scr, *, hidden, valid_vocab):
    H = hidden
    S, B, _ = x_ref.shape
    steps = logits_ref.shape[0]
    Vt = demb_ref.shape[0]
    Vp = bout_ref.shape[1]

    # ---------------- encoder: unrolled source-time loop -------------------
    ewih = ewih_ref[...]
    ewhh = ewhh_ref[...]
    ebih = ebih_ref[...]
    ebhh = ebhh_ref[...]

    h = jnp.zeros((B, H), jnp.float32)
    for t in range(S):                                   # static unroll
        x = x_ref[t]                                     # (B, E)
        gi = jnp.dot(x, ewih, preferred_element_type=jnp.float32) + ebih
        gh = jnp.dot(h, ewhh, preferred_element_type=jnp.float32) + ebhh
        h = _gru_cell(gi, gh, h, H)
        enc_scr[t] = h                                   # stays in VMEM
    # `h` is now the decoder's initial hidden (no HBM hand-off).

    # ---------------- decoder: unrolled target-time loop -------------------
    enc = enc_scr[...]                                   # (S, B, H)
    demb = demb_ref[...]
    dwih_e = dwih_e_ref[...]
    dwih_c = dwih_c_ref[...]
    dwhh = dwhh_ref[...]
    dbih = dbih_ref[...]
    dbhh = dbhh_ref[...]
    wout_h = wout_h_ref[...]
    wout_c = wout_c_ref[...]
    bout = bout_ref[...]

    vt_iota = jax.lax.broadcasted_iota(jnp.int32, (B, Vt), 1)
    lane = jax.lax.broadcasted_iota(jnp.int32, (B, Vp), 1)

    prev = jnp.zeros((B, 1), jnp.int32)                  # previous argmax
    for k in range(steps):                               # static unroll
        # --- input token: teacher-forced (>=0) or previous-step argmax ---
        sel = sel_ref[k]                                 # (B, 1) int32
        inp = jnp.where(sel >= 0, sel, prev)             # (B, 1) int32

        # --- embedding lookup via one-hot matmul (tiny vocab, MXU idle) ---
        onehot = (vt_iota == inp).astype(jnp.float32)    # (B, Vt)
        emb = jnp.dot(onehot, demb, preferred_element_type=jnp.float32)

        # --- Luong dot attention: elementwise mul + reductions ------------
        scores = jnp.sum(enc * h[None, :, :], axis=2, keepdims=True)  # (S,B,1)
        scores = scores - jnp.max(scores, axis=0, keepdims=True)
        w = jnp.exp(scores)
        attn = w * pl.reciprocal(jnp.sum(w, axis=0, keepdims=True), approx=True)
        ctx = jnp.sum(attn * enc, axis=0)                              # (B, H)

        # --- GRU cell on [emb ; ctx] via split input weights --------------
        gi = (jnp.dot(emb, dwih_e, preferred_element_type=jnp.float32)
              + jnp.dot(ctx, dwih_c, preferred_element_type=jnp.float32)
              + dbih)
        gh = jnp.dot(h, dwhh, preferred_element_type=jnp.float32) + dbhh
        h = _gru_cell(gi, gh, h, H)

        # --- output projection on [h ; ctx], lane-dense (vocab pad 128) ---
        logits = (jnp.dot(h, wout_h, preferred_element_type=jnp.float32)
                  + jnp.dot(ctx, wout_c, preferred_element_type=jnp.float32)
                  + bout)                                 # (B, Vp)
        logits_ref[k] = logits

        # --- argmax over the valid vocab (first-max index, all 2-D) -------
        masked = jnp.where(lane < valid_vocab, logits, jnp.float32(-1e30))
        mx = jnp.max(masked, axis=1, keepdims=True)
        top1 = jnp.min(jnp.where(masked == mx, lane, Vp), axis=1, keepdims=True)
        prev = top1.astype(jnp.int32)


def seq2seq_run(sel_tok, x_emb, ewih, ewhh, ebih, ebhh,
                demb, dwih_e, dwih_c, dwhh, dbih, dbhh,
                wout_h, wout_c, bout, *, valid_vocab):
    steps, B, _ = sel_tok.shape
    S, _, E = x_emb.shape
    H = ewhh.shape[0]
    Vt = demb.shape[0]
    Vp = bout.shape[1]
    return pl.pallas_call(
        functools.partial(seq2seq_kernel, hidden=H, valid_vocab=valid_vocab),
        out_shape=jax.ShapeDtypeStruct((steps, B, Vp), jnp.float32),
        grid=(1,),
        in_specs=[
            _full((steps, B, 1)),                        # token / -1 sentinel
            _full((S, B, E)),                            # encoder inputs (embedded)
            _full((E, 3 * H)), _full((H, 3 * H)),        # enc wih, whh
            _full((1, 3 * H)), _full((1, 3 * H)),        # enc bih, bhh
            _full((Vt, E)),                              # decoder embedding table
            _full((E, 3 * H)), _full((H, 3 * H)),        # dec wih split (emb / ctx)
            _full((H, 3 * H)),                           # dec whh
            _full((1, 3 * H)), _full((1, 3 * H)),        # dec bih, bhh
            _full((H, Vp)), _full((H, Vp)),              # wout split (h / ctx)
            _full((1, Vp)),                              # bout (padded)
        ],
        out_specs=_full((steps, B, Vp)),
        scratch_shapes=[pltpu.VMEM((S, B, H), jnp.float32)],   # encoder outputs
        compiler_params=pltpu.CompilerParams(
            dimension_semantics=("arbitrary",)),
    )(sel_tok, x_emb, ewih, ewhh, ebih, ebhh,
      demb, dwih_e, dwih_c, dwhh, dbih, dbhh, wout_h, wout_c, bout)


# ----------------------------------------------------------------------------
# Seq2Seq forward (mirrors the PyTorch module's forward loop)
# ----------------------------------------------------------------------------
def init_params(key, src_vocab, tgt_vocab, emb, hidden):
    ks = jax.random.split(key, 10)
    s = 0.08
    return {
        "enc_emb": jax.random.uniform(ks[0], (src_vocab, emb), jnp.float32, -s, s),
        "enc_wih": jax.random.uniform(ks[1], (emb, 3 * hidden), jnp.float32, -s, s),
        "enc_whh": jax.random.uniform(ks[2], (hidden, 3 * hidden), jnp.float32, -s, s),
        "enc_bih": jnp.zeros((1, 3 * hidden), jnp.float32),
        "enc_bhh": jnp.zeros((1, 3 * hidden), jnp.float32),
        "dec_emb": jax.random.uniform(ks[3], (tgt_vocab, emb), jnp.float32, -s, s),
        "dec_wih": jax.random.uniform(ks[4], (emb + hidden, 3 * hidden), jnp.float32, -s, s),
        "dec_whh": jax.random.uniform(ks[5], (hidden, 3 * hidden), jnp.float32, -s, s),
        "dec_bih": jnp.zeros((1, 3 * hidden), jnp.float32),
        "dec_bhh": jnp.zeros((1, 3 * hidden), jnp.float32),
        "dec_wout": jax.random.uniform(ks[6], (2 * hidden, tgt_vocab), jnp.float32, -s, s),
        "dec_bout": jnp.zeros((1, tgt_vocab), jnp.float32),
    }


def seq2seq_forward(params, src, tgt, teacher_forcing_ratio=0.5):
    """src: (B, S_src) int32 tokens, tgt: (B, S_tgt) int32 tokens."""
    B, S_src = src.shape
    S_tgt = tgt.shape[1]
    E = params["enc_emb"].shape[1]
    H = params["enc_whh"].shape[0]
    V = params["dec_wout"].shape[1]

    # --- encoder input embeddings: single host-side gather (data-dependent)
    x_emb = jnp.take(params["enc_emb"], src.T, axis=0)            # (S_src, B, E)

    # --- teacher-forcing schedule: same host RNG call order as the PyTorch
    # loop.  Kernel step k == PyTorch t=k+1.  k==0 always uses tgt[:,0]; for
    # k>=1 use tgt[:,k] iff the decision drawn at PyTorch step t=k, else the
    # previous argmax.
    steps = S_tgt - 1
    tf = [random.random() < teacher_forcing_ratio for _ in range(steps)]
    forced = jnp.array([True] + tf[:steps - 1], dtype=jnp.bool_)
    teacher_tok = jnp.transpose(tgt[:, :steps]).astype(jnp.int32)[:, :, None]
    sel_tok = jnp.where(forced[:, None, None], teacher_tok, jnp.int32(-1))

    # --- split / lane-pad decoder weights (no in-kernel concats) ------------
    wih = params["dec_wih"]
    wih_e, wih_c = wih[:E], wih[E:]
    Vp = ((V + 127) // 128) * 128
    pad = Vp - V
    wout = jnp.pad(params["dec_wout"], ((0, 0), (0, pad)))
    wout_h, wout_c = wout[:H], wout[H:]
    bout = jnp.pad(params["dec_bout"], ((0, 0), (0, pad)))

    # TODO(synk): for larger B on v7x, shard the batch across the two
    # TensorCores and cast weights to bf16 for the MXU dots (v6e/v7x).
    logits_pad = seq2seq_run(
        sel_tok, x_emb,
        params["enc_wih"], params["enc_whh"], params["enc_bih"], params["enc_bhh"],
        params["dec_emb"], wih_e, wih_c, params["dec_whh"],
        params["dec_bih"], params["dec_bhh"],
        wout_h, wout_c, bout, valid_vocab=V)                      # (steps, B, Vp)

    logits = jnp.transpose(logits_pad[:, :, :V], (1, 0, 2))       # (B, steps, V)
    # outputs[:, 0] stays zero, exactly like the PyTorch reference.
    return jnp.concatenate([jnp.zeros((B, 1, V), jnp.float32), logits], axis=1)


if __name__ == "__main__":
    random.seed(0)  # deterministic teacher-forcing decisions

    B, S_SRC, S_TGT = 2, 8, 8
    EMB, HID = 32, 32
    SRC_VOCAB, TGT_VOCAB = 16, 16

    key = jax.random.PRNGKey(0)
    kp, ks, kt = jax.random.split(key, 3)
    params = init_params(kp, SRC_VOCAB, TGT_VOCAB, EMB, HID)
    src = jax.random.randint(ks, (B, S_SRC), 0, SRC_VOCAB, dtype=jnp.int32)
    tgt = jax.random.randint(kt, (B, S_TGT), 0, TGT_VOCAB, dtype=jnp.int32)

    out = seq2seq_forward(params, src, tgt, teacher_forcing_ratio=0.5)
    jax.block_until_ready(out)
    assert out.shape == (B, S_TGT, TGT_VOCAB)
    assert bool(jnp.all(jnp.isfinite(out)))
    print("KERNEL_OK")
</pallas_src>

<mosaic_0001>
module attributes {stable_mosaic.version = 11 : i64} {
  func.func @seq2seq_kernel(%arg0: i32, %arg1: memref<7x2x1xi32, #tpu.memory_space<vmem>>, %arg2: memref<8x2x32xf32, #tpu.memory_space<vmem>>, %arg3: memref<32x96xf32, #tpu.memory_space<vmem>>, %arg4: memref<32x96xf32, #tpu.memory_space<vmem>>, %arg5: memref<1x96xf32, #tpu.memory_space<vmem>>, %arg6: memref<1x96xf32, #tpu.memory_space<vmem>>, %arg7: memref<16x32xf32, #tpu.memory_space<vmem>>, %arg8: memref<32x96xf32, #tpu.memory_space<vmem>>, %arg9: memref<32x96xf32, #tpu.memory_space<vmem>>, %arg10: memref<32x96xf32, #tpu.memory_space<vmem>>, %arg11: memref<1x96xf32, #tpu.memory_space<vmem>>, %arg12: memref<1x96xf32, #tpu.memory_space<vmem>>, %arg13: memref<32x128xf32, #tpu.memory_space<vmem>>, %arg14: memref<32x128xf32, #tpu.memory_space<vmem>>, %arg15: memref<1x128xf32, #tpu.memory_space<vmem>>, %arg16: memref<7x2x128xf32, #tpu.memory_space<vmem>>, %arg17: memref<8x2x32xf32, #tpu.memory_space<vmem>>) attributes {dimension_semantics = [#tpu.dimension_semantics<arbitrary>], iteration_bounds = array<i64: 1>, scalar_prefetch = 0 : i64, scratch_operands = 1 : i64, tpu.core_type = #tpu.core_type<tc>, window_params = [{pipeline_mode = #tpu.pipeline_mode<synchronous>, transform_indices = @transform_0, window_bounds = array<i64: 7, 2, 1>}, {pipeline_mode = #tpu.pipeline_mode<synchronous>, transform_indices = @transform_1, window_bounds = array<i64: 8, 2, 32>}, {pipeline_mode = #tpu.pipeline_mode<synchronous>, transform_indices = @transform_2, window_bounds = array<i64: 32, 96>}, {pipeline_mode = #tpu.pipeline_mode<synchronous>, transform_indices = @transform_3, window_bounds = array<i64: 32, 96>}, {pipeline_mode = #tpu.pipeline_mode<synchronous>, transform_indices = @transform_4, window_bounds = array<i64: 1, 96>}, {pipeline_mode = #tpu.pipeline_mode<synchronous>, transform_indices = @transform_5, window_bounds = array<i64: 1, 96>}, {pipeline_mode = #tpu.pipeline_mode<synchronous>, transform_indices = @transform_6, window_bounds = array<i64: 16, 32>}, {pipeline_mode = #tpu.pipeline_mode<synchronous>, transform_indices = @transform_7, window_bounds = array<i64: 32, 96>}, {pipeline_mode = #tpu.pipeline_mode<synchronous>, transform_indices = @transform_8, window_bounds = array<i64: 32, 96>}, {pipeline_mode = #tpu.pipeline_mode<synchronous>, transform_indices = @transform_9, window_bounds = array<i64: 32, 96>}, {pipeline_mode = #tpu.pipeline_mode<synchronous>, transform_indices = @transform_10, window_bounds = array<i64: 1, 96>}, {pipeline_mode = #tpu.pipeline_mode<synchronous>, transform_indices = @transform_11, window_bounds = array<i64: 1, 96>}, {pipeline_mode = #tpu.pipeline_mode<synchronous>, transform_indices = @transform_12, window_bounds = array<i64: 32, 128>}, {pipeline_mode = #tpu.pipeline_mode<synchronous>, transform_indices = @transform_13, window_bounds = array<i64: 32, 128>}, {pipeline_mode = #tpu.pipeline_mode<synchronous>, transform_indices = @transform_14, window_bounds = array<i64: 1, 128>}, {pipeline_mode = #tpu.pipeline_mode<synchronous>, transform_indices = @transform_15, window_bounds = array<i64: 7, 2, 128>}]} {
    %c0 = arith.constant 0 : index
    %c0_0 = arith.constant 0 : index
    %0 = vector.load %arg3[%c0, %c0_0] : memref<32x96xf32, #tpu.memory_space<vmem>>, vector<32x96xf32>
    %c0_1 = arith.constant 0 : index
    %c0_2 = arith.constant 0 : index
    %1 = vector.load %arg4[%c0_1, %c0_2] : memref<32x96xf32, #tpu.memory_space<vmem>>, vector<32x96xf32>
    %c0_3 = arith.constant 0 : index
    %c0_4 = arith.constant 0 : index
    %2 = vector.load %arg5[%c0_3, %c0_4] : memref<1x96xf32, #tpu.memory_space<vmem>>, vector<1x96xf32>
    %c0_5 = arith.constant 0 : index
    %c0_6 = arith.constant 0 : index
    %3 = vector.load %arg6[%c0_5, %c0_6] : memref<1x96xf32, #tpu.memory_space<vmem>>, vector<1x96xf32>
    %cst = arith.constant 0.000000e+00 : f32
    %4 = vector.broadcast %cst : f32 to vector<2x32xf32>
    %c0_7 = arith.constant 0 : index
    %c0_8 = arith.constant 0 : index
    %c0_9 = arith.constant 0 : index
    %5 = vector.load %arg2[%c0_7, %c0_8, %c0_9] : memref<8x2x32xf32, #tpu.memory_space<vmem>>, vector<1x2x32xf32>
    %6 = vector.shape_cast %5 : vector<1x2x32xf32> to vector<2x32xf32>
    %cst_10 = arith.constant dense<0.000000e+00> : vector<2x96xf32>
    %7 = tpu.matmul %6, %0, %cst_10 {dimension_numbers = #tpu.dot_dimension_numbers<[1], [0], [0], [1], [0, 0, 1, 1], [], []>} : vector<2x32xf32>, vector<32x96xf32>, vector<2x96xf32> -> vector<2x96xf32>
    %8 = vector.broadcast %2 : vector<1x96xf32> to vector<2x96xf32>
    %9 = arith.addf %7, %8 : vector<2x96xf32>
    %cst_11 = arith.constant dense<0.000000e+00> : vector<2x96xf32>
    %10 = tpu.matmul %4, %1, %cst_11 {dimension_numbers = #tpu.dot_dimension_numbers<[1], [0], [0], [1], [0, 0, 1, 1], [], []>} : vector<2x32xf32>, vector<32x96xf32>, vector<2x96xf32> -> vector<2x96xf32>
    %11 = vector.broadcast %3 : vector<1x96xf32> to vector<2x96xf32>
    %12 = arith.addf %10, %11 : vector<2x96xf32>
    %13 = vector.extract_strided_slice %9 {offsets = [0, 0], sizes = [2, 64], strides = [1, 1]} : vector<2x96xf32> to vector<2x64xf32>
    %14 = vector.extract_strided_slice %12 {offsets = [0, 0], sizes = [2, 64], strides = [1, 1]} : vector<2x96xf32> to vector<2x64xf32>
    %15 = arith.addf %13, %14 : vector<2x64xf32>
    %16 = arith.negf %15 : vector<2x64xf32>
    %17 = math.exp %16 : vector<2x64xf32>
    %cst_12 = arith.constant 1.000000e+00 : f32
    %18 = vector.broadcast %cst_12 : f32 to vector<2x64xf32>
    %19 = arith.addf %18, %17 : vector<2x64xf32>
    %20 = arith.divf %18, %19 : vector<2x64xf32>
    %21 = vector.extract_strided_slice %20 {offsets = [0, 0], sizes = [2, 32], strides = [1, 1]} : vector<2x64xf32> to vector<2x32xf32>
    %22 = vector.extract_strided_slice %20 {offsets = [0, 32], sizes = [2, 32], strides = [1, 1]} : vector<2x64xf32> to vector<2x32xf32>
    %23 = vector.extract_strided_slice %9 {offsets = [0, 64], sizes = [2, 32], strides = [1, 1]} : vector<2x96xf32> to vector<2x32xf32>
    %24 = vector.extract_strided_slice %12 {offsets = [0, 64], sizes = [2, 32], strides = [1, 1]} : vector<2x96xf32> to vector<2x32xf32>
    %25 = arith.mulf %21, %24 : vector<2x32xf32>
    %26 = arith.addf %23, %25 : vector<2x32xf32>
    %27 = math.tanh %26 : vector<2x32xf32>
    %cst_13 = arith.constant 1.000000e+00 : f32
    %28 = vector.broadcast %cst_13 : f32 to vector<2x32xf32>
    %29 = arith.subf %28, %22 : vector<2x32xf32>
    %30 = arith.mulf %29, %27 : vector<2x32xf32>
    %31 = arith.mulf %22, %4 : vector<2x32xf32>
    %32 = arith.addf %30, %31 : vector<2x32xf32>
    %c0_14 = arith.constant 0 : index
    %c0_15 = arith.constant 0 : index
    %c0_16 = arith.constant 0 : index
    %33 = vector.load %arg17[%c0_14, %c0_15, %c0_16] : memref<8x2x32xf32, #tpu.memory_space<vmem>>, vector<1x2x32xf32>
    %34 = vector.shape_cast %33 : vector<1x2x32xf32> to vector<2x32xf32>
    %35 = vector.shape_cast %32 : vector<2x32xf32> to vector<1x2x32xf32>
    tpu.vector_store %arg17[%c0_14, %c0_15, %c0_16], %35 {strides = array<i32>} : memref<8x2x32xf32, #tpu.memory_space<vmem>>, vector<1x2x32xf32>,
    %c1 = arith.constant 1 : index
    %c0_17 = arith.constant 0 : index
    %c0_18 = arith.constant 0 : index
    %36 = vector.load %arg2[%c1, %c0_17, %c0_18] : memref<8x2x32xf32, #tpu.memory_space<vmem>>, vector<1x2x32xf32>
    %37 = vector.shape_cast %36 : vector<1x2x32xf32> to vector<2x32xf32>
    %cst_19 = arith.constant dense<0.000000e+00> : vector<2x96xf32>
    %38 = tpu.matmul %37, %0, %cst_19 {dimension_numbers = #tpu.dot_dimension_numbers<[1], [0], [0], [1], [0, 0, 1, 1], [], []>} : vector<2x32xf32>, vector<32x96xf32>, vector<2x96xf32> -> vector<2x96xf32>
    %39 = vector.broadcast %2 : vector<1x96xf32> to vector<2x96xf32>
    %40 = arith.addf %38, %39 : vector<2x96xf32>
    %cst_20 = arith.constant dense<0.000000e+00> : vector<2x96xf32>
    %41 = tpu.matmul %32, %1, %cst_20 {dimension_numbers = #tpu.dot_dimension_numbers<[1], [0], [0], [1], [0, 0, 1, 1], [], []>} : vector<2x32xf32>, vector<32x96xf32>, vector<2x96xf32> -> vector<2x96xf32>
    %42 = vector.broadcast %3 : vector<1x96xf32> to vector<2x96xf32>
    %43 = arith.addf %41, %42 : vector<2x96xf32>
    %44 = vector.extract_strided_slice %40 {offsets = [0, 0], sizes = [2, 64], strides = [1, 1]} : vector<2x96xf32> to vector<2x64xf32>
    %45 = vector.extract_strided_slice %43 {offsets = [0, 0], sizes = [2, 64], strides = [1, 1]} : vector<2x96xf32> to vector<2x64xf32>
    %46 = arith.addf %44, %45 : vector<2x64xf32>
    %47 = arith.negf %46 : vector<2x64xf32>
    %48 = math.exp %47 : vector<2x64xf32>
    %cst_21 = arith.constant 1.000000e+00 : f32
    %49 = vector.broadcast %cst_21 : f32 to vector<2x64xf32>
    %50 = arith.addf %49, %48 : vector<2x64xf32>
    %51 = arith.divf %49, %50 : vector<2x64xf32>
    %52 = vector.extract_strided_slice %51 {offsets = [0, 0], sizes = [2, 32], strides = [1, 1]} : vector<2x64xf32> to vector<2x32xf32>
    %53 = vector.extract_strided_slice %51 {offsets = [0, 32], sizes = [2, 32], strides = [1, 1]} : vector<2x64xf32> to vector<2x32xf32>
    %54 = vector.extract_strided_slice %40 {offsets = [0, 64], sizes = [2, 32], strides = [1, 1]} : vector<2x96xf32> to vector<2x32xf32>
    %55 = vector.extract_strided_slice %43 {offsets = [0, 64], sizes = [2, 32], strides = [1, 1]} : vector<2x96xf32> to vector<2x32xf32>
    %56 = arith.mulf %52, %55 : vector<2x32xf32>
    %57 = arith.addf %54, %56 : vector<2x32xf32>
    %58 = math.tanh %57 : vector<2x32xf32>
    %cst_22 = arith.constant 1.000000e+00 : f32
    %59 = vector.broadcast %cst_22 : f32 to vector<2x32xf32>
    %60 = arith.subf %59, %53 : vector<2x32xf32>
    %61 = arith.mulf %60, %58 : vector<2x32xf32>
    %62 = arith.mulf %53, %32 : vector<2x32xf32>
    %63 = arith.addf %61, %62 : vector<2x32xf32>
    %c1_23 = arith.constant 1 : index
    %c0_24 = arith.constant 0 : index
    %c0_25 = arith.constant 0 : index
    %64 = vector.load %arg17[%c1_23, %c0_24, %c0_25] : memref<8x2x32xf32, #tpu.memory_space<vmem>>, vector<1x2x32xf32>
    %65 = vector.shape_cast %64 : vector<1x2x32xf32> to vector<2x32xf32>
    %66 = vector.shape_cast %63 : vector<2x32xf32> to vector<1x2x32xf32>
    tpu.vector_store %arg17[%c1_23, %c0_24, %c0_25], %66 {strides = array<i32>} : memref<8x2x32xf32, #tpu.memory_space<vmem>>, vector<1x2x32xf32>,
    %c2 = arith.constant 2 : index
    %c0_26 = arith.constant 0 : index
    %c0_27 = arith.constant 0 : index
    %67 = vector.load %arg2[%c2, %c0_26, %c0_27] : memref<8x2x32xf32, #tpu.memory_space<vmem>>, vector<1x2x32xf32>
    %68 = vector.shape_cast %67 : vector<1x2x32xf32> to vector<2x32xf32>
    %cst_28 = arith.constant dense<0.000000e+00> : vector<2x96xf32>
    %69 = tpu.matmul %68, %0, %cst_28 {dimension_numbers = #tpu.dot_dimension_numbers<[1], [0], [0], [1], [0, 0, 1, 1], [], []>} : vector<2x32xf32>, vector<32x96xf32>, vector<2x96xf32> -> vector<2x96xf32>
    %70 = vector.broadcast %2 : vector<1x96xf32> to vector<2x96xf32>
    %71 = arith.addf %69, %70 : vector<2x96xf32>
    %cst_29 = arith.constant dense<0.000000e+00> : vector<2x96xf32>
    %72 = tpu.matmul %63, %1, %cst_29 {dimension_numbers = #tpu.dot_dimension_numbers<[1], [0], [0], [1], [0, 0, 1, 1], [], []>} : vector<2x32xf32>, vector<32x96xf32>, vector<2x96xf32> -> vector<2x96xf32>
    %73 = vector.broadcast %3 : vector<1x96xf32> to vector<2x96xf32>
    %74 = arith.addf %72, %73 : vector<2x96xf32>
    %75 = vector.extract_strided_slice %71 {offsets = [0, 0], sizes = [2, 64], strides = [1, 1]} : vector<2x96xf32> to vector<2x64xf32>
    %76 = vector.extract_strided_slice %74 {offsets = [0, 0], sizes = [2, 64], strides = [1, 1]} : vector<2x96xf32> to vector<2x64xf32>
    %77 = arith.addf %75, %76 : vector<2x64xf32>
    %78 = arith.negf %77 : vector<2x64xf32>
    %79 = math.exp %78 : vector<2x64xf32>
    %cst_30 = arith.constant 1.000000e+00 : f32
    %80 = vector.broadcast %cst_30 : f32 to vector<2x64xf32>
    %81 = arith.addf %80, %79 : vector<2x64xf32>
    %82 = arith.divf %80, %81 : vector<2x64xf32>
    %83 = vector.extract_strided_slice %82 {offsets = [0, 0], sizes = [2, 32], strides = [1, 1]} : vector<2x64xf32> to vector<2x32xf32>
    %84 = vector.extract_strided_slice %82 {offsets = [0, 32], sizes = [2, 32], strides = [1, 1]} : vector<2x64xf32> to vector<2x32xf32>
    %85 = vector.extract_strided_slice %71 {offsets = [0, 64], sizes = [2, 32], strides = [1, 1]} : vector<2x96xf32> to vector<2x32xf32>
    %86 = vector.extract_strided_slice %74 {offsets = [0, 64], sizes = [2, 32], strides = [1, 1]} : vector<2x96xf32> to vector<2x32xf32>
    %87 = arith.mulf %83, %86 : vector<2x32xf32>
    %88 = arith.addf %85, %87 : vector<2x32xf32>
    %89 = math.tanh %88 : vector<2x32xf32>
    %cst_31 = arith.constant 1.000000e+00 : f32
    %90 = vector.broadcast %cst_31 : f32 to vector<2x32xf32>
    %91 = arith.subf %90, %84 : vector<2x32xf32>
    %92 = arith.mulf %91, %89 : vector<2x32xf32>
    %93 = arith.mulf %84, %63 : vector<2x32xf32>
    %94 = arith.addf %92, %93 : vector<2x32xf32>
    %c2_32 = arith.constant 2 : index
    %c0_33 = arith.constant 0 : index
    %c0_34 = arith.constant 0 : index
    %95 = vector.load %arg17[%c2_32, %c0_33, %c0_34] : memref<8x2x32xf32, #tpu.memory_space<vmem>>, vector<1x2x32xf32>
    %96 = vector.shape_cast %95 : vector<1x2x32xf32> to vector<2x32xf32>
    %97 = vector.shape_cast %94 : vector<2x32xf32> to vector<1x2x32xf32>
    tpu.vector_store %arg17[%c2_32, %c0_33, %c0_34], %97 {strides = array<i32>} : memref<8x2x32xf32, #tpu.memory_space<vmem>>, vector<1x2x32xf32>,
    %c3 = arith.constant 3 : index
    %c0_35 = arith.constant 0 : index
    %c0_36 = arith.constant 0 : index
    %98 = vector.load %arg2[%c3, %c0_35, %c0_36] : memref<8x2x32xf32, #tpu.memory_space<vmem>>, vector<1x2x32xf32>
    %99 = vector.shape_cast %98 : vector<1x2x32xf32> to vector<2x32xf32>
    %cst_37 = arith.constant dense<0.000000e+00> : vector<2x96xf32>
    %100 = tpu.matmul %99, %0, %cst_37 {dimension_numbers = #tpu.dot_dimension_numbers<[1], [0], [0], [1], [0, 0, 1, 1], [], []>} : vector<2x32xf32>, vector<32x96xf32>, vector<2x96xf32> -> vector<2x96xf32>
    %101 = vector.broadcast %2 : vector<1x96xf32> to vector<2x96xf32>
    %102 = arith.addf %100, %101 : vector<2x96xf32>
    %cst_38 = arith.constant dense<0.000000e+00> : vector<2x96xf32>
    %103 = tpu.matmul %94, %1, %cst_38 {dimension_numbers = #tpu.dot_dimension_numbers<[1], [0], [0], [1], [0, 0, 1, 1], [], []>} : vector<2x32xf32>, vector<32x96xf32>, vector<2x96xf32> -> vector<2x96xf32>
    %104 = vector.broadcast %3 : vector<1x96xf32> to vector<2x96xf32>
    %105 = arith.addf %103, %104 : vector<2x96xf32>
    %106 = vector.extract_strided_slice %102 {offsets = [0, 0], sizes = [2, 64], strides = [1, 1]} : vector<2x96xf32> to vector<2x64xf32>
    %107 = vector.extract_strided_slice %105 {offsets = [0, 0], sizes = [2, 64], strides = [1, 1]} : vector<2x96xf32> to vector<2x64xf32>
    %108 = arith.addf %106, %107 : vector<2x64xf32>
    %109 = arith.negf %108 : vector<2x64xf32>
    %110 = math.exp %109 : vector<2x64xf32>
    %cst_39 = arith.constant 1.000000e+00 : f32
    %111 = vector.broadcast %cst_39 : f32 to vector<2x64xf32>
    %112 = arith.addf %111, %110 : vector<2x64xf32>
    %113 = arith.divf %111, %112 : vector<2x64xf32>
    %114 = vector.extract_strided_slice %113 {offsets = [0, 0], sizes = [2, 32], strides = [1, 1]} : vector<2x64xf32> to vector<2x32xf32>
    %115 = vector.extract_strided_slice %113 {offsets = [0, 32], sizes = [2, 32], strides = [1, 1]} : vector<2x64xf32> to vector<2x32xf32>
    %116 = vector.extract_strided_slice %102 {offsets = [0, 64], sizes = [2, 32], strides = [1, 1]} : vector<2x96xf32> to vector<2x32xf32>
    %117 = vector.extract_strided_slice %105 {offsets = [0, 64], sizes = [2, 32], strides = [1, 1]} : vector<2x96xf32> to vector<2x32xf32>
    %118 = arith.mulf %114, %117 : vector<2x32xf32>
    %119 = arith.addf %116, %118 : vector<2x32xf32>
    %120 = math.tanh %119 : vector<2x32xf32>
    %cst_40 = arith.constant 1.000000e+00 : f32
    %121 = vector.broadcast %cst_40 : f32 to vector<2x32xf32>
    %122 = arith.subf %121, %115 : vector<2x32xf32>
    %123 = arith.mulf %122, %120 : vector<2x32xf32>
    %124 = arith.mulf %115, %94 : vector<2x32xf32>
    %125 = arith.addf %123, %124 : vector<2x32xf32>
    %c3_41 = arith.constant 3 : index
    %c0_42 = arith.constant 0 : index
    %c0_43 = arith.constant 0 : index
    %126 = vector.load %arg17[%c3_41, %c0_42, %c0_43] : memref<8x2x32xf32, #tpu.memory_space<vmem>>, vector<1x2x32xf32>
    %127 = vector.shape_cast %126 : vector<1x2x32xf32> to vector<2x32xf32>
    %128 = vector.shape_cast %125 : vector<2x32xf32> to vector<1x2x32xf32>
    tpu.vector_store %arg17[%c3_41, %c0_42, %c0_43], %128 {strides = array<i32>} : memref<8x2x32xf32, #tpu.memory_space<vmem>>, vector<1x2x32xf32>,
    %c4 = arith.constant 4 : index
    %c0_44 = arith.constant 0 : index
    %c0_45 = arith.constant 0 : index
    %129 = vector.load %arg2[%c4, %c0_44, %c0_45] : memref<8x2x32xf32, #tpu.memory_space<vmem>>, vector<1x2x32xf32>
    %130 = vector.shape_cast %129 : vector<1x2x32xf32> to vector<2x32xf32>
    %cst_46 = arith.constant dense<0.000000e+00> : vector<2x96xf32>
    %131 = tpu.matmul %130, %0, %cst_46 {dimension_numbers = #tpu.dot_dimension_numbers<[1], [0], [0], [1], [0, 0, 1, 1], [], []>} : vector<2x32xf32>, vector<32x96xf32>, vector<2x96xf32> -> vector<2x96xf32>
    %132 = vector.broadcast %2 : vector<1x96xf32> to vector<2x96xf32>
    %133 = arith.addf %131, %132 : vector<2x96xf32>
    %cst_47 = arith.constant dense<0.000000e+00> : vector<2x96xf32>
    %134 = tpu.matmul %125, %1, %cst_47 {dimension_numbers = #tpu.dot_dimension_numbers<[1], [0], [0], [1], [0, 0, 1, 1], [], []>} : vector<2x32xf32>, vector<32x96xf32>, vector<2x96xf32> -> vector<2x96xf32>
    %135 = vector.broadcast %3 : vector<1x96xf32> to vector<2x96xf32>
    %136 = arith.addf %134, %135 : vector<2x96xf32>
    %137 = vector.extract_strided_slice %133 {offsets = [0, 0], sizes = [2, 64], strides = [1, 1]} : vector<2x96xf32> to vector<2x64xf32>
    %138 = vector.extract_strided_slice %136 {offsets = [0, 0], sizes = [2, 64], strides = [1, 1]} : vector<2x96xf32> to vector<2x64xf32>
    %139 = arith.addf %137, %138 : vector<2x64xf32>
    %140 = arith.negf %139 : vector<2x64xf32>
    %141 = math.exp %140 : vector<2x64xf32>
    %cst_48 = arith.constant 1.000000e+00 : f32
    %142 = vector.broadcast %cst_48 : f32 to vector<2x64xf32>
    %143 = arith.addf %142, %141 : vector<2x64xf32>
    %144 = arith.divf %142, %143 : vector<2x64xf32>
    %145 = vector.extract_strided_slice %144 {offsets = [0, 0], sizes = [2, 32], strides = [1, 1]} : vector<2x64xf32> to vector<2x32xf32>
    %146 = vector.extract_strided_slice %144 {offsets = [0, 32], sizes = [2, 32], strides = [1, 1]} : vector<2x64xf32> to vector<2x32xf32>
    %147 = vector.extract_strided_slice %133 {offsets = [0, 64], sizes = [2, 32], strides = [1, 1]} : vector<2x96xf32> to vector<2x32xf32>
    %148 = vector.extract_strided_slice %136 {offsets = [0, 64], sizes = [2, 32], strides = [1, 1]} : vector<2x96xf32> to vector<2x32xf32>
    %149 = arith.mulf %145, %148 : vector<2x32xf32>
    %150 = arith.addf %147, %149 : vector<2x32xf32>
    %151 = math.tanh %150 : vector<2x32xf32>
    %cst_49 = arith.constant 1.000000e+00 : f32
    %152 = vector.broadcast %cst_49 : f32 to vector<2x32xf32>
    %153 = arith.subf %152, %146 : vector<2x32xf32>
    %154 = arith.mulf %153, %151 : vector<2x32xf32>
    %155 = arith.mulf %146, %125 : vector<2x32xf32>
    %156 = arith.addf %154, %155 : vector<2x32xf32>
    %c4_50 = arith.constant 4 : index
    %c0_51 = arith.constant 0 : index
    %c0_52 = arith.constant 0 : index
    %157 = vector.load %arg17[%c4_50, %c0_51, %c0_52] : memref<8x2x32xf32, #tpu.memory_space<vmem>>, vector<1x2x32xf32>
    %158 = vector.shape_cast %157 : vector<1x2x32xf32> to vector<2x32xf32>
    %159 = vector.shape_cast %156 : vector<2x32xf32> to vector<1x2x32xf32>
    tpu.vector_store %arg17[%c4_50, %c0_51, %c0_52], %159 {strides = array<i32>} : memref<8x2x32xf32, #tpu.memory_space<vmem>>, vector<1x2x32xf32>,
    %c5 = arith.constant 5 : index
    %c0_53 = arith.constant 0 : index
    %c0_54 = arith.constant 0 : index
    %160 = vector.load %arg2[%c5, %c0_53, %c0_54] : memref<8x2x32xf32, #tpu.memory_space<vmem>>, vector<1x2x32xf32>
    %161 = vector.shape_cast %160 : vector<1x2x32xf32> to vector<2x32xf32>
    %cst_55 = arith.constant dense<0.000000e+00> : vector<2x96xf32>
    %162 = tpu.matmul %161, %0, %cst_55 {dimension_numbers = #tpu.dot_dimension_numbers<[1], [0], [0], [1], [0, 0, 1, 1], [], []>} : vector<2x32xf32>, vector<32x96xf32>, vector<2x96xf32> -> vector<2x96xf32>
    %163 = vector.broadcast %2 : vector<1x96xf32> to vector<2x96xf32>
    %164 = arith.addf %162, %163 : vector<2x96xf32>
    %cst_56 = arith.constant dense<0.000000e+00> : vector<2x96xf32>
    %165 = tpu.matmul %156, %1, %cst_56 {dimension_numbers = #tpu.dot_dimension_numbers<[1], [0], [0], [1], [0, 0, 1, 1], [], []>} : vector<2x32xf32>, vector<32x96xf32>, vector<2x96xf32> -> vector<2x96xf32>
    %166 = vector.broadcast %3 : vector<1x96xf32> to vector<2x96xf32>
    %167 = arith.addf %165, %166 : vector<2x96xf32>
    %168 = vector.extract_strided_slice %164 {offsets = [0, 0], sizes = [2, 64], strides = [1, 1]} : vector<2x96xf32> to vector<2x64xf32>
    %169 = vector.extract_strided_slice %167 {offsets = [0, 0], sizes = [2, 64], strides = [1, 1]} : vector<2x96xf32> to vector<2x64xf32>
    %170 = arith.addf %168, %169 : vector<2x64xf32>
    %171 = arith.negf %170 : vector<2x64xf32>
    %172 = math.exp %171 : vector<2x64xf32>
    %cst_57 = arith.constant 1.000000e+00 : f32
    %173 = vector.broadcast %cst_57 : f32 to vector<2x64xf32>
    %174 = arith.addf %173, %172 : vector<2x64xf32>
    %175 = arith.divf %173, %174 : vector<2x64xf32>
    %176 = vector.extract_strided_slice %175 {offsets = [0, 0], sizes = [2, 32], strides = [1, 1]} : vector<2x64xf32> to vector<2x32xf32>
    %177 = vector.extract_strided_slice %175 {offsets = [0, 32], sizes = [2, 32], strides = [1, 1]} : vector<2x64xf32> to vector<2x32xf32>
    %178 = vector.extract_strided_slice %164 {offsets = [0, 64], sizes = [2, 32], strides = [1, 1]} : vector<2x96xf32> to vector<2x32xf32>
    %179 = vector.extract_strided_slice %167 {offsets = [0, 64], sizes = [2, 32], strides = [1, 1]} : vector<2x96xf32> to vector<2x32xf32>
    %180 = arith.mulf %176, %179 : vector<2x32xf32>
    %181 = arith.addf %178, %180 : vector<2x32xf32>
    %182 = math.tanh %181 : vector<2x32xf32>
    %cst_58 = arith.constant 1.000000e+00 : f32
    %183 = vector.broadcast %cst_58 : f32 to vector<2x32xf32>
    %184 = arith.subf %183, %177 : vector<2x32xf32>
    %185 = arith.mulf %184, %182 : vector<2x32xf32>
    %186 = arith.mulf %177, %156 : vector<2x32xf32>
    %187 = arith.addf %185, %186 : vector<2x32xf32>
    %c5_59 = arith.constant 5 : index
    %c0_60 = arith.constant 0 : index
    %c0_61 = arith.constant 0 : index
    %188 = vector.load %arg17[%c5_59, %c0_60, %c0_61] : memref<8x2x32xf32, #tpu.memory_space<vmem>>, vector<1x2x32xf32>
    %189 = vector.shape_cast %188 : vector<1x2x32xf32> to vector<2x32xf32>
    %190 = vector.shape_cast %187 : vector<2x32xf32> to vector<1x2x32xf32>
    tpu.vector_store %arg17[%c5_59, %c0_60, %c0_61], %190 {strides = array<i32>} : memref<8x2x32xf32, #tpu.memory_space<vmem>>, vector<1x2x32xf32>,
    %c6 = arith.constant 6 : index
    %c0_62 = arith.constant 0 : index
    %c0_63 = arith.constant 0 : index
    %191 = vector.load %arg2[%c6, %c0_62, %c0_63] : memref<8x2x32xf32, #tpu.memory_space<vmem>>, vector<1x2x32xf32>
    %192 = vector.shape_cast %191 : vector<1x2x32xf32> to vector<2x32xf32>
    %cst_64 = arith.constant dense<0.000000e+00> : vector<2x96xf32>
    %193 = tpu.matmul %192, %0, %cst_64 {dimension_numbers = #tpu.dot_dimension_numbers<[1], [0], [0], [1], [0, 0, 1, 1], [], []>} : vector<2x32xf32>, vector<32x96xf32>, vector<2x96xf32> -> vector<2x96xf32>
    %194 = vector.broadcast %2 : vector<1x96xf32> to vector<2x96xf32>
    %195 = arith.addf %193, %194 : vector<2x96xf32>
    %cst_65 = arith.constant dense<0.000000e+00> : vector<2x96xf32>
    %196 = tpu.matmul %187, %1, %cst_65 {dimension_numbers = #tpu.dot_dimension_numbers<[1], [0], [0], [1], [0, 0, 1, 1], [], []>} : vector<2x32xf32>, vector<32x96xf32>, vector<2x96xf32> -> vector<2x96xf32>
    %197 = vector.broadcast %3 : vector<1x96xf32> to vector<2x96xf32>
    %198 = arith.addf %196, %197 : vector<2x96xf32>
    %199 = vector.extract_strided_slice %195 {offsets = [0, 0], sizes = [2, 64], strides = [1, 1]} : vector<2x96xf32> to vector<2x64xf32>
    %200 = vector.extract_strided_slice %198 {offsets = [0, 0], sizes = [2, 64], strides = [1, 1]} : vector<2x96xf32> to vector<2x64xf32>
    %201 = arith.addf %199, %200 : vector<2x64xf32>
    %202 = arith.negf %201 : vector<2x64xf32>
    %203 = math.exp %202 : vector<2x64xf32>
    %cst_66 = arith.constant 1.000000e+00 : f32
    %204 = vector.broadcast %cst_66 : f32 to vector<2x64xf32>
    %205 = arith.addf %204, %203 : vector<2x64xf32>
    %206 = arith.divf %204, %205 : vector<2x64xf32>
    %207 = vector.extract_strided_slice %206 {offsets = [0, 0], sizes = [2, 32], strides = [1, 1]} : vector<2x64xf32> to vector<2x32xf32>
    %208 = vector.extract_strided_slice %206 {offsets = [0, 32], sizes = [2, 32], strides = [1, 1]} : vector<2x64xf32> to vector<2x32xf32>
    %209 = vector.extract_strided_slice %195 {offsets = [0, 64], sizes = [2, 32], strides = [1, 1]} : vector<2x96xf32> to vector<2x32xf32>
    %210 = vector.extract_strided_slice %198 {offsets = [0, 64], sizes = [2, 32], strides = [1, 1]} : vector<2x96xf32> to vector<2x32xf32>
    %211 = arith.mulf %207, %210 : vector<2x32xf32>
    %212 = arith.addf %209, %211 : vector<2x32xf32>
    %213 = math.tanh %212 : vector<2x32xf32>
    %cst_67 = arith.constant 1.000000e+00 : f32
    %214 = vector.broadcast %cst_67 : f32 to vector<2x32xf32>
    %215 = arith.subf %214, %208 : vector<2x32xf32>
    %216 = arith.mulf %215, %213 : vector<2x32xf32>
    %217 = arith.mulf %208, %187 : vector<2x32xf32>
    %218 = arith.addf %216, %217 : vector<2x32xf32>
    %c6_68 = arith.constant 6 : index
    %c0_69 = arith.constant 0 : index
    %c0_70 = arith.constant 0 : index
    %219 = vector.load %arg17[%c6_68, %c0_69, %c0_70] : memref<8x2x32xf32, #tpu.memory_space<vmem>>, vector<1x2x32xf32>
    %220 = vector.shape_cast %219 : vector<1x2x32xf32> to vector<2x32xf32>
    %221 = vector.shape_cast %218 : vector<2x32xf32> to vector<1x2x32xf32>
    tpu.vector_store %arg17[%c6_68, %c0_69, %c0_70], %221 {strides = array<i32>} : memref<8x2x32xf32, #tpu.memory_space<vmem>>, vector<1x2x32xf32>,
    %c7 = arith.constant 7 : index
    %c0_71 = arith.constant 0 : index
    %c0_72 = arith.constant 0 : index
    %222 = vector.load %arg2[%c7, %c0_71, %c0_72] : memref<8x2x32xf32, #tpu.memory_space<vmem>>, vector<1x2x32xf32>
    %223 = vector.shape_cast %222 : vector<1x2x32xf32> to vector<2x32xf32>
    %cst_73 = arith.constant dense<0.000000e+00> : vector<2x96xf32>
    %224 = tpu.matmul %223, %0, %cst_73 {dimension_numbers = #tpu.dot_dimension_numbers<[1], [0], [0], [1], [0, 0, 1, 1], [], []>} : vector<2x32xf32>, vector<32x96xf32>, vector<2x96xf32> -> vector<2x96xf32>
    %225 = vector.broadcast %2 : vector<1x96xf32> to vector<2x96xf32>
    %226 = arith.addf %224, %225 : vector<2x96xf32>
    %cst_74 = arith.constant dense<0.000000e+00> : vector<2x96xf32>
    %227 = tpu.matmul %218, %1, %cst_74 {dimension_numbers = #tpu.dot_dimension_numbers<[1], [0], [0], [1], [0, 0, 1, 1], [], []>} : vector<2x32xf32>, vector<32x96xf32>, vector<2x96xf32> -> vector<2x96xf32>
    %228 = vector.broadcast %3 : vector<1x96xf32> to vector<2x96xf32>
    %229 = arith.addf %227, %228 : vector<2x96xf32>
    %230 = vector.extract_strided_slice %226 {offsets = [0, 0], sizes = [2, 64], strides = [1, 1]} : vector<2x96xf32> to vector<2x64xf32>
    %231 = vector.extract_strided_slice %229 {offsets = [0, 0], sizes = [2, 64], strides = [1, 1]} : vector<2x96xf32> to vector<2x64xf32>
    %232 = arith.addf %230, %231 : vector<2x64xf32>
    %233 = arith.negf %232 : vector<2x64xf32>
    %234 = math.exp %233 : vector<2x64xf32>
    %cst_75 = arith.constant 1.000000e+00 : f32
    %235 = vector.broadcast %cst_75 : f32 to vector<2x64xf32>
    %236 = arith.addf %235, %234 : vector<2x64xf32>
    %237 = arith.divf %235, %236 : vector<2x64xf32>
    %238 = vector.extract_strided_slice %237 {offsets = [0, 0], sizes = [2, 32], strides = [1, 1]} : vector<2x64xf32> to vector<2x32xf32>
    %239 = vector.extract_strided_slice %237 {offsets = [0, 32], sizes = [2, 32], strides = [1, 1]} : vector<2x64xf32> to vector<2x32xf32>
    %240 = vector.extract_strided_slice %226 {offsets = [0, 64], sizes = [2, 32], strides = [1, 1]} : vector<2x96xf32> to vector<2x32xf32>
    %241 = vector.extract_strided_slice %229 {offsets = [0, 64], sizes = [2, 32], strides = [1, 1]} : vector<2x96xf32> to vector<2x32xf32>
    %242 = arith.mulf %238, %241 : vector<2x32xf32>
    %243 = arith.addf %240, %242 : vector<2x32xf32>
    %244 = math.tanh %243 : vector<2x32xf32>
    %cst_76 = arith.constant 1.000000e+00 : f32
    %245 = vector.broadcast %cst_76 : f32 to vector<2x32xf32>
    %246 = arith.subf %245, %239 : vector<2x32xf32>
    %247 = arith.mulf %246, %244 : vector<2x32xf32>
    %248 = arith.mulf %239, %218 : vector<2x32xf32>
    %249 = arith.addf %247, %248 : vector<2x32xf32>
    %c7_77 = arith.constant 7 : index
    %c0_78 = arith.constant 0 : index
    %c0_79 = arith.constant 0 : index
    %250 = vector.load %arg17[%c7_77, %c0_78, %c0_79] : memref<8x2x32xf32, #tpu.memory_space<vmem>>, vector<1x2x32xf32>
    %251 = vector.shape_cast %250 : vector<1x2x32xf32> to vector<2x32xf32>
    %252 = vector.shape_cast %249 : vector<2x32xf32> to vector<1x2x32xf32>
    tpu.vector_store %arg17[%c7_77, %c0_78, %c0_79], %252 {strides = array<i32>} : memref<8x2x32xf32, #tpu.memory_space<vmem>>, vector<1x2x32xf32>,
    %c0_80 = arith.constant 0 : index
    %c0_81 = arith.constant 0 : index
    %c0_82 = arith.constant 0 : index
    %253 = vector.load %arg17[%c0_80, %c0_81, %c0_82] : memref<8x2x32xf32, #tpu.memory_space<vmem>>, vector<8x2x32xf32>
    %c0_83 = arith.constant 0 : index
    %c0_84 = arith.constant 0 : index
    %254 = vector.load %arg7[%c0_83, %c0_84] : memref<16x32xf32, #tpu.memory_space<vmem>>, vector<16x32xf32>
    %c0_85 = arith.constant 0 : index
    %c0_86 = arith.constant 0 : index
    %255 = vector.load %arg8[%c0_85, %c0_86] : memref<32x96xf32, #tpu.memory_space<vmem>>, vector<32x96xf32>
    %c0_87 = arith.constant 0 : index
    %c0_88 = arith.constant 0 : index
    %256 = vector.load %arg9[%c0_87, %c0_88] : memref<32x96xf32, #tpu.memory_space<vmem>>, vector<32x96xf32>
    %c0_89 = arith.constant 0 : index
    %c0_90 = arith.constant 0 : index
    %257 = vector.load %arg10[%c0_89, %c0_90] : memref<32x96xf32, #tpu.memory_space<vmem>>, vector<32x96xf32>
    %c0_91 = arith.constant 0 : index
    %c0_92 = arith.constant 0 : index
    %258 = vector.load %arg11[%c0_91, %c0_92] : memref<1x96xf32, #tpu.memory_space<vmem>>, vector<1x96xf32>
    %c0_93 = arith.constant 0 : index
    %c0_94 = arith.constant 0 : index
    %259 = vector.load %arg12[%c0_93, %c0_94] : memref<1x96xf32, #tpu.memory_space<vmem>>, vector<1x96xf32>
    %c0_95 = arith.constant 0 : index
    %c0_96 = arith.constant 0 : index
    %260 = vector.load %arg13[%c0_95, %c0_96] : memref<32x128xf32, #tpu.memory_space<vmem>>, vector<32x128xf32>
    %c0_97 = arith.constant 0 : index
    %c0_98 = arith.constant 0 : index
    %261 = vector.load %arg14[%c0_97, %c0_98] : memref<32x128xf32, #tpu.memory_space<vmem>>, vector<32x128xf32>
    %c0_99 = arith.constant 0 : index
    %c0_100 = arith.constant 0 : index
    %262 = vector.load %arg15[%c0_99, %c0_100] : memref<1x128xf32, #tpu.memory_space<vmem>>, vector<1x128xf32>
    %263 = tpu.iota {dimensions = array<i32: 1>} : vector<2x16xi32>
    %264 = tpu.iota {dimensions = array<i32: 1>} : vector<2x128xi32>
    %c0_i32 = arith.constant 0 : i32
    %265 = vector.broadcast %c0_i32 : i32 to vector<2x1xi32>
    %c0_101 = arith.constant 0 : index
    %c0_102 = arith.constant 0 : index
    %c0_103 = arith.constant 0 : index
    %266 = vector.load %arg1[%c0_101, %c0_102, %c0_103] : memref<7x2x1xi32, #tpu.memory_space<vmem>>, vector<1x2x1xi32>
    %267 = vector.shape_cast %266 : vector<1x2x1xi32> to vector<2x1xi32>
    %c0_i32_104 = arith.constant 0 : i32
    %268 = vector.broadcast %c0_i32_104 : i32 to vector<2x1xi32>
    %269 = arith.cmpi sge, %267, %268 : vector<2x1xi32>
    %270 = arith.select %269, %267, %265 : vector<2x1xi1>, vector<2x1xi32>
    %271 = vector.broadcast %270 : vector<2x1xi32> to vector<2x16xi32>
    %272 = arith.cmpi eq, %263, %271 : vector<2x16xi32>
    %273 = arith.extui %272 : vector<2x16xi1> to vector<2x16xi32>
    %274 = arith.sitofp %273 : vector<2x16xi32> to vector<2x16xf32>
    %cst_105 = arith.constant dense<0.000000e+00> : vector<2x32xf32>
    %275 = tpu.matmul %274, %254, %cst_105 {dimension_numbers = #tpu.dot_dimension_numbers<[1], [0], [0], [1], [0, 0, 1, 1], [], []>} : vector<2x16xf32>, vector<16x32xf32>, vector<2x32xf32> -> vector<2x32xf32>
    %276 = vector.shape_cast %249 : vector<2x32xf32> to vector<1x2x32xf32>
    %277 = vector.broadcast %276 : vector<1x2x32xf32> to vector<8x2x32xf32>
    %278 = arith.mulf %253, %277 : vector<8x2x32xf32>
    %cst_106 = arith.constant dense<0.000000e+00> : vector<8x2xf32>
    %279 = vector.multi_reduction <add>, %278, %cst_106 [2] : vector<8x2x32xf32> to vector<8x2xf32>
    %280 = vector.shape_cast %279 : vector<8x2xf32> to vector<8x2x1xf32>
    %cst_107 = arith.constant dense<0xFF800000> : vector<2x1xf32>
    %281 = vector.multi_reduction <maximumf>, %280, %cst_107 [0] : vector<8x2x1xf32> to vector<2x1xf32>
    %282 = vector.shape_cast %281 : vector<2x1xf32> to vector<1x2x1xf32>
    %283 = vector.broadcast %282 : vector<1x2x1xf32> to vector<8x2x1xf32>
    %284 = arith.subf %280, %283 : vector<8x2x1xf32>
    %285 = math.exp %284 : vector<8x2x1xf32>
    %cst_108 = arith.constant dense<0.000000e+00> : vector<2x1xf32>
    %286 = vector.multi_reduction <add>, %285, %cst_108 [0] : vector<8x2x1xf32> to vector<2x1xf32>
    %287 = vector.shape_cast %286 : vector<2x1xf32> to vector<1x2x1xf32>
    %288 = tpu.reciprocal %287 {approx = true} : vector<1x2x1xf32> -> vector<1x2x1xf32>
    %289 = vector.broadcast %288 : vector<1x2x1xf32> to vector<8x2x1xf32>
    %290 = arith.mulf %285, %289 : vector<8x2x1xf32>
    %291 = vector.broadcast %290 : vector<8x2x1xf32> to vector<8x2x32xf32>
    %292 = arith.mulf %291, %253 : vector<8x2x32xf32>
    %cst_109 = arith.constant dense<0.000000e+00> : vector<2x32xf32>
    %293 = vector.multi_reduction <add>, %292, %cst_109 [0] : vector<8x2x32xf32> to vector<2x32xf32>
    %cst_110 = arith.constant dense<0.000000e+00> : vector<2x96xf32>
    %294 = tpu.matmul %275, %255, %cst_110 {dimension_numbers = #tpu.dot_dimension_numbers<[1], [0], [0], [1], [0, 0, 1, 1], [], []>} : vector<2x32xf32>, vector<32x96xf32>, vector<2x96xf32> -> vector<2x96xf32>
    %cst_111 = arith.constant dense<0.000000e+00> : vector<2x96xf32>
    %295 = tpu.matmul %293, %256, %cst_111 {dimension_numbers = #tpu.dot_dimension_numbers<[1], [0], [0], [1], [0, 0, 1, 1], [], []>} : vector<2x32xf32>, vector<32x96xf32>, vector<2x96xf32> -> vector<2x96xf32>
    %296 = arith.addf %294, %295 : vector<2x96xf32>
    %297 = vector.broadcast %258 : vector<1x96xf32> to vector<2x96xf32>
    %298 = arith.addf %296, %297 : vector<2x96xf32>
    %cst_112 = arith.constant dense<0.000000e+00> : vector<2x96xf32>
    %299 = tpu.matmul %249, %257, %cst_112 {dimension_numbers = #tpu.dot_dimension_numbers<[1], [0], [0], [1], [0, 0, 1, 1], [], []>} : vector<2x32xf32>, vector<32x96xf32>, vector<2x96xf32> -> vector<2x96xf32>
    %300 = vector.broadcast %259 : vector<1x96xf32> to vector<2x96xf32>
    %301 = arith.addf %299, %300 : vector<2x96xf32>
    %302 = vector.extract_strided_slice %298 {offsets = [0, 0], sizes = [2, 64], strides = [1, 1]} : vector<2x96xf32> to vector<2x64xf32>
    %303 = vector.extract_strided_slice %301 {offsets = [0, 0], sizes = [2, 64], strides = [1, 1]} : vector<2x96xf32> to vector<2x64xf32>
    %304 = arith.addf %302, %303 : vector<2x64xf32>
    %305 = arith.negf %304 : vector<2x64xf32>
    %306 = math.exp %305 : vector<2x64xf32>
    %cst_113 = arith.constant 1.000000e+00 : f32
    %307 = vector.broadcast %cst_113 : f32 to vector<2x64xf32>
    %308 = arith.addf %307, %306 : vector<2x64xf32>
    %309 = arith.divf %307, %308 : vector<2x64xf32>
    %310 = vector.extract_strided_slice %309 {offsets = [0, 0], sizes = [2, 32], strides = [1, 1]} : vector<2x64xf32> to vector<2x32xf32>
    %311 = vector.extract_strided_slice %309 {offsets = [0, 32], sizes = [2, 32], strides = [1, 1]} : vector<2x64xf32> to vector<2x32xf32>
    %312 = vector.extract_strided_slice %298 {offsets = [0, 64], sizes = [2, 32], strides = [1, 1]} : vector<2x96xf32> to vector<2x32xf32>
    %313 = vector.extract_strided_slice %301 {offsets = [0, 64], sizes = [2, 32], strides = [1, 1]} : vector<2x96xf32> to vector<2x32xf32>
    %314 = arith.mulf %310, %313 : vector<2x32xf32>
    %315 = arith.addf %312, %314 : vector<2x32xf32>
    %316 = math.tanh %315 : vector<2x32xf32>
    %cst_114 = arith.constant 1.000000e+00 : f32
    %317 = vector.broadcast %cst_114 : f32 to vector<2x32xf32>
    %318 = arith.subf %317, %311 : vector<2x32xf32>
    %319 = arith.mulf %318, %316 : vector<2x32xf32>
    %320 = arith.mulf %311, %249 : vector<2x32xf32>
    %321 = arith.addf %319, %320 : vector<2x32xf32>
    %cst_115 = arith.constant dense<0.000000e+00> : vector<2x128xf32>
    %322 = tpu.matmul %321, %260, %cst_115 {dimension_numbers = #tpu.dot_dimension_numbers<[1], [0], [0], [1], [0, 0, 1, 1], [], []>} : vector<2x32xf32>, vector<32x128xf32>, vector<2x128xf32> -> vector<2x128xf32>
    %cst_116 = arith.constant dense<0.000000e+00> : vector<2x128xf32>
    %323 = tpu.matmul %293, %261, %cst_116 {dimension_numbers = #tpu.dot_dimension_numbers<[1], [0], [0], [1], [0, 0, 1, 1], [], []>} : vector<2x32xf32>, vector<32x128xf32>, vector<2x128xf32> -> vector<2x128xf32>
    %324 = arith.addf %322, %323 : vector<2x128xf32>
    %325 = vector.broadcast %262 : vector<1x128xf32> to vector<2x128xf32>
    %326 = arith.addf %324, %325 : vector<2x128xf32>
    %c0_117 = arith.constant 0 : index
    %c0_118 = arith.constant 0 : index
    %c0_119 = arith.constant 0 : index
    %327 = vector.load %arg16[%c0_117, %c0_118, %c0_119] : memref<7x2x128xf32, #tpu.memory_space<vmem>>, vector<1x2x128xf32>
    %328 = vector.shape_cast %327 : vector<1x2x128xf32> to vector<2x128xf32>
    %329 = vector.shape_cast %326 : vector<2x128xf32> to vector<1x2x128xf32>
    tpu.vector_store %arg16[%c0_117, %c0_118, %c0_119], %329 {strides = array<i32>} : memref<7x2x128xf32, #tpu.memory_space<vmem>>, vector<1x2x128xf32>,
    %c16_i32 = arith.constant 16 : i32
    %330 = vector.broadcast %c16_i32 : i32 to vector<2x128xi32>
    %331 = arith.cmpi slt, %264, %330 : vector<2x128xi32>
    %cst_120 = arith.constant -1.000000e+30 : f32
    %332 = vector.broadcast %cst_120 : f32 to vector<2x128xf32>
    %333 = arith.select %331, %326, %332 : vector<2x128xi1>, vector<2x128xf32>
    %cst_121 = arith.constant dense<0xFF800000> : vector<2xf32>
    %334 = vector.multi_reduction <maximumf>, %333, %cst_121 [1] : vector<2x128xf32> to vector<2xf32>
    %335 = vector.shape_cast %334 : vector<2xf32> to vector<2x1xf32>
    %336 = vector.broadcast %335 : vector<2x1xf32> to vector<2x128xf32>
    %337 = arith.cmpf oeq, %333, %336 : vector<2x128xf32>
    %c128_i32 = arith.constant 128 : i32
    %338 = vector.broadcast %c128_i32 : i32 to vector<2x128xi32>
    %339 = arith.select %337, %264, %338 : vector<2x128xi1>, vector<2x128xi32>
    %cst_122 = arith.constant dense<2147483647> : vector<2xi32>
    %340 = vector.multi_reduction <minsi>, %339, %cst_122 [1] : vector<2x128xi32> to vector<2xi32>
    %341 = vector.shape_cast %340 : vector<2xi32> to vector<2x1xi32>
    %c1_123 = arith.constant 1 : index
    %c0_124 = arith.constant 0 : index
    %c0_125 = arith.constant 0 : index
    %342 = vector.load %arg1[%c1_123, %c0_124, %c0_125] : memref<7x2x1xi32, #tpu.memory_space<vmem>>, vector<1x2x1xi32>
    %343 = vector.shape_cast %342 : vector<1x2x1xi32> to vector<2x1xi32>
    %c0_i32_126 = arith.constant 0 : i32
    %344 = vector.broadcast %c0_i32_126 : i32 to vector<2x1xi32>
    %345 = arith.cmpi sge, %343, %344 : vector<2x1xi32>
    %346 = arith.select %345, %343, %341 : vector<2x1xi1>, vector<2x1xi32>
    %347 = vector.broadcast %346 : vector<2x1xi32> to vector<2x16xi32>
    %348 = arith.cmpi eq, %263, %347 : vector<2x16xi32>
    %349 = arith.extui %348 : vector<2x16xi1> to vector<2x16xi32>
    %350 = arith.sitofp %349 : vector<2x16xi32> to vector<2x16xf32>
    %cst_127 = arith.constant dense<0.000000e+00> : vector<2x32xf32>
    %351 = tpu.matmul %350, %254, %cst_127 {dimension_numbers = #tpu.dot_dimension_numbers<[1], [0], [0], [1], [0, 0, 1, 1], [], []>} : vector<2x16xf32>, vector<16x32xf32>, vector<2x32xf32> -> vector<2x32xf32>
    %352 = vector.shape_cast %321 : vector<2x32xf32> to vector<1x2x32xf32>
    %353 = vector.broadcast %352 : vector<1x2x32xf32> to vector<8x2x32xf32>
    %354 = arith.mulf %253, %353 : vector<8x2x32xf32>
    %cst_128 = arith.constant dense<0.000000e+00> : vector<8x2xf32>
    %355 = vector.multi_reduction <add>, %354, %cst_128 [2] : vector<8x2x32xf32> to vector<8x2xf32>
    %356 = vector.shape_cast %355 : vector<8x2xf32> to vector<8x2x1xf32>
    %cst_129 = arith.constant dense<0xFF800000> : vector<2x1xf32>
    %357 = vector.multi_reduction <maximumf>, %356, %cst_129 [0] : vector<8x2x1xf32> to vector<2x1xf32>
    %358 = vector.shape_cast %357 : vector<2x1xf32> to vector<1x2x1xf32>
    %359 = vector.broadcast %358 : vector<1x2x1xf32> to vector<8x2x1xf32>
    %360 = arith.subf %356, %359 : vector<8x2x1xf32>
    %361 = math.exp %360 : vector<8x2x1xf32>
    %cst_130 = arith.constant dense<0.000000e+00> : vector<2x1xf32>
    %362 = vector.multi_reduction <add>, %361, %cst_130 [0] : vector<8x2x1xf32> to vector<2x1xf32>
    %363 = vector.shape_cast %362 : vector<2x1xf32> to vector<1x2x1xf32>
    %364 = tpu.reciprocal %363 {approx = true} : vector<1x2x1xf32> -> vector<1x2x1xf32>
    %365 = vector.broadcast %364 : vector<1x2x1xf32> to vector<8x2x1xf32>
    %366 = arith.mulf %361, %365 : vector<8x2x1xf32>
    %367 = vector.broadcast %366 : vector<8x2x1xf32> to vector<8x2x32xf32>
    %368 = arith.mulf %367, %253 : vector<8x2x32xf32>
    %cst_131 = arith.constant dense<0.000000e+00> : vector<2x32xf32>
    %369 = vector.multi_reduction <add>, %368, %cst_131 [0] : vector<8x2x32xf32> to vector<2x32xf32>
    %cst_132 = arith.constant dense<0.000000e+00> : vector<2x96xf32>
    %370 = tpu.matmul %351, %255, %cst_132 {dimension_numbers = #tpu.dot_dimension_numbers<[1], [0], [0], [1], [0, 0, 1, 1], [], []>} : vector<2x32xf32>, vector<32x96xf32>, vector<2x96xf32> -> vector<2x96xf32>
    %cst_133 = arith.constant dense<0.000000e+00> : vector<2x96xf32>
    %371 = tpu.matmul %369, %256, %cst_133 {dimension_numbers = #tpu.dot_dimension_numbers<[1], [0], [0], [1], [0, 0, 1, 1], [], []>} : vector<2x32xf32>, vector<32x96xf32>, vector<2x96xf32> -> vector<2x96xf32>
    %372 = arith.addf %370, %371 : vector<2x96xf32>
    %373 = vector.broadcast %258 : vector<1x96xf32> to vector<2x96xf32>
    %374 = arith.addf %372, %373 : vector<2x96xf32>
    %cst_134 = arith.constant dense<0.000000e+00> : vector<2x96xf32>
    %375 = tpu.matmul %321, %257, %cst_134 {dimension_numbers = #tpu.dot_dimension_numbers<[1], [0], [0], [1], [0, 0, 1, 1], [], []>} : vector<2x32xf32>, vector<32x96xf32>, vector<2x96xf32> -> vector<2x96xf32>
    %376 = vector.broadcast %259 : vector<1x96xf32> to vector<2x96xf32>
    %377 = arith.addf %375, %376 : vector<2x96xf32>
    %378 = vector.extract_strided_slice %374 {offsets = [0, 0], sizes = [2, 64], strides = [1, 1]} : vector<2x96xf32> to vector<2x64xf32>
    %379 = vector.extract_strided_slice %377 {offsets = [0, 0], sizes = [2, 64], strides = [1, 1]} : vector<2x96xf32> to vector<2x64xf32>
    %380 = arith.addf %378, %379 : vector<2x64xf32>
    %381 = arith.negf %380 : vector<2x64xf32>
    %382 = math.exp %381 : vector<2x64xf32>
    %cst_135 = arith.constant 1.000000e+00 : f32
    %383 = vector.broadcast %cst_135 : f32 to vector<2x64xf32>
    %384 = arith.addf %383, %382 : vector<2x64xf32>
    %385 = arith.divf %383, %384 : vector<2x64xf32>
    %386 = vector.extract_strided_slice %385 {offsets = [0, 0], sizes = [2, 32], strides = [1, 1]} : vector<2x64xf32> to vector<2x32xf32>
    %387 = vector.extract_strided_slice %385 {offsets = [0, 32], sizes = [2, 32], strides = [1, 1]} : vector<2x64xf32> to vector<2x32xf32>
    %388 = vector.extract_strided_slice %374 {offsets = [0, 64], sizes = [2, 32], strides = [1, 1]} : vector<2x96xf32> to vector<2x32xf32>
    %389 = vector.extract_strided_slice %377 {offsets = [0, 64], sizes = [2, 32], strides = [1, 1]} : vector<2x96xf32> to vector<2x32xf32>
    %390 = arith.mulf %386, %389 : vector<2x32xf32>
    %391 = arith.addf %388, %390 : vector<2x32xf32>
    %392 = math.tanh %391 : vector<2x32xf32>
    %cst_136 = arith.constant 1.000000e+00 : f32
    %393 = vector.broadcast %cst_136 : f32 to vector<2x32xf32>
    %394 = arith.subf %393, %387 : vector<2x32xf32>
    %395 = arith.mulf %394, %392 : vector<2x32xf32>
    %396 = arith.mulf %387, %321 : vector<2x32xf32>
    %397 = arith.addf %395, %396 : vector<2x32xf32>
    %cst_137 = arith.constant dense<0.000000e+00> : vector<2x128xf32>
    %398 = tpu.matmul %397, %260, %cst_137 {dimension_numbers = #tpu.dot_dimension_numbers<[1], [0], [0], [1], [0, 0, 1, 1], [], []>} : vector<2x32xf32>, vector<32x128xf32>, vector<2x128xf32> -> vector<2x128xf32>
    %cst_138 = arith.constant dense<0.000000e+00> : vector<2x128xf32>
    %399 = tpu.matmul %369, %261, %cst_138 {dimension_numbers = #tpu.dot_dimension_numbers<[1], [0], [0], [1], [0, 0, 1, 1], [], []>} : vector<2x32xf32>, vector<32x128xf32>, vector<2x128xf32> -> vector<2x128xf32>
    %400 = arith.addf %398, %399 : vector<2x128xf32>
    %401 = vector.broadcast %262 : vector<1x128xf32> to vector<2x128xf32>
    %402 = arith.addf %400, %401 : vector<2x128xf32>
    %c1_139 = arith.constant 1 : index
    %c0_140 = arith.constant 0 : index
    %c0_141 = arith.constant 0 : index
    %403 = vector.load %arg16[%c1_139, %c0_140, %c0_141] : memref<7x2x128xf32, #tpu.memory_space<vmem>>, vector<1x2x128xf32>
    %404 = vector.shape_cast %403 : vector<1x2x128xf32> to vector<2x128xf32>
    %405 = vector.shape_cast %402 : vector<2x128xf32> to vector<1x2x128xf32>
    tpu.vector_store %arg16[%c1_139, %c0_140, %c0_141], %405 {strides = array<i32>} : memref<7x2x128xf32, #tpu.memory_space<vmem>>, vector<1x2x128xf32>,
    %c16_i32_142 = arith.constant 16 : i32
    %406 = vector.broadcast %c16_i32_142 : i32 to vector<2x128xi32>
    %407 = arith.cmpi slt, %264, %406 : vector<2x128xi32>
    %cst_143 = arith.constant -1.000000e+30 : f32
    %408 = vector.broadcast %cst_143 : f32 to vector<2x128xf32>
    %409 = arith.select %407, %402, %408 : vector<2x128xi1>, vector<2x128xf32>
    %cst_144 = arith.constant dense<0xFF800000> : vector<2xf32>
    %410 = vector.multi_reduction <maximumf>, %409, %cst_144 [1] : vector<2x128xf32> to vector<2xf32>
    %411 = vector.shape_cast %410 : vector<2xf32> to vector<2x1xf32>
    %412 = vector.broadcast %411 : vector<2x1xf32> to vector<2x128xf32>
    %413 = arith.cmpf oeq, %409, %412 : vector<2x128xf32>
    %c128_i32_145 = arith.constant 128 : i32
    %414 = vector.broadcast %c128_i32_145 : i32 to vector<2x128xi32>
    %415 = arith.select %413, %264, %414 : vector<2x128xi1>, vector<2x128xi32>
    %cst_146 = arith.constant dense<2147483647> : vector<2xi32>
    %416 = vector.multi_reduction <minsi>, %415, %cst_146 [1] : vector<2x128xi32> to vector<2xi32>
    %417 = vector.shape_cast %416 : vector<2xi32> to vector<2x1xi32>
    %c2_147 = arith.constant 2 : index
    %c0_148 = arith.constant 0 : index
    %c0_149 = arith.constant 0 : index
    %418 = vector.load %arg1[%c2_147, %c0_148, %c0_149] : memref<7x2x1xi32, #tpu.memory_space<vmem>>, vector<1x2x1xi32>
    %419 = vector.shape_cast %418 : vector<1x2x1xi32> to vector<2x1xi32>
    %c0_i32_150 = arith.constant 0 : i32
    %420 = vector.broadcast %c0_i32_150 : i32 to vector<2x1xi32>
    %421 = arith.cmpi sge, %419, %420 : vector<2x1xi32>
    %422 = arith.select %421, %419, %417 : vector<2x1xi1>, vector<2x1xi32>
    %423 = vector.broadcast %422 : vector<2x1xi32> to vector<2x16xi32>
    %424 = arith.cmpi eq, %263, %423 : vector<2x16xi32>
    %425 = arith.extui %424 : vector<2x16xi1> to vector<2x16xi32>
    %426 = arith.sitofp %425 : vector<2x16xi32> to vector<2x16xf32>
    %cst_151 = arith.constant dense<0.000000e+00> : vector<2x32xf32>
    %427 = tpu.matmul %426, %254, %cst_151 {dimension_numbers = #tpu.dot_dimension_numbers<[1], [0], [0], [1], [0, 0, 1, 1], [], []>} : vector<2x16xf32>, vector<16x32xf32>, vector<2x32xf32> -> vector<2x32xf32>
    %428 = vector.shape_cast %397 : vector<2x32xf32> to vector<1x2x32xf32>
    %429 = vector.broadcast %428 : vector<1x2x32xf32> to vector<8x2x32xf32>
    %430 = arith.mulf %253, %429 : vector<8x2x32xf32>
    %cst_152 = arith.constant dense<0.000000e+00> : vector<8x2xf32>
    %431 = vector.multi_reduction <add>, %430, %cst_152 [2] : vector<8x2x32xf32> to vector<8x2xf32>
    %432 = vector.shape_cast %431 : vector<8x2xf32> to vector<8x2x1xf32>
    %cst_153 = arith.constant dense<0xFF800000> : vector<2x1xf32>
    %433 = vector.multi_reduction <maximumf>, %432, %cst_153 [0] : vector<8x2x1xf32> to vector<2x1xf32>
    %434 = vector.shape_cast %433 : vector<2x1xf32> to vector<1x2x1xf32>
    %435 = vector.broadcast %434 : vector<1x2x1xf32> to vector<8x2x1xf32>
    %436 = arith.subf %432, %435 : vector<8x2x1xf32>
    %437 = math.exp %436 : vector<8x2x1xf32>
    %cst_154 = arith.constant dense<0.000000e+00> : vector<2x1xf32>
    %438 = vector.multi_reduction <add>, %437, %cst_154 [0] : vector<8x2x1xf32> to vector<2x1xf32>
    %439 = vector.shape_cast %438 : vector<2x1xf32> to vector<1x2x1xf32>
    %440 = tpu.reciprocal %439 {approx = true} : vector<1x2x1xf32> -> vector<1x2x1xf32>
    %441 = vector.broadcast %440 : vector<1x2x1xf32> to vector<8x2x1xf32>
    %442 = arith.mulf %437, %441 : vector<8x2x1xf32>
    %443 = vector.broadcast %442 : vector<8x2x1xf32> to vector<8x2x32xf32>
    %444 = arith.mulf %443, %253 : vector<8x2x32xf32>
    %cst_155 = arith.constant dense<0.000000e+00> : vector<2x32xf32>
    %445 = vector.multi_reduction <add>, %444, %cst_155 [0] : vector<8x2x32xf32> to vector<2x32xf32>
    %cst_156 = arith.constant dense<0.000000e+00> : vector<2x96xf32>
    %446 = tpu.matmul %427, %255, %cst_156 {dimension_numbers = #tpu.dot_dimension_numbers<[1], [0], [0], [1], [0, 0, 1, 1], [], []>} : vector<2x32xf32>, vector<32x96xf32>, vector<2x96xf32> -> vector<2x96xf32>
    %cst_157 = arith.constant dense<0.000000e+00> : vector<2x96xf32>
    %447 = tpu.matmul %445, %256, %cst_157 {dimension_numbers = #tpu.dot_dimension_numbers<[1], [0], [0], [1], [0, 0, 1, 1], [], []>} : vector<2x32xf32>, vector<32x96xf32>, vector<2x96xf32> -> vector<2x96xf32>
    %448 = arith.addf %446, %447 : vector<2x96xf32>
    %449 = vector.broadcast %258 : vector<1x96xf32> to vector<2x96xf32>
    %450 = arith.addf %448, %449 : vector<2x96xf32>
    %cst_158 = arith.constant dense<0.000000e+00> : vector<2x96xf32>
    %451 = tpu.matmul %397, %257, %cst_158 {dimension_numbers = #tpu.dot_dimension_numbers<[1], [0], [0], [1], [0, 0, 1, 1], [], []>} : vector<2x32xf32>, vector<32x96xf32>, vector<2x96xf32> -> vector<2x96xf32>
    %452 = vector.broadcast %259 : vector<1x96xf32> to vector<2x96xf32>
    %453 = arith.addf %451, %452 : vector<2x96xf32>
    %454 = vector.extract_strided_slice %450 {offsets = [0, 0], sizes = [2, 64], strides = [1, 1]} : vector<2x96xf32> to vector<2x64xf32>
    %455 = vector.extract_strided_slice %453 {offsets = [0, 0], sizes = [2, 64], strides = [1, 1]} : vector<2x96xf32> to vector<2x64xf32>
    %456 = arith.addf %454, %455 : vector<2x64xf32>
    %457 = arith.negf %456 : vector<2x64xf32>
    %458 = math.exp %457 : vector<2x64xf32>
    %cst_159 = arith.constant 1.000000e+00 : f32
    %459 = vector.broadcast %cst_159 : f32 to vector<2x64xf32>
    %460 = arith.addf %459, %458 : vector<2x64xf32>
    %461 = arith.divf %459, %460 : vector<2x64xf32>
    %462 = vector.extract_strided_slice %461 {offsets = [0, 0], sizes = [2, 32], strides = [1, 1]} : vector<2x64xf32> to vector<2x32xf32>
    %463 = vector.extract_strided_slice %461 {offsets = [0, 32], sizes = [2, 32], strides = [1, 1]} : vector<2x64xf32> to vector<2x32xf32>
    %464 = vector.extract_strided_slice %450 {offsets = [0, 64], sizes = [2, 32], strides = [1, 1]} : vector<2x96xf32> to vector<2x32xf32>
    %465 = vector.extract_strided_slice %453 {offsets = [0, 64], sizes = [2, 32], strides = [1, 1]} : vector<2x96xf32> to vector<2x32xf32>
    %466 = arith.mulf %462, %465 : vector<2x32xf32>
    %467 = arith.addf %464, %466 : vector<2x32xf32>
    %468 = math.tanh %467 : vector<2x32xf32>
    %cst_160 = arith.constant 1.000000e+00 : f32
    %469 = vector.broadcast %cst_160 : f32 to vector<2x32xf32>
    %470 = arith.subf %469, %463 : vector<2x32xf32>
    %471 = arith.mulf %470, %468 : vector<2x32xf32>
    %472 = arith.mulf %463, %397 : vector<2x32xf32>
    %473 = arith.addf %471, %472 : vector<2x32xf32>
    %cst_161 = arith.constant dense<0.000000e+00> : vector<2x128xf32>
    %474 = tpu.matmul %473, %260, %cst_161 {dimension_numbers = #tpu.dot_dimension_numbers<[1], [0], [0], [1], [0, 0, 1, 1], [], []>} : vector<2x32xf32>, vector<32x128xf32>, vector<2x128xf32> -> vector<2x128xf32>
    %cst_162 = arith.constant dense<0.000000e+00> : vector<2x128xf32>
    %475 = tpu.matmul %445, %261, %cst_162 {dimension_numbers = #tpu.dot_dimension_numbers<[1], [0], [0], [1], [0, 0, 1, 1], [], []>} : vector<2x32xf32>, vector<32x128xf32>, vector<2x128xf32> -> vector<2x128xf32>
    %476 = arith.addf %474, %475 : vector<2x128xf32>
    %477 = vector.broadcast %262 : vector<1x128xf32> to vector<2x128xf32>
    %478 = arith.addf %476, %477 : vector<2x128xf32>
    %c2_163 = arith.constant 2 : index
    %c0_164 = arith.constant 0 : index
    %c0_165 = arith.constant 0 : index
    %479 = vector.load %arg16[%c2_163, %c0_164, %c0_165] : memref<7x2x128xf32, #tpu.memory_space<vmem>>, vector<1x2x128xf32>
    %480 = vector.shape_cast %479 : vector<1x2x128xf32> to vector<2x128xf32>
    %481 = vector.shape_cast %478 : vector<2x128xf32> to vector<1x2x128xf32>
    tpu.vector_store %arg16[%c2_163, %c0_164, %c0_165], %481 {strides = array<i32>} : memref<7x2x128xf32, #tpu.memory_space<vmem>>, vector<1x2x128xf32>,
    %c16_i32_166 = arith.constant 16 : i32
    %482 = vector.broadcast %c16_i32_166 : i32 to vector<2x128xi32>
    %483 = arith.cmpi slt, %264, %482 : vector<2x128xi32>
    %cst_167 = arith.constant -1.000000e+30 : f32
    %484 = vector.broadcast %cst_167 : f32 to vector<2x128xf32>
    %485 = arith.select %483, %478, %484 : vector<2x128xi1>, vector<2x128xf32>
    %cst_168 = arith.constant dense<0xFF800000> : vector<2xf32>
    %486 = vector.multi_reduction <maximumf>, %485, %cst_168 [1] : vector<2x128xf32> to vector<2xf32>
    %487 = vector.shape_cast %486 : vector<2xf32> to vector<2x1xf32>
    %488 = vector.broadcast %487 : vector<2x1xf32> to vector<2x128xf32>
    %489 = arith.cmpf oeq, %485, %488 : vector<2x128xf32>
    %c128_i32_169 = arith.constant 128 : i32
    %490 = vector.broadcast %c128_i32_169 : i32 to vector<2x128xi32>
    %491 = arith.select %489, %264, %490 : vector<2x128xi1>, vector<2x128xi32>
    %cst_170 = arith.constant dense<2147483647> : vector<2xi32>
    %492 = vector.multi_reduction <minsi>, %491, %cst_170 [1] : vector<2x128xi32> to vector<2xi32>
    %493 = vector.shape_cast %492 : vector<2xi32> to vector<2x1xi32>
    %c3_171 = arith.constant 3 : index
    %c0_172 = arith.constant 0 : index
    %c0_173 = arith.constant 0 : index
    %494 = vector.load %arg1[%c3_171, %c0_172, %c0_173] : memref<7x2x1xi32, #tpu.memory_space<vmem>>, vector<1x2x1xi32>
    %495 = vector.shape_cast %494 : vector<1x2x1xi32> to vector<2x1xi32>
    %c0_i32_174 = arith.constant 0 : i32
    %496 = vector.broadcast %c0_i32_174 : i32 to vector<2x1xi32>
    %497 = arith.cmpi sge, %495, %496 : vector<2x1xi32>
    %498 = arith.select %497, %495, %493 : vector<2x1xi1>, vector<2x1xi32>
    %499 = vector.broadcast %498 : vector<2x1xi32> to vector<2x16xi32>
    %500 = arith.cmpi eq, %263, %499 : vector<2x16xi32>
    %501 = arith.extui %500 : vector<2x16xi1> to vector<2x16xi32>
    %502 = arith.sitofp %501 : vector<2x16xi32> to vector<2x16xf32>
    %cst_175 = arith.constant dense<0.000000e+00> : vector<2x32xf32>
    %503 = tpu.matmul %502, %254, %cst_175 {dimension_numbers = #tpu.dot_dimension_numbers<[1], [0], [0], [1], [0, 0, 1, 1], [], []>} : vector<2x16xf32>, vector<16x32xf32>, vector<2x32xf32> -> vector<2x32xf32>
    %504 = vector.shape_cast %473 : vector<2x32xf32> to vector<1x2x32xf32>
    %505 = vector.broadcast %504 : vector<1x2x32xf32> to vector<8x2x32xf32>
    %506 = arith.mulf %253, %505 : vector<8x2x32xf32>
    %cst_176 = arith.constant dense<0.000000e+00> : vector<8x2xf32>
    %507 = vector.multi_reduction <add>, %506, %cst_176 [2] : vector<8x2x32xf32> to vector<8x2xf32>
    %508 = vector.shape_cast %507 : vector<8x2xf32> to vector<8x2x1xf32>
    %cst_177 = arith.constant dense<0xFF800000> : vector<2x1xf32>
    %509 = vector.multi_reduction <maximumf>, %508, %cst_177 [0] : vector<8x2x1xf32> to vector<2x1xf32>
    %510 = vector.shape_cast %509 : vector<2x1xf32> to vector<1x2x1xf32>
    %511 = vector.broadcast %510 : vector<1x2x1xf32> to vector<8x2x1xf32>
    %512 = arith.subf %508, %511 : vector<8x2x1xf32>
    %513 = math.exp %512 : vector<8x2x1xf32>
    %cst_178 = arith.constant dense<0.000000e+00> : vector<2x1xf32>
    %514 = vector.multi_reduction <add>, %513, %cst_178 [0] : vector<8x2x1xf32> to vector<2x1xf32>
    %515 = vector.shape_cast %514 : vector<2x1xf32> to vector<1x2x1xf32>
    %516 = tpu.reciprocal %515 {approx = true} : vector<1x2x1xf32> -> vector<1x2x1xf32>
    %517 = vector.broadcast %516 : vector<1x2x1xf32> to vector<8x2x1xf32>
    %518 = arith.mulf %513, %517 : vector<8x2x1xf32>
    %519 = vector.broadcast %518 : vector<8x2x1xf32> to vector<8x2x32xf32>
    %520 = arith.mulf %519, %253 : vector<8x2x32xf32>
    %cst_179 = arith.constant dense<0.000000e+00> : vector<2x32xf32>
    %521 = vector.multi_reduction <add>, %520, %cst_179 [0] : vector<8x2x32xf32> to vector<2x32xf32>
    %cst_180 = arith.constant dense<0.000000e+00> : vector<2x96xf32>
    %522 = tpu.matmul %503, %255, %cst_180 {dimension_numbers = #tpu.dot_dimension_numbers<[1], [0], [0], [1], [0, 0, 1, 1], [], []>} : vector<2x32xf32>, vector<32x96xf32>, vector<2x96xf32> -> vector<2x96xf32>
    %cst_181 = arith.constant dense<0.000000e+00> : vector<2x96xf32>
    %523 = tpu.matmul %521, %256, %cst_181 {dimension_numbers = #tpu.dot_dimension_numbers<[1], [0], [0], [1], [0, 0, 1, 1], [], []>} : vector<2x32xf32>, vector<32x96xf32>, vector<2x96xf32> -> vector<2x96xf32>
    %524 = arith.addf %522, %523 : vector<2x96xf32>
    %525 = vector.broadcast %258 : vector<1x96xf32> to vector<2x96xf32>
    %526 = arith.addf %524, %525 : vector<2x96xf32>
    %cst_182 = arith.constant dense<0.000000e+00> : vector<2x96xf32>
    %527 = tpu.matmul %473, %257, %cst_182 {dimension_numbers = #tpu.dot_dimension_numbers<[1], [0], [0], [1], [0, 0, 1, 1], [], []>} : vector<2x32xf32>, vector<32x96xf32>, vector<2x96xf32> -> vector<2x96xf32>
    %528 = vector.broadcast %259 : vector<1x96xf32> to vector<2x96xf32>
    %529 = arith.addf %527, %528 : vector<2x96xf32>
    %530 = vector.extract_strided_slice %526 {offsets = [0, 0], sizes = [2, 64], strides = [1, 1]} : vector<2x96xf32> to vector<2x64xf32>
    %531 = vector.extract_strided_slice %529 {offsets = [0, 0], sizes = [2, 64], strides = [1, 1]} : vector<2x96xf32> to vector<2x64xf32>
    %532 = arith.addf %530, %531 : vector<2x64xf32>
    %533 = arith.negf %532 : vector<2x64xf32>
    %534 = math.exp %533 : vector<2x64xf32>
    %cst_183 = arith.constant 1.000000e+00 : f32
    %535 = vector.broadcast %cst_183 : f32 to vector<2x64xf32>
    %536 = arith.addf %535, %534 : vector<2x64xf32>
    %537 = arith.divf %535, %536 : vector<2x64xf32>
    %538 = vector.extract_strided_slice %537 {offsets = [0, 0], sizes = [2, 32], strides = [1, 1]} : vector<2x64xf32> to vector<2x32xf32>
    %539 = vector.extract_strided_slice %537 {offsets = [0, 32], sizes = [2, 32], strides = [1, 1]} : vector<2x64xf32> to vector<2x32xf32>
    %540 = vector.extract_strided_slice %526 {offsets = [0, 64], sizes = [2, 32], strides = [1, 1]} : vector<2x96xf32> to vector<2x32xf32>
    %541 = vector.extract_strided_slice %529 {offsets = [0, 64], sizes = [2, 32], strides = [1, 1]} : vector<2x96xf32> to vector<2x32xf32>
    %542 = arith.mulf %538, %541 : vector<2x32xf32>
    %543 = arith.addf %540, %542 : vector<2x32xf32>
    %544 = math.tanh %543 : vector<2x32xf32>
    %cst_184 = arith.constant 1.000000e+00 : f32
    %545 = vector.broadcast %cst_184 : f32 to vector<2x32xf32>
    %546 = arith.subf %545, %539 : vector<2x32xf32>
    %547 = arith.mulf %546, %544 : vector<2x32xf32>
    %548 = arith.mulf %539, %473 : vector<2x32xf32>
    %549 = arith.addf %547, %548 : vector<2x32xf32>
    %cst_185 = arith.constant dense<0.000000e+00> : vector<2x128xf32>
    %550 = tpu.matmul %549, %260, %cst_185 {dimension_numbers = #tpu.dot_dimension_numbers<[1], [0], [0], [1], [0, 0, 1, 1], [], []>} : vector<2x32xf32>, vector<32x128xf32>, vector<2x128xf32> -> vector<2x128xf32>
    %cst_186 = arith.constant dense<0.000000e+00> : vector<2x128xf32>
    %551 = tpu.matmul %521, %261, %cst_186 {dimension_numbers = #tpu.dot_dimension_numbers<[1], [0], [0], [1], [0, 0, 1, 1], [], []>} : vector<2x32xf32>, vector<32x128xf32>, vector<2x128xf32> -> vector<2x128xf32>
    %552 = arith.addf %550, %551 : vector<2x128xf32>
    %553 = vector.broadcast %262 : vector<1x128xf32> to vector<2x128xf32>
    %554 = arith.addf %552, %553 : vector<2x128xf32>
    %c3_187 = arith.constant 3 : index
    %c0_188 = arith.constant 0 : index
    %c0_189 = arith.constant 0 : index
    %555 = vector.load %arg16[%c3_187, %c0_188, %c0_189] : memref<7x2x128xf32, #tpu.memory_space<vmem>>, vector<1x2x128xf32>
    %556 = vector.shape_cast %555 : vector<1x2x128xf32> to vector<2x128xf32>
    %557 = vector.shape_cast %554 : vector<2x128xf32> to vector<1x2x128xf32>
    tpu.vector_store %arg16[%c3_187, %c0_188, %c0_189], %557 {strides = array<i32>} : memref<7x2x128xf32, #tpu.memory_space<vmem>>, vector<1x2x128xf32>,
    %c16_i32_190 = arith.constant 16 : i32
    %558 = vector.broadcast %c16_i32_190 : i32 to vector<2x128xi32>
    %559 = arith.cmpi slt, %264, %558 : vector<2x128xi32>
    %cst_191 = arith.constant -1.000000e+30 : f32
    %560 = vector.broadcast %cst_191 : f32 to vector<2x128xf32>
    %561 = arith.select %559, %554, %560 : vector<2x128xi1>, vector<2x128xf32>
    %cst_192 = arith.constant dense<0xFF800000> : vector<2xf32>
    %562 = vector.multi_reduction <maximumf>, %561, %cst_192 [1] : vector<2x128xf32> to vector<2xf32>
    %563 = vector.shape_cast %562 : vector<2xf32> to vector<2x1xf32>
    %564 = vector.broadcast %563 : vector<2x1xf32> to vector<2x128xf32>
    %565 = arith.cmpf oeq, %561, %564 : vector<2x128xf32>
    %c128_i32_193 = arith.constant 128 : i32
    %566 = vector.broadcast %c128_i32_193 : i32 to vector<2x128xi32>
    %567 = arith.select %565, %264, %566 : vector<2x128xi1>, vector<2x128xi32>
    %cst_194 = arith.constant dense<2147483647> : vector<2xi32>
    %568 = vector.multi_reduction <minsi>, %567, %cst_194 [1] : vector<2x128xi32> to vector<2xi32>
    %569 = vector.shape_cast %568 : vector<2xi32> to vector<2x1xi32>
    %c4_195 = arith.constant 4 : index
    %c0_196 = arith.constant 0 : index
    %c0_197 = arith.constant 0 : index
    %570 = vector.load %arg1[%c4_195, %c0_196, %c0_197] : memref<7x2x1xi32, #tpu.memory_space<vmem>>, vector<1x2x1xi32>
    %571 = vector.shape_cast %570 : vector<1x2x1xi32> to vector<2x1xi32>
    %c0_i32_198 = arith.constant 0 : i32
    %572 = vector.broadcast %c0_i32_198 : i32 to vector<2x1xi32>
    %573 = arith.cmpi sge, %571, %572 : vector<2x1xi32>
    %574 = arith.select %573, %571, %569 : vector<2x1xi1>, vector<2x1xi32>
    %575 = vector.broadcast %574 : vector<2x1xi32> to vector<2x16xi32>
    %576 = arith.cmpi eq, %263, %575 : vector<2x16xi32>
    %577 = arith.extui %576 : vector<2x16xi1> to vector<2x16xi32>
    %578 = arith.sitofp %577 : vector<2x16xi32> to vector<2x16xf32>
    %cst_199 = arith.constant dense<0.000000e+00> : vector<2x32xf32>
    %579 = tpu.matmul %578, %254, %cst_199 {dimension_numbers = #tpu.dot_dimension_numbers<[1], [0], [0], [1], [0, 0, 1, 1], [], []>} : vector<2x16xf32>, vector<16x32xf32>, vector<2x32xf32> -> vector<2x32xf32>
    %580 = vector.shape_cast %549 : vector<2x32xf32> to vector<1x2x32xf32>
    %581 = vector.broadcast %580 : vector<1x2x32xf32> to vector<8x2x32xf32>
    %582 = arith.mulf %253, %581 : vector<8x2x32xf32>
    %cst_200 = arith.constant dense<0.000000e+00> : vector<8x2xf32>
    %583 = vector.multi_reduction <add>, %582, %cst_200 [2] : vector<8x2x32xf32> to vector<8x2xf32>
    %584 = vector.shape_cast %583 : vector<8x2xf32> to vector<8x2x1xf32>
    %cst_201 = arith.constant dense<0xFF800000> : vector<2x1xf32>
    %585 = vector.multi_reduction <maximumf>, %584, %cst_201 [0] : vector<8x2x1xf32> to vector<2x1xf32>
    %586 = vector.shape_cast %585 : vector<2x1xf32> to vector<1x2x1xf32>
    %587 = vector.broadcast %586 : vector<1x2x1xf32> to vector<8x2x1xf32>
    %588 = arith.subf %584, %587 : vector<8x2x1xf32>
    %589 = math.exp %588 : vector<8x2x1xf32>
    %cst_202 = arith.constant dense<0.000000e+00> : vector<2x1xf32>
    %590 = vector.multi_reduction <add>, %589, %cst_202 [0] : vector<8x2x1xf32> to vector<2x1xf32>
    %591 = vector.shape_cast %590 : vector<2x1xf32> to vector<1x2x1xf32>
    %592 = tpu.reciprocal %591 {approx = true} : vector<1x2x1xf32> -> vector<1x2x1xf32>
    %593 = vector.broadcast %592 : vector<1x2x1xf32> to vector<8x2x1xf32>
    %594 = arith.mulf %589, %593 : vector<8x2x1xf32>
    %595 = vector.broadcast %594 : vector<8x2x1xf32> to vector<8x2x32xf32>
    %596 = arith.mulf %595, %253 : vector<8x2x32xf32>
    %cst_203 = arith.constant dense<0.000000e+00> : vector<2x32xf32>
    %597 = vector.multi_reduction <add>, %596, %cst_203 [0] : vector<8x2x32xf32> to vector<2x32xf32>
    %cst_204 = arith.constant dense<0.000000e+00> : vector<2x96xf32>
    %598 = tpu.matmul %579, %255, %cst_204 {dimension_numbers = #tpu.dot_dimension_numbers<[1], [0], [0], [1], [0, 0, 1, 1], [], []>} : vector<2x32xf32>, vector<32x96xf32>, vector<2x96xf32> -> vector<2x96xf32>
    %cst_205 = arith.constant dense<0.000000e+00> : vector<2x96xf32>
    %599 = tpu.matmul %597, %256, %cst_205 {dimension_numbers = #tpu.dot_dimension_numbers<[1], [0], [0], [1], [0, 0, 1, 1], [], []>} : vector<2x32xf32>, vector<32x96xf32>, vector<2x96xf32> -> vector<2x96xf32>
    %600 = arith.addf %598, %599 : vector<2x96xf32>
    %601 = vector.broadcast %258 : vector<1x96xf32> to vector<2x96xf32>
    %602 = arith.addf %600, %601 : vector<2x96xf32>
    %cst_206 = arith.constant dense<0.000000e+00> : vector<2x96xf32>
    %603 = tpu.matmul %549, %257, %cst_206 {dimension_numbers = #tpu.dot_dimension_numbers<[1], [0], [0], [1], [0, 0, 1, 1], [], []>} : vector<2x32xf32>, vector<32x96xf32>, vector<2x96xf32> -> vector<2x96xf32>
    %604 = vector.broadcast %259 : vector<1x96xf32> to vector<2x96xf32>
    %605 = arith.addf %603, %604 : vector<2x96xf32>
    %606 = vector.extract_strided_slice %602 {offsets = [0, 0], sizes = [2, 64], strides = [1, 1]} : vector<2x96xf32> to vector<2x64xf32>
    %607 = vector.extract_strided_slice %605 {offsets = [0, 0], sizes = [2, 64], strides = [1, 1]} : vector<2x96xf32> to vector<2x64xf32>
    %608 = arith.addf %606, %607 : vector<2x64xf32>
    %609 = arith.negf %608 : vector<2x64xf32>
    %610 = math.exp %609 : vector<2x64xf32>
    %cst_207 = arith.constant 1.000000e+00 : f32
    %611 = vector.broadcast %cst_207 : f32 to vector<2x64xf32>
    %612 = arith.addf %611, %610 : vector<2x64xf32>
    %613 = arith.divf %611, %612 : vector<2x64xf32>
    %614 = vector.extract_strided_slice %613 {offsets = [0, 0], sizes = [2, 32], strides = [1, 1]} : vector<2x64xf32> to vector<2x32xf32>
    %615 = vector.extract_strided_slice %613 {offsets = [0, 32], sizes = [2, 32], strides = [1, 1]} : vector<2x64xf32> to vector<2x32xf32>
    %616 = vector.extract_strided_slice %602 {offsets = [0, 64], sizes = [2, 32], strides = [1, 1]} : vector<2x96xf32> to vector<2x32xf32>
    %617 = vector.extract_strided_slice %605 {offsets = [0, 64], sizes = [2, 32], strides = [1, 1]} : vector<2x96xf32> to vector<2x32xf32>
    %618 = arith.mulf %614, %617 : vector<2x32xf32>
    %619 = arith.addf %616, %618 : vector<2x32xf32>
    %620 = math.tanh %619 : vector<2x32xf32>
    %cst_208 = arith.constant 1.000000e+00 : f32
    %621 = vector.broadcast %cst_208 : f32 to vector<2x32xf32>
    %622 = arith.subf %621, %615 : vector<2x32xf32>
    %623 = arith.mulf %622, %620 : vector<2x32xf32>
    %624 = arith.mulf %615, %549 : vector<2x32xf32>
    %625 = arith.addf %623, %624 : vector<2x32xf32>
    %cst_209 = arith.constant dense<0.000000e+00> : vector<2x128xf32>
    %626 = tpu.matmul %625, %260, %cst_209 {dimension_numbers = #tpu.dot_dimension_numbers<[1], [0], [0], [1], [0, 0, 1, 1], [], []>} : vector<2x32xf32>, vector<32x128xf32>, vector<2x128xf32> -> vector<2x128xf32>
    %cst_210 = arith.constant dense<0.000000e+00> : vector<2x128xf32>
    %627 = tpu.matmul %597, %261, %cst_210 {dimension_numbers = #tpu.dot_dimension_numbers<[1], [0], [0], [1], [0, 0, 1, 1], [], []>} : vector<2x32xf32>, vector<32x128xf32>, vector<2x128xf32> -> vector<2x128xf32>
    %628 = arith.addf %626, %627 : vector<2x128xf32>
    %629 = vector.broadcast %262 : vector<1x128xf32> to vector<2x128xf32>
    %630 = arith.addf %628, %629 : vector<2x128xf32>
    %c4_211 = arith.constant 4 : index
    %c0_212 = arith.constant 0 : index
    %c0_213 = arith.constant 0 : index
    %631 = vector.load %arg16[%c4_211, %c0_212, %c0_213] : memref<7x2x128xf32, #tpu.memory_space<vmem>>, vector<1x2x128xf32>
    %632 = vector.shape_cast %631 : vector<1x2x128xf32> to vector<2x128xf32>
    %633 = vector.shape_cast %630 : vector<2x128xf32> to vector<1x2x128xf32>
    tpu.vector_store %arg16[%c4_211, %c0_212, %c0_213], %633 {strides = array<i32>} : memref<7x2x128xf32, #tpu.memory_space<vmem>>, vector<1x2x128xf32>,
    %c16_i32_214 = arith.constant 16 : i32
    %634 = vector.broadcast %c16_i32_214 : i32 to vector<2x128xi32>
    %635 = arith.cmpi slt, %264, %634 : vector<2x128xi32>
    %cst_215 = arith.constant -1.000000e+30 : f32
    %636 = vector.broadcast %cst_215 : f32 to vector<2x128xf32>
    %637 = arith.select %635, %630, %636 : vector<2x128xi1>, vector<2x128xf32>
    %cst_216 = arith.constant dense<0xFF800000> : vector<2xf32>
    %638 = vector.multi_reduction <maximumf>, %637, %cst_216 [1] : vector<2x128xf32> to vector<2xf32>
    %639 = vector.shape_cast %638 : vector<2xf32> to vector<2x1xf32>
    %640 = vector.broadcast %639 : vector<2x1xf32> to vector<2x128xf32>
    %641 = arith.cmpf oeq, %637, %640 : vector<2x128xf32>
    %c128_i32_217 = arith.constant 128 : i32
    %642 = vector.broadcast %c128_i32_217 : i32 to vector<2x128xi32>
    %643 = arith.select %641, %264, %642 : vector<2x128xi1>, vector<2x128xi32>
    %cst_218 = arith.constant dense<2147483647> : vector<2xi32>
    %644 = vector.multi_reduction <minsi>, %643, %cst_218 [1] : vector<2x128xi32> to vector<2xi32>
    %645 = vector.shape_cast %644 : vector<2xi32> to vector<2x1xi32>
    %c5_219 = arith.constant 5 : index
    %c0_220 = arith.constant 0 : index
    %c0_221 = arith.constant 0 : index
    %646 = vector.load %arg1[%c5_219, %c0_220, %c0_221] : memref<7x2x1xi32, #tpu.memory_space<vmem>>, vector<1x2x1xi32>
    %647 = vector.shape_cast %646 : vector<1x2x1xi32> to vector<2x1xi32>
    %c0_i32_222 = arith.constant 0 : i32
    %648 = vector.broadcast %c0_i32_222 : i32 to vector<2x1xi32>
    %649 = arith.cmpi sge, %647, %648 : vector<2x1xi32>
    %650 = arith.select %649, %647, %645 : vector<2x1xi1>, vector<2x1xi32>
    %651 = vector.broadcast %650 : vector<2x1xi32> to vector<2x16xi32>
    %652 = arith.cmpi eq, %263, %651 : vector<2x16xi32>
    %653 = arith.extui %652 : vector<2x16xi1> to vector<2x16xi32>
    %654 = arith.sitofp %653 : vector<2x16xi32> to vector<2x16xf32>
    %cst_223 = arith.constant dense<0.000000e+00> : vector<2x32xf32>
    %655 = tpu.matmul %654, %254, %cst_223 {dimension_numbers = #tpu.dot_dimension_numbers<[1], [0], [0], [1], [0, 0, 1, 1], [], []>} : vector<2x16xf32>, vector<16x32xf32>, vector<2x32xf32> -> vector<2x32xf32>
    %656 = vector.shape_cast %625 : vector<2x32xf32> to vector<1x2x32xf32>
    %657 = vector.broadcast %656 : vector<1x2x32xf32> to vector<8x2x32xf32>
    %658 = arith.mulf %253, %657 : vector<8x2x32xf32>
    %cst_224 = arith.constant dense<0.000000e+00> : vector<8x2xf32>
    %659 = vector.multi_reduction <add>, %658, %cst_224 [2] : vector<8x2x32xf32> to vector<8x2xf32>
    %660 = vector.shape_cast %659 : vector<8x2xf32> to vector<8x2x1xf32>
    %cst_225 = arith.constant dense<0xFF800000> : vector<2x1xf32>
    %661 = vector.multi_reduction <maximumf>, %660, %cst_225 [0] : vector<8x2x1xf32> to vector<2x1xf32>
    %662 = vector.shape_cast %661 : vector<2x1xf32> to vector<1x2x1xf32>
    %663 = vector.broadcast %662 : vector<1x2x1xf32> to vector<8x2x1xf32>
    %664 = arith.subf %660, %663 : vector<8x2x1xf32>
    %665 = math.exp %664 : vector<8x2x1xf32>
    %cst_226 = arith.constant dense<0.000000e+00> : vector<2x1xf32>
    %666 = vector.multi_reduction <add>, %665, %cst_226 [0] : vector<8x2x1xf32> to vector<2x1xf32>
    %667 = vector.shape_cast %666 : vector<2x1xf32> to vector<1x2x1xf32>
    %668 = tpu.reciprocal %667 {approx = true} : vector<1x2x1xf32> -> vector<1x2x1xf32>
    %669 = vector.broadcast %668 : vector<1x2x1xf32> to vector<8x2x1xf32>
    %670 = arith.mulf %665, %669 : vector<8x2x1xf32>
    %671 = vector.broadcast %670 : vector<8x2x1xf32> to vector<8x2x32xf32>
    %672 = arith.mulf %671, %253 : vector<8x2x32xf32>
    %cst_227 = arith.constant dense<0.000000e+00> : vector<2x32xf32>
    %673 = vector.multi_reduction <add>, %672, %cst_227 [0] : vector<8x2x32xf32> to vector<2x32xf32>
    %cst_228 = arith.constant dense<0.000000e+00> : vector<2x96xf32>
    %674 = tpu.matmul %655, %255, %cst_228 {dimension_numbers = #tpu.dot_dimension_numbers<[1], [0], [0], [1], [0, 0, 1, 1], [], []>} : vector<2x32xf32>, vector<32x96xf32>, vector<2x96xf32> -> vector<2x96xf32>
    %cst_229 = arith.constant dense<0.000000e+00> : vector<2x96xf32>
    %675 = tpu.matmul %673, %256, %cst_229 {dimension_numbers = #tpu.dot_dimension_numbers<[1], [0], [0], [1], [0, 0, 1, 1], [], []>} : vector<2x32xf32>, vector<32x96xf32>, vector<2x96xf32> -> vector<2x96xf32>
    %676 = arith.addf %674, %675 : vector<2x96xf32>
    %677 = vector.broadcast %258 : vector<1x96xf32> to vector<2x96xf32>
    %678 = arith.addf %676, %677 : vector<2x96xf32>
    %cst_230 = arith.constant dense<0.000000e+00> : vector<2x96xf32>
    %679 = tpu.matmul %625, %257, %cst_230 {dimension_numbers = #tpu.dot_dimension_numbers<[1], [0], [0], [1], [0, 0, 1, 1], [], []>} : vector<2x32xf32>, vector<32x96xf32>, vector<2x96xf32> -> vector<2x96xf32>
    %680 = vector.broadcast %259 : vector<1x96xf32> to vector<2x96xf32>
    %681 = arith.addf %679, %680 : vector<2x96xf32>
    %682 = vector.extract_strided_slice %678 {offsets = [0, 0], sizes = [2, 64], strides = [1, 1]} : vector<2x96xf32> to vector<2x64xf32>
    %683 = vector.extract_strided_slice %681 {offsets = [0, 0], sizes = [2, 64], strides = [1, 1]} : vector<2x96xf32> to vector<2x64xf32>
    %684 = arith.addf %682, %683 : vector<2x64xf32>
    %685 = arith.negf %684 : vector<2x64xf32>
    %686 = math.exp %685 : vector<2x64xf32>
    %cst_231 = arith.constant 1.000000e+00 : f32
    %687 = vector.broadcast %cst_231 : f32 to vector<2x64xf32>
    %688 = arith.addf %687, %686 : vector<2x64xf32>
    %689 = arith.divf %687, %688 : vector<2x64xf32>
    %690 = vector.extract_strided_slice %689 {offsets = [0, 0], sizes = [2, 32], strides = [1, 1]} : vector<2x64xf32> to vector<2x32xf32>
    %691 = vector.extract_strided_slice %689 {offsets = [0, 32], sizes = [2, 32], strides = [1, 1]} : vector<2x64xf32> to vector<2x32xf32>
    %692 = vector.extract_strided_slice %678 {offsets = [0, 64], sizes = [2, 32], strides = [1, 1]} : vector<2x96xf32> to vector<2x32xf32>
    %693 = vector.extract_strided_slice %681 {offsets = [0, 64], sizes = [2, 32], strides = [1, 1]} : vector<2x96xf32> to vector<2x32xf32>
    %694 = arith.mulf %690, %693 : vector<2x32xf32>
    %695 = arith.addf %692, %694 : vector<2x32xf32>
    %696 = math.tanh %695 : vector<2x32xf32>
    %cst_232 = arith.constant 1.000000e+00 : f32
    %697 = vector.broadcast %cst_232 : f32 to vector<2x32xf32>
    %698 = arith.subf %697, %691 : vector<2x32xf32>
    %699 = arith.mulf %698, %696 : vector<2x32xf32>
    %700 = arith.mulf %691, %625 : vector<2x32xf32>
    %701 = arith.addf %699, %700 : vector<2x32xf32>
    %cst_233 = arith.constant dense<0.000000e+00> : vector<2x128xf32>
    %702 = tpu.matmul %701, %260, %cst_233 {dimension_numbers = #tpu.dot_dimension_numbers<[1], [0], [0], [1], [0, 0, 1, 1], [], []>} : vector<2x32xf32>, vector<32x128xf32>, vector<2x128xf32> -> vector<2x128xf32>
    %cst_234 = arith.constant dense<0.000000e+00> : vector<2x128xf32>
    %703 = tpu.matmul %673, %261, %cst_234 {dimension_numbers = #tpu.dot_dimension_numbers<[1], [0], [0], [1], [0, 0, 1, 1], [], []>} : vector<2x32xf32>, vector<32x128xf32>, vector<2x128xf32> -> vector<2x128xf32>
    %704 = arith.addf %702, %703 : vector<2x128xf32>
    %705 = vector.broadcast %262 : vector<1x128xf32> to vector<2x128xf32>
    %706 = arith.addf %704, %705 : vector<2x128xf32>
    %c5_235 = arith.constant 5 : index
    %c0_236 = arith.constant 0 : index
    %c0_237 = arith.constant 0 : index
    %707 = vector.load %arg16[%c5_235, %c0_236, %c0_237] : memref<7x2x128xf32, #tpu.memory_space<vmem>>, vector<1x2x128xf32>
    %708 = vector.shape_cast %707 : vector<1x2x128xf32> to vector<2x128xf32>
    %709 = vector.shape_cast %706 : vector<2x128xf32> to vector<1x2x128xf32>
    tpu.vector_store %arg16[%c5_235, %c0_236, %c0_237], %709 {strides = array<i32>} : memref<7x2x128xf32, #tpu.memory_space<vmem>>, vector<1x2x128xf32>,
    %c16_i32_238 = arith.constant 16 : i32
    %710 = vector.broadcast %c16_i32_238 : i32 to vector<2x128xi32>
    %711 = arith.cmpi slt, %264, %710 : vector<2x128xi32>
    %cst_239 = arith.constant -1.000000e+30 : f32
    %712 = vector.broadcast %cst_239 : f32 to vector<2x128xf32>
    %713 = arith.select %711, %706, %712 : vector<2x128xi1>, vector<2x128xf32>
    %cst_240 = arith.constant dense<0xFF800000> : vector<2xf32>
    %714 = vector.multi_reduction <maximumf>, %713, %cst_240 [1] : vector<2x128xf32> to vector<2xf32>
    %715 = vector.shape_cast %714 : vector<2xf32> to vector<2x1xf32>
    %716 = vector.broadcast %715 : vector<2x1xf32> to vector<2x128xf32>
    %717 = arith.cmpf oeq, %713, %716 : vector<2x128xf32>
    %c128_i32_241 = arith.constant 128 : i32
    %718 = vector.broadcast %c128_i32_241 : i32 to vector<2x128xi32>
    %719 = arith.select %717, %264, %718 : vector<2x128xi1>, vector<2x128xi32>
    %cst_242 = arith.constant dense<2147483647> : vector<2xi32>
    %720 = vector.multi_reduction <minsi>, %719, %cst_242 [1] : vector<2x128xi32> to vector<2xi32>
    %721 = vector.shape_cast %720 : vector<2xi32> to vector<2x1xi32>
    %c6_243 = arith.constant 6 : index
    %c0_244 = arith.constant 0 : index
    %c0_245 = arith.constant 0 : index
    %722 = vector.load %arg1[%c6_243, %c0_244, %c0_245] : memref<7x2x1xi32, #tpu.memory_space<vmem>>, vector<1x2x1xi32>
    %723 = vector.shape_cast %722 : vector<1x2x1xi32> to vector<2x1xi32>
    %c0_i32_246 = arith.constant 0 : i32
    %724 = vector.broadcast %c0_i32_246 : i32 to vector<2x1xi32>
    %725 = arith.cmpi sge, %723, %724 : vector<2x1xi32>
    %726 = arith.select %725, %723, %721 : vector<2x1xi1>, vector<2x1xi32>
    %727 = vector.broadcast %726 : vector<2x1xi32> to vector<2x16xi32>
    %728 = arith.cmpi eq, %263, %727 : vector<2x16xi32>
    %729 = arith.extui %728 : vector<2x16xi1> to vector<2x16xi32>
    %730 = arith.sitofp %729 : vector<2x16xi32> to vector<2x16xf32>
    %cst_247 = arith.constant dense<0.000000e+00> : vector<2x32xf32>
    %731 = tpu.matmul %730, %254, %cst_247 {dimension_numbers = #tpu.dot_dimension_numbers<[1], [0], [0], [1], [0, 0, 1, 1], [], []>} : vector<2x16xf32>, vector<16x32xf32>, vector<2x32xf32> -> vector<2x32xf32>
    %732 = vector.shape_cast %701 : vector<2x32xf32> to vector<1x2x32xf32>
    %733 = vector.broadcast %732 : vector<1x2x32xf32> to vector<8x2x32xf32>
    %734 = arith.mulf %253, %733 : vector<8x2x32xf32>
    %cst_248 = arith.constant dense<0.000000e+00> : vector<8x2xf32>
    %735 = vector.multi_reduction <add>, %734, %cst_248 [2] : vector<8x2x32xf32> to vector<8x2xf32>
    %736 = vector.shape_cast %735 : vector<8x2xf32> to vector<8x2x1xf32>
    %cst_249 = arith.constant dense<0xFF800000> : vector<2x1xf32>
    %737 = vector.multi_reduction <maximumf>, %736, %cst_249 [0] : vector<8x2x1xf32> to vector<2x1xf32>
    %738 = vector.shape_cast %737 : vector<2x1xf32> to vector<1x2x1xf32>
    %739 = vector.broadcast %738 : vector<1x2x1xf32> to vector<8x2x1xf32>
    %740 = arith.subf %736, %739 : vector<8x2x1xf32>
    %741 = math.exp %740 : vector<8x2x1xf32>
    %cst_250 = arith.constant dense<0.000000e+00> : vector<2x1xf32>
    %742 = vector.multi_reduction <add>, %741, %cst_250 [0] : vector<8x2x1xf32> to vector<2x1xf32>
    %743 = vector.shape_cast %742 : vector<2x1xf32> to vector<1x2x1xf32>
    %744 = tpu.reciprocal %743 {approx = true} : vector<1x2x1xf32> -> vector<1x2x1xf32>
    %745 = vector.broadcast %744 : vector<1x2x1xf32> to vector<8x2x1xf32>
    %746 = arith.mulf %741, %745 : vector<8x2x1xf32>
    %747 = vector.broadcast %746 : vector<8x2x1xf32> to vector<8x2x32xf32>
    %748 = arith.mulf %747, %253 : vector<8x2x32xf32>
    %cst_251 = arith.constant dense<0.000000e+00> : vector<2x32xf32>
    %749 = vector.multi_reduction <add>, %748, %cst_251 [0] : vector<8x2x32xf32> to vector<2x32xf32>
    %cst_252 = arith.constant dense<0.000000e+00> : vector<2x96xf32>
    %750 = tpu.matmul %731, %255, %cst_252 {dimension_numbers = #tpu.dot_dimension_numbers<[1], [0], [0], [1], [0, 0, 1, 1], [], []>} : vector<2x32xf32>, vector<32x96xf32>, vector<2x96xf32> -> vector<2x96xf32>
    %cst_253 = arith.constant dense<0.000000e+00> : vector<2x96xf32>
    %751 = tpu.matmul %749, %256, %cst_253 {dimension_numbers = #tpu.dot_dimension_numbers<[1], [0], [0], [1], [0, 0, 1, 1], [], []>} : vector<2x32xf32>, vector<32x96xf32>, vector<2x96xf32> -> vector<2x96xf32>
    %752 = arith.addf %750, %751 : vector<2x96xf32>
    %753 = vector.broadcast %258 : vector<1x96xf32> to vector<2x96xf32>
    %754 = arith.addf %752, %753 : vector<2x96xf32>
    %cst_254 = arith.constant dense<0.000000e+00> : vector<2x96xf32>
    %755 = tpu.matmul %701, %257, %cst_254 {dimension_numbers = #tpu.dot_dimension_numbers<[1], [0], [0], [1], [0, 0, 1, 1], [], []>} : vector<2x32xf32>, vector<32x96xf32>, vector<2x96xf32> -> vector<2x96xf32>
    %756 = vector.broadcast %259 : vector<1x96xf32> to vector<2x96xf32>
    %757 = arith.addf %755, %756 : vector<2x96xf32>
    %758 = vector.extract_strided_slice %754 {offsets = [0, 0], sizes = [2, 64], strides = [1, 1]} : vector<2x96xf32> to vector<2x64xf32>
    %759 = vector.extract_strided_slice %757 {offsets = [0, 0], sizes = [2, 64], strides = [1, 1]} : vector<2x96xf32> to vector<2x64xf32>
    %760 = arith.addf %758, %759 : vector<2x64xf32>
    %761 = arith.negf %760 : vector<2x64xf32>
    %762 = math.exp %761 : vector<2x64xf32>
    %cst_255 = arith.constant 1.000000e+00 : f32
    %763 = vector.broadcast %cst_255 : f32 to vector<2x64xf32>
    %764 = arith.addf %763, %762 : vector<2x64xf32>
    %765 = arith.divf %763, %764 : vector<2x64xf32>
    %766 = vector.extract_strided_slice %765 {offsets = [0, 0], sizes = [2, 32], strides = [1, 1]} : vector<2x64xf32> to vector<2x32xf32>
    %767 = vector.extract_strided_slice %765 {offsets = [0, 32], sizes = [2, 32], strides = [1, 1]} : vector<2x64xf32> to vector<2x32xf32>
    %768 = vector.extract_strided_slice %754 {offsets = [0, 64], sizes = [2, 32], strides = [1, 1]} : vector<2x96xf32> to vector<2x32xf32>
    %769 = vector.extract_strided_slice %757 {offsets = [0, 64], sizes = [2, 32], strides = [1, 1]} : vector<2x96xf32> to vector<2x32xf32>
    %770 = arith.mulf %766, %769 : vector<2x32xf32>
    %771 = arith.addf %768, %770 : vector<2x32xf32>
    %772 = math.tanh %771 : vector<2x32xf32>
    %cst_256 = arith.constant 1.000000e+00 : f32
    %773 = vector.broadcast %cst_256 : f32 to vector<2x32xf32>
    %774 = arith.subf %773, %767 : vector<2x32xf32>
    %775 = arith.mulf %774, %772 : vector<2x32xf32>
    %776 = arith.mulf %767, %701 : vector<2x32xf32>
    %777 = arith.addf %775, %776 : vector<2x32xf32>
    %cst_257 = arith.constant dense<0.000000e+00> : vector<2x128xf32>
    %778 = tpu.matmul %777, %260, %cst_257 {dimension_numbers = #tpu.dot_dimension_numbers<[1], [0], [0], [1], [0, 0, 1, 1], [], []>} : vector<2x32xf32>, vector<32x128xf32>, vector<2x128xf32> -> vector<2x128xf32>
    %cst_258 = arith.constant dense<0.000000e+00> : vector<2x128xf32>
    %779 = tpu.matmul %749, %261, %cst_258 {dimension_numbers = #tpu.dot_dimension_numbers<[1], [0], [0], [1], [0, 0, 1, 1], [], []>} : vector<2x32xf32>, vector<32x128xf32>, vector<2x128xf32> -> vector<2x128xf32>
    %780 = arith.addf %778, %779 : vector<2x128xf32>
    %781 = vector.broadcast %262 : vector<1x128xf32> to vector<2x128xf32>
    %782 = arith.addf %780, %781 : vector<2x128xf32>
    %c6_259 = arith.constant 6 : index
    %c0_260 = arith.constant 0 : index
    %c0_261 = arith.constant 0 : index
    %783 = vector.load %arg16[%c6_259, %c0_260, %c0_261] : memref<7x2x128xf32, #tpu.memory_space<vmem>>, vector<1x2x128xf32>
    %784 = vector.shape_cast %783 : vector<1x2x128xf32> to vector<2x128xf32>
    %785 = vector.shape_cast %782 : vector<2x128xf32> to vector<1x2x128xf32>
    tpu.vector_store %arg16[%c6_259, %c0_260, %c0_261], %785 {strides = array<i32>} : memref<7x2x128xf32, #tpu.memory_space<vmem>>, vector<1x2x128xf32>,
    return
  }
  func.func @transform_0(%arg0: i32) -> (i32, i32, i32) {
    %c0_i32 = arith.constant 0 : i32
    %c0_i32_0 = arith.constant 0 : i32
    %c0_i32_1 = arith.constant 0 : i32
    %c0_i32_2 = arith.constant 0 : i32
    return %c0_i32, %c0_i32_0, %c0_i32_1 : i32, i32, i32
  }
  func.func @transform_1(%arg0: i32) -> (i32, i32, i32) {
    %c0_i32 = arith.constant 0 : i32
    %c0_i32_0 = arith.constant 0 : i32
    %c0_i32_1 = arith.constant 0 : i32
    %c0_i32_2 = arith.constant 0 : i32
    return %c0_i32, %c0_i32_0, %c0_i32_1 : i32, i32, i32
  }
  func.func @transform_2(%arg0: i32) -> (i32, i32) {
    %c0_i32 = arith.constant 0 : i32
    %c0_i32_0 = arith.constant 0 : i32
    %c0_i32_1 = arith.constant 0 : i32
    return %c0_i32, %c0_i32_0 : i32, i32
  }
  func.func @transform_3(%arg0: i32) -> (i32, i32) {
    %c0_i32 = arith.constant 0 : i32
    %c0_i32_0 = arith.constant 0 : i32
    %c0_i32_1 = arith.constant 0 : i32
    return %c0_i32, %c0_i32_0 : i32, i32
  }
  func.func @transform_4(%arg0: i32) -> (i32, i32) {
    %c0_i32 = arith.constant 0 : i32
    %c0_i32_0 = arith.constant 0 : i32
    %c0_i32_1 = arith.constant 0 : i32
    return %c0_i32, %c0_i32_0 : i32, i32
  }
  func.func @transform_5(%arg0: i32) -> (i32, i32) {
    %c0_i32 = arith.constant 0 : i32
    %c0_i32_0 = arith.constant 0 : i32
    %c0_i32_1 = arith.constant 0 : i32
    return %c0_i32, %c0_i32_0 : i32, i32
  }
  func.func @transform_6(%arg0: i32) -> (i32, i32) {
    %c0_i32 = arith.constant 0 : i32
    %c0_i32_0 = arith.constant 0 : i32
    %c0_i32_1 = arith.constant 0 : i32
    return %c0_i32, %c0_i32_0 : i32, i32
  }
  func.func @transform_7(%arg0: i32) -> (i32, i32) {
    %c0_i32 = arith.constant 0 : i32
    %c0_i32_0 = arith.constant 0 : i32
    %c0_i32_1 = arith.constant 0 : i32
    return %c0_i32, %c0_i32_0 : i32, i32
  }
  func.func @transform_8(%arg0: i32) -> (i32, i32) {
    %c0_i32 = arith.constant 0 : i32
    %c0_i32_0 = arith.constant 0 : i32
    %c0_i32_1 = arith.constant 0 : i32
    return %c0_i32, %c0_i32_0 : i32, i32
  }
  func.func @transform_9(%arg0: i32) -> (i32, i32) {
    %c0_i32 = arith.constant 0 : i32
    %c0_i32_0 = arith.constant 0 : i32
    %c0_i32_1 = arith.constant 0 : i32
    return %c0_i32, %c0_i32_0 : i32, i32
  }
  func.func @transform_10(%arg0: i32) -> (i32, i32) {
    %c0_i32 = arith.constant 0 : i32
    %c0_i32_0 = arith.constant 0 : i32
    %c0_i32_1 = arith.constant 0 : i32
    return %c0_i32, %c0_i32_0 : i32, i32
  }
  func.func @transform_11(%arg0: i32) -> (i32, i32) {
    %c0_i32 = arith.constant 0 : i32
    %c0_i32_0 = arith.constant 0 : i32
    %c0_i32_1 = arith.constant 0 : i32
    return %c0_i32, %c0_i32_0 : i32, i32
  }
  func.func @transform_12(%arg0: i32) -> (i32, i32) {
    %c0_i32 = arith.constant 0 : i32
    %c0_i32_0 = arith.constant 0 : i32
    %c0_i32_1 = arith.constant 0 : i32
    return %c0_i32, %c0_i32_0 : i32, i32
  }
  func.func @transform_13(%arg0: i32) -> (i32, i32) {
    %c0_i32 = arith.constant 0 : i32
    %c0_i32_0 = arith.constant 0 : i32
    %c0_i32_1 = arith.constant 0 : i32
    return %c0_i32, %c0_i32_0 : i32, i32
  }
  func.func @transform_14(%arg0: i32) -> (i32, i32) {
    %c0_i32 = arith.constant 0 : i32
    %c0_i32_0 = arith.constant 0 : i32
    %c0_i32_1 = arith.constant 0 : i32
    return %c0_i32, %c0_i32_0 : i32, i32
  }
  func.func @transform_15(%arg0: i32) -> (i32, i32, i32) {
    %c0_i32 = arith.constant 0 : i32
    %c0_i32_0 = arith.constant 0 : i32
    %c0_i32_1 = arith.constant 0 : i32
    %c0_i32_2 = arith.constant 0 : i32
    return %c0_i32, %c0_i32_0, %c0_i32_1 : i32, i32, i32
  }
}

</mosaic_0001>

<llo_original>
// kernel: tpu_custom_call.1
$region0: #{tpu_custom_call.1}
  #allocation0 [shape = 'u32[]', space=smem, size = 0x4, offset = 0x4, fixed_abs, tag = 'smem constant byte address 0x4 - core index']
  #allocation1 [shape = 'u32[144,128]{1,0:T(1,128)}', space=vmem, size = 0x12000, scoped, tag = 'internal scratch']
  #allocation2 [shape = 'f32[8,2,32]{2,1,0:T(2,128)}', space=vmem, size = 0x2000, scoped, tag = 'scratch operand']
  %s0 = inlined_call_operand.vmem [shape: s32[7,2,1], index: 0, kind: input, shape index: {}]
  %s1 = inlined_call_operand.hbm [shape: f32[8,2,32], index: 1, kind: input, shape index: {}]
  %s2 = inlined_call_operand.hbm [shape: f32[32,96], index: 2, kind: input, shape index: {}]
  %s3 = inlined_call_operand.hbm [shape: f32[32,96], index: 3, kind: input, shape index: {}]
  %s4 = inlined_call_operand.vmem [shape: f32[1,96], index: 4, kind: input, shape index: {}]
  %s5 = inlined_call_operand.hbm [shape: f32[1,96], index: 5, kind: input, shape index: {}]
  %s6 = inlined_call_operand.hbm [shape: f32[16,32], index: 6, kind: input, shape index: {}]
  %s7 = inlined_call_operand.vmem [shape: f32[32,96], index: 7, kind: input, shape index: {}]
  %s8 = inlined_call_operand.hbm [shape: f32[32,96], index: 8, kind: input, shape index: {}]
  %s9 = inlined_call_operand.hbm [shape: f32[32,96], index: 9, kind: input, shape index: {}]
  %s10 = inlined_call_operand.hbm [shape: f32[1,96], index: 10, kind: input, shape index: {}]
  %s11 = inlined_call_operand.hbm [shape: f32[1,96], index: 11, kind: input, shape index: {}]
  %s12 = inlined_call_operand.hbm [shape: f32[32,128], index: 12, kind: input, shape index: {}]
  %s13 = inlined_call_operand.vmem [shape: f32[32,128], index: 13, kind: input, shape index: {}]
  %s14 = inlined_call_operand.vmem [shape: f32[1,128], index: 14, kind: input, shape index: {}]
  %s15 = inlined_call_operand.hbm [shape: f32[7,2,128], index: 15, kind: output, shape index: {}]
  %s16 = sld [smem:[#allocation0]]
  $region110: #{tpu_custom_call.1} parent=0
    _
  %s18 = ssub.s32 1, %s16
  %s19 = scalar_select 0, %s18, %s16
  $region1: #{tpu_custom_call.1} parent=0
    #allocation3 [shape = 'u8[8192]{0}', space=vmem, size = 0x2000, scoped, tag = 'input window, operand 1, single buffered']
    #allocation4 [shape = 's32[1]{0}', space=sflag, size = 0x4, scoped, tag = 'scoped memory for tpu_custom_call.1']
    #allocation5 [shape = 's32[1]{0}', space=sflag, size = 0x4, scoped, tag = 'scoped memory for tpu_custom_call.1']
    #allocation6 [shape = 'u8[16384]{0}', space=vmem, size = 0x4000, scoped, tag = 'input window, operand 2, single buffered']
    #allocation7 [shape = 's32[1]{0}', space=sflag, size = 0x4, scoped, tag = 'scoped memory for tpu_custom_call.1']
    #allocation8 [shape = 'u8[16384]{0}', space=vmem, size = 0x4000, scoped, tag = 'input window, operand 3, single buffered']
    #allocation9 [shape = 'u8[512]{0}', space=vmem, size = 0x400, scoped, tag = 'input window, operand 5, single buffered']
    #allocation10 [shape = 's32[1]{0}', space=sflag, size = 0x4, scoped, tag = 'scoped memory for tpu_custom_call.1']
    #allocation11 [shape = 'u8[8192]{0}', space=vmem, size = 0x2000, scoped, tag = 'input window, operand 6, single buffered']
    #allocation12 [shape = 'u8[16384]{0}', space=vmem, size = 0x4000, scoped, tag = 'input window, operand 8, single buffered']
    #allocation13 [shape = 's32[1]{0}', space=sflag, size = 0x4, scoped, tag = 'scoped memory for tpu_custom_call.1']
    #allocation14 [shape = 'u8[16384]{0}', space=vmem, size = 0x4000, scoped, tag = 'input window, operand 9, single buffered']
    #allocation15 [shape = 'u8[512]{0}', space=vmem, size = 0x400, scoped, tag = 'input window, operand 10, single buffered']
    #allocation16 [shape = 's32[1]{0}', space=sflag, size = 0x4, scoped, tag = 'scoped memory for tpu_custom_call.1']
    #allocation17 [shape = 'u8[512]{0}', space=vmem, size = 0x400, scoped, tag = 'input window, operand 11, single buffered']
    #allocation18 [shape = 'u8[16384]{0}', space=vmem, size = 0x4000, scoped, tag = 'input window, operand 12, single buffered']
    #allocation19 [shape = 's32[1]{0}', space=sflag, size = 0x4, scoped, tag = 'scoped memory for tpu_custom_call.1']
    #allocation20 [shape = 'u8[7168]{0}', space=vmem, size = 0x1c00, scoped, tag = 'output window, operand 0, single buffered']
    %20 = vsyncpa [#allocation4], 0
    %21 = vsyncpa [#allocation7], 0
    %22 = vsyncpa [#allocation10], 0
    %23 = vsyncpa [#allocation13], 0
    %24 = vsyncpa [#allocation16], 0
    %25 = vsyncpa [#allocation19], 0
    %26 = vsyncpa [#allocation5], 0
    // Predicated region
    $region2: #{tpu_custom_call.1} parent=1 // pred_check
      _
    $region3: #{tpu_custom_call.1} parent=1 // pred_check_branch
      %28 = sbr.rel (0) target = $region5
    $region4: #{tpu_custom_call.1} parent=1 // pred_region
      _
    $region5: #{tpu_custom_call.1} parent=1 // pred_fallthru
      _
    // Predicated region
    $region6: #{tpu_custom_call.1} parent=1 // pred_check
      _
    $region7: #{tpu_custom_call.1} parent=1 // pred_check_branch
      %30 = sbr.rel (0) target = $region9
    $region8: #{tpu_custom_call.1} parent=1 // pred_region
      %s32 = ssub.s32 256, 256
      %33 = vsyncadd [#allocation4], %s32
      %s34 = sshll.u32 [#allocation3], 4
      %s35 = int_to_ptr.vmem [resolvable:$true] %s34
      %40 = dma.hbm_to_vmem [thread:$0]  %s1, 256, %s35, [#allocation4], 32, 32, 2
    $region9: #{tpu_custom_call.1} parent=1 // pred_fallthru
      _
    // Predicated region
    $region10: #{tpu_custom_call.1} parent=1 // pred_check
      _
    $region11: #{tpu_custom_call.1} parent=1 // pred_check_branch
      %42 = sbr.rel (0) target = $region13
    $region12: #{tpu_custom_call.1} parent=1 // pred_region
      %s44 = ssub.s32 512, 512
      %45 = vsyncadd [#allocation7], %s44
      %s46 = sshll.u32 [#allocation6], 4
      %s47 = int_to_ptr.vmem [resolvable:$true] %s46
      %52 = dma.hbm_to_vmem [thread:$0]  %s2, 512, %s47, [#allocation7], 128, 128, 8
    $region13: #{tpu_custom_call.1} parent=1 // pred_fallthru
      _
    // Predicated region
    $region14: #{tpu_custom_call.1} parent=1 // pred_check
      _
    $region15: #{tpu_custom_call.1} parent=1 // pred_check_branch
      %54 = sbr.rel (0) target = $region17
    $region16: #{tpu_custom_call.1} parent=1 // pred_region
      %s56 = ssub.s32 512, 512
      %57 = vsyncadd [#allocation7], %s56
      %s58 = sshll.u32 [#allocation8], 4
      %s59 = int_to_ptr.vmem [resolvable:$true] %s58
      %64 = dma.hbm_to_vmem [thread:$0]  %s3, 512, %s59, [#allocation7], 128, 128, 8
    $region17: #{tpu_custom_call.1} parent=1 // pred_fallthru
      _
    // Predicated region
    $region18: #{tpu_custom_call.1} parent=1 // pred_check
      _
    $region19: #{tpu_custom_call.1} parent=1 // pred_check_branch
      %66 = sbr.rel (0) target = $region21
    $region20: #{tpu_custom_call.1} parent=1 // pred_region
      _
    $region21: #{tpu_custom_call.1} parent=1 // pred_fallthru
      _
    // Predicated region
    $region22: #{tpu_custom_call.1} parent=1 // pred_check
      _
    $region23: #{tpu_custom_call.1} parent=1 // pred_check_branch
      %68 = sbr.rel (0) target = $region25
    $region24: #{tpu_custom_call.1} parent=1 // pred_region
      %s70 = ssub.s32 16, 16
      %71 = vsyncadd [#allocation10], %s70
      %s73 = sshll.u32 [#allocation9], 4
      %s74 = int_to_ptr.vmem [resolvable:$true] %s73
      %76 = dma.hbm_to_vmem [thread:$0]  %s5, 16, %s74, [#allocation10]
    $region25: #{tpu_custom_call.1} parent=1 // pred_fallthru
      _
    // Predicated region
    $region26: #{tpu_custom_call.1} parent=1 // pred_check
      _
    $region27: #{tpu_custom_call.1} parent=1 // pred_check_branch
      %78 = sbr.rel (0) target = $region29
    $region28: #{tpu_custom_call.1} parent=1 // pred_region
      %s80 = ssub.s32 256, 256
      %81 = vsyncadd [#allocation10], %s80
      %s82 = sshll.u32 [#allocation11], 4
      %s83 = int_to_ptr.vmem [resolvable:$true] %s82
      %88 = dma.hbm_to_vmem [thread:$0]  %s6, 256, %s83, [#allocation10], 128, 128, 8
    $region29: #{tpu_custom_call.1} parent=1 // pred_fallthru
      _
    // Predicated region
    $region30: #{tpu_custom_call.1} parent=1 // pred_check
      _
    $region31: #{tpu_custom_call.1} parent=1 // pred_check_branch
      %90 = sbr.rel (0) target = $region33
    $region32: #{tpu_custom_call.1} parent=1 // pred_region
      _
    $region33: #{tpu_custom_call.1} parent=1 // pred_fallthru
      _
    // Predicated region
    $region34: #{tpu_custom_call.1} parent=1 // pred_check
      _
    $region35: #{tpu_custom_call.1} parent=1 // pred_check_branch
      %92 = sbr.rel (0) target = $region37
    $region36: #{tpu_custom_call.1} parent=1 // pred_region
      %s94 = ssub.s32 512, 512
      %95 = vsyncadd [#allocation13], %s94
      %s96 = sshll.u32 [#allocation12], 4
      %s97 = int_to_ptr.vmem [resolvable:$true] %s96
      %102 = dma.hbm_to_vmem [thread:$0]  %s8, 512, %s97, [#allocation13], 128, 128, 8
    $region37: #{tpu_custom_call.1} parent=1 // pred_fallthru
      _
    // Predicated region
    $region38: #{tpu_custom_call.1} parent=1 // pred_check
      _
    $region39: #{tpu_custom_call.1} parent=1 // pred_check_branch
      %104 = sbr.rel (0) target = $region41
    $region40: #{tpu_custom_call.1} parent=1 // pred_region
      %s106 = ssub.s32 512, 512
      %107 = vsyncadd [#allocation13], %s106
      %s108 = sshll.u32 [#allocation14], 4
      %s109 = int_to_ptr.vmem [resolvable:$true] %s108
      %114 = dma.hbm_to_vmem [thread:$0]  %s9, 512, %s109, [#allocation13], 128, 128, 8
    $region41: #{tpu_custom_call.1} parent=1 // pred_fallthru
      _
    // Predicated region
    $region42: #{tpu_custom_call.1} parent=1 // pred_check
      _
    $region43: #{tpu_custom_call.1} parent=1 // pred_check_branch
      %116 = sbr.rel (0) target = $region45
    $region44: #{tpu_custom_call.1} parent=1 // pred_region
      %s118 = ssub.s32 16, 16
      %119 = vsyncadd [#allocation16], %s118
      %s121 = sshll.u32 [#allocation15], 4
      %s122 = int_to_ptr.vmem [resolvable:$true] %s121
      %124 = dma.hbm_to_vmem [thread:$0]  %s10, 16, %s122, [#allocation16]
    $region45: #{tpu_custom_call.1} parent=1 // pred_fallthru
      _
    // Predicated region
    $region46: #{tpu_custom_call.1} parent=1 // pred_check
      _
    $region47: #{tpu_custom_call.1} parent=1 // pred_check_branch
      %126 = sbr.rel (0) target = $region49
    $region48: #{tpu_custom_call.1} parent=1 // pred_region
      %s128 = ssub.s32 16, 16
      %129 = vsyncadd [#allocation16], %s128
      %s131 = sshll.u32 [#allocation17], 4
      %s132 = int_to_ptr.vmem [resolvable:$true] %s131
      %134 = dma.hbm_to_vmem [thread:$0]  %s11, 16, %s132, [#allocation16]
    $region49: #{tpu_custom_call.1} parent=1 // pred_fallthru
      _
    // Predicated region
    $region50: #{tpu_custom_call.1} parent=1 // pred_check
      _
    $region51: #{tpu_custom_call.1} parent=1 // pred_check_branch
      %136 = sbr.rel (0) target = $region53
    $region52: #{tpu_custom_call.1} parent=1 // pred_region
      %s138 = ssub.s32 512, 512
      %139 = vsyncadd [#allocation19], %s138
      %s140 = sshll.u32 [#allocation18], 4
      %s141 = int_to_ptr.vmem [resolvable:$true] %s140
      %146 = dma.hbm_to_vmem [thread:$0]  %s12, 512, %s141, [#allocation19], 128, 128, 8
    $region53: #{tpu_custom_call.1} parent=1 // pred_fallthru
      _
    // Predicated region
    $region54: #{tpu_custom_call.1} parent=1 // pred_check
      _
    $region55: #{tpu_custom_call.1} parent=1 // pred_check_branch
      %148 = sbr.rel (0) target = $region57
    $region56: #{tpu_custom_call.1} parent=1 // pred_region
      _
    $region57: #{tpu_custom_call.1} parent=1 // pred_fallthru
      _
    // Predicated region
    $region58: #{tpu_custom_call.1} parent=1 // pred_check
      _
    $region59: #{tpu_custom_call.1} parent=1 // pred_check_branch
      %150 = sbr.rel (0) target = $region61
    $region60: #{tpu_custom_call.1} parent=1 // pred_region
      _
    $region61: #{tpu_custom_call.1} parent=1 // pred_fallthru
      _
    // Predicated region
    $region62: #{tpu_custom_call.1} parent=1 // pred_check
      _
    $region63: #{tpu_custom_call.1} parent=1 // pred_check_branch
      %152 = sbr.rel (0) target = $region65
    $region64: #{tpu_custom_call.1} parent=1 // pred_region
      %153 = dma.done [#allocation4], 256
    $region65: #{tpu_custom_call.1} parent=1 // pred_fallthru
      _
    // Predicated region
    $region66: #{tpu_custom_call.1} parent=1 // pred_check
      _
    $region67: #{tpu_custom_call.1} parent=1 // pred_check_branch
      %155 = sbr.rel (0) target = $region69
    $region68: #{tpu_custom_call.1} parent=1 // pred_region
      %156 = dma.done [#allocation7], 512
    $region69: #{tpu_custom_call.1} parent=1 // pred_fallthru
      _
    // Predicated region
    $region70: #{tpu_custom_call.1} parent=1 // pred_check
      _
    $region71: #{tpu_custom_call.1} parent=1 // pred_check_branch
      %158 = sbr.rel (0) target = $region73
    $region72: #{tpu_custom_call.1} parent=1 // pred_region
      %159 = dma.done [#allocation7], 512
    $region73: #{tpu_custom_call.1} parent=1 // pred_fallthru
      _
    // Predicated region
    $region74: #{tpu_custom_call.1} parent=1 // pred_check
      _
    $region75: #{tpu_custom_call.1} parent=1 // pred_check_branch
      %161 = sbr.rel (0) target = $region77
    $region76: #{tpu_custom_call.1} parent=1 // pred_region
      %162 = dma.done [#allocation10], 16
    $region77: #{tpu_custom_call.1} parent=1 // pred_fallthru
      _
    // Predicated region
    $region78: #{tpu_custom_call.1} parent=1 // pred_check
      _
    $region79: #{tpu_custom_call.1} parent=1 // pred_check_branch
      %164 = sbr.rel (0) target = $region81
    $region80: #{tpu_custom_call.1} parent=1 // pred_region
      %165 = dma.done [#allocation10], 256
    $region81: #{tpu_custom_call.1} parent=1 // pred_fallthru
      _
    // Predicated region
    $region82: #{tpu_custom_call.1} parent=1 // pred_check
      _
    $region83: #{tpu_custom_call.1} parent=1 // pred_check_branch
      %167 = sbr.rel (0) target = $region85
    $region84: #{tpu_custom_call.1} parent=1 // pred_region
      %168 = dma.done [#allocation13], 512
    $region85: #{tpu_custom_call.1} parent=1 // pred_fallthru
      _
    // Predicated region
    $region86: #{tpu_custom_call.1} parent=1 // pred_check
      _
    $region87: #{tpu_custom_call.1} parent=1 // pred_check_branch
      %170 = sbr.rel (0) target = $region89
    $region88: #{tpu_custom_call.1} parent=1 // pred_region
      %171 = dma.done [#allocation13], 512
    $region89: #{tpu_custom_call.1} parent=1 // pred_fallthru
      _
    // Predicated region
    $region90: #{tpu_custom_call.1} parent=1 // pred_check
      _
    $region91: #{tpu_custom_call.1} parent=1 // pred_check_branch
      %173 = sbr.rel (0) target = $region93
    $region92: #{tpu_custom_call.1} parent=1 // pred_region
      %174 = dma.done [#allocation16], 16
    $region93: #{tpu_custom_call.1} parent=1 // pred_fallthru
      _
    // Predicated region
    $region94: #{tpu_custom_call.1} parent=1 // pred_check
      _
    $region95: #{tpu_custom_call.1} parent=1 // pred_check_branch
      %176 = sbr.rel (0) target = $region97
    $region96: #{tpu_custom_call.1} parent=1 // pred_region
      %177 = dma.done [#allocation16], 16
    $region97: #{tpu_custom_call.1} parent=1 // pred_fallthru
      _
    // Predicated region
    $region98: #{tpu_custom_call.1} parent=1 // pred_check
      _
    $region99: #{tpu_custom_call.1} parent=1 // pred_check_branch
      %179 = sbr.rel (0) target = $region101
    $region100: #{tpu_custom_call.1} parent=1 // pred_region
      %180 = dma.done [#allocation19], 512
    $region101: #{tpu_custom_call.1} parent=1 // pred_fallthru
      _
    %v181 = vld [vmem:[#allocation6] sm:$0xff]
    %v182 = vld [vmem:[#allocation6 + $0x8] sm:$0xff]
    %v183 = vld [vmem:[#allocation6 + $0x10] sm:$0xff]
    %v184 = vld [vmem:[#allocation6 + $0x18] sm:$0xff]
    %v185 = vld [vmem:[#allocation8] sm:$0xff]
    %v186 = vld [vmem:[#allocation8 + $0x8] sm:$0xff]
    %v187 = vld [vmem:[#allocation8 + $0x10] sm:$0xff]
    %v188 = vld [vmem:[#allocation8 + $0x18] sm:$0xff]
    %v189 = vld [vmem:[%s4] sm:$0x1]
    %v190 = vld [vmem:[#allocation9] sm:$0x1]
    %v191 = vld [vmem:[#allocation3] sm:$0x3]
    %v193 = vlaneseq
    %v194 = vshrl.u32 %v193, 7
    %v195 = vsub.s32 0, %v194
    %v196 = vrot.slane %v189, %v195
    %vm198 = vcmask 261120
    %v200 = vsel %vm198, %v191, 0
    %202 = vmatprep.subr.mxu0 0.0
    %203 = vmatpush1.msra.mxu0 %v181
    %204 = vmatprep.subr.mxu0 0.0
    %205 = vmatpush1.msra.mxu0 %v182
    %206 = vmatprep.subr.mxu0 0.0
    %207 = vmatpush1.msra.mxu0 %v183
    %208 = vmatprep.subr.mxu0 0.0
    %209 = vmatpush1.msra.mxu0 %v184
    %210 = vmatprep.subr.mxu0 0.0
    %211 = vmatpush1.msra.mxu0 0.0
    %212 = vmatprep.subr.mxu0 0.0
    %213 = vmatpush1.msra.mxu0 0.0
    %214 = vmatprep.subr.mxu0 0.0
    %215 = vmatpush1.msra.mxu0 0.0
    %216 = vmatprep.subr.mxu0 0.0
    %217 = vmatpush1.msra.mxu0 0.0
    %218 = vmatprep.subr.mxu0 0.0
    %219 = vmatpush1.msra.mxu0 0.0
    %220 = vmatprep.subr.mxu0 0.0
    %221 = vmatpush1.msra.mxu0 0.0
    %222 = vmatprep.subr.mxu0 0.0
    %223 = vmatpush1.msra.mxu0 0.0
    %224 = vmatprep.subr.mxu0 0.0
    %225 = vmatpush1.msra.mxu0 0.0
    %226 = vmatprep.subr.mxu0 0.0
    %227 = vmatpush1.msra.mxu0 0.0
    %228 = vmatprep.subr.mxu0 0.0
    %229 = vmatpush1.msra.mxu0 0.0
    %230 = vmatprep.subr.mxu0 0.0
    %231 = vmatpush1.msra.mxu0 0.0
    %232 = vmatprep.subr.mxu0 0.0
    %233 = vmatpush1.msra.mxu0 0.0
    %234 = vmatprep.subr.mxu0 0.0
    %235 = vmatpush1.msra.mxu0 0.0
    %236 = vmatprep.subr.mxu0 0.0
    %237 = vmatpush1.msra.mxu0 0.0
    %238 = vmatprep.subr.mxu0 0.0
    %239 = vmatpush1.msra.mxu0 0.0
    %240 = vmatprep.subr.mxu0 0.0
    %241 = vmatpush1.msra.mxu0 0.0
    %242 = vmatprep.subr.mxu0 0.0
    %243 = vmatpush1.msra.mxu0 0.0
    %244 = vmatprep.subr.mxu0 0.0
    %245 = vmatpush1.msra.mxu0 0.0
    %246 = vmatprep.subr.mxu0 0.0
    %247 = vmatpush1.msra.mxu0 0.0
    %248 = vmatprep.subr.mxu0 0.0
    %249 = vmatpush1.msra.mxu0 0.0
    %250 = vmatprep.subr.mxu0 0.0
    %251 = vmatpush1.msra.mxu0 0.0
    %252 = vmatprep.subr.mxu0 0.0
    %253 = vmatpush1.msra.mxu0 0.0
    %254 = vmatprep.subr.mxu0 0.0
    %255 = vmatpush1.msra.mxu0 0.0
    %256 = vmatprep.subr.mxu0 0.0
    %257 = vmatpush1.msra.mxu0 0.0
    %258 = vmatprep.subr.mxu0 0.0
    %259 = vmatpush1.msra.mxu0 0.0
    %260 = vmatprep.subr.mxu0 0.0
    %261 = vmatpush1.msra.mxu0 0.0
    %262 = vmatprep.subr.mxu0 0.0
    %263 = vmatpush1.msra.mxu0 0.0
    %264 = vmatprep.subr.mxu0 0.0
    %265 = vmatpush1.msra.mxu0 0.0
    %266 = vmatprep.mubr.f32.mxu0 0.0
    %267 = vmatmul.mubr.f32.gmra.mrb[0].mxu0 %v200
    %v268 = vpop.f32.mrb[0].mxu0
    %v269 = vadd.f32 %v196, %v268
    %v270 = vpop.f32.mrb[0].mxu0
    %271 = vdwg.mxu0
    %v273 = vlaneseq
    %v274 = vshrl.u32 %v273, 7
    %v275 = vsub.s32 0, %v274
    %v276 = vrot.slane %v190, %v275
    %v279 = vsel %vm198, 0.0, 0
    %281 = vmatprep.subr.mxu0 0.0
    %282 = vmatpush1.msra.mxu0 %v185
    %283 = vmatprep.subr.mxu0 0.0
    %284 = vmatpush1.msra.mxu0 %v186
    %285 = vmatprep.subr.mxu0 0.0
    %286 = vmatpush1.msra.mxu0 %v187
    %287 = vmatprep.subr.mxu0 0.0
    %288 = vmatpush1.msra.mxu0 %v188
    %289 = vmatprep.subr.mxu0 0.0
    %290 = vmatpush1.msra.mxu0 0.0
    %291 = vmatprep.subr.mxu0 0.0
    %292 = vmatpush1.msra.mxu0 0.0
    %293 = vmatprep.subr.mxu0 0.0
    %294 = vmatpush1.msra.mxu0 0.0
    %295 = vmatprep.subr.mxu0 0.0
    %296 = vmatpush1.msra.mxu0 0.0
    %297 = vmatprep.subr.mxu0 0.0
    %298 = vmatpush1.msra.mxu0 0.0
    %299 = vmatprep.subr.mxu0 0.0
    %300 = vmatpush1.msra.mxu0 0.0
    %301 = vmatprep.subr.mxu0 0.0
    %302 = vmatpush1.msra.mxu0 0.0
    %303 = vmatprep.subr.mxu0 0.0
    %304 = vmatpush1.msra.mxu0 0.0
    %305 = vmatprep.subr.mxu0 0.0
    %306 = vmatpush1.msra.mxu0 0.0
    %307 = vmatprep.subr.mxu0 0.0
    %308 = vmatpush1.msra.mxu0 0.0
    %309 = vmatprep.subr.mxu0 0.0
    %310 = vmatpush1.msra.mxu0 0.0
    %311 = vmatprep.subr.mxu0 0.0
    %312 = vmatpush1.msra.mxu0 0.0
    %313 = vmatprep.subr.mxu0 0.0
    %314 = vmatpush1.msra.mxu0 0.0
    %315 = vmatprep.subr.mxu0 0.0
    %316 = vmatpush1.msra.mxu0 0.0
    %317 = vmatprep.subr.mxu0 0.0
    %318 = vmatpush1.msra.mxu0 0.0
    %319 = vmatprep.subr.mxu0 0.0
    %320 = vmatpush1.msra.mxu0 0.0
    %321 = vmatprep.subr.mxu0 0.0
    %322 = vmatpush1.msra.mxu0 0.0
    %323 = vmatprep.subr.mxu0 0.0
    %324 = vmatpush1.msra.mxu0 0.0
    %325 = vmatprep.subr.mxu0 0.0
    %326 = vmatpush1.msra.mxu0 0.0
    %327 = vmatprep.subr.mxu0 0.0
    %328 = vmatpush1.msra.mxu0 0.0
    %329 = vmatprep.subr.mxu0 0.0
    %330 = vmatpush1.msra.mxu0 0.0
    %331 = vmatprep.subr.mxu0 0.0
    %332 = vmatpush1.msra.mxu0 0.0
    %333 = vmatprep.subr.mxu0 0.0
    %334 = vmatpush1.msra.mxu0 0.0
    %335 = vmatprep.subr.mxu0 0.0
    %336 = vmatpush1.msra.mxu0 0.0
    %337 = vmatprep.subr.mxu0 0.0
    %338 = vmatpush1.msra.mxu0 0.0
    %339 = vmatprep.subr.mxu0 0.0
    %340 = vmatpush1.msra.mxu0 0.0
    %341 = vmatprep.subr.mxu0 0.0
    %342 = vmatpush1.msra.mxu0 0.0
    %343 = vmatprep.subr.mxu0 0.0
    %344 = vmatpush1.msra.mxu0 0.0
    %345 = vmatprep.mubr.f32.mxu0 0.0
    %346 = vmatmul.mubr.f32.gmra.mrb[0].mxu0 %v279
    %v347 = vpop.f32.mrb[0].mxu0
    %v348 = vadd.f32 %v276, %v347
    %v349 = vpop.f32.mrb[0].mxu0
    %350 = vdwg.mxu0
    %v351 = vadd.f32 %v269, %v348
    %v352 = vxor.u32 %v351, 2147483648
    %v353 = vmul.f32 %v352, 1.442695
    %v354 = vpow.pop %v353
    %v355 = vadd.f32 %v354, 1.0
    %v356 = vrcp.pop %v355
    %v357 = vmul.f32 1.0, %v356
    %359 = vrot.lane.b32.xlu0 %v348, 64
    %v360 = vpop.permute.xlu0 %359
    %v362 = vmul.f32 %v357, %v360
    %364 = vrot.lane.b32.xlu0 %v362, 64
    %v365 = vpop.permute.xlu0 %364
    %v367 = vadd.f32 %v269, %v365
    %v368 = vtanh.pop %v367
    %v369 = vsub.f32 1.0, %v357
    %371 = vrot.lane.b32.xlu0 %v368, 96
    %v372 = vpop.permute.xlu0 %371
    %v374 = vmul.f32 %v369, %v372
    %v375 = vmul.f32 %v357, 0.0
    %v376 = vadd.f32 %v374, %v375
    %378 = vrot.lane.b32.xlu0 %v376, 96
    %v379 = vpop.permute.xlu0 %378
    %vm381 = vcmask 254976
    %382 = vst.msk [vmem:[#allocation2] sm:$0x3] %vm381, %v379
    %s383 = scalar_lea.vmem [#allocation3], 2
    %v384 = vld [vmem:[%s383] sm:$0x3]
    %v386 = vsel %vm198, %v384, 0
    %388 = vmatprep.subr.mxu0 0.0
    %389 = vmatpush1.msra.mxu0 %v181
    %390 = vmatprep.subr.mxu0 0.0
    %391 = vmatpush1.msra.mxu0 %v182
    %392 = vmatprep.subr.mxu0 0.0
    %393 = vmatpush1.msra.mxu0 %v183
    %394 = vmatprep.subr.mxu0 0.0
    %395 = vmatpush1.msra.mxu0 %v184
    %396 = vmatprep.subr.mxu0 0.0
    %397 = vmatpush1.msra.mxu0 0.0
    %398 = vmatprep.subr.mxu0 0.0
    %399 = vmatpush1.msra.mxu0 0.0
    %400 = vmatprep.subr.mxu0 0.0
    %401 = vmatpush1.msra.mxu0 0.0
    %402 = vmatprep.subr.mxu0 0.0
    %403 = vmatpush1.msra.mxu0 0.0
    %404 = vmatprep.subr.mxu0 0.0
    %405 = vmatpush1.msra.mxu0 0.0
    %406 = vmatprep.subr.mxu0 0.0
    %407 = vmatpush1.msra.mxu0 0.0
    %408 = vmatprep.subr.mxu0 0.0
    %409 = vmatpush1.msra.mxu0 0.0
    %410 = vmatprep.subr.mxu0 0.0
    %411 = vmatpush1.msra.mxu0 0.0
    %412 = vmatprep.subr.mxu0 0.0
    %413 = vmatpush1.msra.mxu0 0.0
    %414 = vmatprep.subr.mxu0 0.0
    %415 = vmatpush1.msra.mxu0 0.0
    %416 = vmatprep.subr.mxu0 0.0
    %417 = vmatpush1.msra.mxu0 0.0
    %418 = vmatprep.subr.mxu0 0.0
    %419 = vmatpush1.msra.mxu0 0.0
    %420 = vmatprep.subr.mxu0 0.0
    %421 = vmatpush1.msra.mxu0 0.0
    %422 = vmatprep.subr.mxu0 0.0
    %423 = vmatpush1.msra.mxu0 0.0
    %424 = vmatprep.subr.mxu0 0.0
    %425 = vmatpush1.msra.mxu0 0.0
    %426 = vmatprep.subr.mxu0 0.0
    %427 = vmatpush1.msra.mxu0 0.0
    %428 = vmatprep.subr.mxu0 0.0
    %429 = vmatpush1.msra.mxu0 0.0
    %430 = vmatprep.subr.mxu0 0.0
    %431 = vmatpush1.msra.mxu0 0.0
    %432 = vmatprep.subr.mxu0 0.0
    %433 = vmatpush1.msra.mxu0 0.0
    %434 = vmatprep.subr.mxu0 0.0
    %435 = vmatpush1.msra.mxu0 0.0
    %436 = vmatprep.subr.mxu0 0.0
    %437 = vmatpush1.msra.mxu0 0.0
    %438 = vmatprep.subr.mxu0 0.0
    %439 = vmatpush1.msra.mxu0 0.0
    %440 = vmatprep.subr.mxu0 0.0
    %441 = vmatpush1.msra.mxu0 0.0
    %442 = vmatprep.subr.mxu0 0.0
    %443 = vmatpush1.msra.mxu0 0.0
    %444 = vmatprep.subr.mxu0 0.0
    %445 = vmatpush1.msra.mxu0 0.0
    %446 = vmatprep.subr.mxu0 0.0
    %447 = vmatpush1.msra.mxu0 0.0
    %448 = vmatprep.subr.mxu0 0.0
    %449 = vmatpush1.msra.mxu0 0.0
    %450 = vmatprep.subr.mxu0 0.0
    %451 = vmatpush1.msra.mxu0 0.0
    %452 = vmatprep.mubr.f32.mxu0 0.0
    %453 = vmatmul.mubr.f32.gmra.mrb[0].mxu0 %v386
    %v454 = vpop.f32.mrb[0].mxu0
    %v455 = vadd.f32 %v196, %v454
    %v456 = vpop.f32.mrb[0].mxu0
    %457 = vdwg.mxu0
    %v458 = vsel %vm198, %v379, 0
    %460 = vmatprep.subr.mxu0 0.0
    %461 = vmatpush1.msra.mxu0 %v185
    %462 = vmatprep.subr.mxu0 0.0
    %463 = vmatpush1.msra.mxu0 %v186
    %464 = vmatprep.subr.mxu0 0.0
    %465 = vmatpush1.msra.mxu0 %v187
    %466 = vmatprep.subr.mxu0 0.0
    %467 = vmatpush1.msra.mxu0 %v188
    %468 = vmatprep.subr.mxu0 0.0
    %469 = vmatpush1.msra.mxu0 0.0
    %470 = vmatprep.subr.mxu0 0.0
    %471 = vmatpush1.msra.mxu0 0.0
    %472 = vmatprep.subr.mxu0 0.0
    %473 = vmatpush1.msra.mxu0 0.0
    %474 = vmatprep.subr.mxu0 0.0
    %475 = vmatpush1.msra.mxu0 0.0
    %476 = vmatprep.subr.mxu0 0.0
    %477 = vmatpush1.msra.mxu0 0.0
    %478 = vmatprep.subr.mxu0 0.0
    %479 = vmatpush1.msra.mxu0 0.0
    %480 = vmatprep.subr.mxu0 0.0
    %481 = vmatpush1.msra.mxu0 0.0
    %482 = vmatprep.subr.mxu0 0.0
    %483 = vmatpush1.msra.mxu0 0.0
    %484 = vmatprep.subr.mxu0 0.0
    %485 = vmatpush1.msra.mxu0 0.0
    %486 = vmatprep.subr.mxu0 0.0
    %487 = vmatpush1.msra.mxu0 0.0
    %488 = vmatprep.subr.mxu0 0.0
    %489 = vmatpush1.msra.mxu0 0.0
    %490 = vmatprep.subr.mxu0 0.0
    %491 = vmatpush1.msra.mxu0 0.0
    %492 = vmatprep.subr.mxu0 0.0
    %493 = vmatpush1.msra.mxu0 0.0
    %494 = vmatprep.subr.mxu0 0.0
    %495 = vmatpush1.msra.mxu0 0.0
    %496 = vmatprep.subr.mxu0 0.0
    %497 = vmatpush1.msra.mxu0 0.0
    %498 = vmatprep.subr.mxu0 0.0
    %499 = vmatpush1.msra.mxu0 0.0
    %500 = vmatprep.subr.mxu0 0.0
    %501 = vmatpush1.msra.mxu0 0.0
    %502 = vmatprep.subr.mxu0 0.0
    %503 = vmatpush1.msra.mxu0 0.0
    %504 = vmatprep.subr.mxu0 0.0
    %505 = vmatpush1.msra.mxu0 0.0
    %506 = vmatprep.subr.mxu0 0.0
    %507 = vmatpush1.msra.mxu0 0.0
    %508 = vmatprep.subr.mxu0 0.0
    %509 = vmatpush1.msra.mxu0 0.0
    %510 = vmatprep.subr.mxu0 0.0
    %511 = vmatpush1.msra.mxu0 0.0
    %512 = vmatprep.subr.mxu0 0.0
    %513 = vmatpush1.msra.mxu0 0.0
    %514 = vmatprep.subr.mxu0 0.0
    %515 = vmatpush1.msra.mxu0 0.0
    %516 = vmatprep.subr.mxu0 0.0
    %517 = vmatpush1.msra.mxu0 0.0
    %518 = vmatprep.subr.mxu0 0.0
    %519 = vmatpush1.msra.mxu0 0.0
    %520 = vmatprep.subr.mxu0 0.0
    %521 = vmatpush1.msra.mxu0 0.0
    %522 = vmatprep.subr.mxu0 0.0
    %523 = vmatpush1.msra.mxu0 0.0
    %524 = vmatprep.mubr.f32.mxu0 0.0
    %525 = vmatmul.mubr.f32.gmra.mrb[0].mxu0 %v458
    %v526 = vpop.f32.mrb[0].mxu0
    %v527 = vadd.f32 %v276, %v526
    %v528 = vpop.f32.mrb[0].mxu0
    %529 = vdwg.mxu0
    %v530 = vadd.f32 %v455, %v527
    %v531 = vxor.u32 %v530, 2147483648
    %v532 = vmul.f32 %v531, 1.442695
    %v533 = vpow.pop %v532
    %v534 = vadd.f32 %v533, 1.0
    %v535 = vrcp.pop %v534
    %v536 = vmul.f32 1.0, %v535
    %538 = vrot.lane.b32.xlu0 %v527, 64
    %v539 = vpop.permute.xlu0 %538
    %v541 = vmul.f32 %v536, %v539
    %543 = vrot.lane.b32.xlu0 %v541, 64
    %v544 = vpop.permute.xlu0 %543
    %v546 = vadd.f32 %v455, %v544
    %v547 = vtanh.pop %v546
    %v548 = vsub.f32 1.0, %v536
    %550 = vrot.lane.b32.xlu0 %v547, 96
    %v551 = vpop.permute.xlu0 %550
    %v553 = vmul.f32 %v548, %v551
    %v554 = vmul.f32 %v536, %v376
    %v555 = vadd.f32 %v553, %v554
    %557 = vrot.lane.b32.xlu0 %v555, 96
    %v558 = vpop.permute.xlu0 %557
    %s560 = scalar_lea.vmem [#allocation2], 2
    %561 = vst.msk [vmem:[%s560] sm:$0x3] %vm381, %v558
    %s562 = scalar_lea.vmem [#allocation3], 4
    %v563 = vld [vmem:[%s562] sm:$0x3]
    %v565 = vsel %vm198, %v563, 0
    %567 = vmatprep.subr.mxu0 0.0
    %568 = vmatpush1.msra.mxu0 %v181
    %569 = vmatprep.subr.mxu0 0.0
    %570 = vmatpush1.msra.mxu0 %v182
    %571 = vmatprep.subr.mxu0 0.0
    %572 = vmatpush1.msra.mxu0 %v183
    %573 = vmatprep.subr.mxu0 0.0
    %574 = vmatpush1.msra.mxu0 %v184
    %575 = vmatprep.subr.mxu0 0.0
    %576 = vmatpush1.msra.mxu0 0.0
    %577 = vmatprep.subr.mxu0 0.0
    %578 = vmatpush1.msra.mxu0 0.0
    %579 = vmatprep.subr.mxu0 0.0
    %580 = vmatpush1.msra.mxu0 0.0
    %581 = vmatprep.subr.mxu0 0.0
    %582 = vmatpush1.msra.mxu0 0.0
    %583 = vmatprep.subr.mxu0 0.0
    %584 = vmatpush1.msra.mxu0 0.0
    %585 = vmatprep.subr.mxu0 0.0
    %586 = vmatpush1.msra.mxu0 0.0
    %587 = vmatprep.subr.mxu0 0.0
    %588 = vmatpush1.msra.mxu0 0.0
    %589 = vmatprep.subr.mxu0 0.0
    %590 = vmatpush1.msra.mxu0 0.0
    %591 = vmatprep.subr.mxu0 0.0
    %592 = vmatpush1.msra.mxu0 0.0
    %593 = vmatprep.subr.mxu0 0.0
    %594 = vmatpush1.msra.mxu0 0.0
    %595 = vmatprep.subr.mxu0 0.0
    %596 = vmatpush1.msra.mxu0 0.0
    %597 = vmatprep.subr.mxu0 0.0
    %598 = vmatpush1.msra.mxu0 0.0
    %599 = vmatprep.subr.mxu0 0.0
    %600 = vmatpush1.msra.mxu0 0.0
    %601 = vmatprep.subr.mxu0 0.0
    %602 = vmatpush1.msra.mxu0 0.0
    %603 = vmatprep.subr.mxu0 0.0
    %604 = vmatpush1.msra.mxu0 0.0
    %605 = vmatprep.subr.mxu0 0.0
    %606 = vmatpush1.msra.mxu0 0.0
    %607 = vmatprep.subr.mxu0 0.0
    %608 = vmatpush1.msra.mxu0 0.0
    %609 = vmatprep.subr.mxu0 0.0
    %610 = vmatpush1.msra.mxu0 0.0
    %611 = vmatprep.subr.mxu0 0.0
    %612 = vmatpush1.msra.mxu0 0.0
    %613 = vmatprep.subr.mxu0 0.0
    %614 = vmatpush1.msra.mxu0 0.0
    %615 = vmatprep.subr.mxu0 0.0
    %616 = vmatpush1.msra.mxu0 0.0
    %617 = vmatprep.subr.mxu0 0.0
    %618 = vmatpush1.msra.mxu0 0.0
    %619 = vmatprep.subr.mxu0 0.0
    %620 = vmatpush1.msra.mxu0 0.0
    %621 = vmatprep.subr.mxu0 0.0
    %622 = vmatpush1.msra.mxu0 0.0
    %623 = vmatprep.subr.mxu0 0.0
    %624 = vmatpush1.msra.mxu0 0.0
    %625 = vmatprep.subr.mxu0 0.0
    %626 = vmatpush1.msra.mxu0 0.0
    %627 = vmatprep.subr.mxu0 0.0
    %628 = vmatpush1.msra.mxu0 0.0
    %629 = vmatprep.subr.mxu0 0.0
    %630 = vmatpush1.msra.mxu0 0.0
    %631 = vmatprep.mubr.f32.mxu0 0.0
    %632 = vmatmul.mubr.f32.gmra.mrb[0].mxu0 %v565
    %v633 = vpop.f32.mrb[0].mxu0
    %v634 = vadd.f32 %v196, %v633
    %v635 = vpop.f32.mrb[0].mxu0
    %636 = vdwg.mxu0
    %v637 = vsel %vm198, %v558, 0
    %639 = vmatprep.subr.mxu0 0.0
    %640 = vmatpush1.msra.mxu0 %v185
    %641 = vmatprep.subr.mxu0 0.0
    %642 = vmatpush1.msra.mxu0 %v186
    %643 = vmatprep.subr.mxu0 0.0
    %644 = vmatpush1.msra.mxu0 %v187
    %645 = vmatprep.subr.mxu0 0.0
    %646 = vmatpush1.msra.mxu0 %v188
    %647 = vmatprep.subr.mxu0 0.0
    %648 = vmatpush1.msra.mxu0 0.0
    %649 = vmatprep.subr.mxu0 0.0
    %650 = vmatpush1.msra.mxu0 0.0
    %651 = vmatprep.subr.mxu0 0.0
    %652 = vmatpush1.msra.mxu0 0.0
    %653 = vmatprep.subr.mxu0 0.0
    %654 = vmatpush1.msra.mxu0 0.0
    %655 = vmatprep.subr.mxu0 0.0
    %656 = vmatpush1.msra.mxu0 0.0
    %657 = vmatprep.subr.mxu0 0.0
    %658 = vmatpush1.msra.mxu0 0.0
    %659 = vmatprep.subr.mxu0 0.0
    %660 = vmatpush1.msra.mxu0 0.0
    %661 = vmatprep.subr.mxu0 0.0
    %662 = vmatpush1.msra.mxu0 0.0
    %663 = vmatprep.subr.mxu0 0.0
    %664 = vmatpush1.msra.mxu0 0.0
    %665 = vmatprep.subr.mxu0 0.0
    %666 = vmatpush1.msra.mxu0 0.0
    %667 = vmatprep.subr.mxu0 0.0
    %668 = vmatpush1.msra.mxu0 0.0
    %669 = vmatprep.subr.mxu0 0.0
    %670 = vmatpush1.msra.mxu0 0.0
    %671 = vmatprep.subr.mxu0 0.0
    %672 = vmatpush1.msra.mxu0 0.0
    %673 = vmatprep.subr.mxu0 0.0
    %674 = vmatpush1.msra.mxu0 0.0
    %675 = vmatprep.subr.mxu0 0.0
    %676 = vmatpush1.msra.mxu0 0.0
    %677 = vmatprep.subr.mxu0 0.0
    %678 = vmatpush1.msra.mxu0 0.0
    %679 = vmatprep.subr.mxu0 0.0
    %680 = vmatpush1.msra.mxu0 0.0
    %681 = vmatprep.subr.mxu0 0.0
    %682 = vmatpush1.msra.mxu0 0.0
    %683 = vmatprep.subr.mxu0 0.0
    %684 = vmatpush1.msra.mxu0 0.0
    %685 = vmatprep.subr.mxu0 0.0
    %686 = vmatpush1.msra.mxu0 0.0
    %687 = vmatprep.subr.mxu0 0.0
    %688 = vmatpush1.msra.mxu0 0.0
    %689 = vmatprep.subr.mxu0 0.0
    %690 = vmatpush1.msra.mxu0 0.0
    %691 = vmatprep.subr.mxu0 0.0
    %692 = vmatpush1.msra.mxu0 0.0
    %693 = vmatprep.subr.mxu0 0.0
    %694 = vmatpush1.msra.mxu0 0.0
    %695 = vmatprep.subr.mxu0 0.0
    %696 = vmatpush1.msra.mxu0 0.0
    %697 = vmatprep.subr.mxu0 0.0
    %698 = vmatpush1.msra.mxu0 0.0
    %699 = vmatprep.subr.mxu0 0.0
    %700 = vmatpush1.msra.mxu0 0.0
    %701 = vmatprep.subr.mxu0 0.0
    %702 = vmatpush1.msra.mxu0 0.0
    %703 = vmatprep.mubr.f32.mxu0 0.0
    %704 = vmatmul.mubr.f32.gmra.mrb[0].mxu0 %v637
    %v705 = vpop.f32.mrb[0].mxu0
    %v706 = vadd.f32 %v276, %v705
    %v707 = vpop.f32.mrb[0].mxu0
    %708 = vdwg.mxu0
    %v709 = vadd.f32 %v634, %v706
    %v710 = vxor.u32 %v709, 2147483648
    %v711 = vmul.f32 %v710, 1.442695
    %v712 = vpow.pop %v711
    %v713 = vadd.f32 %v712, 1.0
    %v714 = vrcp.pop %v713
    %v715 = vmul.f32 1.0, %v714
    %717 = vrot.lane.b32.xlu0 %v706, 64
    %v718 = vpop.permute.xlu0 %717
    %v720 = vmul.f32 %v715, %v718
    %722 = vrot.lane.b32.xlu0 %v720, 64
    %v723 = vpop.permute.xlu0 %722
    %v725 = vadd.f32 %v634, %v723
    %v726 = vtanh.pop %v725
    %v727 = vsub.f32 1.0, %v715
    %729 = vrot.lane.b32.xlu0 %v726, 96
    %v730 = vpop.permute.xlu0 %729
    %v732 = vmul.f32 %v727, %v730
    %v733 = vmul.f32 %v715, %v555
    %v734 = vadd.f32 %v732, %v733
    %736 = vrot.lane.b32.xlu0 %v734, 96
    %v737 = vpop.permute.xlu0 %736
    %s739 = scalar_lea.vmem [#allocation2], 4
    %740 = vst.msk [vmem:[%s739] sm:$0x3] %vm381, %v737
    %s741 = scalar_lea.vmem [#allocation3], 6
    %v742 = vld [vmem:[%s741] sm:$0x3]
    %v744 = vsel %vm198, %v742, 0
    %746 = vmatprep.subr.mxu0 0.0
    %747 = vmatpush1.msra.mxu0 %v181
    %748 = vmatprep.subr.mxu0 0.0
    %749 = vmatpush1.msra.mxu0 %v182
    %750 = vmatprep.subr.mxu0 0.0
    %751 = vmatpush1.msra.mxu0 %v183
    %752 = vmatprep.subr.mxu0 0.0
    %753 = vmatpush1.msra.mxu0 %v184
    %754 = vmatprep.subr.mxu0 0.0
    %755 = vmatpush1.msra.mxu0 0.0
    %756 = vmatprep.subr.mxu0 0.0
    %757 = vmatpush1.msra.mxu0 0.0
    %758 = vmatprep.subr.mxu0 0.0
    %759 = vmatpush1.msra.mxu0 0.0
    %760 = vmatprep.subr.mxu0 0.0
    %761 = vmatpush1.msra.mxu0 0.0
    %762 = vmatprep.subr.mxu0 0.0
    %763 = vmatpush1.msra.mxu0 0.0
    %764 = vmatprep.subr.mxu0 0.0
    %765 = vmatpush1.msra.mxu0 0.0
    %766 = vmatprep.subr.mxu0 0.0
    %767 = vmatpush1.msra.mxu0 0.0
    %768 = vmatprep.subr.mxu0 0.0
    %769 = vmatpush1.msra.mxu0 0.0
    %770 = vmatprep.subr.mxu0 0.0
    %771 = vmatpush1.msra.mxu0 0.0
    %772 = vmatprep.subr.mxu0 0.0
    %773 = vmatpush1.msra.mxu0 0.0
    %774 = vmatprep.subr.mxu0 0.0
    %775 = vmatpush1.msra.mxu0 0.0
    %776 = vmatprep.subr.mxu0 0.0
    %777 = vmatpush1.msra.mxu0 0.0
    %778 = vmatprep.subr.mxu0 0.0
    %779 = vmatpush1.msra.mxu0 0.0
    %780 = vmatprep.subr.mxu0 0.0
    %781 = vmatpush1.msra.mxu0 0.0
    %782 = vmatprep.subr.mxu0 0.0
    %783 = vmatpush1.msra.mxu0 0.0
    %784 = vmatprep.subr.mxu0 0.0
    %785 = vmatpush1.msra.mxu0 0.0
    %786 = vmatprep.subr.mxu0 0.0
    %787 = vmatpush1.msra.mxu0 0.0
    %788 = vmatprep.subr.mxu0 0.0
    %789 = vmatpush1.msra.mxu0 0.0
    %790 = vmatprep.subr.mxu0 0.0
    %791 = vmatpush1.msra.mxu0 0.0
    %792 = vmatprep.subr.mxu0 0.0
    %793 = vmatpush1.msra.mxu0 0.0
    %794 = vmatprep.subr.mxu0 0.0
    %795 = vmatpush1.msra.mxu0 0.0
    %796 = vmatprep.subr.mxu0 0.0
    %797 = vmatpush1.msra.mxu0 0.0
    %798 = vmatprep.subr.mxu0 0.0
    %799 = vmatpush1.msra.mxu0 0.0
    %800 = vmatprep.subr.mxu0 0.0
    %801 = vmatpush1.msra.mxu0 0.0
    %802 = vmatprep.subr.mxu0 0.0
    %803 = vmatpush1.msra.mxu0 0.0
    %804 = vmatprep.subr.mxu0 0.0
    %805 = vmatpush1.msra.mxu0 0.0
    %806 = vmatprep.subr.mxu0 0.0
    %807 = vmatpush1.msra.mxu0 0.0
    %808 = vmatprep.subr.mxu0 0.0
    %809 = vmatpush1.msra.mxu0 0.0
    %810 = vmatprep.mubr.f32.mxu0 0.0
    %811 = vmatmul.mubr.f32.gmra.mrb[0].mxu0 %v744
    %v812 = vpop.f32.mrb[0].mxu0
    %v813 = vadd.f32 %v196, %v812
    %v814 = vpop.f32.mrb[0].mxu0
    %815 = vdwg.mxu0
    %v816 = vsel %vm198, %v737, 0
    %818 = vmatprep.subr.mxu0 0.0
    %819 = vmatpush1.msra.mxu0 %v185
    %820 = vmatprep.subr.mxu0 0.0
    %821 = vmatpush1.msra.mxu0 %v186
    %822 = vmatprep.subr.mxu0 0.0
    %823 = vmatpush1.msra.mxu0 %v187
    %824 = vmatprep.subr.mxu0 0.0
    %825 = vmatpush1.msra.mxu0 %v188
    %826 = vmatprep.subr.mxu0 0.0
    %827 = vmatpush1.msra.mxu0 0.0
    %828 = vmatprep.subr.mxu0 0.0
    %829 = vmatpush1.msra.mxu0 0.0
    %830 = vmatprep.subr.mxu0 0.0
    %831 = vmatpush1.msra.mxu0 0.0
    %832 = vmatprep.subr.mxu0 0.0
    %833 = vmatpush1.msra.mxu0 0.0
    %834 = vmatprep.subr.mxu0 0.0
    %835 = vmatpush1.msra.mxu0 0.0
    %836 = vmatprep.subr.mxu0 0.0
    %837 = vmatpush1.msra.mxu0 0.0
    %838 = vmatprep.subr.mxu0 0.0
    %839 = vmatpush1.msra.mxu0 0.0
    %840 = vmatprep.subr.mxu0 0.0
    %841 = vmatpush1.msra.mxu0 0.0
    %842 = vmatprep.subr.mxu0 0.0
    %843 = vmatpush1.msra.mxu0 0.0
    %844 = vmatprep.subr.mxu0 0.0
    %845 = vmatpush1.msra.mxu0 0.0
    %846 = vmatprep.subr.mxu0 0.0
    %847 = vmatpush1.msra.mxu0 0.0
    %848 = vmatprep.subr.mxu0 0.0
    %849 = vmatpush1.msra.mxu0 0.0
    %850 = vmatprep.subr.mxu0 0.0
    %851 = vmatpush1.msra.mxu0 0.0
    %852 = vmatprep.subr.mxu0 0.0
    %853 = vmatpush1.msra.mxu0 0.0
    %854 = vmatprep.subr.mxu0 0.0
    %855 = vmatpush1.msra.mxu0 0.0
    %856 = vmatprep.subr.mxu0 0.0
    %857 = vmatpush1.msra.mxu0 0.0
    %858 = vmatprep.subr.mxu0 0.0
    %859 = vmatpush1.msra.mxu0 0.0
    %860 = vmatprep.subr.mxu0 0.0
    %861 = vmatpush1.msra.mxu0 0.0
    %862 = vmatprep.subr.mxu0 0.0
    %863 = vmatpush1.msra.mxu0 0.0
    %864 = vmatprep.subr.mxu0 0.0
    %865 = vmatpush1.msra.mxu0 0.0
    %866 = vmatprep.subr.mxu0 0.0
    %867 = vmatpush1.msra.mxu0 0.0
    %868 = vmatprep.subr.mxu0 0.0
    %869 = vmatpush1.msra.mxu0 0.0
    %870 = vmatprep.subr.mxu0 0.0
    %871 = vmatpush1.msra.mxu0 0.0
    %872 = vmatprep.subr.mxu0 0.0
    %873 = vmatpush1.msra.mxu0 0.0
    %874 = vmatprep.subr.mxu0 0.0
    %875 = vmatpush1.msra.mxu0 0.0
    %876 = vmatprep.subr.mxu0 0.0
    %877 = vmatpush1.msra.mxu0 0.0
    %878 = vmatprep.subr.mxu0 0.0
    %879 = vmatpush1.msra.mxu0 0.0
    %880 = vmatprep.subr.mxu0 0.0
    %881 = vmatpush1.msra.mxu0 0.0
    %882 = vmatprep.mubr.f32.mxu0 0.0
    %883 = vmatmul.mubr.f32.gmra.mrb[0].mxu0 %v816
    %v884 = vpop.f32.mrb[0].mxu0
    %v885 = vadd.f32 %v276, %v884
    %v886 = vpop.f32.mrb[0].mxu0
    %887 = vdwg.mxu0
    %v888 = vadd.f32 %v813, %v885
    %v889 = vxor.u32 %v888, 2147483648
    %v890 = vmul.f32 %v889, 1.442695
    %v891 = vpow.pop %v890
    %v892 = vadd.f32 %v891, 1.0
    %v893 = vrcp.pop %v892
    %v894 = vmul.f32 1.0, %v893
    %896 = vrot.lane.b32.xlu0 %v885, 64
    %v897 = vpop.permute.xlu0 %896
    %v899 = vmul.f32 %v894, %v897
    %901 = vrot.lane.b32.xlu0 %v899, 64
    %v902 = vpop.permute.xlu0 %901
    %v904 = vadd.f32 %v813, %v902
    %v905 = vtanh.pop %v904
    %v906 = vsub.f32 1.0, %v894
    %908 = vrot.lane.b32.xlu0 %v905, 96
    %v909 = vpop.permute.xlu0 %908
    %v911 = vmul.f32 %v906, %v909
    %v912 = vmul.f32 %v894, %v734
    %v913 = vadd.f32 %v911, %v912
    %915 = vrot.lane.b32.xlu0 %v913, 96
    %v916 = vpop.permute.xlu0 %915
    %s918 = scalar_lea.vmem [#allocation2], 6
    %919 = vst.msk [vmem:[%s918] sm:$0x3] %vm381, %v916
    %s920 = scalar_lea.vmem [#allocation3], 8
    %v921 = vld [vmem:[%s920] sm:$0x3]
    %v923 = vsel %vm198, %v921, 0
    %925 = vmatprep.subr.mxu0 0.0
    %926 = vmatpush1.msra.mxu0 %v181
    %927 = vmatprep.subr.mxu0 0.0
    %928 = vmatpush1.msra.mxu0 %v182
    %929 = vmatprep.subr.mxu0 0.0
    %930 = vmatpush1.msra.mxu0 %v183
    %931 = vmatprep.subr.mxu0 0.0
    %932 = vmatpush1.msra.mxu0 %v184
    %933 = vmatprep.subr.mxu0 0.0
    %934 = vmatpush1.msra.mxu0 0.0
    %935 = vmatprep.subr.mxu0 0.0
    %936 = vmatpush1.msra.mxu0 0.0
    %937 = vmatprep.subr.mxu0 0.0
    %938 = vmatpush1.msra.mxu0 0.0
    %939 = vmatprep.subr.mxu0 0.0
    %940 = vmatpush1.msra.mxu0 0.0
    %941 = vmatprep.subr.mxu0 0.0
    %942 = vmatpush1.msra.mxu0 0.0
    %943 = vmatprep.subr.mxu0 0.0
    %944 = vmatpush1.msra.mxu0 0.0
    %945 = vmatprep.subr.mxu0 0.0
    %946 = vmatpush1.msra.mxu0 0.0
    %947 = vmatprep.subr.mxu0 0.0
    %948 = vmatpush1.msra.mxu0 0.0
    %949 = vmatprep.subr.mxu0 0.0
    %950 = vmatpush1.msra.mxu0 0.0
    %951 = vmatprep.subr.mxu0 0.0
    %952 = vmatpush1.msra.mxu0 0.0
    %953 = vmatprep.subr.mxu0 0.0
    %954 = vmatpush1.msra.mxu0 0.0
    %955 = vmatprep.subr.mxu0 0.0
    %956 = vmatpush1.msra.mxu0 0.0
    %957 = vmatprep.subr.mxu0 0.0
    %958 = vmatpush1.msra.mxu0 0.0
    %959 = vmatprep.subr.mxu0 0.0
    %960 = vmatpush1.msra.mxu0 0.0
    %961 = vmatprep.subr.mxu0 0.0
    %962 = vmatpush1.msra.mxu0 0.0
    %963 = vmatprep.subr.mxu0 0.0
    %964 = vmatpush1.msra.mxu0 0.0
    %965 = vmatprep.subr.mxu0 0.0
    %966 = vmatpush1.msra.mxu0 0.0
    %967 = vmatprep.subr.mxu0 0.0
    %968 = vmatpush1.msra.mxu0 0.0
    %969 = vmatprep.subr.mxu0 0.0
    %970 = vmatpush1.msra.mxu0 0.0
    %971 = vmatprep.subr.mxu0 0.0
    %972 = vmatpush1.msra.mxu0 0.0
    %973 = vmatprep.subr.mxu0 0.0
    %974 = vmatpush1.msra.mxu0 0.0
    %975 = vmatprep.subr.mxu0 0.0
    %976 = vmatpush1.msra.mxu0 0.0
    %977 = vmatprep.subr.mxu0 0.0
    %978 = vmatpush1.msra.mxu0 0.0
    %979 = vmatprep.subr.mxu0 0.0
    %980 = vmatpush1.msra.mxu0 0.0
    %981 = vmatprep.subr.mxu0 0.0
    %982 = vmatpush1.msra.mxu0 0.0
    %983 = vmatprep.subr.mxu0 0.0
    %984 = vmatpush1.msra.mxu0 0.0
    %985 = vmatprep.subr.mxu0 0.0
    %986 = vmatpush1.msra.mxu0 0.0
    %987 = vmatprep.subr.mxu0 0.0
    %988 = vmatpush1.msra.mxu0 0.0
    %989 = vmatprep.mubr.f32.mxu0 0.0
    %990 = vmatmul.mubr.f32.gmra.mrb[0].mxu0 %v923
    %v991 = vpop.f32.mrb[0].mxu0
    %v992 = vadd.f32 %v196, %v991
    %v993 = vpop.f32.mrb[0].mxu0
    %994 = vdwg.mxu0
    %v995 = vsel %vm198, %v916, 0
    %997 = vmatprep.subr.mxu0 0.0
    %998 = vmatpush1.msra.mxu0 %v185
    %999 = vmatprep.subr.mxu0 0.0
    %1000 = vmatpush1.msra.mxu0 %v186
    %1001 = vmatprep.subr.mxu0 0.0
    %1002 = vmatpush1.msra.mxu0 %v187
    %1003 = vmatprep.subr.mxu0 0.0
    %1004 = vmatpush1.msra.mxu0 %v188
    %1005 = vmatprep.subr.mxu0 0.0
    %1006 = vmatpush1.msra.mxu0 0.0
    %1007 = vmatprep.subr.mxu0 0.0
    %1008 = vmatpush1.msra.mxu0 0.0
    %1009 = vmatprep.subr.mxu0 0.0
    %1010 = vmatpush1.msra.mxu0 0.0
    %1011 = vmatprep.subr.mxu0 0.0
    %1012 = vmatpush1.msra.mxu0 0.0
    %1013 = vmatprep.subr.mxu0 0.0
    %1014 = vmatpush1.msra.mxu0 0.0
    %1015 = vmatprep.subr.mxu0 0.0
    %1016 = vmatpush1.msra.mxu0 0.0
    %1017 = vmatprep.subr.mxu0 0.0
    %1018 = vmatpush1.msra.mxu0 0.0
    %1019 = vmatprep.subr.mxu0 0.0
    %1020 = vmatpush1.msra.mxu0 0.0
    %1021 = vmatprep.subr.mxu0 0.0
    %1022 = vmatpush1.msra.mxu0 0.0
    %1023 = vmatprep.subr.mxu0 0.0
    %1024 = vmatpush1.msra.mxu0 0.0
    %1025 = vmatprep.subr.mxu0 0.0
    %1026 = vmatpush1.msra.mxu0 0.0
    %1027 = vmatprep.subr.mxu0 0.0
    %1028 = vmatpush1.msra.mxu0 0.0
    %1029 = vmatprep.subr.mxu0 0.0
    %1030 = vmatpush1.msra.mxu0 0.0
    %1031 = vmatprep.subr.mxu0 0.0
    %1032 = vmatpush1.msra.mxu0 0.0
    %1033 = vmatprep.subr.mxu0 0.0
    %1034 = vmatpush1.msra.mxu0 0.0
    %1035 = vmatprep.subr.mxu0 0.0
    %1036 = vmatpush1.msra.mxu0 0.0
    %1037 = vmatprep.subr.mxu0 0.0
    %1038 = vmatpush1.msra.mxu0 0.0
    %1039 = vmatprep.subr.mxu0 0.0
    %1040 = vmatpush1.msra.mxu0 0.0
    %1041 = vmatprep.subr.mxu0 0.0
    %1042 = vmatpush1.msra.mxu0 0.0
    %1043 = vmatprep.subr.mxu0 0.0
    %1044 = vmatpush1.msra.mxu0 0.0
    %1045 = vmatprep.subr.mxu0 0.0
    %1046 = vmatpush1.msra.mxu0 0.0
    %1047 = vmatprep.subr.mxu0 0.0
    %1048 = vmatpush1.msra.mxu0 0.0
    %1049 = vmatprep.subr.mxu0 0.0
    %1050 = vmatpush1.msra.mxu0 0.0
    %1051 = vmatprep.subr.mxu0 0.0
    %1052 = vmatpush1.msra.mxu0 0.0
    %1053 = vmatprep.subr.mxu0 0.0
    %1054 = vmatpush1.msra.mxu0 0.0
    %1055 = vmatprep.subr.mxu0 0.0
    %1056 = vmatpush1.msra.mxu0 0.0
    %1057 = vmatprep.subr.mxu0 0.0
    %1058 = vmatpush1.msra.mxu0 0.0
    %1059 = vmatprep.subr.mxu0 0.0
    %1060 = vmatpush1.msra.mxu0 0.0
    %1061 = vmatprep.mubr.f32.mxu0 0.0
    %1062 = vmatmul.mubr.f32.gmra.mrb[0].mxu0 %v995
    %v1063 = vpop.f32.mrb[0].mxu0
    %v1064 = vadd.f32 %v276, %v1063
    %v1065 = vpop.f32.mrb[0].mxu0
    %1066 = vdwg.mxu0
    %v1067 = vadd.f32 %v992, %v1064
    %v1068 = vxor.u32 %v1067, 2147483648
    %v1069 = vmul.f32 %v1068, 1.442695
    %v1070 = vpow.pop %v1069
    %v1071 = vadd.f32 %v1070, 1.0
    %v1072 = vrcp.pop %v1071
    %v1073 = vmul.f32 1.0, %v1072
    %1075 = vrot.lane.b32.xlu0 %v1064, 64
    %v1076 = vpop.permute.xlu0 %1075
    %v1078 = vmul.f32 %v1073, %v1076
    %1080 = vrot.lane.b32.xlu0 %v1078, 64
    %v1081 = vpop.permute.xlu0 %1080
    %v1083 = vadd.f32 %v992, %v1081
    %v1084 = vtanh.pop %v1083
    %v1085 = vsub.f32 1.0, %v1073
    %1087 = vrot.lane.b32.xlu0 %v1084, 96
    %v1088 = vpop.permute.xlu0 %1087
    %v1090 = vmul.f32 %v1085, %v1088
    %v1091 = vmul.f32 %v1073, %v913
    %v1092 = vadd.f32 %v1090, %v1091
    %1094 = vrot.lane.b32.xlu0 %v1092, 96
    %v1095 = vpop.permute.xlu0 %1094
    %s1097 = scalar_lea.vmem [#allocation2], 8
    %1098 = vst.msk [vmem:[%s1097] sm:$0x3] %vm381, %v1095
    %s1099 = scalar_lea.vmem [#allocation3], 10
    %v1100 = vld [vmem:[%s1099] sm:$0x3]
    %v1102 = vsel %vm198, %v1100, 0
    %1104 = vmatprep.subr.mxu0 0.0
    %1105 = vmatpush1.msra.mxu0 %v181
    %1106 = vmatprep.subr.mxu0 0.0
    %1107 = vmatpush1.msra.mxu0 %v182
    %1108 = vmatprep.subr.mxu0 0.0
    %1109 = vmatpush1.msra.mxu0 %v183
    %1110 = vmatprep.subr.mxu0 0.0
    %1111 = vmatpush1.msra.mxu0 %v184
    %1112 = vmatprep.subr.mxu0 0.0
    %1113 = vmatpush1.msra.mxu0 0.0
    %1114 = vmatprep.subr.mxu0 0.0
    %1115 = vmatpush1.msra.mxu0 0.0
    %1116 = vmatprep.subr.mxu0 0.0
    %1117 = vmatpush1.msra.mxu0 0.0
    %1118 = vmatprep.subr.mxu0 0.0
    %1119 = vmatpush1.msra.mxu0 0.0
    %1120 = vmatprep.subr.mxu0 0.0
    %1121 = vmatpush1.msra.mxu0 0.0
    %1122 = vmatprep.subr.mxu0 0.0
    %1123 = vmatpush1.msra.mxu0 0.0
    %1124 = vmatprep.subr.mxu0 0.0
    %1125 = vmatpush1.msra.mxu0 0.0
    %1126 = vmatprep.subr.mxu0 0.0
    %1127 = vmatpush1.msra.mxu0 0.0
    %1128 = vmatprep.subr.mxu0 0.0
    %1129 = vmatpush1.msra.mxu0 0.0
    %1130 = vmatprep.subr.mxu0 0.0
    %1131 = vmatpush1.msra.mxu0 0.0
    %1132 = vmatprep.subr.mxu0 0.0
    %1133 = vmatpush1.msra.mxu0 0.0
    %1134 = vmatprep.subr.mxu0 0.0
    %1135 = vmatpush1.msra.mxu0 0.0
    %1136 = vmatprep.subr.mxu0 0.0
    %1137 = vmatpush1.msra.mxu0 0.0
    %1138 = vmatprep.subr.mxu0 0.0
    %1139 = vmatpush1.msra.mxu0 0.0
    %1140 = vmatprep.subr.mxu0 0.0
    %1141 = vmatpush1.msra.mxu0 0.0
    %1142 = vmatprep.subr.mxu0 0.0
    %1143 = vmatpush1.msra.mxu0 0.0
    %1144 = vmatprep.subr.mxu0 0.0
    %1145 = vmatpush1.msra.mxu0 0.0
    %1146 = vmatprep.subr.mxu0 0.0
    %1147 = vmatpush1.msra.mxu0 0.0
    %1148 = vmatprep.subr.mxu0 0.0
    %1149 = vmatpush1.msra.mxu0 0.0
    %1150 = vmatprep.subr.mxu0 0.0
    %1151 = vmatpush1.msra.mxu0 0.0
    %1152 = vmatprep.subr.mxu0 0.0
    %1153 = vmatpush1.msra.mxu0 0.0
    %1154 = vmatprep.subr.mxu0 0.0
    %1155 = vmatpush1.msra.mxu0 0.0
    %1156 = vmatprep.subr.mxu0 0.0
    %1157 = vmatpush1.msra.mxu0 0.0
    %1158 = vmatprep.subr.mxu0 0.0
    %1159 = vmatpush1.msra.mxu0 0.0
    %1160 = vmatprep.subr.mxu0 0.0
    %1161 = vmatpush1.msra.mxu0 0.0
    %1162 = vmatprep.subr.mxu0 0.0
    %1163 = vmatpush1.msra.mxu0 0.0
    %1164 = vmatprep.subr.mxu0 0.0
    %1165 = vmatpush1.msra.mxu0 0.0
    %1166 = vmatprep.subr.mxu0 0.0
    %1167 = vmatpush1.msra.mxu0 0.0
    %1168 = vmatprep.mubr.f32.mxu0 0.0
    %1169 = vmatmul.mubr.f32.gmra.mrb[0].mxu0 %v1102
    %v1170 = vpop.f32.mrb[0].mxu0
    %v1171 = vadd.f32 %v196, %v1170
    %v1172 = vpop.f32.mrb[0].mxu0
    %1173 = vdwg.mxu0
    %v1174 = vsel %vm198, %v1095, 0
    %1176 = vmatprep.subr.mxu0 0.0
    %1177 = vmatpush1.msra.mxu0 %v185
    %1178 = vmatprep.subr.mxu0 0.0
    %1179 = vmatpush1.msra.mxu0 %v186
    %1180 = vmatprep.subr.mxu0 0.0
    %1181 = vmatpush1.msra.mxu0 %v187
    %1182 = vmatprep.subr.mxu0 0.0
    %1183 = vmatpush1.msra.mxu0 %v188
    %1184 = vmatprep.subr.mxu0 0.0
    %1185 = vmatpush1.msra.mxu0 0.0
    %1186 = vmatprep.subr.mxu0 0.0
    %1187 = vmatpush1.msra.mxu0 0.0
    %1188 = vmatprep.subr.mxu0 0.0
    %1189 = vmatpush1.msra.mxu0 0.0
    %1190 = vmatprep.subr.mxu0 0.0
    %1191 = vmatpush1.msra.mxu0 0.0
    %1192 = vmatprep.subr.mxu0 0.0
    %1193 = vmatpush1.msra.mxu0 0.0
    %1194 = vmatprep.subr.mxu0 0.0
    %1195 = vmatpush1.msra.mxu0 0.0
    %1196 = vmatprep.subr.mxu0 0.0
    %1197 = vmatpush1.msra.mxu0 0.0
    %1198 = vmatprep.subr.mxu0 0.0
    %1199 = vmatpush1.msra.mxu0 0.0
    %1200 = vmatprep.subr.mxu0 0.0
    %1201 = vmatpush1.msra.mxu0 0.0
    %1202 = vmatprep.subr.mxu0 0.0
    %1203 = vmatpush1.msra.mxu0 0.0
    %1204 = vmatprep.subr.mxu0 0.0
    %1205 = vmatpush1.msra.mxu0 0.0
    %1206 = vmatprep.subr.mxu0 0.0
    %1207 = vmatpush1.msra.mxu0 0.0
    %1208 = vmatprep.subr.mxu0 0.0
    %1209 = vmatpush1.msra.mxu0 0.0
    %1210 = vmatprep.subr.mxu0 0.0
    %1211 = vmatpush1.msra.mxu0 0.0
    %1212 = vmatprep.subr.mxu0 0.0
    %1213 = vmatpush1.msra.mxu0 0.0
    %1214 = vmatprep.subr.mxu0 0.0
    %1215 = vmatpush1.msra.mxu0 0.0
    %1216 = vmatprep.subr.mxu0 0.0
    %1217 = vmatpush1.msra.mxu0 0.0
    %1218 = vmatprep.subr.mxu0 0.0
    %1219 = vmatpush1.msra.mxu0 0.0
    %1220 = vmatprep.subr.mxu0 0.0
    %1221 = vmatpush1.msra.mxu0 0.0
    %1222 = vmatprep.subr.mxu0 0.0
    %1223 = vmatpush1.msra.mxu0 0.0
    %1224 = vmatprep.subr.mxu0 0.0
    %1225 = vmatpush1.msra.mxu0 0.0
    %1226 = vmatprep.subr.mxu0 0.0
    %1227 = vmatpush1.msra.mxu0 0.0
    %1228 = vmatprep.subr.mxu0 0.0
    %1229 = vmatpush1.msra.mxu0 0.0
    %1230 = vmatprep.subr.mxu0 0.0
    %1231 = vmatpush1.msra.mxu0 0.0
    %1232 = vmatprep.subr.mxu0 0.0
    %1233 = vmatpush1.msra.mxu0 0.0
    %1234 = vmatprep.subr.mxu0 0.0
    %1235 = vmatpush1.msra.mxu0 0.0
    %1236 = vmatprep.subr.mxu0 0.0
    %1237 = vmatpush1.msra.mxu0 0.0
    %1238 = vmatprep.subr.mxu0 0.0
    %1239 = vmatpush1.msra.mxu0 0.0
    %1240 = vmatprep.mubr.f32.mxu0 0.0
    %1241 = vmatmul.mubr.f32.gmra.mrb[0].mxu0 %v1174
    %v1242 = vpop.f32.mrb[0].mxu0
    %v1243 = vadd.f32 %v276, %v1242
    %v1244 = vpop.f32.mrb[0].mxu0
    %1245 = vdwg.mxu0
    %v1246 = vadd.f32 %v1171, %v1243
    %v1247 = vxor.u32 %v1246, 2147483648
    %v1248 = vmul.f32 %v1247, 1.442695
    %v1249 = vpow.pop %v1248
    %v1250 = vadd.f32 %v1249, 1.0
    %v1251 = vrcp.pop %v1250
    %v1252 = vmul.f32 1.0, %v1251
    %1254 = vrot.lane.b32.xlu0 %v1243, 64
    %v1255 = vpop.permute.xlu0 %1254
    %v1257 = vmul.f32 %v1252, %v1255
    %1259 = vrot.lane.b32.xlu0 %v1257, 64
    %v1260 = vpop.permute.xlu0 %1259
    %v1262 = vadd.f32 %v1171, %v1260
    %v1263 = vtanh.pop %v1262
    %v1264 = vsub.f32 1.0, %v1252
    %1266 = vrot.lane.b32.xlu0 %v1263, 96
    %v1267 = vpop.permute.xlu0 %1266
    %v1269 = vmul.f32 %v1264, %v1267
    %v1270 = vmul.f32 %v1252, %v1092
    %v1271 = vadd.f32 %v1269, %v1270
    %1273 = vrot.lane.b32.xlu0 %v1271, 96
    %v1274 = vpop.permute.xlu0 %1273
    %s1276 = scalar_lea.vmem [#allocation2], 10
    %1277 = vst.msk [vmem:[%s1276] sm:$0x3] %vm381, %v1274
    %s1278 = scalar_lea.vmem [#allocation3], 12
    %v1279 = vld [vmem:[%s1278] sm:$0x3]
    %v1281 = vsel %vm198, %v1279, 0
    %1283 = vmatprep.subr.mxu0 0.0
    %1284 = vmatpush1.msra.mxu0 %v181
    %1285 = vmatprep.subr.mxu0 0.0
    %1286 = vmatpush1.msra.mxu0 %v182
    %1287 = vmatprep.subr.mxu0 0.0
    %1288 = vmatpush1.msra.mxu0 %v183
    %1289 = vmatprep.subr.mxu0 0.0
    %1290 = vmatpush1.msra.mxu0 %v184
    %1291 = vmatprep.subr.mxu0 0.0
    %1292 = vmatpush1.msra.mxu0 0.0
    %1293 = vmatprep.subr.mxu0 0.0
    %1294 = vmatpush1.msra.mxu0 0.0
    %1295 = vmatprep.subr.mxu0 0.0
    %1296 = vmatpush1.msra.mxu0 0.0
    %1297 = vmatprep.subr.mxu0 0.0
    %1298 = vmatpush1.msra.mxu0 0.0
    %1299 = vmatprep.subr.mxu0 0.0
    %1300 = vmatpush1.msra.mxu0 0.0
    %1301 = vmatprep.subr.mxu0 0.0
    %1302 = vmatpush1.msra.mxu0 0.0
    %1303 = vmatprep.subr.mxu0 0.0
    %1304 = vmatpush1.msra.mxu0 0.0
    %1305 = vmatprep.subr.mxu0 0.0
    %1306 = vmatpush1.msra.mxu0 0.0
    %1307 = vmatprep.subr.mxu0 0.0
    %1308 = vmatpush1.msra.mxu0 0.0
    %1309 = vmatprep.subr.mxu0 0.0
    %1310 = vmatpush1.msra.mxu0 0.0
    %1311 = vmatprep.subr.mxu0 0.0
    %1312 = vmatpush1.msra.mxu0 0.0
    %1313 = vmatprep.subr.mxu0 0.0
    %1314 = vmatpush1.msra.mxu0 0.0
    %1315 = vmatprep.subr.mxu0 0.0
    %1316 = vmatpush1.msra.mxu0 0.0
    %1317 = vmatprep.subr.mxu0 0.0
    %1318 = vmatpush1.msra.mxu0 0.0
    %1319 = vmatprep.subr.mxu0 0.0
    %1320 = vmatpush1.msra.mxu0 0.0
    %1321 = vmatprep.subr.mxu0 0.0
    %1322 = vmatpush1.msra.mxu0 0.0
    %1323 = vmatprep.subr.mxu0 0.0
    %1324 = vmatpush1.msra.mxu0 0.0
    %1325 = vmatprep.subr.mxu0 0.0
    %1326 = vmatpush1.msra.mxu0 0.0
    %1327 = vmatprep.subr.mxu0 0.0
    %1328 = vmatpush1.msra.mxu0 0.0
    %1329 = vmatprep.subr.mxu0 0.0
    %1330 = vmatpush1.msra.mxu0 0.0
    %1331 = vmatprep.subr.mxu0 0.0
    %1332 = vmatpush1.msra.mxu0 0.0
    %1333 = vmatprep.subr.mxu0 0.0
    %1334 = vmatpush1.msra.mxu0 0.0
    %1335 = vmatprep.subr.mxu0 0.0
    %1336 = vmatpush1.msra.mxu0 0.0
    %1337 = vmatprep.subr.mxu0 0.0
    %1338 = vmatpush1.msra.mxu0 0.0
    %1339 = vmatprep.subr.mxu0 0.0
    %1340 = vmatpush1.msra.mxu0 0.0
    %1341 = vmatprep.subr.mxu0 0.0
    %1342 = vmatpush1.msra.mxu0 0.0
    %1343 = vmatprep.subr.mxu0 0.0
    %1344 = vmatpush1.msra.mxu0 0.0
    %1345 = vmatprep.subr.mxu0 0.0
    %1346 = vmatpush1.msra.mxu0 0.0
    %1347 = vmatprep.mubr.f32.mxu0 0.0
    %1348 = vmatmul.mubr.f32.gmra.mrb[0].mxu0 %v1281
    %v1349 = vpop.f32.mrb[0].mxu0
    %v1350 = vadd.f32 %v196, %v1349
    %v1351 = vpop.f32.mrb[0].mxu0
    %1352 = vdwg.mxu0
    %v1353 = vsel %vm198, %v1274, 0
    %1355 = vmatprep.subr.mxu0 0.0
    %1356 = vmatpush1.msra.mxu0 %v185
    %1357 = vmatprep.subr.mxu0 0.0
    %1358 = vmatpush1.msra.mxu0 %v186
    %1359 = vmatprep.subr.mxu0 0.0
    %1360 = vmatpush1.msra.mxu0 %v187
    %1361 = vmatprep.subr.mxu0 0.0
    %1362 = vmatpush1.msra.mxu0 %v188
    %1363 = vmatprep.subr.mxu0 0.0
    %1364 = vmatpush1.msra.mxu0 0.0
    %1365 = vmatprep.subr.mxu0 0.0
    %1366 = vmatpush1.msra.mxu0 0.0
    %1367 = vmatprep.subr.mxu0 0.0
    %1368 = vmatpush1.msra.mxu0 0.0
    %1369 = vmatprep.subr.mxu0 0.0
    %1370 = vmatpush1.msra.mxu0 0.0
    %1371 = vmatprep.subr.mxu0 0.0
    %1372 = vmatpush1.msra.mxu0 0.0
    %1373 = vmatprep.subr.mxu0 0.0
    %1374 = vmatpush1.msra.mxu0 0.0
    %1375 = vmatprep.subr.mxu0 0.0
    %1376 = vmatpush1.msra.mxu0 0.0
    %1377 = vmatprep.subr.mxu0 0.0
    %1378 = vmatpush1.msra.mxu0 0.0
    %1379 = vmatprep.subr.mxu0 0.0
    %1380 = vmatpush1.msra.mxu0 0.0
    %1381 = vmatprep.subr.mxu0 0.0
    %1382 = vmatpush1.msra.mxu0 0.0
    %1383 = vmatprep.subr.mxu0 0.0
    %1384 = vmatpush1.msra.mxu0 0.0
    %1385 = vmatprep.subr.mxu0 0.0
    %1386 = vmatpush1.msra.mxu0 0.0
    %1387 = vmatprep.subr.mxu0 0.0
    %1388 = vmatpush1.msra.mxu0 0.0
    %1389 = vmatprep.subr.mxu0 0.0
    %1390 = vmatpush1.msra.mxu0 0.0
    %1391 = vmatprep.subr.mxu0 0.0
    %1392 = vmatpush1.msra.mxu0 0.0
    %1393 = vmatprep.subr.mxu0 0.0
    %1394 = vmatpush1.msra.mxu0 0.0
    %1395 = vmatprep.subr.mxu0 0.0
    %1396 = vmatpush1.msra.mxu0 0.0
    %1397 = vmatprep.subr.mxu0 0.0
    %1398 = vmatpush1.msra.mxu0 0.0
    %1399 = vmatprep.subr.mxu0 0.0
    %1400 = vmatpush1.msra.mxu0 0.0
    %1401 = vmatprep.subr.mxu0 0.0
    %1402 = vmatpush1.msra.mxu0 0.0
    %1403 = vmatprep.subr.mxu0 0.0
    %1404 = vmatpush1.msra.mxu0 0.0
    %1405 = vmatprep.subr.mxu0 0.0
    %1406 = vmatpush1.msra.mxu0 0.0
    %1407 = vmatprep.subr.mxu0 0.0
    %1408 = vmatpush1.msra.mxu0 0.0
    %1409 = vmatprep.subr.mxu0 0.0
    %1410 = vmatpush1.msra.mxu0 0.0
    %1411 = vmatprep.subr.mxu0 0.0
    %1412 = vmatpush1.msra.mxu0 0.0
    %1413 = vmatprep.subr.mxu0 0.0
    %1414 = vmatpush1.msra.mxu0 0.0
    %1415 = vmatprep.subr.mxu0 0.0
    %1416 = vmatpush1.msra.mxu0 0.0
    %1417 = vmatprep.subr.mxu0 0.0
    %1418 = vmatpush1.msra.mxu0 0.0
    %1419 = vmatprep.mubr.f32.mxu0 0.0
    %1420 = vmatmul.mubr.f32.gmra.mrb[0].mxu0 %v1353
    %v1421 = vpop.f32.mrb[0].mxu0
    %v1422 = vadd.f32 %v276, %v1421
    %v1423 = vpop.f32.mrb[0].mxu0
    %1424 = vdwg.mxu0
    %v1425 = vadd.f32 %v1350, %v1422
    %v1426 = vxor.u32 %v1425, 2147483648
    %v1427 = vmul.f32 %v1426, 1.442695
    %v1428 = vpow.pop %v1427
    %v1429 = vadd.f32 %v1428, 1.0
    %v1430 = vrcp.pop %v1429
    %v1431 = vmul.f32 1.0, %v1430
    %1433 = vrot.lane.b32.xlu0 %v1422, 64
    %v1434 = vpop.permute.xlu0 %1433
    %v1436 = vmul.f32 %v1431, %v1434
    %1438 = vrot.lane.b32.xlu0 %v1436, 64
    %v1439 = vpop.permute.xlu0 %1438
    %v1441 = vadd.f32 %v1350, %v1439
    %v1442 = vtanh.pop %v1441
    %v1443 = vsub.f32 1.0, %v1431
    %1445 = vrot.lane.b32.xlu0 %v1442, 96
    %v1446 = vpop.permute.xlu0 %1445
    %v1448 = vmul.f32 %v1443, %v1446
    %v1449 = vmul.f32 %v1431, %v1271
    %v1450 = vadd.f32 %v1448, %v1449
    %1452 = vrot.lane.b32.xlu0 %v1450, 96
    %v1453 = vpop.permute.xlu0 %1452
    %s1455 = scalar_lea.vmem [#allocation2], 12
    %1456 = vst.msk [vmem:[%s1455] sm:$0x3] %vm381, %v1453
    %s1457 = scalar_lea.vmem [#allocation3], 14
    %v1458 = vld [vmem:[%s1457] sm:$0x3]
    %v1460 = vsel %vm198, %v1458, 0
    %1462 = vmatprep.subr.mxu0 0.0
    %1463 = vmatpush1.msra.mxu0 %v181
    %1464 = vmatprep.subr.mxu0 0.0
    %1465 = vmatpush1.msra.mxu0 %v182
    %1466 = vmatprep.subr.mxu0 0.0
    %1467 = vmatpush1.msra.mxu0 %v183
    %1468 = vmatprep.subr.mxu0 0.0
    %1469 = vmatpush1.msra.mxu0 %v184
    %1470 = vmatprep.subr.mxu0 0.0
    %1471 = vmatpush1.msra.mxu0 0.0
    %1472 = vmatprep.subr.mxu0 0.0
    %1473 = vmatpush1.msra.mxu0 0.0
    %1474 = vmatprep.subr.mxu0 0.0
    %1475 = vmatpush1.msra.mxu0 0.0
    %1476 = vmatprep.subr.mxu0 0.0
    %1477 = vmatpush1.msra.mxu0 0.0
    %1478 = vmatprep.subr.mxu0 0.0
    %1479 = vmatpush1.msra.mxu0 0.0
    %1480 = vmatprep.subr.mxu0 0.0
    %1481 = vmatpush1.msra.mxu0 0.0
    %1482 = vmatprep.subr.mxu0 0.0
    %1483 = vmatpush1.msra.mxu0 0.0
    %1484 = vmatprep.subr.mxu0 0.0
    %1485 = vmatpush1.msra.mxu0 0.0
    %1486 = vmatprep.subr.mxu0 0.0
    %1487 = vmatpush1.msra.mxu0 0.0
    %1488 = vmatprep.subr.mxu0 0.0
    %1489 = vmatpush1.msra.mxu0 0.0
    %1490 = vmatprep.subr.mxu0 0.0
    %1491 = vmatpush1.msra.mxu0 0.0
    %1492 = vmatprep.subr.mxu0 0.0
    %1493 = vmatpush1.msra.mxu0 0.0
    %1494 = vmatprep.subr.mxu0 0.0
    %1495 = vmatpush1.msra.mxu0 0.0
    %1496 = vmatprep.subr.mxu0 0.0
    %1497 = vmatpush1.msra.mxu0 0.0
    %1498 = vmatprep.subr.mxu0 0.0
    %1499 = vmatpush1.msra.mxu0 0.0
    %1500 = vmatprep.subr.mxu0 0.0
    %1501 = vmatpush1.msra.mxu0 0.0
    %1502 = vmatprep.subr.mxu0 0.0
    %1503 = vmatpush1.msra.mxu0 0.0
    %1504 = vmatprep.subr.mxu0 0.0
    %1505 = vmatpush1.msra.mxu0 0.0
    %1506 = vmatprep.subr.mxu0 0.0
    %1507 = vmatpush1.msra.mxu0 0.0
    %1508 = vmatprep.subr.mxu0 0.0
    %1509 = vmatpush1.msra.mxu0 0.0
    %1510 = vmatprep.subr.mxu0 0.0
    %1511 = vmatpush1.msra.mxu0 0.0
    %1512 = vmatprep.subr.mxu0 0.0
    %1513 = vmatpush1.msra.mxu0 0.0
    %1514 = vmatprep.subr.mxu0 0.0
    %1515 = vmatpush1.msra.mxu0 0.0
    %1516 = vmatprep.subr.mxu0 0.0
    %1517 = vmatpush1.msra.mxu0 0.0
    %1518 = vmatprep.subr.mxu0 0.0
    %1519 = vmatpush1.msra.mxu0 0.0
    %1520 = vmatprep.subr.mxu0 0.0
    %1521 = vmatpush1.msra.mxu0 0.0
    %1522 = vmatprep.subr.mxu0 0.0
    %1523 = vmatpush1.msra.mxu0 0.0
    %1524 = vmatprep.subr.mxu0 0.0
    %1525 = vmatpush1.msra.mxu0 0.0
    %1526 = vmatprep.mubr.f32.mxu0 0.0
    %1527 = vmatmul.mubr.f32.gmra.mrb[0].mxu0 %v1460
    %v1528 = vpop.f32.mrb[0].mxu0
    %v1529 = vadd.f32 %v196, %v1528
    %v1530 = vpop.f32.mrb[0].mxu0
    %1531 = vdwg.mxu0
    %v1532 = vsel %vm198, %v1453, 0
    %1534 = vmatprep.subr.mxu0 0.0
    %1535 = vmatpush1.msra.mxu0 %v185
    %1536 = vmatprep.subr.mxu0 0.0
    %1537 = vmatpush1.msra.mxu0 %v186
    %1538 = vmatprep.subr.mxu0 0.0
    %1539 = vmatpush1.msra.mxu0 %v187
    %1540 = vmatprep.subr.mxu0 0.0
    %1541 = vmatpush1.msra.mxu0 %v188
    %1542 = vmatprep.subr.mxu0 0.0
    %1543 = vmatpush1.msra.mxu0 0.0
    %1544 = vmatprep.subr.mxu0 0.0
    %1545 = vmatpush1.msra.mxu0 0.0
    %1546 = vmatprep.subr.mxu0 0.0
    %1547 = vmatpush1.msra.mxu0 0.0
    %1548 = vmatprep.subr.mxu0 0.0
    %1549 = vmatpush1.msra.mxu0 0.0
    %1550 = vmatprep.subr.mxu0 0.0
    %1551 = vmatpush1.msra.mxu0 0.0
    %1552 = vmatprep.subr.mxu0 0.0
    %1553 = vmatpush1.msra.mxu0 0.0
    %1554 = vmatprep.subr.mxu0 0.0
    %1555 = vmatpush1.msra.mxu0 0.0
    %1556 = vmatprep.subr.mxu0 0.0
    %1557 = vmatpush1.msra.mxu0 0.0
    %1558 = vmatprep.subr.mxu0 0.0
    %1559 = vmatpush1.msra.mxu0 0.0
    %1560 = vmatprep.subr.mxu0 0.0
    %1561 = vmatpush1.msra.mxu0 0.0
    %1562 = vmatprep.subr.mxu0 0.0
    %1563 = vmatpush1.msra.mxu0 0.0
    %1564 = vmatprep.subr.mxu0 0.0
    %1565 = vmatpush1.msra.mxu0 0.0
    %1566 = vmatprep.subr.mxu0 0.0
    %1567 = vmatpush1.msra.mxu0 0.0
    %1568 = vmatprep.subr.mxu0 0.0
    %1569 = vmatpush1.msra.mxu0 0.0
    %1570 = vmatprep.subr.mxu0 0.0
    %1571 = vmatpush1.msra.mxu0 0.0
    %1572 = vmatprep.subr.mxu0 0.0
    %1573 = vmatpush1.msra.mxu0 0.0
    %1574 = vmatprep.subr.mxu0 0.0
    %1575 = vmatpush1.msra.mxu0 0.0
    %1576 = vmatprep.subr.mxu0 0.0
    %1577 = vmatpush1.msra.mxu0 0.0
    %1578 = vmatprep.subr.mxu0 0.0
    %1579 = vmatpush1.msra.mxu0 0.0
    %1580 = vmatprep.subr.mxu0 0.0
    %1581 = vmatpush1.msra.mxu0 0.0
    %1582 = vmatprep.subr.mxu0 0.0
    %1583 = vmatpush1.msra.mxu0 0.0
    %1584 = vmatprep.subr.mxu0 0.0
    %1585 = vmatpush1.msra.mxu0 0.0
    %1586 = vmatprep.subr.mxu0 0.0
    %1587 = vmatpush1.msra.mxu0 0.0
    %1588 = vmatprep.subr.mxu0 0.0
    %1589 = vmatpush1.msra.mxu0 0.0
    %1590 = vmatprep.subr.mxu0 0.0
    %1591 = vmatpush1.msra.mxu0 0.0
    %1592 = vmatprep.subr.mxu0 0.0
    %1593 = vmatpush1.msra.mxu0 0.0
    %1594 = vmatprep.subr.mxu0 0.0
    %1595 = vmatpush1.msra.mxu0 0.0
    %1596 = vmatprep.subr.mxu0 0.0
    %1597 = vmatpush1.msra.mxu0 0.0
    %1598 = vmatprep.mubr.f32.mxu0 0.0
    %1599 = vmatmul.mubr.f32.gmra.mrb[0].mxu0 %v1532
    %v1600 = vpop.f32.mrb[0].mxu0
    %v1601 = vadd.f32 %v276, %v1600
    %v1602 = vpop.f32.mrb[0].mxu0
    %1603 = vdwg.mxu0
    %v1604 = vadd.f32 %v1529, %v1601
    %v1605 = vxor.u32 %v1604, 2147483648
    %v1606 = vmul.f32 %v1605, 1.442695
    %v1607 = vpow.pop %v1606
    %v1608 = vadd.f32 %v1607, 1.0
    %v1609 = vrcp.pop %v1608
    %v1610 = vmul.f32 1.0, %v1609
    %1612 = vrot.lane.b32.xlu0 %v1601, 64
    %v1613 = vpop.permute.xlu0 %1612
    %v1615 = vmul.f32 %v1610, %v1613
    %1617 = vrot.lane.b32.xlu0 %v1615, 64
    %v1618 = vpop.permute.xlu0 %1617
    %v1620 = vadd.f32 %v1529, %v1618
    %v1621 = vtanh.pop %v1620
    %v1622 = vsub.f32 1.0, %v1610
    %1624 = vrot.lane.b32.xlu0 %v1621, 96
    %v1625 = vpop.permute.xlu0 %1624
    %v1627 = vmul.f32 %v1622, %v1625
    %v1628 = vmul.f32 %v1610, %v1450
    %v1629 = vadd.f32 %v1627, %v1628
    %1631 = vrot.lane.b32.xlu0 %v1629, 96
    %v1632 = vpop.permute.xlu0 %1631
    %s1634 = scalar_lea.vmem [#allocation2], 14
    %1635 = vst.msk [vmem:[%s1634] sm:$0x3] %vm381, %v1632
    %v1636 = vld [vmem:[#allocation2] sm:$0x3]
    %v1637 = vld [vmem:[#allocation2 + $0x2] sm:$0x3]
    %v1638 = vld [vmem:[#allocation2 + $0x4] sm:$0x3]
    %v1639 = vld [vmem:[#allocation2 + $0x6] sm:$0x3]
    %v1640 = vld [vmem:[#allocation2 + $0x8] sm:$0x3]
    %v1641 = vld [vmem:[#allocation2 + $0xa] sm:$0x3]
    %v1642 = vld [vmem:[#allocation2 + $0xc] sm:$0x3]
    %v1643 = vld [vmem:[#allocation2 + $0xe] sm:$0x3]
    %v1644 = vld [vmem:[#allocation11] sm:$0xff]
    %v1645 = vld [vmem:[#allocation11 + $0x8] sm:$0xff]
    %v1646 = vld [vmem:[%s7] sm:$0xff]
    %v1647 = vld [vmem:[%s7 + $0x8] sm:$0xff]
    %v1648 = vld [vmem:[%s7 + $0x10] sm:$0xff]
    %v1649 = vld [vmem:[%s7 + $0x18] sm:$0xff]
    %v1650 = vld [vmem:[#allocation12] sm:$0xff]
    %v1651 = vld [vmem:[#allocation12 + $0x8] sm:$0xff]
    %v1652 = vld [vmem:[#allocation12 + $0x10] sm:$0xff]
    %v1653 = vld [vmem:[#allocation12 + $0x18] sm:$0xff]
    %v1654 = vld [vmem:[#allocation14] sm:$0xff]
    %v1655 = vld [vmem:[#allocation14 + $0x8] sm:$0xff]
    %v1656 = vld [vmem:[#allocation14 + $0x10] sm:$0xff]
    %v1657 = vld [vmem:[#allocation14 + $0x18] sm:$0xff]
    %v1658 = vld [vmem:[#allocation15] sm:$0x1]
    %v1659 = vld [vmem:[#allocation17] sm:$0x1]
    %v1660 = vld [vmem:[#allocation18] sm:$0xff]
    %v1661 = vld [vmem:[#allocation18 + $0x8] sm:$0xff]
    %v1662 = vld [vmem:[#allocation18 + $0x10] sm:$0xff]
    %v1663 = vld [vmem:[#allocation18 + $0x18] sm:$0xff]
    %v1664 = vld [vmem:[%s13] sm:$0xff]
    %v1665 = vld [vmem:[%s13 + $0x8] sm:$0xff]
    %v1666 = vld [vmem:[%s13 + $0x10] sm:$0xff]
    %v1667 = vld [vmem:[%s13 + $0x18] sm:$0xff]
    %v1668 = vld [vmem:[%s14] sm:$0x1]
    %v1669 = vlaneseq
    %v1670 = vand.u32 %v1669, 127
    %v1671 = vld [vmem:[%s0] sm:$0x3]
    %vm1672 = vcmp.ge.s32.totalorder %v1671, 0
    %v1673 = vsel %vm1672, %v1671, 0
    %1674 = vset.pattern.permute.xlu0 0
    %1675 = vperm.xlu0 %1674, %v1673
    %v1676 = vpop.permute.xlu0 %1675
    %vm1677 = vcmp.eq.s32.totalorder %v1670, %v1676
    %v1678 = vsel %vm1677, 1, 0
    %v1679 = vcvt.s32.f32 %v1678
    %vm1680 = vcmask 130048
    %v1682 = vsel %vm1680, %v1679, 0
    %1684 = vmatprep.subr.mxu0 0.0
    %1685 = vmatpush1.msra.mxu0 %v1644
    %1686 = vmatprep.subr.mxu0 0.0
    %1687 = vmatpush1.msra.mxu0 %v1645
    %1688 = vmatprep.subr.mxu0 0.0
    %1689 = vmatpush1.msra.mxu0 0.0
    %1690 = vmatprep.subr.mxu0 0.0
    %1691 = vmatpush1.msra.mxu0 0.0
    %1692 = vmatprep.subr.mxu0 0.0
    %1693 = vmatpush1.msra.mxu0 0.0
    %1694 = vmatprep.subr.mxu0 0.0
    %1695 = vmatpush1.msra.mxu0 0.0
    %1696 = vmatprep.subr.mxu0 0.0
    %1697 = vmatpush1.msra.mxu0 0.0
    %1698 = vmatprep.subr.mxu0 0.0
    %1699 = vmatpush1.msra.mxu0 0.0
    %1700 = vmatprep.subr.mxu0 0.0
    %1701 = vmatpush1.msra.mxu0 0.0
    %1702 = vmatprep.subr.mxu0 0.0
    %1703 = vmatpush1.msra.mxu0 0.0
    %1704 = vmatprep.subr.mxu0 0.0
    %1705 = vmatpush1.msra.mxu0 0.0
    %1706 = vmatprep.subr.mxu0 0.0
    %1707 = vmatpush1.msra.mxu0 0.0
    %1708 = vmatprep.subr.mxu0 0.0
    %1709 = vmatpush1.msra.mxu0 0.0
    %1710 = vmatprep.subr.mxu0 0.0
    %1711 = vmatpush1.msra.mxu0 0.0
    %1712 = vmatprep.subr.mxu0 0.0
    %1713 = vmatpush1.msra.mxu0 0.0
    %1714 = vmatprep.subr.mxu0 0.0
    %1715 = vmatpush1.msra.mxu0 0.0
    %1716 = vmatprep.subr.mxu0 0.0
    %1717 = vmatpush1.msra.mxu0 0.0
    %1718 = vmatprep.subr.mxu0 0.0
    %1719 = vmatpush1.msra.mxu0 0.0
    %1720 = vmatprep.subr.mxu0 0.0
    %1721 = vmatpush1.msra.mxu0 0.0
    %1722 = vmatprep.subr.mxu0 0.0
    %1723 = vmatpush1.msra.mxu0 0.0
    %1724 = vmatprep.subr.mxu0 0.0
    %1725 = vmatpush1.msra.mxu0 0.0
    %1726 = vmatprep.subr.mxu0 0.0
    %1727 = vmatpush1.msra.mxu0 0.0
    %1728 = vmatprep.subr.mxu0 0.0
    %1729 = vmatpush1.msra.mxu0 0.0
    %1730 = vmatprep.subr.mxu0 0.0
    %1731 = vmatpush1.msra.mxu0 0.0
    %1732 = vmatprep.subr.mxu0 0.0
    %1733 = vmatpush1.msra.mxu0 0.0
    %1734 = vmatprep.subr.mxu0 0.0
    %1735 = vmatpush1.msra.mxu0 0.0
    %1736 = vmatprep.subr.mxu0 0.0
    %1737 = vmatpush1.msra.mxu0 0.0
    %1738 = vmatprep.subr.mxu0 0.0
    %1739 = vmatpush1.msra.mxu0 0.0
    %1740 = vmatprep.subr.mxu0 0.0
    %1741 = vmatpush1.msra.mxu0 0.0
    %1742 = vmatprep.subr.mxu0 0.0
    %1743 = vmatpush1.msra.mxu0 0.0
    %1744 = vmatprep.subr.mxu0 0.0
    %1745 = vmatpush1.msra.mxu0 0.0
    %1746 = vmatprep.subr.mxu0 0.0
    %1747 = vmatpush1.msra.mxu0 0.0
    %1748 = vmatprep.mubr.f32.mxu0 0.0
    %1749 = vmatmul.mubr.f32.gmra.mrb[0].mxu0 %v1682
    %v1750 = vpop.f32.mrb[0].mxu0
    %v1751 = vadd.f32 0.0, %v1750
    %v1752 = vpop.f32.mrb[0].mxu0
    %1753 = vdwg.mxu0
    %v1754 = vmul.f32 %v1636, %v1632
    %v1755 = vmul.f32 %v1637, %v1632
    %v1756 = vmul.f32 %v1638, %v1632
    %v1757 = vmul.f32 %v1639, %v1632
    %v1758 = vmul.f32 %v1640, %v1632
    %v1759 = vmul.f32 %v1641, %v1632
    %v1760 = vmul.f32 %v1642, %v1632
    %v1761 = vmul.f32 %v1643, %v1632
    %v1762 = vsel %vm381, %v1754, 0.0
    %1763 = vadd.xlane.f32.xlu0 %v1762
    %v1764 = vpop.xlane.xlu0 %1763
    %v1765 = vsel %vm381, %v1755, 0.0
    %1766 = vadd.xlane.f32.xlu0 %v1765
    %v1767 = vpop.xlane.xlu0 %1766
    %v1768 = vsel %vm381, %v1756, 0.0
    %1769 = vadd.xlane.f32.xlu0 %v1768
    %v1770 = vpop.xlane.xlu0 %1769
    %v1771 = vsel %vm381, %v1757, 0.0
    %1772 = vadd.xlane.f32.xlu0 %v1771
    %v1773 = vpop.xlane.xlu0 %1772
    %v1774 = vsel %vm381, %v1758, 0.0
    %1775 = vadd.xlane.f32.xlu0 %v1774
    %v1776 = vpop.xlane.xlu0 %1775
    %v1777 = vsel %vm381, %v1759, 0.0
    %1778 = vadd.xlane.f32.xlu0 %v1777
    %v1779 = vpop.xlane.xlu0 %1778
    %v1780 = vsel %vm381, %v1760, 0.0
    %1781 = vadd.xlane.f32.xlu0 %v1780
    %v1782 = vpop.xlane.xlu0 %1781
    %v1783 = vsel %vm381, %v1761, 0.0
    %1784 = vadd.xlane.f32.xlu0 %v1783
    %v1785 = vpop.xlane.xlu0 %1784
    %vm1786 = vcmask 1041408
    %v1787 = vsel %vm1786, %v1764, -inf
    %v1788 = vsel %vm1786, %v1767, -inf
    %v1789 = vsel %vm1786, %v1770, -inf
    %v1790 = vsel %vm1786, %v1773, -inf
    %v1791 = vsel %vm1786, %v1776, -inf
    %v1792 = vmax.f32 %v1787, %v1791
    %v1793 = vsel %vm1786, %v1779, -inf
    %v1794 = vmax.f32 %v1788, %v1793
    %v1795 = vsel %vm1786, %v1782, -inf
    %v1796 = vmax.f32 %v1789, %v1795
    %v1797 = vsel %vm1786, %v1785, -inf
    %v1798 = vmax.f32 %v1790, %v1797
    %v1799 = vmax.f32 %v1792, %v1794
    %v1800 = vmax.f32 %v1796, %v1798
    %v1801 = vmax.f32 %v1799, %v1800
    %v1802 = vsub.f32 %v1764, %v1801
    %v1803 = vsub.f32 %v1767, %v1801
    %v1804 = vsub.f32 %v1770, %v1801
    %v1805 = vsub.f32 %v1773, %v1801
    %v1806 = vsub.f32 %v1776, %v1801
    %v1807 = vsub.f32 %v1779, %v1801
    %v1808 = vsub.f32 %v1782, %v1801
    %v1809 = vsub.f32 %v1785, %v1801
    %v1810 = vmul.f32 %v1802, 1.442695
    %v1811 = vpow.pop %v1810
    %v1812 = vmul.f32 %v1803, 1.442695
    %v1813 = vpow.pop %v1812
    %v1814 = vmul.f32 %v1804, 1.442695
    %v1815 = vpow.pop %v1814
    %v1816 = vmul.f32 %v1805, 1.442695
    %v1817 = vpow.pop %v1816
    %v1818 = vmul.f32 %v1806, 1.442695
    %v1819 = vpow.pop %v1818
    %v1820 = vmul.f32 %v1807, 1.442695
    %v1821 = vpow.pop %v1820
    %v1822 = vmul.f32 %v1808, 1.442695
    %v1823 = vpow.pop %v1822
    %v1824 = vmul.f32 %v1809, 1.442695
    %v1825 = vpow.pop %v1824
    %v1826 = vsel %vm1786, %v1811, 0.0
    %v1827 = vsel %vm1786, %v1813, 0.0
    %v1828 = vadd.f32 %v1826, %v1827
    %v1829 = vsel %vm1786, %v1815, 0.0
    %v1830 = vadd.f32 %v1828, %v1829
    %v1831 = vsel %vm1786, %v1817, 0.0
    %v1832 = vadd.f32 %v1830, %v1831
    %v1833 = vsel %vm1786, %v1819, 0.0
    %v1834 = vadd.f32 %v1832, %v1833
    %v1835 = vsel %vm1786, %v1821, 0.0
    %v1836 = vadd.f32 %v1834, %v1835
    %v1837 = vsel %vm1786, %v1823, 0.0
    %v1838 = vadd.f32 %v1836, %v1837
    %v1839 = vsel %vm1786, %v1825, 0.0
    %v1840 = vadd.f32 %v1838, %v1839
    %v1841 = vrcp.pop %v1840
    %v1842 = vmul.f32 %v1811, %v1841
    %v1843 = vmul.f32 %v1813, %v1841
    %v1844 = vmul.f32 %v1815, %v1841
    %v1845 = vmul.f32 %v1817, %v1841
    %v1846 = vmul.f32 %v1819, %v1841
    %v1847 = vmul.f32 %v1821, %v1841
    %v1848 = vmul.f32 %v1823, %v1841
    %v1849 = vmul.f32 %v1825, %v1841
    %v1850 = vmul.f32 %v1842, %v1636
    %v1851 = vmul.f32 %v1843, %v1637
    %v1852 = vmul.f32 %v1844, %v1638
    %v1853 = vmul.f32 %v1845, %v1639
    %v1854 = vmul.f32 %v1846, %v1640
    %v1855 = vmul.f32 %v1847, %v1641
    %v1856 = vmul.f32 %v1848, %v1642
    %v1857 = vmul.f32 %v1849, %v1643
    %v1858 = vsel %vm381, %v1850, 0.0
    %v1859 = vsel %vm381, %v1851, 0.0
    %v1860 = vadd.f32 %v1858, %v1859
    %v1861 = vsel %vm381, %v1852, 0.0
    %v1862 = vadd.f32 %v1860, %v1861
    %v1863 = vsel %vm381, %v1853, 0.0
    %v1864 = vadd.f32 %v1862, %v1863
    %v1865 = vsel %vm381, %v1854, 0.0
    %v1866 = vadd.f32 %v1864, %v1865
    %v1867 = vsel %vm381, %v1855, 0.0
    %v1868 = vadd.f32 %v1866, %v1867
    %v1869 = vsel %vm381, %v1856, 0.0
    %v1870 = vadd.f32 %v1868, %v1869
    %v1871 = vsel %vm381, %v1857, 0.0
    %v1872 = vadd.f32 %v1870, %v1871
    %v1874 = vsel %vm198, %v1872, 0
    %1876 = vmatprep.subr.mxu0 0.0
    %1877 = vmatpush1.msra.mxu0 %v1650
    %1878 = vmatprep.subr.mxu0 0.0
    %1879 = vmatpush1.msra.mxu0 %v1651
    %1880 = vmatprep.subr.mxu0 0.0
    %1881 = vmatpush1.msra.mxu0 %v1652
    %1882 = vmatprep.subr.mxu0 0.0
    %1883 = vmatpush1.msra.mxu0 %v1653
    %1884 = vmatprep.subr.mxu0 0.0
    %1885 = vmatpush1.msra.mxu0 0.0
    %1886 = vmatprep.subr.mxu0 0.0
    %1887 = vmatpush1.msra.mxu0 0.0
    %1888 = vmatprep.subr.mxu0 0.0
    %1889 = vmatpush1.msra.mxu0 0.0
    %1890 = vmatprep.subr.mxu0 0.0
    %1891 = vmatpush1.msra.mxu0 0.0
    %1892 = vmatprep.subr.mxu0 0.0
    %1893 = vmatpush1.msra.mxu0 0.0
    %1894 = vmatprep.subr.mxu0 0.0
    %1895 = vmatpush1.msra.mxu0 0.0
    %1896 = vmatprep.subr.mxu0 0.0
    %1897 = vmatpush1.msra.mxu0 0.0
    %1898 = vmatprep.subr.mxu0 0.0
    %1899 = vmatpush1.msra.mxu0 0.0
    %1900 = vmatprep.subr.mxu0 0.0
    %1901 = vmatpush1.msra.mxu0 0.0
    %1902 = vmatprep.subr.mxu0 0.0
    %1903 = vmatpush1.msra.mxu0 0.0
    %1904 = vmatprep.subr.mxu0 0.0
    %1905 = vmatpush1.msra.mxu0 0.0
    %1906 = vmatprep.subr.mxu0 0.0
    %1907 = vmatpush1.msra.mxu0 0.0
    %1908 = vmatprep.subr.mxu0 0.0
    %1909 = vmatpush1.msra.mxu0 0.0
    %1910 = vmatprep.subr.mxu0 0.0
    %1911 = vmatpush1.msra.mxu0 0.0
    %1912 = vmatprep.subr.mxu0 0.0
    %1913 = vmatpush1.msra.mxu0 0.0
    %1914 = vmatprep.subr.mxu0 0.0
    %1915 = vmatpush1.msra.mxu0 0.0
    %1916 = vmatprep.subr.mxu0 0.0
    %1917 = vmatpush1.msra.mxu0 0.0
    %1918 = vmatprep.subr.mxu0 0.0
    %1919 = vmatpush1.msra.mxu0 0.0
    %1920 = vmatprep.subr.mxu0 0.0
    %1921 = vmatpush1.msra.mxu0 0.0
    %1922 = vmatprep.subr.mxu0 0.0
    %1923 = vmatpush1.msra.mxu0 0.0
    %1924 = vmatprep.subr.mxu0 0.0
    %1925 = vmatpush1.msra.mxu0 0.0
    %1926 = vmatprep.subr.mxu0 0.0
    %1927 = vmatpush1.msra.mxu0 0.0
    %1928 = vmatprep.subr.mxu0 0.0
    %1929 = vmatpush1.msra.mxu0 0.0
    %1930 = vmatprep.subr.mxu0 0.0
    %1931 = vmatpush1.msra.mxu0 0.0
    %1932 = vmatprep.subr.mxu0 0.0
    %1933 = vmatpush1.msra.mxu0 0.0
    %1934 = vmatprep.subr.mxu0 0.0
    %1935 = vmatpush1.msra.mxu0 0.0
    %1936 = vmatprep.subr.mxu0 0.0
    %1937 = vmatpush1.msra.mxu0 0.0
    %1938 = vmatprep.subr.mxu0 0.0
    %1939 = vmatpush1.msra.mxu0 0.0
    %1940 = vmatprep.mubr.f32.mxu0 0.0
    %1941 = vmatmul.mubr.f32.gmra.mrb[0].mxu0 %v1874
    %v1942 = vpop.f32.mrb[0].mxu0
    %v1943 = vadd.f32 0.0, %v1942
    %v1944 = vpop.f32.mrb[0].mxu0
    %1945 = vdwg.mxu0
    %v1947 = vsel %vm198, %v1751, 0
    %1949 = vmatprep.subr.mxu0 0.0
    %1950 = vmatpush1.msra.mxu0 %v1646
    %1951 = vmatprep.subr.mxu0 0.0
    %1952 = vmatpush1.msra.mxu0 %v1647
    %1953 = vmatprep.subr.mxu0 0.0
    %1954 = vmatpush1.msra.mxu0 %v1648
    %1955 = vmatprep.subr.mxu0 0.0
    %1956 = vmatpush1.msra.mxu0 %v1649
    %1957 = vmatprep.subr.mxu0 0.0
    %1958 = vmatpush1.msra.mxu0 0.0
    %1959 = vmatprep.subr.mxu0 0.0
    %1960 = vmatpush1.msra.mxu0 0.0
    %1961 = vmatprep.subr.mxu0 0.0
    %1962 = vmatpush1.msra.mxu0 0.0
    %1963 = vmatprep.subr.mxu0 0.0
    %1964 = vmatpush1.msra.mxu0 0.0
    %1965 = vmatprep.subr.mxu0 0.0
    %1966 = vmatpush1.msra.mxu0 0.0
    %1967 = vmatprep.subr.mxu0 0.0
    %1968 = vmatpush1.msra.mxu0 0.0
    %1969 = vmatprep.subr.mxu0 0.0
    %1970 = vmatpush1.msra.mxu0 0.0
    %1971 = vmatprep.subr.mxu0 0.0
    %1972 = vmatpush1.msra.mxu0 0.0
    %1973 = vmatprep.subr.mxu0 0.0
    %1974 = vmatpush1.msra.mxu0 0.0
    %1975 = vmatprep.subr.mxu0 0.0
    %1976 = vmatpush1.msra.mxu0 0.0
    %1977 = vmatprep.subr.mxu0 0.0
    %1978 = vmatpush1.msra.mxu0 0.0
    %1979 = vmatprep.subr.mxu0 0.0
    %1980 = vmatpush1.msra.mxu0 0.0
    %1981 = vmatprep.subr.mxu0 0.0
    %1982 = vmatpush1.msra.mxu0 0.0
    %1983 = vmatprep.subr.mxu0 0.0
    %1984 = vmatpush1.msra.mxu0 0.0
    %1985 = vmatprep.subr.mxu0 0.0
    %1986 = vmatpush1.msra.mxu0 0.0
    %1987 = vmatprep.subr.mxu0 0.0
    %1988 = vmatpush1.msra.mxu0 0.0
    %1989 = vmatprep.subr.mxu0 0.0
    %1990 = vmatpush1.msra.mxu0 0.0
    %1991 = vmatprep.subr.mxu0 0.0
    %1992 = vmatpush1.msra.mxu0 0.0
    %1993 = vmatprep.subr.mxu0 0.0
    %1994 = vmatpush1.msra.mxu0 0.0
    %1995 = vmatprep.subr.mxu0 0.0
    %1996 = vmatpush1.msra.mxu0 0.0
    %1997 = vmatprep.subr.mxu0 0.0
    %1998 = vmatpush1.msra.mxu0 0.0
    %1999 = vmatprep.subr.mxu0 0.0
    %2000 = vmatpush1.msra.mxu0 0.0
    %2001 = vmatprep.subr.mxu0 0.0
    %2002 = vmatpush1.msra.mxu0 0.0
    %2003 = vmatprep.subr.mxu0 0.0
    %2004 = vmatpush1.msra.mxu0 0.0
    %2005 = vmatprep.subr.mxu0 0.0
    %2006 = vmatpush1.msra.mxu0 0.0
    %2007 = vmatprep.subr.mxu0 0.0
    %2008 = vmatpush1.msra.mxu0 0.0
    %2009 = vmatprep.subr.mxu0 0.0
    %2010 = vmatpush1.msra.mxu0 0.0
    %2011 = vmatprep.subr.mxu0 0.0
    %2012 = vmatpush1.msra.mxu0 0.0
    %2013 = vmatprep.mubr.f32.mxu0 0.0
    %2014 = vmatmul.mubr.f32.gmra.mrb[0].mxu0 %v1947
    %v2015 = vpop.f32.mrb[0].mxu0
    %v2016 = vadd.f32 %v1943, %v2015
    %v2017 = vpop.f32.mrb[0].mxu0
    %2018 = vdwg.mxu0
    %v2020 = vlaneseq
    %v2021 = vshrl.u32 %v2020, 7
    %v2022 = vsub.s32 0, %v2021
    %v2023 = vrot.slane %v1658, %v2022
    %v2025 = vadd.f32 %v2016, %v2023
    %v2027 = vlaneseq
    %v2028 = vshrl.u32 %v2027, 7
    %v2029 = vsub.s32 0, %v2028
    %v2030 = vrot.slane %v1659, %v2029
    %v2032 = vsel %vm198, %v1632, 0
    %2034 = vmatprep.subr.mxu0 0.0
    %2035 = vmatpush1.msra.mxu0 %v1654
    %2036 = vmatprep.subr.mxu0 0.0
    %2037 = vmatpush1.msra.mxu0 %v1655
    %2038 = vmatprep.subr.mxu0 0.0
    %2039 = vmatpush1.msra.mxu0 %v1656
    %2040 = vmatprep.subr.mxu0 0.0
    %2041 = vmatpush1.msra.mxu0 %v1657
    %2042 = vmatprep.subr.mxu0 0.0
    %2043 = vmatpush1.msra.mxu0 0.0
    %2044 = vmatprep.subr.mxu0 0.0
    %2045 = vmatpush1.msra.mxu0 0.0
    %2046 = vmatprep.subr.mxu0 0.0
    %2047 = vmatpush1.msra.mxu0 0.0
    %2048 = vmatprep.subr.mxu0 0.0
    %2049 = vmatpush1.msra.mxu0 0.0
    %2050 = vmatprep.subr.mxu0 0.0
    %2051 = vmatpush1.msra.mxu0 0.0
    %2052 = vmatprep.subr.mxu0 0.0
    %2053 = vmatpush1.msra.mxu0 0.0
    %2054 = vmatprep.subr.mxu0 0.0
    %2055 = vmatpush1.msra.mxu0 0.0
    %2056 = vmatprep.subr.mxu0 0.0
    %2057 = vmatpush1.msra.mxu0 0.0
    %2058 = vmatprep.subr.mxu0 0.0
    %2059 = vmatpush1.msra.mxu0 0.0
    %2060 = vmatprep.subr.mxu0 0.0
    %2061 = vmatpush1.msra.mxu0 0.0
    %2062 = vmatprep.subr.mxu0 0.0
    %2063 = vmatpush1.msra.mxu0 0.0
    %2064 = vmatprep.subr.mxu0 0.0
    %2065 = vmatpush1.msra.mxu0 0.0
    %2066 = vmatprep.subr.mxu0 0.0
    %2067 = vmatpush1.msra.mxu0 0.0
    %2068 = vmatprep.subr.mxu0 0.0
    %2069 = vmatpush1.msra.mxu0 0.0
    %2070 = vmatprep.subr.mxu0 0.0
    %2071 = vmatpush1.msra.mxu0 0.0
    %2072 = vmatprep.subr.mxu0 0.0
    %2073 = vmatpush1.msra.mxu0 0.0
    %2074 = vmatprep.subr.mxu0 0.0
    %2075 = vmatpush1.msra.mxu0 0.0
    %2076 = vmatprep.subr.mxu0 0.0
    %2077 = vmatpush1.msra.mxu0 0.0
    %2078 = vmatprep.subr.mxu0 0.0
    %2079 = vmatpush1.msra.mxu0 0.0
    %2080 = vmatprep.subr.mxu0 0.0
    %2081 = vmatpush1.msra.mxu0 0.0
    %2082 = vmatprep.subr.mxu0 0.0
    %2083 = vmatpush1.msra.mxu0 0.0
    %2084 = vmatprep.subr.mxu0 0.0
    %2085 = vmatpush1.msra.mxu0 0.0
    %2086 = vmatprep.subr.mxu0 0.0
    %2087 = vmatpush1.msra.mxu0 0.0
    %2088 = vmatprep.subr.mxu0 0.0
    %2089 = vmatpush1.msra.mxu0 0.0
    %2090 = vmatprep.subr.mxu0 0.0
    %2091 = vmatpush1.msra.mxu0 0.0
    %2092 = vmatprep.subr.mxu0 0.0
    %2093 = vmatpush1.msra.mxu0 0.0
    %2094 = vmatprep.subr.mxu0 0.0
    %2095 = vmatpush1.msra.mxu0 0.0
    %2096 = vmatprep.subr.mxu0 0.0
    %2097 = vmatpush1.msra.mxu0 0.0
    %2098 = vmatprep.mubr.f32.mxu0 0.0
    %2099 = vmatmul.mubr.f32.gmra.mrb[0].mxu0 %v2032
    %v2100 = vpop.f32.mrb[0].mxu0
    %v2101 = vadd.f32 %v2030, %v2100
    %v2102 = vpop.f32.mrb[0].mxu0
    %2103 = vdwg.mxu0
    %v2104 = vadd.f32 %v2025, %v2101
    %v2105 = vxor.u32 %v2104, 2147483648
    %v2106 = vmul.f32 %v2105, 1.442695
    %v2107 = vpow.pop %v2106
    %v2108 = vadd.f32 %v2107, 1.0
    %v2109 = vrcp.pop %v2108
    %v2110 = vmul.f32 1.0, %v2109
    %2112 = vrot.lane.b32.xlu0 %v2101, 64
    %v2113 = vpop.permute.xlu0 %2112
    %v2115 = vmul.f32 %v2110, %v2113
    %2117 = vrot.lane.b32.xlu0 %v2115, 64
    %v2118 = vpop.permute.xlu0 %2117
    %v2120 = vadd.f32 %v2025, %v2118
    %v2121 = vtanh.pop %v2120
    %v2122 = vsub.f32 1.0, %v2110
    %2124 = vrot.lane.b32.xlu0 %v2121, 96
    %v2125 = vpop.permute.xlu0 %2124
    %v2127 = vmul.f32 %v2122, %v2125
    %v2128 = vmul.f32 %v2110, %v1629
    %v2129 = vadd.f32 %v2127, %v2128
    %2130 = vmatprep.subr.mxu0 0.0
    %2131 = vmatpush1.msra.mxu0 %v1664
    %2132 = vmatprep.subr.mxu0 0.0
    %2133 = vmatpush1.msra.mxu0 %v1665
    %2134 = vmatprep.subr.mxu0 0.0
    %2135 = vmatpush1.msra.mxu0 %v1666
    %2136 = vmatprep.subr.mxu0 0.0
    %2137 = vmatpush1.msra.mxu0 %v1667
    %2138 = vmatprep.subr.mxu0 0.0
    %2139 = vmatpush1.msra.mxu0 0.0
    %2140 = vmatprep.subr.mxu0 0.0
    %2141 = vmatpush1.msra.mxu0 0.0
    %2142 = vmatprep.subr.mxu0 0.0
    %2143 = vmatpush1.msra.mxu0 0.0
    %2144 = vmatprep.subr.mxu0 0.0
    %2145 = vmatpush1.msra.mxu0 0.0
    %2146 = vmatprep.subr.mxu0 0.0
    %2147 = vmatpush1.msra.mxu0 0.0
    %2148 = vmatprep.subr.mxu0 0.0
    %2149 = vmatpush1.msra.mxu0 0.0
    %2150 = vmatprep.subr.mxu0 0.0
    %2151 = vmatpush1.msra.mxu0 0.0
    %2152 = vmatprep.subr.mxu0 0.0
    %2153 = vmatpush1.msra.mxu0 0.0
    %2154 = vmatprep.subr.mxu0 0.0
    %2155 = vmatpush1.msra.mxu0 0.0
    %2156 = vmatprep.subr.mxu0 0.0
    %2157 = vmatpush1.msra.mxu0 0.0
    %2158 = vmatprep.subr.mxu0 0.0
    %2159 = vmatpush1.msra.mxu0 0.0
    %2160 = vmatprep.subr.mxu0 0.0
    %2161 = vmatpush1.msra.mxu0 0.0
    %2162 = vmatprep.subr.mxu0 0.0
    %2163 = vmatpush1.msra.mxu0 0.0
    %2164 = vmatprep.subr.mxu0 0.0
    %2165 = vmatpush1.msra.mxu0 0.0
    %2166 = vmatprep.subr.mxu0 0.0
    %2167 = vmatpush1.msra.mxu0 0.0
    %2168 = vmatprep.subr.mxu0 0.0
    %2169 = vmatpush1.msra.mxu0 0.0
    %2170 = vmatprep.subr.mxu0 0.0
    %2171 = vmatpush1.msra.mxu0 0.0
    %2172 = vmatprep.subr.mxu0 0.0
    %2173 = vmatpush1.msra.mxu0 0.0
    %2174 = vmatprep.subr.mxu0 0.0
    %2175 = vmatpush1.msra.mxu0 0.0
    %2176 = vmatprep.subr.mxu0 0.0
    %2177 = vmatpush1.msra.mxu0 0.0
    %2178 = vmatprep.subr.mxu0 0.0
    %2179 = vmatpush1.msra.mxu0 0.0
    %2180 = vmatprep.subr.mxu0 0.0
    %2181 = vmatpush1.msra.mxu0 0.0
    %2182 = vmatprep.subr.mxu0 0.0
    %2183 = vmatpush1.msra.mxu0 0.0
    %2184 = vmatprep.subr.mxu0 0.0
    %2185 = vmatpush1.msra.mxu0 0.0
    %2186 = vmatprep.subr.mxu0 0.0
    %2187 = vmatpush1.msra.mxu0 0.0
    %2188 = vmatprep.subr.mxu0 0.0
    %2189 = vmatpush1.msra.mxu0 0.0
    %2190 = vmatprep.subr.mxu0 0.0
    %2191 = vmatpush1.msra.mxu0 0.0
    %2192 = vmatprep.subr.mxu0 0.0
    %2193 = vmatpush1.msra.mxu0 0.0
    %2194 = vmatprep.mubr.f32.mxu0 0.0
    %2195 = vmatmul.mubr.f32.gmra.mrb[0].mxu0 %v1874
    %v2196 = vpop.f32.mrb[0].mxu0
    %v2197 = vadd.f32 0.0, %v2196
    %v2198 = vpop.f32.mrb[0].mxu0
    %2199 = vdwg.mxu0
    %2201 = vrot.lane.b32.xlu0 %v2129, 96
    %v2202 = vpop.permute.xlu0 %2201
    %v2203 = vsel %vm198, %v2202, 0
    %2205 = vmatprep.subr.mxu0 0.0
    %2206 = vmatpush1.msra.mxu0 %v1660
    %2207 = vmatprep.subr.mxu0 0.0
    %2208 = vmatpush1.msra.mxu0 %v1661
    %2209 = vmatprep.subr.mxu0 0.0
    %2210 = vmatpush1.msra.mxu0 %v1662
    %2211 = vmatprep.subr.mxu0 0.0
    %2212 = vmatpush1.msra.mxu0 %v1663
    %2213 = vmatprep.subr.mxu0 0.0
    %2214 = vmatpush1.msra.mxu0 0.0
    %2215 = vmatprep.subr.mxu0 0.0
    %2216 = vmatpush1.msra.mxu0 0.0
    %2217 = vmatprep.subr.mxu0 0.0
    %2218 = vmatpush1.msra.mxu0 0.0
    %2219 = vmatprep.subr.mxu0 0.0
    %2220 = vmatpush1.msra.mxu0 0.0
    %2221 = vmatprep.subr.mxu0 0.0
    %2222 = vmatpush1.msra.mxu0 0.0
    %2223 = vmatprep.subr.mxu0 0.0
    %2224 = vmatpush1.msra.mxu0 0.0
    %2225 = vmatprep.subr.mxu0 0.0
    %2226 = vmatpush1.msra.mxu0 0.0
    %2227 = vmatprep.subr.mxu0 0.0
    %2228 = vmatpush1.msra.mxu0 0.0
    %2229 = vmatprep.subr.mxu0 0.0
    %2230 = vmatpush1.msra.mxu0 0.0
    %2231 = vmatprep.subr.mxu0 0.0
    %2232 = vmatpush1.msra.mxu0 0.0
    %2233 = vmatprep.subr.mxu0 0.0
    %2234 = vmatpush1.msra.mxu0 0.0
    %2235 = vmatprep.subr.mxu0 0.0
    %2236 = vmatpush1.msra.mxu0 0.0
    %2237 = vmatprep.subr.mxu0 0.0
    %2238 = vmatpush1.msra.mxu0 0.0
    %2239 = vmatprep.subr.mxu0 0.0
    %2240 = vmatpush1.msra.mxu0 0.0
    %2241 = vmatprep.subr.mxu0 0.0
    %2242 = vmatpush1.msra.mxu0 0.0
    %2243 = vmatprep.subr.mxu0 0.0
    %2244 = vmatpush1.msra.mxu0 0.0
    %2245 = vmatprep.subr.mxu0 0.0
    %2246 = vmatpush1.msra.mxu0 0.0
    %2247 = vmatprep.subr.mxu0 0.0
    %2248 = vmatpush1.msra.mxu0 0.0
    %2249 = vmatprep.subr.mxu0 0.0
    %2250 = vmatpush1.msra.mxu0 0.0
    %2251 = vmatprep.subr.mxu0 0.0
    %2252 = vmatpush1.msra.mxu0 0.0
    %2253 = vmatprep.subr.mxu0 0.0
    %2254 = vmatpush1.msra.mxu0 0.0
    %2255 = vmatprep.subr.mxu0 0.0
    %2256 = vmatpush1.msra.mxu0 0.0
    %2257 = vmatprep.subr.mxu0 0.0
    %2258 = vmatpush1.msra.mxu0 0.0
    %2259 = vmatprep.subr.mxu0 0.0
    %2260 = vmatpush1.msra.mxu0 0.0
    %2261 = vmatprep.subr.mxu0 0.0
    %2262 = vmatpush1.msra.mxu0 0.0
    %2263 = vmatprep.subr.mxu0 0.0
    %2264 = vmatpush1.msra.mxu0 0.0
    %2265 = vmatprep.subr.mxu0 0.0
    %2266 = vmatpush1.msra.mxu0 0.0
    %2267 = vmatprep.subr.mxu0 0.0
    %2268 = vmatpush1.msra.mxu0 0.0
    %2269 = vmatprep.mubr.f32.mxu0 0.0
    %2270 = vmatmul.mubr.f32.gmra.mrb[0].mxu0 %v2203
    %v2271 = vpop.f32.mrb[0].mxu0
    %v2272 = vadd.f32 %v2197, %v2271
    %v2273 = vpop.f32.mrb[0].mxu0
    %2274 = vdwg.mxu0
    %v2276 = vlaneseq
    %v2277 = vshrl.u32 %v2276, 7
    %v2278 = vsub.s32 0, %v2277
    %v2279 = vrot.slane %v1668, %v2278
    %v2281 = vadd.f32 %v2272, %v2279
    %2282 = vst [vmem:[#allocation20] sm:$0x3] %v2281
    %vm2283 = vcmp.lt.s32.totalorder %v1670, 16
    %v2284 = vsel %vm2283, %v2281, -1e+30
    %v2285 = vsel %vm1786, %v2284, -inf
    %2286 = vmax.xlane.f32.xlu0 %v2285
    %v2287 = vpop.xlane.xlu0 %2286
    %vm2288 = vcmp.eq.f32.partialorder %v2284, %v2287
    %v2289 = vsel %vm2288, %v1670, 128
    %v2290 = vsel %vm1786, %v2289, 2147483647
    %v2291 = vand.u32 %v2290, 65535
    %v2292 = vshra.s32 %v2290, 16
    %v2293 = vcvt.s32.f32 %v2291
    %v2294 = vcvt.s32.f32 %v2292
    %2295 = vmin.xlane.f32.xlu0 %v2294
    %v2296 = vpop.xlane.xlu0 %2295
    %vm2297 = vcmp.eq.f32.partialorder %v2294, %v2296
    %v2298 = vsel %vm2297, %v2293, inf
    %2299 = vmin.xlane.f32.xlu0 %v2298
    %v2300 = vpop.xlane.xlu0 %2299
    %v2301 = vcvt.f32.s32 %v2300
    %v2302 = vcvt.f32.s32 %v2296
    %v2303 = vshll.u32 %v2302, 16
    %v2304 = vadd.s32 %v2303, %v2301
    %s2305 = scalar_lea.vmem %s0, 2
    %v2306 = vld [vmem:[%s2305] sm:$0x3]
    %vm2307 = vcmp.ge.s32.totalorder %v2306, 0
    %v2308 = vsel %vm2307, %v2306, %v2304
    %2309 = vset.pattern.permute.xlu0 0
    %2310 = vperm.xlu0 %2309, %v2308
    %v2311 = vpop.permute.xlu0 %2310
    %vm2312 = vcmp.eq.s32.totalorder %v1670, %v2311
    %v2313 = vsel %vm2312, 1, 0
    %v2314 = vcvt.s32.f32 %v2313
    %v2316 = vsel %vm1680, %v2314, 0
    %2318 = vmatprep.subr.mxu0 0.0
    %2319 = vmatpush1.msra.mxu0 %v1644
    %2320 = vmatprep.subr.mxu0 0.0
    %2321 = vmatpush1.msra.mxu0 %v1645
    %2322 = vmatprep.subr.mxu0 0.0
    %2323 = vmatpush1.msra.mxu0 0.0
    %2324 = vmatprep.subr.mxu0 0.0
    %2325 = vmatpush1.msra.mxu0 0.0
    %2326 = vmatprep.subr.mxu0 0.0
    %2327 = vmatpush1.msra.mxu0 0.0
    %2328 = vmatprep.subr.mxu0 0.0
    %2329 = vmatpush1.msra.mxu0 0.0
    %2330 = vmatprep.subr.mxu0 0.0
    %2331 = vmatpush1.msra.mxu0 0.0
    %2332 = vmatprep.subr.mxu0 0.0
    %2333 = vmatpush1.msra.mxu0 0.0
    %2334 = vmatprep.subr.mxu0 0.0
    %2335 = vmatpush1.msra.mxu0 0.0
    %2336 = vmatprep.subr.mxu0 0.0
    %2337 = vmatpush1.msra.mxu0 0.0
    %2338 = vmatprep.subr.mxu0 0.0
    %2339 = vmatpush1.msra.mxu0 0.0
    %2340 = vmatprep.subr.mxu0 0.0
    %2341 = vmatpush1.msra.mxu0 0.0
    %2342 = vmatprep.subr.mxu0 0.0
    %2343 = vmatpush1.msra.mxu0 0.0
    %2344 = vmatprep.subr.mxu0 0.0
    %2345 = vmatpush1.msra.mxu0 0.0
    %2346 = vmatprep.subr.mxu0 0.0
    %2347 = vmatpush1.msra.mxu0 0.0
    %2348 = vmatprep.subr.mxu0 0.0
    %2349 = vmatpush1.msra.mxu0 0.0
    %2350 = vmatprep.subr.mxu0 0.0
    %2351 = vmatpush1.msra.mxu0 0.0
    %2352 = vmatprep.subr.mxu0 0.0
    %2353 = vmatpush1.msra.mxu0 0.0
    %2354 = vmatprep.subr.mxu0 0.0
    %2355 = vmatpush1.msra.mxu0 0.0
    %2356 = vmatprep.subr.mxu0 0.0
    %2357 = vmatpush1.msra.mxu0 0.0
    %2358 = vmatprep.subr.mxu0 0.0
    %2359 = vmatpush1.msra.mxu0 0.0
    %2360 = vmatprep.subr.mxu0 0.0
    %2361 = vmatpush1.msra.mxu0 0.0
    %2362 = vmatprep.subr.mxu0 0.0
    %2363 = vmatpush1.msra.mxu0 0.0
    %2364 = vmatprep.subr.mxu0 0.0
    %2365 = vmatpush1.msra.mxu0 0.0
    %2366 = vmatprep.subr.mxu0 0.0
    %2367 = vmatpush1.msra.mxu0 0.0
    %2368 = vmatprep.subr.mxu0 0.0
    %2369 = vmatpush1.msra.mxu0 0.0
    %2370 = vmatprep.subr.mxu0 0.0
    %2371 = vmatpush1.msra.mxu0 0.0
    %2372 = vmatprep.subr.mxu0 0.0
    %2373 = vmatpush1.msra.mxu0 0.0
    %2374 = vmatprep.subr.mxu0 0.0
    %2375 = vmatpush1.msra.mxu0 0.0
    %2376 = vmatprep.subr.mxu0 0.0
    %2377 = vmatpush1.msra.mxu0 0.0
    %2378 = vmatprep.subr.mxu0 0.0
    %2379 = vmatpush1.msra.mxu0 0.0
    %2380 = vmatprep.subr.mxu0 0.0
    %2381 = vmatpush1.msra.mxu0 0.0
    %2382 = vmatprep.mubr.f32.mxu0 0.0
    %2383 = vmatmul.mubr.f32.gmra.mrb[0].mxu0 %v2316
    %v2384 = vpop.f32.mrb[0].mxu0
    %v2385 = vadd.f32 0.0, %v2384
    %v2386 = vpop.f32.mrb[0].mxu0
    %2387 = vdwg.mxu0
    %v2389 = vmul.f32 %v1636, %v2202
    %v2390 = vmul.f32 %v1637, %v2202
    %v2391 = vmul.f32 %v1638, %v2202
    %v2392 = vmul.f32 %v1639, %v2202
    %v2393 = vmul.f32 %v1640, %v2202
    %v2394 = vmul.f32 %v1641, %v2202
    %v2395 = vmul.f32 %v1642, %v2202
    %v2396 = vmul.f32 %v1643, %v2202
    %v2397 = vsel %vm381, %v2389, 0.0
    %2398 = vadd.xlane.f32.xlu0 %v2397
    %v2399 = vpop.xlane.xlu0 %2398
    %v2400 = vsel %vm381, %v2390, 0.0
    %2401 = vadd.xlane.f32.xlu0 %v2400
    %v2402 = vpop.xlane.xlu0 %2401
    %v2403 = vsel %vm381, %v2391, 0.0
    %2404 = vadd.xlane.f32.xlu0 %v2403
    %v2405 = vpop.xlane.xlu0 %2404
    %v2406 = vsel %vm381, %v2392, 0.0
    %2407 = vadd.xlane.f32.xlu0 %v2406
    %v2408 = vpop.xlane.xlu0 %2407
    %v2409 = vsel %vm381, %v2393, 0.0
    %2410 = vadd.xlane.f32.xlu0 %v2409
    %v2411 = vpop.xlane.xlu0 %2410
    %v2412 = vsel %vm381, %v2394, 0.0
    %2413 = vadd.xlane.f32.xlu0 %v2412
    %v2414 = vpop.xlane.xlu0 %2413
    %v2415 = vsel %vm381, %v2395, 0.0
    %2416 = vadd.xlane.f32.xlu0 %v2415
    %v2417 = vpop.xlane.xlu0 %2416
    %v2418 = vsel %vm381, %v2396, 0.0
    %2419 = vadd.xlane.f32.xlu0 %v2418
    %v2420 = vpop.xlane.xlu0 %2419
    %v2421 = vsel %vm1786, %v2399, -inf
    %v2422 = vsel %vm1786, %v2402, -inf
    %v2423 = vsel %vm1786, %v2405, -inf
    %v2424 = vsel %vm1786, %v2408, -inf
    %v2425 = vsel %vm1786, %v2411, -inf
    %v2426 = vmax.f32 %v2421, %v2425
    %v2427 = vsel %vm1786, %v2414, -inf
    %v2428 = vmax.f32 %v2422, %v2427
    %v2429 = vsel %vm1786, %v2417, -inf
    %v2430 = vmax.f32 %v2423, %v2429
    %v2431 = vsel %vm1786, %v2420, -inf
    %v2432 = vmax.f32 %v2424, %v2431
    %v2433 = vmax.f32 %v2426, %v2428
    %v2434 = vmax.f32 %v2430, %v2432
    %v2435 = vmax.f32 %v2433, %v2434
    %v2436 = vsub.f32 %v2399, %v2435
    %v2437 = vsub.f32 %v2402, %v2435
    %v2438 = vsub.f32 %v2405, %v2435
    %v2439 = vsub.f32 %v2408, %v2435
    %v2440 = vsub.f32 %v2411, %v2435
    %v2441 = vsub.f32 %v2414, %v2435
    %v2442 = vsub.f32 %v2417, %v2435
    %v2443 = vsub.f32 %v2420, %v2435
    %v2444 = vmul.f32 %v2436, 1.442695
    %v2445 = vpow.pop %v2444
    %v2446 = vmul.f32 %v2437, 1.442695
    %v2447 = vpow.pop %v2446
    %v2448 = vmul.f32 %v2438, 1.442695
    %v2449 = vpow.pop %v2448
    %v2450 = vmul.f32 %v2439, 1.442695
    %v2451 = vpow.pop %v2450
    %v2452 = vmul.f32 %v2440, 1.442695
    %v2453 = vpow.pop %v2452
    %v2454 = vmul.f32 %v2441, 1.442695
    %v2455 = vpow.pop %v2454
    %v2456 = vmul.f32 %v2442, 1.442695
    %v2457 = vpow.pop %v2456
    %v2458 = vmul.f32 %v2443, 1.442695
    %v2459 = vpow.pop %v2458
    %v2460 = vsel %vm1786, %v2445, 0.0
    %v2461 = vsel %vm1786, %v2447, 0.0
    %v2462 = vadd.f32 %v2460, %v2461
    %v2463 = vsel %vm1786, %v2449, 0.0
    %v2464 = vadd.f32 %v2462, %v2463
    %v2465 = vsel %vm1786, %v2451, 0.0
    %v2466 = vadd.f32 %v2464, %v2465
    %v2467 = vsel %vm1786, %v2453, 0.0
    %v2468 = vadd.f32 %v2466, %v2467
    %v2469 = vsel %vm1786, %v2455, 0.0
    %v2470 = vadd.f32 %v2468, %v2469
    %v2471 = vsel %vm1786, %v2457, 0.0
    %v2472 = vadd.f32 %v2470, %v2471
    %v2473 = vsel %vm1786, %v2459, 0.0
    %v2474 = vadd.f32 %v2472, %v2473
    %v2475 = vrcp.pop %v2474
    %v2476 = vmul.f32 %v2445, %v2475
    %v2477 = vmul.f32 %v2447, %v2475
    %v2478 = vmul.f32 %v2449, %v2475
    %v2479 = vmul.f32 %v2451, %v2475
    %v2480 = vmul.f32 %v2453, %v2475
    %v2481 = vmul.f32 %v2455, %v2475
    %v2482 = vmul.f32 %v2457, %v2475
    %v2483 = vmul.f32 %v2459, %v2475
    %v2484 = vmul.f32 %v2476, %v1636
    %v2485 = vmul.f32 %v2477, %v1637
    %v2486 = vmul.f32 %v2478, %v1638
    %v2487 = vmul.f32 %v2479, %v1639
    %v2488 = vmul.f32 %v2480, %v1640
    %v2489 = vmul.f32 %v2481, %v1641
    %v2490 = vmul.f32 %v2482, %v1642
    %v2491 = vmul.f32 %v2483, %v1643
    %v2492 = vsel %vm381, %v2484, 0.0
    %v2493 = vsel %vm381, %v2485, 0.0
    %v2494 = vadd.f32 %v2492, %v2493
    %v2495 = vsel %vm381, %v2486, 0.0
    %v2496 = vadd.f32 %v2494, %v2495
    %v2497 = vsel %vm381, %v2487, 0.0
    %v2498 = vadd.f32 %v2496, %v2497
    %v2499 = vsel %vm381, %v2488, 0.0
    %v2500 = vadd.f32 %v2498, %v2499
    %v2501 = vsel %vm381, %v2489, 0.0
    %v2502 = vadd.f32 %v2500, %v2501
    %v2503 = vsel %vm381, %v2490, 0.0
    %v2504 = vadd.f32 %v2502, %v2503
    %v2505 = vsel %vm381, %v2491, 0.0
    %v2506 = vadd.f32 %v2504, %v2505
    %v2508 = vsel %vm198, %v2506, 0
    %2510 = vmatprep.subr.mxu0 0.0
    %2511 = vmatpush1.msra.mxu0 %v1650
    %2512 = vmatprep.subr.mxu0 0.0
    %2513 = vmatpush1.msra.mxu0 %v1651
    %2514 = vmatprep.subr.mxu0 0.0
    %2515 = vmatpush1.msra.mxu0 %v1652
    %2516 = vmatprep.subr.mxu0 0.0
    %2517 = vmatpush1.msra.mxu0 %v1653
    %2518 = vmatprep.subr.mxu0 0.0
    %2519 = vmatpush1.msra.mxu0 0.0
    %2520 = vmatprep.subr.mxu0 0.0
    %2521 = vmatpush1.msra.mxu0 0.0
    %2522 = vmatprep.subr.mxu0 0.0
    %2523 = vmatpush1.msra.mxu0 0.0
    %2524 = vmatprep.subr.mxu0 0.0
    %2525 = vmatpush1.msra.mxu0 0.0
    %2526 = vmatprep.subr.mxu0 0.0
    %2527 = vmatpush1.msra.mxu0 0.0
    %2528 = vmatprep.subr.mxu0 0.0
    %2529 = vmatpush1.msra.mxu0 0.0
    %2530 = vmatprep.subr.mxu0 0.0
    %2531 = vmatpush1.msra.mxu0 0.0
    %2532 = vmatprep.subr.mxu0 0.0
    %2533 = vmatpush1.msra.mxu0 0.0
    %2534 = vmatprep.subr.mxu0 0.0
    %2535 = vmatpush1.msra.mxu0 0.0
    %2536 = vmatprep.subr.mxu0 0.0
    %2537 = vmatpush1.msra.mxu0 0.0
    %2538 = vmatprep.subr.mxu0 0.0
    %2539 = vmatpush1.msra.mxu0 0.0
    %2540 = vmatprep.subr.mxu0 0.0
    %2541 = vmatpush1.msra.mxu0 0.0
    %2542 = vmatprep.subr.mxu0 0.0
    %2543 = vmatpush1.msra.mxu0 0.0
    %2544 = vmatprep.subr.mxu0 0.0
    %2545 = vmatpush1.msra.mxu0 0.0
    %2546 = vmatprep.subr.mxu0 0.0
    %2547 = vmatpush1.msra.mxu0 0.0
    %2548 = vmatprep.subr.mxu0 0.0
    %2549 = vmatpush1.msra.mxu0 0.0
    %2550 = vmatprep.subr.mxu0 0.0
    %2551 = vmatpush1.msra.mxu0 0.0
    %2552 = vmatprep.subr.mxu0 0.0
    %2553 = vmatpush1.msra.mxu0 0.0
    %2554 = vmatprep.subr.mxu0 0.0
    %2555 = vmatpush1.msra.mxu0 0.0
    %2556 = vmatprep.subr.mxu0 0.0
    %2557 = vmatpush1.msra.mxu0 0.0
    %2558 = vmatprep.subr.mxu0 0.0
    %2559 = vmatpush1.msra.mxu0 0.0
    %2560 = vmatprep.subr.mxu0 0.0
    %2561 = vmatpush1.msra.mxu0 0.0
    %2562 = vmatprep.subr.mxu0 0.0
    %2563 = vmatpush1.msra.mxu0 0.0
    %2564 = vmatprep.subr.mxu0 0.0
    %2565 = vmatpush1.msra.mxu0 0.0
    %2566 = vmatprep.subr.mxu0 0.0
    %2567 = vmatpush1.msra.mxu0 0.0
    %2568 = vmatprep.subr.mxu0 0.0
    %2569 = vmatpush1.msra.mxu0 0.0
    %2570 = vmatprep.subr.mxu0 0.0
    %2571 = vmatpush1.msra.mxu0 0.0
    %2572 = vmatprep.subr.mxu0 0.0
    %2573 = vmatpush1.msra.mxu0 0.0
    %2574 = vmatprep.mubr.f32.mxu0 0.0
    %2575 = vmatmul.mubr.f32.gmra.mrb[0].mxu0 %v2508
    %v2576 = vpop.f32.mrb[0].mxu0
    %v2577 = vadd.f32 0.0, %v2576
    %v2578 = vpop.f32.mrb[0].mxu0
    %2579 = vdwg.mxu0
    %v2581 = vsel %vm198, %v2385, 0
    %2583 = vmatprep.subr.mxu0 0.0
    %2584 = vmatpush1.msra.mxu0 %v1646
    %2585 = vmatprep.subr.mxu0 0.0
    %2586 = vmatpush1.msra.mxu0 %v1647
    %2587 = vmatprep.subr.mxu0 0.0
    %2588 = vmatpush1.msra.mxu0 %v1648
    %2589 = vmatprep.subr.mxu0 0.0
    %2590 = vmatpush1.msra.mxu0 %v1649
    %2591 = vmatprep.subr.mxu0 0.0
    %2592 = vmatpush1.msra.mxu0 0.0
    %2593 = vmatprep.subr.mxu0 0.0
    %2594 = vmatpush1.msra.mxu0 0.0
    %2595 = vmatprep.subr.mxu0 0.0
    %2596 = vmatpush1.msra.mxu0 0.0
    %2597 = vmatprep.subr.mxu0 0.0
    %2598 = vmatpush1.msra.mxu0 0.0
    %2599 = vmatprep.subr.mxu0 0.0
    %2600 = vmatpush1.msra.mxu0 0.0
    %2601 = vmatprep.subr.mxu0 0.0
    %2602 = vmatpush1.msra.mxu0 0.0
    %2603 = vmatprep.subr.mxu0 0.0
    %2604 = vmatpush1.msra.mxu0 0.0
    %2605 = vmatprep.subr.mxu0 0.0
    %2606 = vmatpush1.msra.mxu0 0.0
    %2607 = vmatprep.subr.mxu0 0.0
    %2608 = vmatpush1.msra.mxu0 0.0
    %2609 = vmatprep.subr.mxu0 0.0
    %2610 = vmatpush1.msra.mxu0 0.0
    %2611 = vmatprep.subr.mxu0 0.0
    %2612 = vmatpush1.msra.mxu0 0.0
    %2613 = vmatprep.subr.mxu0 0.0
    %2614 = vmatpush1.msra.mxu0 0.0
    %2615 = vmatprep.subr.mxu0 0.0
    %2616 = vmatpush1.msra.mxu0 0.0
    %2617 = vmatprep.subr.mxu0 0.0
    %2618 = vmatpush1.msra.mxu0 0.0
    %2619 = vmatprep.subr.mxu0 0.0
    %2620 = vmatpush1.msra.mxu0 0.0
    %2621 = vmatprep.subr.mxu0 0.0
    %2622 = vmatpush1.msra.mxu0 0.0
    %2623 = vmatprep.subr.mxu0 0.0
    %2624 = vmatpush1.msra.mxu0 0.0
    %2625 = vmatprep.subr.mxu0 0.0
    %2626 = vmatpush1.msra.mxu0 0.0
    %2627 = vmatprep.subr.mxu0 0.0
    %2628 = vmatpush1.msra.mxu0 0.0
    %2629 = vmatprep.subr.mxu0 0.0
    %2630 = vmatpush1.msra.mxu0 0.0
    %2631 = vmatprep.subr.mxu0 0.0
    %2632 = vmatpush1.msra.mxu0 0.0
    %2633 = vmatprep.subr.mxu0 0.0
    %2634 = vmatpush1.msra.mxu0 0.0
    %2635 = vmatprep.subr.mxu0 0.0
    %2636 = vmatpush1.msra.mxu0 0.0
    %2637 = vmatprep.subr.mxu0 0.0
    %2638 = vmatpush1.msra.mxu0 0.0
    %2639 = vmatprep.subr.mxu0 0.0
    %2640 = vmatpush1.msra.mxu0 0.0
    %2641 = vmatprep.subr.mxu0 0.0
    %2642 = vmatpush1.msra.mxu0 0.0
    %2643 = vmatprep.subr.mxu0 0.0
    %2644 = vmatpush1.msra.mxu0 0.0
    %2645 = vmatprep.subr.mxu0 0.0
    %2646 = vmatpush1.msra.mxu0 0.0
    %2647 = vmatprep.mubr.f32.mxu0 0.0
    %2648 = vmatmul.mubr.f32.gmra.mrb[0].mxu0 %v2581
    %v2649 = vpop.f32.mrb[0].mxu0
    %v2650 = vadd.f32 %v2577, %v2649
    %v2651 = vpop.f32.mrb[0].mxu0
    %2652 = vdwg.mxu0
    %v2653 = vadd.f32 %v2650, %v2023
    %2654 = vmatprep.subr.mxu0 0.0
    %2655 = vmatpush1.msra.mxu0 %v1654
    %2656 = vmatprep.subr.mxu0 0.0
    %2657 = vmatpush1.msra.mxu0 %v1655
    %2658 = vmatprep.subr.mxu0 0.0
    %2659 = vmatpush1.msra.mxu0 %v1656
    %2660 = vmatprep.subr.mxu0 0.0
    %2661 = vmatpush1.msra.mxu0 %v1657
    %2662 = vmatprep.subr.mxu0 0.0
    %2663 = vmatpush1.msra.mxu0 0.0
    %2664 = vmatprep.subr.mxu0 0.0
    %2665 = vmatpush1.msra.mxu0 0.0
    %2666 = vmatprep.subr.mxu0 0.0
    %2667 = vmatpush1.msra.mxu0 0.0
    %2668 = vmatprep.subr.mxu0 0.0
    %2669 = vmatpush1.msra.mxu0 0.0
    %2670 = vmatprep.subr.mxu0 0.0
    %2671 = vmatpush1.msra.mxu0 0.0
    %2672 = vmatprep.subr.mxu0 0.0
    %2673 = vmatpush1.msra.mxu0 0.0
    %2674 = vmatprep.subr.mxu0 0.0
    %2675 = vmatpush1.msra.mxu0 0.0
    %2676 = vmatprep.subr.mxu0 0.0
    %2677 = vmatpush1.msra.mxu0 0.0
    %2678 = vmatprep.subr.mxu0 0.0
    %2679 = vmatpush1.msra.mxu0 0.0
    %2680 = vmatprep.subr.mxu0 0.0
    %2681 = vmatpush1.msra.mxu0 0.0
    %2682 = vmatprep.subr.mxu0 0.0
    %2683 = vmatpush1.msra.mxu0 0.0
    %2684 = vmatprep.subr.mxu0 0.0
    %2685 = vmatpush1.msra.mxu0 0.0
    %2686 = vmatprep.subr.mxu0 0.0
    %2687 = vmatpush1.msra.mxu0 0.0
    %2688 = vmatprep.subr.mxu0 0.0
    %2689 = vmatpush1.msra.mxu0 0.0
    %2690 = vmatprep.subr.mxu0 0.0
    %2691 = vmatpush1.msra.mxu0 0.0
    %2692 = vmatprep.subr.mxu0 0.0
    %2693 = vmatpush1.msra.mxu0 0.0
    %2694 = vmatprep.subr.mxu0 0.0
    %2695 = vmatpush1.msra.mxu0 0.0
    %2696 = vmatprep.subr.mxu0 0.0
    %2697 = vmatpush1.msra.mxu0 0.0
    %2698 = vmatprep.subr.mxu0 0.0
    %2699 = vmatpush1.msra.mxu0 0.0
    %2700 = vmatprep.subr.mxu0 0.0
    %2701 = vmatpush1.msra.mxu0 0.0
    %2702 = vmatprep.subr.mxu0 0.0
    %2703 = vmatpush1.msra.mxu0 0.0
    %2704 = vmatprep.subr.mxu0 0.0
    %2705 = vmatpush1.msra.mxu0 0.0
    %2706 = vmatprep.subr.mxu0 0.0
    %2707 = vmatpush1.msra.mxu0 0.0
    %2708 = vmatprep.subr.mxu0 0.0
    %2709 = vmatpush1.msra.mxu0 0.0
    %2710 = vmatprep.subr.mxu0 0.0
    %2711 = vmatpush1.msra.mxu0 0.0
    %2712 = vmatprep.subr.mxu0 0.0
    %2713 = vmatpush1.msra.mxu0 0.0
    %2714 = vmatprep.subr.mxu0 0.0
    %2715 = vmatpush1.msra.mxu0 0.0
    %2716 = vmatprep.subr.mxu0 0.0
    %2717 = vmatpush1.msra.mxu0 0.0
    %2718 = vmatprep.mubr.f32.mxu0 0.0
    %2719 = vmatmul.mubr.f32.gmra.mrb[0].mxu0 %v2203
    %v2720 = vpop.f32.mrb[0].mxu0
    %v2721 = vadd.f32 %v2030, %v2720
    %v2722 = vpop.f32.mrb[0].mxu0
    %2723 = vdwg.mxu0
    %v2724 = vadd.f32 %v2653, %v2721
    %v2725 = vxor.u32 %v2724, 2147483648
    %v2726 = vmul.f32 %v2725, 1.442695
    %v2727 = vpow.pop %v2726
    %v2728 = vadd.f32 %v2727, 1.0
    %v2729 = vrcp.pop %v2728
    %v2730 = vmul.f32 1.0, %v2729
    %2732 = vrot.lane.b32.xlu0 %v2721, 64
    %v2733 = vpop.permute.xlu0 %2732
    %v2735 = vmul.f32 %v2730, %v2733
    %2737 = vrot.lane.b32.xlu0 %v2735, 64
    %v2738 = vpop.permute.xlu0 %2737
    %v2740 = vadd.f32 %v2653, %v2738
    %v2741 = vtanh.pop %v2740
    %v2742 = vsub.f32 1.0, %v2730
    %2744 = vrot.lane.b32.xlu0 %v2741, 96
    %v2745 = vpop.permute.xlu0 %2744
    %v2747 = vmul.f32 %v2742, %v2745
    %v2748 = vmul.f32 %v2730, %v2129
    %v2749 = vadd.f32 %v2747, %v2748
    %2750 = vmatprep.subr.mxu0 0.0
    %2751 = vmatpush1.msra.mxu0 %v1664
    %2752 = vmatprep.subr.mxu0 0.0
    %2753 = vmatpush1.msra.mxu0 %v1665
    %2754 = vmatprep.subr.mxu0 0.0
    %2755 = vmatpush1.msra.mxu0 %v1666
    %2756 = vmatprep.subr.mxu0 0.0
    %2757 = vmatpush1.msra.mxu0 %v1667
    %2758 = vmatprep.subr.mxu0 0.0
    %2759 = vmatpush1.msra.mxu0 0.0
    %2760 = vmatprep.subr.mxu0 0.0
    %2761 = vmatpush1.msra.mxu0 0.0
    %2762 = vmatprep.subr.mxu0 0.0
    %2763 = vmatpush1.msra.mxu0 0.0
    %2764 = vmatprep.subr.mxu0 0.0
    %2765 = vmatpush1.msra.mxu0 0.0
    %2766 = vmatprep.subr.mxu0 0.0
    %2767 = vmatpush1.msra.mxu0 0.0
    %2768 = vmatprep.subr.mxu0 0.0
    %2769 = vmatpush1.msra.mxu0 0.0
    %2770 = vmatprep.subr.mxu0 0.0
    %2771 = vmatpush1.msra.mxu0 0.0
    %2772 = vmatprep.subr.mxu0 0.0
    %2773 = vmatpush1.msra.mxu0 0.0
    %2774 = vmatprep.subr.mxu0 0.0
    %2775 = vmatpush1.msra.mxu0 0.0
    %2776 = vmatprep.subr.mxu0 0.0
    %2777 = vmatpush1.msra.mxu0 0.0
    %2778 = vmatprep.subr.mxu0 0.0
    %2779 = vmatpush1.msra.mxu0 0.0
    %2780 = vmatprep.subr.mxu0 0.0
    %2781 = vmatpush1.msra.mxu0 0.0
    %2782 = vmatprep.subr.mxu0 0.0
    %2783 = vmatpush1.msra.mxu0 0.0
    %2784 = vmatprep.subr.mxu0 0.0
    %2785 = vmatpush1.msra.mxu0 0.0
    %2786 = vmatprep.subr.mxu0 0.0
    %2787 = vmatpush1.msra.mxu0 0.0
    %2788 = vmatprep.subr.mxu0 0.0
    %2789 = vmatpush1.msra.mxu0 0.0
    %2790 = vmatprep.subr.mxu0 0.0
    %2791 = vmatpush1.msra.mxu0 0.0
    %2792 = vmatprep.subr.mxu0 0.0
    %2793 = vmatpush1.msra.mxu0 0.0
    %2794 = vmatprep.subr.mxu0 0.0
    %2795 = vmatpush1.msra.mxu0 0.0
    %2796 = vmatprep.subr.mxu0 0.0
    %2797 = vmatpush1.msra.mxu0 0.0
    %2798 = vmatprep.subr.mxu0 0.0
    %2799 = vmatpush1.msra.mxu0 0.0
    %2800 = vmatprep.subr.mxu0 0.0
    %2801 = vmatpush1.msra.mxu0 0.0
    %2802 = vmatprep.subr.mxu0 0.0
    %2803 = vmatpush1.msra.mxu0 0.0
    %2804 = vmatprep.subr.mxu0 0.0
    %2805 = vmatpush1.msra.mxu0 0.0
    %2806 = vmatprep.subr.mxu0 0.0
    %2807 = vmatpush1.msra.mxu0 0.0
    %2808 = vmatprep.subr.mxu0 0.0
    %2809 = vmatpush1.msra.mxu0 0.0
    %2810 = vmatprep.subr.mxu0 0.0
    %2811 = vmatpush1.msra.mxu0 0.0
    %2812 = vmatprep.subr.mxu0 0.0
    %2813 = vmatpush1.msra.mxu0 0.0
    %2814 = vmatprep.mubr.f32.mxu0 0.0
    %2815 = vmatmul.mubr.f32.gmra.mrb[0].mxu0 %v2508
    %v2816 = vpop.f32.mrb[0].mxu0
    %v2817 = vadd.f32 0.0, %v2816
    %v2818 = vpop.f32.mrb[0].mxu0
    %2819 = vdwg.mxu0
    %2821 = vrot.lane.b32.xlu0 %v2749, 96
    %v2822 = vpop.permute.xlu0 %2821
    %v2823 = vsel %vm198, %v2822, 0
    %2825 = vmatprep.subr.mxu0 0.0
    %2826 = vmatpush1.msra.mxu0 %v1660
    %2827 = vmatprep.subr.mxu0 0.0
    %2828 = vmatpush1.msra.mxu0 %v1661
    %2829 = vmatprep.subr.mxu0 0.0
    %2830 = vmatpush1.msra.mxu0 %v1662
    %2831 = vmatprep.subr.mxu0 0.0
    %2832 = vmatpush1.msra.mxu0 %v1663
    %2833 = vmatprep.subr.mxu0 0.0
    %2834 = vmatpush1.msra.mxu0 0.0
    %2835 = vmatprep.subr.mxu0 0.0
    %2836 = vmatpush1.msra.mxu0 0.0
    %2837 = vmatprep.subr.mxu0 0.0
    %2838 = vmatpush1.msra.mxu0 0.0
    %2839 = vmatprep.subr.mxu0 0.0
    %2840 = vmatpush1.msra.mxu0 0.0
    %2841 = vmatprep.subr.mxu0 0.0
    %2842 = vmatpush1.msra.mxu0 0.0
    %2843 = vmatprep.subr.mxu0 0.0
    %2844 = vmatpush1.msra.mxu0 0.0
    %2845 = vmatprep.subr.mxu0 0.0
    %2846 = vmatpush1.msra.mxu0 0.0
    %2847 = vmatprep.subr.mxu0 0.0
    %2848 = vmatpush1.msra.mxu0 0.0
    %2849 = vmatprep.subr.mxu0 0.0
    %2850 = vmatpush1.msra.mxu0 0.0
    %2851 = vmatprep.subr.mxu0 0.0
    %2852 = vmatpush1.msra.mxu0 0.0
    %2853 = vmatprep.subr.mxu0 0.0
    %2854 = vmatpush1.msra.mxu0 0.0
    %2855 = vmatprep.subr.mxu0 0.0
    %2856 = vmatpush1.msra.mxu0 0.0
    %2857 = vmatprep.subr.mxu0 0.0
    %2858 = vmatpush1.msra.mxu0 0.0
    %2859 = vmatprep.subr.mxu0 0.0
    %2860 = vmatpush1.msra.mxu0 0.0
    %2861 = vmatprep.subr.mxu0 0.0
    %2862 = vmatpush1.msra.mxu0 0.0
    %2863 = vmatprep.subr.mxu0 0.0
    %2864 = vmatpush1.msra.mxu0 0.0
    %2865 = vmatprep.subr.mxu0 0.0
    %2866 = vmatpush1.msra.mxu0 0.0
    %2867 = vmatprep.subr.mxu0 0.0
    %2868 = vmatpush1.msra.mxu0 0.0
    %2869 = vmatprep.subr.mxu0 0.0
    %2870 = vmatpush1.msra.mxu0 0.0
    %2871 = vmatprep.subr.mxu0 0.0
    %2872 = vmatpush1.msra.mxu0 0.0
    %2873 = vmatprep.subr.mxu0 0.0
    %2874 = vmatpush1.msra.mxu0 0.0
    %2875 = vmatprep.subr.mxu0 0.0
    %2876 = vmatpush1.msra.mxu0 0.0
    %2877 = vmatprep.subr.mxu0 0.0
    %2878 = vmatpush1.msra.mxu0 0.0
    %2879 = vmatprep.subr.mxu0 0.0
    %2880 = vmatpush1.msra.mxu0 0.0
    %2881 = vmatprep.subr.mxu0 0.0
    %2882 = vmatpush1.msra.mxu0 0.0
    %2883 = vmatprep.subr.mxu0 0.0
    %2884 = vmatpush1.msra.mxu0 0.0
    %2885 = vmatprep.subr.mxu0 0.0
    %2886 = vmatpush1.msra.mxu0 0.0
    %2887 = vmatprep.subr.mxu0 0.0
    %2888 = vmatpush1.msra.mxu0 0.0
    %2889 = vmatprep.mubr.f32.mxu0 0.0
    %2890 = vmatmul.mubr.f32.gmra.mrb[0].mxu0 %v2823
    %v2891 = vpop.f32.mrb[0].mxu0
    %v2892 = vadd.f32 %v2817, %v2891
    %v2893 = vpop.f32.mrb[0].mxu0
    %2894 = vdwg.mxu0
    %v2895 = vadd.f32 %v2892, %v2279
    %s2896 = scalar_lea.vmem [#allocation20], 2
    %2897 = vst [vmem:[%s2896] sm:$0x3] %v2895
    %v2898 = vsel %vm2283, %v2895, -1e+30
    %v2899 = vsel %vm1786, %v2898, -inf
    %2900 = vmax.xlane.f32.xlu0 %v2899
    %v2901 = vpop.xlane.xlu0 %2900
    %vm2902 = vcmp.eq.f32.partialorder %v2898, %v2901
    %v2903 = vsel %vm2902, %v1670, 128
    %v2904 = vsel %vm1786, %v2903, 2147483647
    %v2905 = vand.u32 %v2904, 65535
    %v2906 = vshra.s32 %v2904, 16
    %v2907 = vcvt.s32.f32 %v2905
    %v2908 = vcvt.s32.f32 %v2906
    %2909 = vmin.xlane.f32.xlu0 %v2908
    %v2910 = vpop.xlane.xlu0 %2909
    %vm2911 = vcmp.eq.f32.partialorder %v2908, %v2910
    %v2912 = vsel %vm2911, %v2907, inf
    %2913 = vmin.xlane.f32.xlu0 %v2912
    %v2914 = vpop.xlane.xlu0 %2913
    %v2915 = vcvt.f32.s32 %v2914
    %v2916 = vcvt.f32.s32 %v2910
    %v2917 = vshll.u32 %v2916, 16
    %v2918 = vadd.s32 %v2917, %v2915
    %s2919 = scalar_lea.vmem %s0, 4
    %v2920 = vld [vmem:[%s2919] sm:$0x3]
    %vm2921 = vcmp.ge.s32.totalorder %v2920, 0
    %v2922 = vsel %vm2921, %v2920, %v2918
    %2923 = vset.pattern.permute.xlu0 0
    %2924 = vperm.xlu0 %2923, %v2922
    %v2925 = vpop.permute.xlu0 %2924
    %vm2926 = vcmp.eq.s32.totalorder %v1670, %v2925
    %v2927 = vsel %vm2926, 1, 0
    %v2928 = vcvt.s32.f32 %v2927
    %v2930 = vsel %vm1680, %v2928, 0
    %2932 = vmatprep.subr.mxu0 0.0
    %2933 = vmatpush1.msra.mxu0 %v1644
    %2934 = vmatprep.subr.mxu0 0.0
    %2935 = vmatpush1.msra.mxu0 %v1645
    %2936 = vmatprep.subr.mxu0 0.0
    %2937 = vmatpush1.msra.mxu0 0.0
    %2938 = vmatprep.subr.mxu0 0.0
    %2939 = vmatpush1.msra.mxu0 0.0
    %2940 = vmatprep.subr.mxu0 0.0
    %2941 = vmatpush1.msra.mxu0 0.0
    %2942 = vmatprep.subr.mxu0 0.0
    %2943 = vmatpush1.msra.mxu0 0.0
    %2944 = vmatprep.subr.mxu0 0.0
    %2945 = vmatpush1.msra.mxu0 0.0
    %2946 = vmatprep.subr.mxu0 0.0
    %2947 = vmatpush1.msra.mxu0 0.0
    %2948 = vmatprep.subr.mxu0 0.0
    %2949 = vmatpush1.msra.mxu0 0.0
    %2950 = vmatprep.subr.mxu0 0.0
    %2951 = vmatpush1.msra.mxu0 0.0
    %2952 = vmatprep.subr.mxu0 0.0
    %2953 = vmatpush1.msra.mxu0 0.0
    %2954 = vmatprep.subr.mxu0 0.0
    %2955 = vmatpush1.msra.mxu0 0.0
    %2956 = vmatprep.subr.mxu0 0.0
    %2957 = vmatpush1.msra.mxu0 0.0
    %2958 = vmatprep.subr.mxu0 0.0
    %2959 = vmatpush1.msra.mxu0 0.0
    %2960 = vmatprep.subr.mxu0 0.0
    %2961 = vmatpush1.msra.mxu0 0.0
    %2962 = vmatprep.subr.mxu0 0.0
    %2963 = vmatpush1.msra.mxu0 0.0
    %2964 = vmatprep.subr.mxu0 0.0
    %2965 = vmatpush1.msra.mxu0 0.0
    %2966 = vmatprep.subr.mxu0 0.0
    %2967 = vmatpush1.msra.mxu0 0.0
    %2968 = vmatprep.subr.mxu0 0.0
    %2969 = vmatpush1.msra.mxu0 0.0
    %2970 = vmatprep.subr.mxu0 0.0
    %2971 = vmatpush1.msra.mxu0 0.0
    %2972 = vmatprep.subr.mxu0 0.0
    %2973 = vmatpush1.msra.mxu0 0.0
    %2974 = vmatprep.subr.mxu0 0.0
    %2975 = vmatpush1.msra.mxu0 0.0
    %2976 = vmatprep.subr.mxu0 0.0
    %2977 = vmatpush1.msra.mxu0 0.0
    %2978 = vmatprep.subr.mxu0 0.0
    %2979 = vmatpush1.msra.mxu0 0.0
    %2980 = vmatprep.subr.mxu0 0.0
    %2981 = vmatpush1.msra.mxu0 0.0
    %2982 = vmatprep.subr.mxu0 0.0
    %2983 = vmatpush1.msra.mxu0 0.0
    %2984 = vmatprep.subr.mxu0 0.0
    %2985 = vmatpush1.msra.mxu0 0.0
    %2986 = vmatprep.subr.mxu0 0.0
    %2987 = vmatpush1.msra.mxu0 0.0
    %2988 = vmatprep.subr.mxu0 0.0
    %2989 = vmatpush1.msra.mxu0 0.0
    %2990 = vmatprep.subr.mxu0 0.0
    %2991 = vmatpush1.msra.mxu0 0.0
    %2992 = vmatprep.subr.mxu0 0.0
    %2993 = vmatpush1.msra.mxu0 0.0
    %2994 = vmatprep.subr.mxu0 0.0
    %2995 = vmatpush1.msra.mxu0 0.0
    %2996 = vmatprep.mubr.f32.mxu0 0.0
    %2997 = vmatmul.mubr.f32.gmra.mrb[0].mxu0 %v2930
    %v2998 = vpop.f32.mrb[0].mxu0
    %v2999 = vadd.f32 0.0, %v2998
    %v3000 = vpop.f32.mrb[0].mxu0
    %3001 = vdwg.mxu0
    %v3003 = vmul.f32 %v1636, %v2822
    %v3004 = vmul.f32 %v1637, %v2822
    %v3005 = vmul.f32 %v1638, %v2822
    %v3006 = vmul.f32 %v1639, %v2822
    %v3007 = vmul.f32 %v1640, %v2822
    %v3008 = vmul.f32 %v1641, %v2822
    %v3009 = vmul.f32 %v1642, %v2822
    %v3010 = vmul.f32 %v1643, %v2822
    %v3011 = vsel %vm381, %v3003, 0.0
    %3012 = vadd.xlane.f32.xlu0 %v3011
    %v3013 = vpop.xlane.xlu0 %3012
    %v3014 = vsel %vm381, %v3004, 0.0
    %3015 = vadd.xlane.f32.xlu0 %v3014
    %v3016 = vpop.xlane.xlu0 %3015
    %v3017 = vsel %vm381, %v3005, 0.0
    %3018 = vadd.xlane.f32.xlu0 %v3017
    %v3019 = vpop.xlane.xlu0 %3018
    %v3020 = vsel %vm381, %v3006, 0.0
    %3021 = vadd.xlane.f32.xlu0 %v3020
    %v3022 = vpop.xlane.xlu0 %3021
    %v3023 = vsel %vm381, %v3007, 0.0
    %3024 = vadd.xlane.f32.xlu0 %v3023
    %v3025 = vpop.xlane.xlu0 %3024
    %v3026 = vsel %vm381, %v3008, 0.0
    %3027 = vadd.xlane.f32.xlu0 %v3026
    %v3028 = vpop.xlane.xlu0 %3027
    %v3029 = vsel %vm381, %v3009, 0.0
    %3030 = vadd.xlane.f32.xlu0 %v3029
    %v3031 = vpop.xlane.xlu0 %3030
    %v3032 = vsel %vm381, %v3010, 0.0
    %3033 = vadd.xlane.f32.xlu0 %v3032
    %v3034 = vpop.xlane.xlu0 %3033
    %v3035 = vsel %vm1786, %v3013, -inf
    %v3036 = vsel %vm1786, %v3016, -inf
    %v3037 = vsel %vm1786, %v3019, -inf
    %v3038 = vsel %vm1786, %v3022, -inf
    %v3039 = vsel %vm1786, %v3025, -inf
    %v3040 = vmax.f32 %v3035, %v3039
    %v3041 = vsel %vm1786, %v3028, -inf
    %v3042 = vmax.f32 %v3036, %v3041
    %v3043 = vsel %vm1786, %v3031, -inf
    %v3044 = vmax.f32 %v3037, %v3043
    %v3045 = vsel %vm1786, %v3034, -inf
    %v3046 = vmax.f32 %v3038, %v3045
    %v3047 = vmax.f32 %v3040, %v3042
    %v3048 = vmax.f32 %v3044, %v3046
    %v3049 = vmax.f32 %v3047, %v3048
    %v3050 = vsub.f32 %v3013, %v3049
    %v3051 = vsub.f32 %v3016, %v3049
    %v3052 = vsub.f32 %v3019, %v3049
    %v3053 = vsub.f32 %v3022, %v3049
    %v3054 = vsub.f32 %v3025, %v3049
    %v3055 = vsub.f32 %v3028, %v3049
    %v3056 = vsub.f32 %v3031, %v3049
    %v3057 = vsub.f32 %v3034, %v3049
    %v3058 = vmul.f32 %v3050, 1.442695
    %v3059 = vpow.pop %v3058
    %v3060 = vmul.f32 %v3051, 1.442695
    %v3061 = vpow.pop %v3060
    %v3062 = vmul.f32 %v3052, 1.442695
    %v3063 = vpow.pop %v3062
    %v3064 = vmul.f32 %v3053, 1.442695
    %v3065 = vpow.pop %v3064
    %v3066 = vmul.f32 %v3054, 1.442695
    %v3067 = vpow.pop %v3066
    %v3068 = vmul.f32 %v3055, 1.442695
    %v3069 = vpow.pop %v3068
    %v3070 = vmul.f32 %v3056, 1.442695
    %v3071 = vpow.pop %v3070
    %v3072 = vmul.f32 %v3057, 1.442695
    %v3073 = vpow.pop %v3072
    %v3074 = vsel %vm1786, %v3059, 0.0
    %v3075 = vsel %vm1786, %v3061, 0.0
    %v3076 = vadd.f32 %v3074, %v3075
    %v3077 = vsel %vm1786, %v3063, 0.0
    %v3078 = vadd.f32 %v3076, %v3077
    %v3079 = vsel %vm1786, %v3065, 0.0
    %v3080 = vadd.f32 %v3078, %v3079
    %v3081 = vsel %vm1786, %v3067, 0.0
    %v3082 = vadd.f32 %v3080, %v3081
    %v3083 = vsel %vm1786, %v3069, 0.0
    %v3084 = vadd.f32 %v3082, %v3083
    %v3085 = vsel %vm1786, %v3071, 0.0
    %v3086 = vadd.f32 %v3084, %v3085
    %v3087 = vsel %vm1786, %v3073, 0.0
    %v3088 = vadd.f32 %v3086, %v3087
    %v3089 = vrcp.pop %v3088
    %v3090 = vmul.f32 %v3059, %v3089
    %v3091 = vmul.f32 %v3061, %v3089
    %v3092 = vmul.f32 %v3063, %v3089
    %v3093 = vmul.f32 %v3065, %v3089
    %v3094 = vmul.f32 %v3067, %v3089
    %v3095 = vmul.f32 %v3069, %v3089
    %v3096 = vmul.f32 %v3071, %v3089
    %v3097 = vmul.f32 %v3073, %v3089
    %v3098 = vmul.f32 %v3090, %v1636
    %v3099 = vmul.f32 %v3091, %v1637
    %v3100 = vmul.f32 %v3092, %v1638
    %v3101 = vmul.f32 %v3093, %v1639
    %v3102 = vmul.f32 %v3094, %v1640
    %v3103 = vmul.f32 %v3095, %v1641
    %v3104 = vmul.f32 %v3096, %v1642
    %v3105 = vmul.f32 %v3097, %v1643
    %v3106 = vsel %vm381, %v3098, 0.0
    %v3107 = vsel %vm381, %v3099, 0.0
    %v3108 = vadd.f32 %v3106, %v3107
    %v3109 = vsel %vm381, %v3100, 0.0
    %v3110 = vadd.f32 %v3108, %v3109
    %v3111 = vsel %vm381, %v3101, 0.0
    %v3112 = vadd.f32 %v3110, %v3111
    %v3113 = vsel %vm381, %v3102, 0.0
    %v3114 = vadd.f32 %v3112, %v3113
    %v3115 = vsel %vm381, %v3103, 0.0
    %v3116 = vadd.f32 %v3114, %v3115
    %v3117 = vsel %vm381, %v3104, 0.0
    %v3118 = vadd.f32 %v3116, %v3117
    %v3119 = vsel %vm381, %v3105, 0.0
    %v3120 = vadd.f32 %v3118, %v3119
    %v3122 = vsel %vm198, %v3120, 0
    %3124 = vmatprep.subr.mxu0 0.0
    %3125 = vmatpush1.msra.mxu0 %v1650
    %3126 = vmatprep.subr.mxu0 0.0
    %3127 = vmatpush1.msra.mxu0 %v1651
    %3128 = vmatprep.subr.mxu0 0.0
    %3129 = vmatpush1.msra.mxu0 %v1652
    %3130 = vmatprep.subr.mxu0 0.0
    %3131 = vmatpush1.msra.mxu0 %v1653
    %3132 = vmatprep.subr.mxu0 0.0
    %3133 = vmatpush1.msra.mxu0 0.0
    %3134 = vmatprep.subr.mxu0 0.0
    %3135 = vmatpush1.msra.mxu0 0.0
    %3136 = vmatprep.subr.mxu0 0.0
    %3137 = vmatpush1.msra.mxu0 0.0
    %3138 = vmatprep.subr.mxu0 0.0
    %3139 = vmatpush1.msra.mxu0 0.0
    %3140 = vmatprep.subr.mxu0 0.0
    %3141 = vmatpush1.msra.mxu0 0.0
    %3142 = vmatprep.subr.mxu0 0.0
    %3143 = vmatpush1.msra.mxu0 0.0
    %3144 = vmatprep.subr.mxu0 0.0
    %3145 = vmatpush1.msra.mxu0 0.0
    %3146 = vmatprep.subr.mxu0 0.0
    %3147 = vmatpush1.msra.mxu0 0.0
    %3148 = vmatprep.subr.mxu0 0.0
    %3149 = vmatpush1.msra.mxu0 0.0
    %3150 = vmatprep.subr.mxu0 0.0
    %3151 = vmatpush1.msra.mxu0 0.0
    %3152 = vmatprep.subr.mxu0 0.0
    %3153 = vmatpush1.msra.mxu0 0.0
    %3154 = vmatprep.subr.mxu0 0.0
    %3155 = vmatpush1.msra.mxu0 0.0
    %3156 = vmatprep.subr.mxu0 0.0
    %3157 = vmatpush1.msra.mxu0 0.0
    %3158 = vmatprep.subr.mxu0 0.0
    %3159 = vmatpush1.msra.mxu0 0.0
    %3160 = vmatprep.subr.mxu0 0.0
    %3161 = vmatpush1.msra.mxu0 0.0
    %3162 = vmatprep.subr.mxu0 0.0
    %3163 = vmatpush1.msra.mxu0 0.0
    %3164 = vmatprep.subr.mxu0 0.0
    %3165 = vmatpush1.msra.mxu0 0.0
    %3166 = vmatprep.subr.mxu0 0.0
    %3167 = vmatpush1.msra.mxu0 0.0
    %3168 = vmatprep.subr.mxu0 0.0
    %3169 = vmatpush1.msra.mxu0 0.0
    %3170 = vmatprep.subr.mxu0 0.0
    %3171 = vmatpush1.msra.mxu0 0.0
    %3172 = vmatprep.subr.mxu0 0.0
    %3173 = vmatpush1.msra.mxu0 0.0
    %3174 = vmatprep.subr.mxu0 0.0
    %3175 = vmatpush1.msra.mxu0 0.0
    %3176 = vmatprep.subr.mxu0 0.0
    %3177 = vmatpush1.msra.mxu0 0.0
    %3178 = vmatprep.subr.mxu0 0.0
    %3179 = vmatpush1.msra.mxu0 0.0
    %3180 = vmatprep.subr.mxu0 0.0
    %3181 = vmatpush1.msra.mxu0 0.0
    %3182 = vmatprep.subr.mxu0 0.0
    %3183 = vmatpush1.msra.mxu0 0.0
    %3184 = vmatprep.subr.mxu0 0.0
    %3185 = vmatpush1.msra.mxu0 0.0
    %3186 = vmatprep.subr.mxu0 0.0
    %3187 = vmatpush1.msra.mxu0 0.0
    %3188 = vmatprep.mubr.f32.mxu0 0.0
    %3189 = vmatmul.mubr.f32.gmra.mrb[0].mxu0 %v3122
    %v3190 = vpop.f32.mrb[0].mxu0
    %v3191 = vadd.f32 0.0, %v3190
    %v3192 = vpop.f32.mrb[0].mxu0
    %3193 = vdwg.mxu0
    %v3195 = vsel %vm198, %v2999, 0
    %3197 = vmatprep.subr.mxu0 0.0
    %3198 = vmatpush1.msra.mxu0 %v1646
    %3199 = vmatprep.subr.mxu0 0.0
    %3200 = vmatpush1.msra.mxu0 %v1647
    %3201 = vmatprep.subr.mxu0 0.0
    %3202 = vmatpush1.msra.mxu0 %v1648
    %3203 = vmatprep.subr.mxu0 0.0
    %3204 = vmatpush1.msra.mxu0 %v1649
    %3205 = vmatprep.subr.mxu0 0.0
    %3206 = vmatpush1.msra.mxu0 0.0
    %3207 = vmatprep.subr.mxu0 0.0
    %3208 = vmatpush1.msra.mxu0 0.0
    %3209 = vmatprep.subr.mxu0 0.0
    %3210 = vmatpush1.msra.mxu0 0.0
    %3211 = vmatprep.subr.mxu0 0.0
    %3212 = vmatpush1.msra.mxu0 0.0
    %3213 = vmatprep.subr.mxu0 0.0
    %3214 = vmatpush1.msra.mxu0 0.0
    %3215 = vmatprep.subr.mxu0 0.0
    %3216 = vmatpush1.msra.mxu0 0.0
    %3217 = vmatprep.subr.mxu0 0.0
    %3218 = vmatpush1.msra.mxu0 0.0
    %3219 = vmatprep.subr.mxu0 0.0
    %3220 = vmatpush1.msra.mxu0 0.0
    %3221 = vmatprep.subr.mxu0 0.0
    %3222 = vmatpush1.msra.mxu0 0.0
    %3223 = vmatprep.subr.mxu0 0.0
    %3224 = vmatpush1.msra.mxu0 0.0
    %3225 = vmatprep.subr.mxu0 0.0
    %3226 = vmatpush1.msra.mxu0 0.0
    %3227 = vmatprep.subr.mxu0 0.0
    %3228 = vmatpush1.msra.mxu0 0.0
    %3229 = vmatprep.subr.mxu0 0.0
    %3230 = vmatpush1.msra.mxu0 0.0
    %3231 = vmatprep.subr.mxu0 0.0
    %3232 = vmatpush1.msra.mxu0 0.0
    %3233 = vmatprep.subr.mxu0 0.0
    %3234 = vmatpush1.msra.mxu0 0.0
    %3235 = vmatprep.subr.mxu0 0.0
    %3236 = vmatpush1.msra.mxu0 0.0
    %3237 = vmatprep.subr.mxu0 0.0
    %3238 = vmatpush1.msra.mxu0 0.0
    %3239 = vmatprep.subr.mxu0 0.0
    %3240 = vmatpush1.msra.mxu0 0.0
    %3241 = vmatprep.subr.mxu0 0.0
    %3242 = vmatpush1.msra.mxu0 0.0
    %3243 = vmatprep.subr.mxu0 0.0
    %3244 = vmatpush1.msra.mxu0 0.0
    %3245 = vmatprep.subr.mxu0 0.0
    %3246 = vmatpush1.msra.mxu0 0.0
    %3247 = vmatprep.subr.mxu0 0.0
    %3248 = vmatpush1.msra.mxu0 0.0
    %3249 = vmatprep.subr.mxu0 0.0
    %3250 = vmatpush1.msra.mxu0 0.0
    %3251 = vmatprep.subr.mxu0 0.0
    %3252 = vmatpush1.msra.mxu0 0.0
    %3253 = vmatprep.subr.mxu0 0.0
    %3254 = vmatpush1.msra.mxu0 0.0
    %3255 = vmatprep.subr.mxu0 0.0
    %3256 = vmatpush1.msra.mxu0 0.0
    %3257 = vmatprep.subr.mxu0 0.0
    %3258 = vmatpush1.msra.mxu0 0.0
    %3259 = vmatprep.subr.mxu0 0.0
    %3260 = vmatpush1.msra.mxu0 0.0
    %3261 = vmatprep.mubr.f32.mxu0 0.0
    %3262 = vmatmul.mubr.f32.gmra.mrb[0].mxu0 %v3195
    %v3263 = vpop.f32.mrb[0].mxu0
    %v3264 = vadd.f32 %v3191, %v3263
    %v3265 = vpop.f32.mrb[0].mxu0
    %3266 = vdwg.mxu0
    %v3267 = vadd.f32 %v3264, %v2023
    %3268 = vmatprep.subr.mxu0 0.0
    %3269 = vmatpush1.msra.mxu0 %v1654
    %3270 = vmatprep.subr.mxu0 0.0
    %3271 = vmatpush1.msra.mxu0 %v1655
    %3272 = vmatprep.subr.mxu0 0.0
    %3273 = vmatpush1.msra.mxu0 %v1656
    %3274 = vmatprep.subr.mxu0 0.0
    %3275 = vmatpush1.msra.mxu0 %v1657
    %3276 = vmatprep.subr.mxu0 0.0
    %3277 = vmatpush1.msra.mxu0 0.0
    %3278 = vmatprep.subr.mxu0 0.0
    %3279 = vmatpush1.msra.mxu0 0.0
    %3280 = vmatprep.subr.mxu0 0.0
    %3281 = vmatpush1.msra.mxu0 0.0
    %3282 = vmatprep.subr.mxu0 0.0
    %3283 = vmatpush1.msra.mxu0 0.0
    %3284 = vmatprep.subr.mxu0 0.0
    %3285 = vmatpush1.msra.mxu0 0.0
    %3286 = vmatprep.subr.mxu0 0.0
    %3287 = vmatpush1.msra.mxu0 0.0
    %3288 = vmatprep.subr.mxu0 0.0
    %3289 = vmatpush1.msra.mxu0 0.0
    %3290 = vmatprep.subr.mxu0 0.0
    %3291 = vmatpush1.msra.mxu0 0.0
    %3292 = vmatprep.subr.mxu0 0.0
    %3293 = vmatpush1.msra.mxu0 0.0
    %3294 = vmatprep.subr.mxu0 0.0
    %3295 = vmatpush1.msra.mxu0 0.0
    %3296 = vmatprep.subr.mxu0 0.0
    %3297 = vmatpush1.msra.mxu0 0.0
    %3298 = vmatprep.subr.mxu0 0.0
    %3299 = vmatpush1.msra.mxu0 0.0
    %3300 = vmatprep.subr.mxu0 0.0
    %3301 = vmatpush1.msra.mxu0 0.0
    %3302 = vmatprep.subr.mxu0 0.0
    %3303 = vmatpush1.msra.mxu0 0.0
    %3304 = vmatprep.subr.mxu0 0.0
    %3305 = vmatpush1.msra.mxu0 0.0
    %3306 = vmatprep.subr.mxu0 0.0
    %3307 = vmatpush1.msra.mxu0 0.0
    %3308 = vmatprep.subr.mxu0 0.0
    %3309 = vmatpush1.msra.mxu0 0.0
    %3310 = vmatprep.subr.mxu0 0.0
    %3311 = vmatpush1.msra.mxu0 0.0
    %3312 = vmatprep.subr.mxu0 0.0
    %3313 = vmatpush1.msra.mxu0 0.0
    %3314 = vmatprep.subr.mxu0 0.0
    %3315 = vmatpush1.msra.mxu0 0.0
    %3316 = vmatprep.subr.mxu0 0.0
    %3317 = vmatpush1.msra.mxu0 0.0
    %3318 = vmatprep.subr.mxu0 0.0
    %3319 = vmatpush1.msra.mxu0 0.0
    %3320 = vmatprep.subr.mxu0 0.0
    %3321 = vmatpush1.msra.mxu0 0.0
    %3322 = vmatprep.subr.mxu0 0.0
    %3323 = vmatpush1.msra.mxu0 0.0
    %3324 = vmatprep.subr.mxu0 0.0
    %3325 = vmatpush1.msra.mxu0 0.0
    %3326 = vmatprep.subr.mxu0 0.0
    %3327 = vmatpush1.msra.mxu0 0.0
    %3328 = vmatprep.subr.mxu0 0.0
    %3329 = vmatpush1.msra.mxu0 0.0
    %3330 = vmatprep.subr.mxu0 0.0
    %3331 = vmatpush1.msra.mxu0 0.0
    %3332 = vmatprep.mubr.f32.mxu0 0.0
    %3333 = vmatmul.mubr.f32.gmra.mrb[0].mxu0 %v2823
    %v3334 = vpop.f32.mrb[0].mxu0
    %v3335 = vadd.f32 %v2030, %v3334
    %v3336 = vpop.f32.mrb[0].mxu0
    %3337 = vdwg.mxu0
    %v3338 = vadd.f32 %v3267, %v3335
    %v3339 = vxor.u32 %v3338, 2147483648
    %v3340 = vmul.f32 %v3339, 1.442695
    %v3341 = vpow.pop %v3340
    %v3342 = vadd.f32 %v3341, 1.0
    %v3343 = vrcp.pop %v3342
    %v3344 = vmul.f32 1.0, %v3343
    %3346 = vrot.lane.b32.xlu0 %v3335, 64
    %v3347 = vpop.permute.xlu0 %3346
    %v3349 = vmul.f32 %v3344, %v3347
    %3351 = vrot.lane.b32.xlu0 %v3349, 64
    %v3352 = vpop.permute.xlu0 %3351
    %v3354 = vadd.f32 %v3267, %v3352
    %v3355 = vtanh.pop %v3354
    %v3356 = vsub.f32 1.0, %v3344
    %3358 = vrot.lane.b32.xlu0 %v3355, 96
    %v3359 = vpop.permute.xlu0 %3358
    %v3361 = vmul.f32 %v3356, %v3359
    %v3362 = vmul.f32 %v3344, %v2749
    %v3363 = vadd.f32 %v3361, %v3362
    %3364 = vmatprep.subr.mxu0 0.0
    %3365 = vmatpush1.msra.mxu0 %v1664
    %3366 = vmatprep.subr.mxu0 0.0
    %3367 = vmatpush1.msra.mxu0 %v1665
    %3368 = vmatprep.subr.mxu0 0.0
    %3369 = vmatpush1.msra.mxu0 %v1666
    %3370 = vmatprep.subr.mxu0 0.0
    %3371 = vmatpush1.msra.mxu0 %v1667
    %3372 = vmatprep.subr.mxu0 0.0
    %3373 = vmatpush1.msra.mxu0 0.0
    %3374 = vmatprep.subr.mxu0 0.0
    %3375 = vmatpush1.msra.mxu0 0.0
    %3376 = vmatprep.subr.mxu0 0.0
    %3377 = vmatpush1.msra.mxu0 0.0
    %3378 = vmatprep.subr.mxu0 0.0
    %3379 = vmatpush1.msra.mxu0 0.0
    %3380 = vmatprep.subr.mxu0 0.0
    %3381 = vmatpush1.msra.mxu0 0.0
    %3382 = vmatprep.subr.mxu0 0.0
    %3383 = vmatpush1.msra.mxu0 0.0
    %3384 = vmatprep.subr.mxu0 0.0
    %3385 = vmatpush1.msra.mxu0 0.0
    %3386 = vmatprep.subr.mxu0 0.0
    %3387 = vmatpush1.msra.mxu0 0.0
    %3388 = vmatprep.subr.mxu0 0.0
    %3389 = vmatpush1.msra.mxu0 0.0
    %3390 = vmatprep.subr.mxu0 0.0
    %3391 = vmatpush1.msra.mxu0 0.0
    %3392 = vmatprep.subr.mxu0 0.0
    %3393 = vmatpush1.msra.mxu0 0.0
    %3394 = vmatprep.subr.mxu0 0.0
    %3395 = vmatpush1.msra.mxu0 0.0
    %3396 = vmatprep.subr.mxu0 0.0
    %3397 = vmatpush1.msra.mxu0 0.0
    %3398 = vmatprep.subr.mxu0 0.0
    %3399 = vmatpush1.msra.mxu0 0.0
    %3400 = vmatprep.subr.mxu0 0.0
    %3401 = vmatpush1.msra.mxu0 0.0
    %3402 = vmatprep.subr.mxu0 0.0
    %3403 = vmatpush1.msra.mxu0 0.0
    %3404 = vmatprep.subr.mxu0 0.0
    %3405 = vmatpush1.msra.mxu0 0.0
    %3406 = vmatprep.subr.mxu0 0.0
    %3407 = vmatpush1.msra.mxu0 0.0
    %3408 = vmatprep.subr.mxu0 0.0
    %3409 = vmatpush1.msra.mxu0 0.0
    %3410 = vmatprep.subr.mxu0 0.0
    %3411 = vmatpush1.msra.mxu0 0.0
    %3412 = vmatprep.subr.mxu0 0.0
    %3413 = vmatpush1.msra.mxu0 0.0
    %3414 = vmatprep.subr.mxu0 0.0
    %3415 = vmatpush1.msra.mxu0 0.0
    %3416 = vmatprep.subr.mxu0 0.0
    %3417 = vmatpush1.msra.mxu0 0.0
    %3418 = vmatprep.subr.mxu0 0.0
    %3419 = vmatpush1.msra.mxu0 0.0
    %3420 = vmatprep.subr.mxu0 0.0
    %3421 = vmatpush1.msra.mxu0 0.0
    %3422 = vmatprep.subr.mxu0 0.0
    %3423 = vmatpush1.msra.mxu0 0.0
    %3424 = vmatprep.subr.mxu0 0.0
    %3425 = vmatpush1.msra.mxu0 0.0
    %3426 = vmatprep.subr.mxu0 0.0
    %3427 = vmatpush1.msra.mxu0 0.0
    %3428 = vmatprep.mubr.f32.mxu0 0.0
    %3429 = vmatmul.mubr.f32.gmra.mrb[0].mxu0 %v3122
    %v3430 = vpop.f32.mrb[0].mxu0
    %v3431 = vadd.f32 0.0, %v3430
    %v3432 = vpop.f32.mrb[0].mxu0
    %3433 = vdwg.mxu0
    %3435 = vrot.lane.b32.xlu0 %v3363, 96
    %v3436 = vpop.permute.xlu0 %3435
    %v3437 = vsel %vm198, %v3436, 0
    %3439 = vmatprep.subr.mxu0 0.0
    %3440 = vmatpush1.msra.mxu0 %v1660
    %3441 = vmatprep.subr.mxu0 0.0
    %3442 = vmatpush1.msra.mxu0 %v1661
    %3443 = vmatprep.subr.mxu0 0.0
    %3444 = vmatpush1.msra.mxu0 %v1662
    %3445 = vmatprep.subr.mxu0 0.0
    %3446 = vmatpush1.msra.mxu0 %v1663
    %3447 = vmatprep.subr.mxu0 0.0
    %3448 = vmatpush1.msra.mxu0 0.0
    %3449 = vmatprep.subr.mxu0 0.0
    %3450 = vmatpush1.msra.mxu0 0.0
    %3451 = vmatprep.subr.mxu0 0.0
    %3452 = vmatpush1.msra.mxu0 0.0
    %3453 = vmatprep.subr.mxu0 0.0
    %3454 = vmatpush1.msra.mxu0 0.0
    %3455 = vmatprep.subr.mxu0 0.0
    %3456 = vmatpush1.msra.mxu0 0.0
    %3457 = vmatprep.subr.mxu0 0.0
    %3458 = vmatpush1.msra.mxu0 0.0
    %3459 = vmatprep.subr.mxu0 0.0
    %3460 = vmatpush1.msra.mxu0 0.0
    %3461 = vmatprep.subr.mxu0 0.0
    %3462 = vmatpush1.msra.mxu0 0.0
    %3463 = vmatprep.subr.mxu0 0.0
    %3464 = vmatpush1.msra.mxu0 0.0
    %3465 = vmatprep.subr.mxu0 0.0
    %3466 = vmatpush1.msra.mxu0 0.0
    %3467 = vmatprep.subr.mxu0 0.0
    %3468 = vmatpush1.msra.mxu0 0.0
    %3469 = vmatprep.subr.mxu0 0.0
    %3470 = vmatpush1.msra.mxu0 0.0
    %3471 = vmatprep.subr.mxu0 0.0
    %3472 = vmatpush1.msra.mxu0 0.0
    %3473 = vmatprep.subr.mxu0 0.0
    %3474 = vmatpush1.msra.mxu0 0.0
    %3475 = vmatprep.subr.mxu0 0.0
    %3476 = vmatpush1.msra.mxu0 0.0
    %3477 = vmatprep.subr.mxu0 0.0
    %3478 = vmatpush1.msra.mxu0 0.0
    %3479 = vmatprep.subr.mxu0 0.0
    %3480 = vmatpush1.msra.mxu0 0.0
    %3481 = vmatprep.subr.mxu0 0.0
    %3482 = vmatpush1.msra.mxu0 0.0
    %3483 = vmatprep.subr.mxu0 0.0
    %3484 = vmatpush1.msra.mxu0 0.0
    %3485 = vmatprep.subr.mxu0 0.0
    %3486 = vmatpush1.msra.mxu0 0.0
    %3487 = vmatprep.subr.mxu0 0.0
    %3488 = vmatpush1.msra.mxu0 0.0
    %3489 = vmatprep.subr.mxu0 0.0
    %3490 = vmatpush1.msra.mxu0 0.0
    %3491 = vmatprep.subr.mxu0 0.0
    %3492 = vmatpush1.msra.mxu0 0.0
    %3493 = vmatprep.subr.mxu0 0.0
    %3494 = vmatpush1.msra.mxu0 0.0
    %3495 = vmatprep.subr.mxu0 0.0
    %3496 = vmatpush1.msra.mxu0 0.0
    %3497 = vmatprep.subr.mxu0 0.0
    %3498 = vmatpush1.msra.mxu0 0.0
    %3499 = vmatprep.subr.mxu0 0.0
    %3500 = vmatpush1.msra.mxu0 0.0
    %3501 = vmatprep.subr.mxu0 0.0
    %3502 = vmatpush1.msra.mxu0 0.0
    %3503 = vmatprep.mubr.f32.mxu0 0.0
    %3504 = vmatmul.mubr.f32.gmra.mrb[0].mxu0 %v3437
    %v3505 = vpop.f32.mrb[0].mxu0
    %v3506 = vadd.f32 %v3431, %v3505
    %v3507 = vpop.f32.mrb[0].mxu0
    %3508 = vdwg.mxu0
    %v3509 = vadd.f32 %v3506, %v2279
    %s3510 = scalar_lea.vmem [#allocation20], 4
    %3511 = vst [vmem:[%s3510] sm:$0x3] %v3509
    %v3512 = vsel %vm2283, %v3509, -1e+30
    %v3513 = vsel %vm1786, %v3512, -inf
    %3514 = vmax.xlane.f32.xlu0 %v3513
    %v3515 = vpop.xlane.xlu0 %3514
    %vm3516 = vcmp.eq.f32.partialorder %v3512, %v3515
    %v3517 = vsel %vm3516, %v1670, 128
    %v3518 = vsel %vm1786, %v3517, 2147483647
    %v3519 = vand.u32 %v3518, 65535
    %v3520 = vshra.s32 %v3518, 16
    %v3521 = vcvt.s32.f32 %v3519
    %v3522 = vcvt.s32.f32 %v3520
    %3523 = vmin.xlane.f32.xlu0 %v3522
    %v3524 = vpop.xlane.xlu0 %3523
    %vm3525 = vcmp.eq.f32.partialorder %v3522, %v3524
    %v3526 = vsel %vm3525, %v3521, inf
    %3527 = vmin.xlane.f32.xlu0 %v3526
    %v3528 = vpop.xlane.xlu0 %3527
    %v3529 = vcvt.f32.s32 %v3528
    %v3530 = vcvt.f32.s32 %v3524
    %v3531 = vshll.u32 %v3530, 16
    %v3532 = vadd.s32 %v3531, %v3529
    %s3533 = scalar_lea.vmem %s0, 6
    %v3534 = vld [vmem:[%s3533] sm:$0x3]
    %vm3535 = vcmp.ge.s32.totalorder %v3534, 0
    %v3536 = vsel %vm3535, %v3534, %v3532
    %3537 = vset.pattern.permute.xlu0 0
    %3538 = vperm.xlu0 %3537, %v3536
    %v3539 = vpop.permute.xlu0 %3538
    %vm3540 = vcmp.eq.s32.totalorder %v1670, %v3539
    %v3541 = vsel %vm3540, 1, 0
    %v3542 = vcvt.s32.f32 %v3541
    %v3544 = vsel %vm1680, %v3542, 0
    %3546 = vmatprep.subr.mxu0 0.0
    %3547 = vmatpush1.msra.mxu0 %v1644
    %3548 = vmatprep.subr.mxu0 0.0
    %3549 = vmatpush1.msra.mxu0 %v1645
    %3550 = vmatprep.subr.mxu0 0.0
    %3551 = vmatpush1.msra.mxu0 0.0
    %3552 = vmatprep.subr.mxu0 0.0
    %3553 = vmatpush1.msra.mxu0 0.0
    %3554 = vmatprep.subr.mxu0 0.0
    %3555 = vmatpush1.msra.mxu0 0.0
    %3556 = vmatprep.subr.mxu0 0.0
    %3557 = vmatpush1.msra.mxu0 0.0
    %3558 = vmatprep.subr.mxu0 0.0
    %3559 = vmatpush1.msra.mxu0 0.0
    %3560 = vmatprep.subr.mxu0 0.0
    %3561 = vmatpush1.msra.mxu0 0.0
    %3562 = vmatprep.subr.mxu0 0.0
    %3563 = vmatpush1.msra.mxu0 0.0
    %3564 = vmatprep.subr.mxu0 0.0
    %3565 = vmatpush1.msra.mxu0 0.0
    %3566 = vmatprep.subr.mxu0 0.0
    %3567 = vmatpush1.msra.mxu0 0.0
    %3568 = vmatprep.subr.mxu0 0.0
    %3569 = vmatpush1.msra.mxu0 0.0
    %3570 = vmatprep.subr.mxu0 0.0
    %3571 = vmatpush1.msra.mxu0 0.0
    %3572 = vmatprep.subr.mxu0 0.0
    %3573 = vmatpush1.msra.mxu0 0.0
    %3574 = vmatprep.subr.mxu0 0.0
    %3575 = vmatpush1.msra.mxu0 0.0
    %3576 = vmatprep.subr.mxu0 0.0
    %3577 = vmatpush1.msra.mxu0 0.0
    %3578 = vmatprep.subr.mxu0 0.0
    %3579 = vmatpush1.msra.mxu0 0.0
    %3580 = vmatprep.subr.mxu0 0.0
    %3581 = vmatpush1.msra.mxu0 0.0
    %3582 = vmatprep.subr.mxu0 0.0
    %3583 = vmatpush1.msra.mxu0 0.0
    %3584 = vmatprep.subr.mxu0 0.0
    %3585 = vmatpush1.msra.mxu0 0.0
    %3586 = vmatprep.subr.mxu0 0.0
    %3587 = vmatpush1.msra.mxu0 0.0
    %3588 = vmatprep.subr.mxu0 0.0
    %3589 = vmatpush1.msra.mxu0 0.0
    %3590 = vmatprep.subr.mxu0 0.0
    %3591 = vmatpush1.msra.mxu0 0.0
    %3592 = vmatprep.subr.mxu0 0.0
    %3593 = vmatpush1.msra.mxu0 0.0
    %3594 = vmatprep.subr.mxu0 0.0
    %3595 = vmatpush1.msra.mxu0 0.0
    %3596 = vmatprep.subr.mxu0 0.0
    %3597 = vmatpush1.msra.mxu0 0.0
    %3598 = vmatprep.subr.mxu0 0.0
    %3599 = vmatpush1.msra.mxu0 0.0
    %3600 = vmatprep.subr.mxu0 0.0
    %3601 = vmatpush1.msra.mxu0 0.0
    %3602 = vmatprep.subr.mxu0 0.0
    %3603 = vmatpush1.msra.mxu0 0.0
    %3604 = vmatprep.subr.mxu0 0.0
    %3605 = vmatpush1.msra.mxu0 0.0
    %3606 = vmatprep.subr.mxu0 0.0
    %3607 = vmatpush1.msra.mxu0 0.0
    %3608 = vmatprep.subr.mxu0 0.0
    %3609 = vmatpush1.msra.mxu0 0.0
    %3610 = vmatprep.mubr.f32.mxu0 0.0
    %3611 = vmatmul.mubr.f32.gmra.mrb[0].mxu0 %v3544
    %v3612 = vpop.f32.mrb[0].mxu0
    %v3613 = vadd.f32 0.0, %v3612
    %v3614 = vpop.f32.mrb[0].mxu0
    %3615 = vdwg.mxu0
    %v3617 = vmul.f32 %v1636, %v3436
    %v3618 = vmul.f32 %v1637, %v3436
    %v3619 = vmul.f32 %v1638, %v3436
    %v3620 = vmul.f32 %v1639, %v3436
    %v3621 = vmul.f32 %v1640, %v3436
    %v3622 = vmul.f32 %v1641, %v3436
    %v3623 = vmul.f32 %v1642, %v3436
    %v3624 = vmul.f32 %v1643, %v3436
    %v3625 = vsel %vm381, %v3617, 0.0
    %3626 = vadd.xlane.f32.xlu0 %v3625
    %v3627 = vpop.xlane.xlu0 %3626
    %v3628 = vsel %vm381, %v3618, 0.0
    %3629 = vadd.xlane.f32.xlu0 %v3628
    %v3630 = vpop.xlane.xlu0 %3629
    %v3631 = vsel %vm381, %v3619, 0.0
    %3632 = vadd.xlane.f32.xlu0 %v3631
    %v3633 = vpop.xlane.xlu0 %3632
    %v3634 = vsel %vm381, %v3620, 0.0
    %3635 = vadd.xlane.f32.xlu0 %v3634
    %v3636 = vpop.xlane.xlu0 %3635
    %v3637 = vsel %vm381, %v3621, 0.0
    %3638 = vadd.xlane.f32.xlu0 %v3637
    %v3639 = vpop.xlane.xlu0 %3638
    %v3640 = vsel %vm381, %v3622, 0.0
    %3641 = vadd.xlane.f32.xlu0 %v3640
    %v3642 = vpop.xlane.xlu0 %3641
    %v3643 = vsel %vm381, %v3623, 0.0
    %3644 = vadd.xlane.f32.xlu0 %v3643
    %v3645 = vpop.xlane.xlu0 %3644
    %v3646 = vsel %vm381, %v3624, 0.0
    %3647 = vadd.xlane.f32.xlu0 %v3646
    %v3648 = vpop.xlane.xlu0 %3647
    %v3649 = vsel %vm1786, %v3627, -inf
    %v3650 = vsel %vm1786, %v3630, -inf
    %v3651 = vsel %vm1786, %v3633, -inf
    %v3652 = vsel %vm1786, %v3636, -inf
    %v3653 = vsel %vm1786, %v3639, -inf
    %v3654 = vmax.f32 %v3649, %v3653
    %v3655 = vsel %vm1786, %v3642, -inf
    %v3656 = vmax.f32 %v3650, %v3655
    %v3657 = vsel %vm1786, %v3645, -inf
    %v3658 = vmax.f32 %v3651, %v3657
    %v3659 = vsel %vm1786, %v3648, -inf
    %v3660 = vmax.f32 %v3652, %v3659
    %v3661 = vmax.f32 %v3654, %v3656
    %v3662 = vmax.f32 %v3658, %v3660
    %v3663 = vmax.f32 %v3661, %v3662
    %v3664 = vsub.f32 %v3627, %v3663
    %v3665 = vsub.f32 %v3630, %v3663
    %v3666 = vsub.f32 %v3633, %v3663
    %v3667 = vsub.f32 %v3636, %v3663
    %v3668 = vsub.f32 %v3639, %v3663
    %v3669 = vsub.f32 %v3642, %v3663
    %v3670 = vsub.f32 %v3645, %v3663
    %v3671 = vsub.f32 %v3648, %v3663
    %v3672 = vmul.f32 %v3664, 1.442695
    %v3673 = vpow.pop %v3672
    %v3674 = vmul.f32 %v3665, 1.442695
    %v3675 = vpow.pop %v3674
    %v3676 = vmul.f32 %v3666, 1.442695
    %v3677 = vpow.pop %v3676
    %v3678 = vmul.f32 %v3667, 1.442695
    %v3679 = vpow.pop %v3678
    %v3680 = vmul.f32 %v3668, 1.442695
    %v3681 = vpow.pop %v3680
    %v3682 = vmul.f32 %v3669, 1.442695
    %v3683 = vpow.pop %v3682
    %v3684 = vmul.f32 %v3670, 1.442695
    %v3685 = vpow.pop %v3684
    %v3686 = vmul.f32 %v3671, 1.442695
    %v3687 = vpow.pop %v3686
    %v3688 = vsel %vm1786, %v3673, 0.0
    %v3689 = vsel %vm1786, %v3675, 0.0
    %v3690 = vadd.f32 %v3688, %v3689
    %v3691 = vsel %vm1786, %v3677, 0.0
    %v3692 = vadd.f32 %v3690, %v3691
    %v3693 = vsel %vm1786, %v3679, 0.0
    %v3694 = vadd.f32 %v3692, %v3693
    %v3695 = vsel %vm1786, %v3681, 0.0
    %v3696 = vadd.f32 %v3694, %v3695
    %v3697 = vsel %vm1786, %v3683, 0.0
    %v3698 = vadd.f32 %v3696, %v3697
    %v3699 = vsel %vm1786, %v3685, 0.0
    %v3700 = vadd.f32 %v3698, %v3699
    %v3701 = vsel %vm1786, %v3687, 0.0
    %v3702 = vadd.f32 %v3700, %v3701
    %v3703 = vrcp.pop %v3702
    %v3704 = vmul.f32 %v3673, %v3703
    %v3705 = vmul.f32 %v3675, %v3703
    %v3706 = vmul.f32 %v3677, %v3703
    %v3707 = vmul.f32 %v3679, %v3703
    %v3708 = vmul.f32 %v3681, %v3703
    %v3709 = vmul.f32 %v3683, %v3703
    %v3710 = vmul.f32 %v3685, %v3703
    %v3711 = vmul.f32 %v3687, %v3703
    %v3712 = vmul.f32 %v3704, %v1636
    %v3713 = vmul.f32 %v3705, %v1637
    %v3714 = vmul.f32 %v3706, %v1638
    %v3715 = vmul.f32 %v3707, %v1639
    %v3716 = vmul.f32 %v3708, %v1640
    %v3717 = vmul.f32 %v3709, %v1641
    %v3718 = vmul.f32 %v3710, %v1642
    %v3719 = vmul.f32 %v3711, %v1643
    %v3720 = vsel %vm381, %v3712, 0.0
    %v3721 = vsel %vm381, %v3713, 0.0
    %v3722 = vadd.f32 %v3720, %v3721
    %v3723 = vsel %vm381, %v3714, 0.0
    %v3724 = vadd.f32 %v3722, %v3723
    %v3725 = vsel %vm381, %v3715, 0.0
    %v3726 = vadd.f32 %v3724, %v3725
    %v3727 = vsel %vm381, %v3716, 0.0
    %v3728 = vadd.f32 %v3726, %v3727
    %v3729 = vsel %vm381, %v3717, 0.0
    %v3730 = vadd.f32 %v3728, %v3729
    %v3731 = vsel %vm381, %v3718, 0.0
    %v3732 = vadd.f32 %v3730, %v3731
    %v3733 = vsel %vm381, %v3719, 0.0
    %v3734 = vadd.f32 %v3732, %v3733
    %v3736 = vsel %vm198, %v3734, 0
    %3738 = vmatprep.subr.mxu0 0.0
    %3739 = vmatpush1.msra.mxu0 %v1650
    %3740 = vmatprep.subr.mxu0 0.0
    %3741 = vmatpush1.msra.mxu0 %v1651
    %3742 = vmatprep.subr.mxu0 0.0
    %3743 = vmatpush1.msra.mxu0 %v1652
    %3744 = vmatprep.subr.mxu0 0.0
    %3745 = vmatpush1.msra.mxu0 %v1653
    %3746 = vmatprep.subr.mxu0 0.0
    %3747 = vmatpush1.msra.mxu0 0.0
    %3748 = vmatprep.subr.mxu0 0.0
    %3749 = vmatpush1.msra.mxu0 0.0
    %3750 = vmatprep.subr.mxu0 0.0
    %3751 = vmatpush1.msra.mxu0 0.0
    %3752 = vmatprep.subr.mxu0 0.0
    %3753 = vmatpush1.msra.mxu0 0.0
    %3754 = vmatprep.subr.mxu0 0.0
    %3755 = vmatpush1.msra.mxu0 0.0
    %3756 = vmatprep.subr.mxu0 0.0
    %3757 = vmatpush1.msra.mxu0 0.0
    %3758 = vmatprep.subr.mxu0 0.0
    %3759 = vmatpush1.msra.mxu0 0.0
    %3760 = vmatprep.subr.mxu0 0.0
    %3761 = vmatpush1.msra.mxu0 0.0
    %3762 = vmatprep.subr.mxu0 0.0
    %3763 = vmatpush1.msra.mxu0 0.0
    %3764 = vmatprep.subr.mxu0 0.0
    %3765 = vmatpush1.msra.mxu0 0.0
    %3766 = vmatprep.subr.mxu0 0.0
    %3767 = vmatpush1.msra.mxu0 0.0
    %3768 = vmatprep.subr.mxu0 0.0
    %3769 = vmatpush1.msra.mxu0 0.0
    %3770 = vmatprep.subr.mxu0 0.0
    %3771 = vmatpush1.msra.mxu0 0.0
    %3772 = vmatprep.subr.mxu0 0.0
    %3773 = vmatpush1.msra.mxu0 0.0
    %3774 = vmatprep.subr.mxu0 0.0
    %3775 = vmatpush1.msra.mxu0 0.0
    %3776 = vmatprep.subr.mxu0 0.0
    %3777 = vmatpush1.msra.mxu0 0.0
    %3778 = vmatprep.subr.mxu0 0.0
    %3779 = vmatpush1.msra.mxu0 0.0
    %3780 = vmatprep.subr.mxu0 0.0
    %3781 = vmatpush1.msra.mxu0 0.0
    %3782 = vmatprep.subr.mxu0 0.0
    %3783 = vmatpush1.msra.mxu0 0.0
    %3784 = vmatprep.subr.mxu0 0.0
    %3785 = vmatpush1.msra.mxu0 0.0
    %3786 = vmatprep.subr.mxu0 0.0
    %3787 = vmatpush1.msra.mxu0 0.0
    %3788 = vmatprep.subr.mxu0 0.0
    %3789 = vmatpush1.msra.mxu0 0.0
    %3790 = vmatprep.subr.mxu0 0.0
    %3791 = vmatpush1.msra.mxu0 0.0
    %3792 = vmatprep.subr.mxu0 0.0
    %3793 = vmatpush1.msra.mxu0 0.0
    %3794 = vmatprep.subr.mxu0 0.0
    %3795 = vmatpush1.msra.mxu0 0.0
    %3796 = vmatprep.subr.mxu0 0.0
    %3797 = vmatpush1.msra.mxu0 0.0
    %3798 = vmatprep.subr.mxu0 0.0
    %3799 = vmatpush1.msra.mxu0 0.0
    %3800 = vmatprep.subr.mxu0 0.0
    %3801 = vmatpush1.msra.mxu0 0.0
    %3802 = vmatprep.mubr.f32.mxu0 0.0
    %3803 = vmatmul.mubr.f32.gmra.mrb[0].mxu0 %v3736
    %v3804 = vpop.f32.mrb[0].mxu0
    %v3805 = vadd.f32 0.0, %v3804
    %v3806 = vpop.f32.mrb[0].mxu0
    %3807 = vdwg.mxu0
    %v3809 = vsel %vm198, %v3613, 0
    %3811 = vmatprep.subr.mxu0 0.0
    %3812 = vmatpush1.msra.mxu0 %v1646
    %3813 = vmatprep.subr.mxu0 0.0
    %3814 = vmatpush1.msra.mxu0 %v1647
    %3815 = vmatprep.subr.mxu0 0.0
    %3816 = vmatpush1.msra.mxu0 %v1648
    %3817 = vmatprep.subr.mxu0 0.0
    %3818 = vmatpush1.msra.mxu0 %v1649
    %3819 = vmatprep.subr.mxu0 0.0
    %3820 = vmatpush1.msra.mxu0 0.0
    %3821 = vmatprep.subr.mxu0 0.0
    %3822 = vmatpush1.msra.mxu0 0.0
    %3823 = vmatprep.subr.mxu0 0.0
    %3824 = vmatpush1.msra.mxu0 0.0
    %3825 = vmatprep.subr.mxu0 0.0
    %3826 = vmatpush1.msra.mxu0 0.0
    %3827 = vmatprep.subr.mxu0 0.0
    %3828 = vmatpush1.msra.mxu0 0.0
    %3829 = vmatprep.subr.mxu0 0.0
    %3830 = vmatpush1.msra.mxu0 0.0
    %3831 = vmatprep.subr.mxu0 0.0
    %3832 = vmatpush1.msra.mxu0 0.0
    %3833 = vmatprep.subr.mxu0 0.0
    %3834 = vmatpush1.msra.mxu0 0.0
    %3835 = vmatprep.subr.mxu0 0.0
    %3836 = vmatpush1.msra.mxu0 0.0
    %3837 = vmatprep.subr.mxu0 0.0
    %3838 = vmatpush1.msra.mxu0 0.0
    %3839 = vmatprep.subr.mxu0 0.0
    %3840 = vmatpush1.msra.mxu0 0.0
    %3841 = vmatprep.subr.mxu0 0.0
    %3842 = vmatpush1.msra.mxu0 0.0
    %3843 = vmatprep.subr.mxu0 0.0
    %3844 = vmatpush1.msra.mxu0 0.0
    %3845 = vmatprep.subr.mxu0 0.0
    %3846 = vmatpush1.msra.mxu0 0.0
    %3847 = vmatprep.subr.mxu0 0.0
    %3848 = vmatpush1.msra.mxu0 0.0
    %3849 = vmatprep.subr.mxu0 0.0
    %3850 = vmatpush1.msra.mxu0 0.0
    %3851 = vmatprep.subr.mxu0 0.0
    %3852 = vmatpush1.msra.mxu0 0.0
    %3853 = vmatprep.subr.mxu0 0.0
    %3854 = vmatpush1.msra.mxu0 0.0
    %3855 = vmatprep.subr.mxu0 0.0
    %3856 = vmatpush1.msra.mxu0 0.0
    %3857 = vmatprep.subr.mxu0 0.0
    %3858 = vmatpush1.msra.mxu0 0.0
    %3859 = vmatprep.subr.mxu0 0.0
    %3860 = vmatpush1.msra.mxu0 0.0
    %3861 = vmatprep.subr.mxu0 0.0
    %3862 = vmatpush1.msra.mxu0 0.0
    %3863 = vmatprep.subr.mxu0 0.0
    %3864 = vmatpush1.msra.mxu0 0.0
    %3865 = vmatprep.subr.mxu0 0.0
    %3866 = vmatpush1.msra.mxu0 0.0
    %3867 = vmatprep.subr.mxu0 0.0
    %3868 = vmatpush1.msra.mxu0 0.0
    %3869 = vmatprep.subr.mxu0 0.0
    %3870 = vmatpush1.msra.mxu0 0.0
    %3871 = vmatprep.subr.mxu0 0.0
    %3872 = vmatpush1.msra.mxu0 0.0
    %3873 = vmatprep.subr.mxu0 0.0
    %3874 = vmatpush1.msra.mxu0 0.0
    %3875 = vmatprep.mubr.f32.mxu0 0.0
    %3876 = vmatmul.mubr.f32.gmra.mrb[0].mxu0 %v3809
    %v3877 = vpop.f32.mrb[0].mxu0
    %v3878 = vadd.f32 %v3805, %v3877
    %v3879 = vpop.f32.mrb[0].mxu0
    %3880 = vdwg.mxu0
    %v3881 = vadd.f32 %v3878, %v2023
    %3882 = vmatprep.subr.mxu0 0.0
    %3883 = vmatpush1.msra.mxu0 %v1654
    %3884 = vmatprep.subr.mxu0 0.0
    %3885 = vmatpush1.msra.mxu0 %v1655
    %3886 = vmatprep.subr.mxu0 0.0
    %3887 = vmatpush1.msra.mxu0 %v1656
    %3888 = vmatprep.subr.mxu0 0.0
    %3889 = vmatpush1.msra.mxu0 %v1657
    %3890 = vmatprep.subr.mxu0 0.0
    %3891 = vmatpush1.msra.mxu0 0.0
    %3892 = vmatprep.subr.mxu0 0.0
    %3893 = vmatpush1.msra.mxu0 0.0
    %3894 = vmatprep.subr.mxu0 0.0
    %3895 = vmatpush1.msra.mxu0 0.0
    %3896 = vmatprep.subr.mxu0 0.0
    %3897 = vmatpush1.msra.mxu0 0.0
    %3898 = vmatprep.subr.mxu0 0.0
    %3899 = vmatpush1.msra.mxu0 0.0
    %3900 = vmatprep.subr.mxu0 0.0
    %3901 = vmatpush1.msra.mxu0 0.0
    %3902 = vmatprep.subr.mxu0 0.0
    %3903 = vmatpush1.msra.mxu0 0.0
    %3904 = vmatprep.subr.mxu0 0.0
    %3905 = vmatpush1.msra.mxu0 0.0
    %3906 = vmatprep.subr.mxu0 0.0
    %3907 = vmatpush1.msra.mxu0 0.0
    %3908 = vmatprep.subr.mxu0 0.0
    %3909 = vmatpush1.msra.mxu0 0.0
    %3910 = vmatprep.subr.mxu0 0.0
    %3911 = vmatpush1.msra.mxu0 0.0
    %3912 = vmatprep.subr.mxu0 0.0
    %3913 = vmatpush1.msra.mxu0 0.0
    %3914 = vmatprep.subr.mxu0 0.0
    %3915 = vmatpush1.msra.mxu0 0.0
    %3916 = vmatprep.subr.mxu0 0.0
    %3917 = vmatpush1.msra.mxu0 0.0
    %3918 = vmatprep.subr.mxu0 0.0
    %3919 = vmatpush1.msra.mxu0 0.0
    %3920 = vmatprep.subr.mxu0 0.0
    %3921 = vmatpush1.msra.mxu0 0.0
    %3922 = vmatprep.subr.mxu0 0.0
    %3923 = vmatpush1.msra.mxu0 0.0
    %3924 = vmatprep.subr.mxu0 0.0
    %3925 = vmatpush1.msra.mxu0 0.0
    %3926 = vmatprep.subr.mxu0 0.0
    %3927 = vmatpush1.msra.mxu0 0.0
    %3928 = vmatprep.subr.mxu0 0.0
    %3929 = vmatpush1.msra.mxu0 0.0
    %3930 = vmatprep.subr.mxu0 0.0
    %3931 = vmatpush1.msra.mxu0 0.0
    %3932 = vmatprep.subr.mxu0 0.0
    %3933 = vmatpush1.msra.mxu0 0.0
    %3934 = vmatprep.subr.mxu0 0.0
    %3935 = vmatpush1.msra.mxu0 0.0
    %3936 = vmatprep.subr.mxu0 0.0
    %3937 = vmatpush1.msra.mxu0 0.0
    %3938 = vmatprep.subr.mxu0 0.0
    %3939 = vmatpush1.msra.mxu0 0.0
    %3940 = vmatprep.subr.mxu0 0.0
    %3941 = vmatpush1.msra.mxu0 0.0
    %3942 = vmatprep.subr.mxu0 0.0
    %3943 = vmatpush1.msra.mxu0 0.0
    %3944 = vmatprep.subr.mxu0 0.0
    %3945 = vmatpush1.msra.mxu0 0.0
    %3946 = vmatprep.mubr.f32.mxu0 0.0
    %3947 = vmatmul.mubr.f32.gmra.mrb[0].mxu0 %v3437
    %v3948 = vpop.f32.mrb[0].mxu0
    %v3949 = vadd.f32 %v2030, %v3948
    %v3950 = vpop.f32.mrb[0].mxu0
    %3951 = vdwg.mxu0
    %v3952 = vadd.f32 %v3881, %v3949
    %v3953 = vxor.u32 %v3952, 2147483648
    %v3954 = vmul.f32 %v3953, 1.442695
    %v3955 = vpow.pop %v3954
    %v3956 = vadd.f32 %v3955, 1.0
    %v3957 = vrcp.pop %v3956
    %v3958 = vmul.f32 1.0, %v3957
    %3960 = vrot.lane.b32.xlu0 %v3949, 64
    %v3961 = vpop.permute.xlu0 %3960
    %v3963 = vmul.f32 %v3958, %v3961
    %3965 = vrot.lane.b32.xlu0 %v3963, 64
    %v3966 = vpop.permute.xlu0 %3965
    %v3968 = vadd.f32 %v3881, %v3966
    %v3969 = vtanh.pop %v3968
    %v3970 = vsub.f32 1.0, %v3958
    %3972 = vrot.lane.b32.xlu0 %v3969, 96
    %v3973 = vpop.permute.xlu0 %3972
    %v3975 = vmul.f32 %v3970, %v3973
    %v3976 = vmul.f32 %v3958, %v3363
    %v3977 = vadd.f32 %v3975, %v3976
    %3978 = vmatprep.subr.mxu0 0.0
    %3979 = vmatpush1.msra.mxu0 %v1664
    %3980 = vmatprep.subr.mxu0 0.0
    %3981 = vmatpush1.msra.mxu0 %v1665
    %3982 = vmatprep.subr.mxu0 0.0
    %3983 = vmatpush1.msra.mxu0 %v1666
    %3984 = vmatprep.subr.mxu0 0.0
    %3985 = vmatpush1.msra.mxu0 %v1667
    %3986 = vmatprep.subr.mxu0 0.0
    %3987 = vmatpush1.msra.mxu0 0.0
    %3988 = vmatprep.subr.mxu0 0.0
    %3989 = vmatpush1.msra.mxu0 0.0
    %3990 = vmatprep.subr.mxu0 0.0
    %3991 = vmatpush1.msra.mxu0 0.0
    %3992 = vmatprep.subr.mxu0 0.0
    %3993 = vmatpush1.msra.mxu0 0.0
    %3994 = vmatprep.subr.mxu0 0.0
    %3995 = vmatpush1.msra.mxu0 0.0
    %3996 = vmatprep.subr.mxu0 0.0
    %3997 = vmatpush1.msra.mxu0 0.0
    %3998 = vmatprep.subr.mxu0 0.0
    %3999 = vmatpush1.msra.mxu0 0.0
    %4000 = vmatprep.subr.mxu0 0.0
    %4001 = vmatpush1.msra.mxu0 0.0
    %4002 = vmatprep.subr.mxu0 0.0
    %4003 = vmatpush1.msra.mxu0 0.0
    %4004 = vmatprep.subr.mxu0 0.0
    %4005 = vmatpush1.msra.mxu0 0.0
    %4006 = vmatprep.subr.mxu0 0.0
    %4007 = vmatpush1.msra.mxu0 0.0
    %4008 = vmatprep.subr.mxu0 0.0
    %4009 = vmatpush1.msra.mxu0 0.0
    %4010 = vmatprep.subr.mxu0 0.0
    %4011 = vmatpush1.msra.mxu0 0.0
    %4012 = vmatprep.subr.mxu0 0.0
    %4013 = vmatpush1.msra.mxu0 0.0
    %4014 = vmatprep.subr.mxu0 0.0
    %4015 = vmatpush1.msra.mxu0 0.0
    %4016 = vmatprep.subr.mxu0 0.0
    %4017 = vmatpush1.msra.mxu0 0.0
    %4018 = vmatprep.subr.mxu0 0.0
    %4019 = vmatpush1.msra.mxu0 0.0
    %4020 = vmatprep.subr.mxu0 0.0
    %4021 = vmatpush1.msra.mxu0 0.0
    %4022 = vmatprep.subr.mxu0 0.0
    %4023 = vmatpush1.msra.mxu0 0.0
    %4024 = vmatprep.subr.mxu0 0.0
    %4025 = vmatpush1.msra.mxu0 0.0
    %4026 = vmatprep.subr.mxu0 0.0
    %4027 = vmatpush1.msra.mxu0 0.0
    %4028 = vmatprep.subr.mxu0 0.0
    %4029 = vmatpush1.msra.mxu0 0.0
    %4030 = vmatprep.subr.mxu0 0.0
    %4031 = vmatpush1.msra.mxu0 0.0
    %4032 = vmatprep.subr.mxu0 0.0
    %4033 = vmatpush1.msra.mxu0 0.0
    %4034 = vmatprep.subr.mxu0 0.0
    %4035 = vmatpush1.msra.mxu0 0.0
    %4036 = vmatprep.subr.mxu0 0.0
    %4037 = vmatpush1.msra.mxu0 0.0
    %4038 = vmatprep.subr.mxu0 0.0
    %4039 = vmatpush1.msra.mxu0 0.0
    %4040 = vmatprep.subr.mxu0 0.0
    %4041 = vmatpush1.msra.mxu0 0.0
    %4042 = vmatprep.mubr.f32.mxu0 0.0
    %4043 = vmatmul.mubr.f32.gmra.mrb[0].mxu0 %v3736
    %v4044 = vpop.f32.mrb[0].mxu0
    %v4045 = vadd.f32 0.0, %v4044
    %v4046 = vpop.f32.mrb[0].mxu0
    %4047 = vdwg.mxu0
    %4049 = vrot.lane.b32.xlu0 %v3977, 96
    %v4050 = vpop.permute.xlu0 %4049
    %v4051 = vsel %vm198, %v4050, 0
    %4053 = vmatprep.subr.mxu0 0.0
    %4054 = vmatpush1.msra.mxu0 %v1660
    %4055 = vmatprep.subr.mxu0 0.0
    %4056 = vmatpush1.msra.mxu0 %v1661
    %4057 = vmatprep.subr.mxu0 0.0
    %4058 = vmatpush1.msra.mxu0 %v1662
    %4059 = vmatprep.subr.mxu0 0.0
    %4060 = vmatpush1.msra.mxu0 %v1663
    %4061 = vmatprep.subr.mxu0 0.0
    %4062 = vmatpush1.msra.mxu0 0.0
    %4063 = vmatprep.subr.mxu0 0.0
    %4064 = vmatpush1.msra.mxu0 0.0
    %4065 = vmatprep.subr.mxu0 0.0
    %4066 = vmatpush1.msra.mxu0 0.0
    %4067 = vmatprep.subr.mxu0 0.0
    %4068 = vmatpush1.msra.mxu0 0.0
    %4069 = vmatprep.subr.mxu0 0.0
    %4070 = vmatpush1.msra.mxu0 0.0
    %4071 = vmatprep.subr.mxu0 0.0
    %4072 = vmatpush1.msra.mxu0 0.0
    %4073 = vmatprep.subr.mxu0 0.0
    %4074 = vmatpush1.msra.mxu0 0.0
    %4075 = vmatprep.subr.mxu0 0.0
    %4076 = vmatpush1.msra.mxu0 0.0
    %4077 = vmatprep.subr.mxu0 0.0
    %4078 = vmatpush1.msra.mxu0 0.0
    %4079 = vmatprep.subr.mxu0 0.0
    %4080 = vmatpush1.msra.mxu0 0.0
    %4081 = vmatprep.subr.mxu0 0.0
    %4082 = vmatpush1.msra.mxu0 0.0
    %4083 = vmatprep.subr.mxu0 0.0
    %4084 = vmatpush1.msra.mxu0 0.0
    %4085 = vmatprep.subr.mxu0 0.0
    %4086 = vmatpush1.msra.mxu0 0.0
    %4087 = vmatprep.subr.mxu0 0.0
    %4088 = vmatpush1.msra.mxu0 0.0
    %4089 = vmatprep.subr.mxu0 0.0
    %4090 = vmatpush1.msra.mxu0 0.0
    %4091 = vmatprep.subr.mxu0 0.0
    %4092 = vmatpush1.msra.mxu0 0.0
    %4093 = vmatprep.subr.mxu0 0.0
    %4094 = vmatpush1.msra.mxu0 0.0
    %4095 = vmatprep.subr.mxu0 0.0
    %4096 = vmatpush1.msra.mxu0 0.0
    %4097 = vmatprep.subr.mxu0 0.0
    %4098 = vmatpush1.msra.mxu0 0.0
    %4099 = vmatprep.subr.mxu0 0.0
    %4100 = vmatpush1.msra.mxu0 0.0
    %4101 = vmatprep.subr.mxu0 0.0
    %4102 = vmatpush1.msra.mxu0 0.0
    %4103 = vmatprep.subr.mxu0 0.0
    %4104 = vmatpush1.msra.mxu0 0.0
    %4105 = vmatprep.subr.mxu0 0.0
    %4106 = vmatpush1.msra.mxu0 0.0
    %4107 = vmatprep.subr.mxu0 0.0
    %4108 = vmatpush1.msra.mxu0 0.0
    %4109 = vmatprep.subr.mxu0 0.0
    %4110 = vmatpush1.msra.mxu0 0.0
    %4111 = vmatprep.subr.mxu0 0.0
    %4112 = vmatpush1.msra.mxu0 0.0
    %4113 = vmatprep.subr.mxu0 0.0
    %4114 = vmatpush1.msra.mxu0 0.0
    %4115 = vmatprep.subr.mxu0 0.0
    %4116 = vmatpush1.msra.mxu0 0.0
    %4117 = vmatprep.mubr.f32.mxu0 0.0
    %4118 = vmatmul.mubr.f32.gmra.mrb[0].mxu0 %v4051
    %v4119 = vpop.f32.mrb[0].mxu0
    %v4120 = vadd.f32 %v4045, %v4119
    %v4121 = vpop.f32.mrb[0].mxu0
    %4122 = vdwg.mxu0
    %v4123 = vadd.f32 %v4120, %v2279
    %s4124 = scalar_lea.vmem [#allocation20], 6
    %4125 = vst [vmem:[%s4124] sm:$0x3] %v4123
    %v4126 = vsel %vm2283, %v4123, -1e+30
    %v4127 = vsel %vm1786, %v4126, -inf
    %4128 = vmax.xlane.f32.xlu0 %v4127
    %v4129 = vpop.xlane.xlu0 %4128
    %vm4130 = vcmp.eq.f32.partialorder %v4126, %v4129
    %v4131 = vsel %vm4130, %v1670, 128
    %v4132 = vsel %vm1786, %v4131, 2147483647
    %v4133 = vand.u32 %v4132, 65535
    %v4134 = vshra.s32 %v4132, 16
    %v4135 = vcvt.s32.f32 %v4133
    %v4136 = vcvt.s32.f32 %v4134
    %4137 = vmin.xlane.f32.xlu0 %v4136
    %v4138 = vpop.xlane.xlu0 %4137
    %vm4139 = vcmp.eq.f32.partialorder %v4136, %v4138
    %v4140 = vsel %vm4139, %v4135, inf
    %4141 = vmin.xlane.f32.xlu0 %v4140
    %v4142 = vpop.xlane.xlu0 %4141
    %v4143 = vcvt.f32.s32 %v4142
    %v4144 = vcvt.f32.s32 %v4138
    %v4145 = vshll.u32 %v4144, 16
    %v4146 = vadd.s32 %v4145, %v4143
    %s4147 = scalar_lea.vmem %s0, 8
    %v4148 = vld [vmem:[%s4147] sm:$0x3]
    %vm4149 = vcmp.ge.s32.totalorder %v4148, 0
    %v4150 = vsel %vm4149, %v4148, %v4146
    %4151 = vset.pattern.permute.xlu0 0
    %4152 = vperm.xlu0 %4151, %v4150
    %v4153 = vpop.permute.xlu0 %4152
    %vm4154 = vcmp.eq.s32.totalorder %v1670, %v4153
    %v4155 = vsel %vm4154, 1, 0
    %v4156 = vcvt.s32.f32 %v4155
    %v4158 = vsel %vm1680, %v4156, 0
    %4160 = vmatprep.subr.mxu0 0.0
    %4161 = vmatpush1.msra.mxu0 %v1644
    %4162 = vmatprep.subr.mxu0 0.0
    %4163 = vmatpush1.msra.mxu0 %v1645
    %4164 = vmatprep.subr.mxu0 0.0
    %4165 = vmatpush1.msra.mxu0 0.0
    %4166 = vmatprep.subr.mxu0 0.0
    %4167 = vmatpush1.msra.mxu0 0.0
    %4168 = vmatprep.subr.mxu0 0.0
    %4169 = vmatpush1.msra.mxu0 0.0
    %4170 = vmatprep.subr.mxu0 0.0
    %4171 = vmatpush1.msra.mxu0 0.0
    %4172 = vmatprep.subr.mxu0 0.0
    %4173 = vmatpush1.msra.mxu0 0.0
    %4174 = vmatprep.subr.mxu0 0.0
    %4175 = vmatpush1.msra.mxu0 0.0
    %4176 = vmatprep.subr.mxu0 0.0
    %4177 = vmatpush1.msra.mxu0 0.0
    %4178 = vmatprep.subr.mxu0 0.0
    %4179 = vmatpush1.msra.mxu0 0.0
    %4180 = vmatprep.subr.mxu0 0.0
    %4181 = vmatpush1.msra.mxu0 0.0
    %4182 = vmatprep.subr.mxu0 0.0
    %4183 = vmatpush1.msra.mxu0 0.0
    %4184 = vmatprep.subr.mxu0 0.0
    %4185 = vmatpush1.msra.mxu0 0.0
    %4186 = vmatprep.subr.mxu0 0.0
    %4187 = vmatpush1.msra.mxu0 0.0
    %4188 = vmatprep.subr.mxu0 0.0
    %4189 = vmatpush1.msra.mxu0 0.0
    %4190 = vmatprep.subr.mxu0 0.0
    %4191 = vmatpush1.msra.mxu0 0.0
    %4192 = vmatprep.subr.mxu0 0.0
    %4193 = vmatpush1.msra.mxu0 0.0
    %4194 = vmatprep.subr.mxu0 0.0
    %4195 = vmatpush1.msra.mxu0 0.0
    %4196 = vmatprep.subr.mxu0 0.0
    %4197 = vmatpush1.msra.mxu0 0.0
    %4198 = vmatprep.subr.mxu0 0.0
    %4199 = vmatpush1.msra.mxu0 0.0
    %4200 = vmatprep.subr.mxu0 0.0
    %4201 = vmatpush1.msra.mxu0 0.0
    %4202 = vmatprep.subr.mxu0 0.0
    %4203 = vmatpush1.msra.mxu0 0.0
    %4204 = vmatprep.subr.mxu0 0.0
    %4205 = vmatpush1.msra.mxu0 0.0
    %4206 = vmatprep.subr.mxu0 0.0
    %4207 = vmatpush1.msra.mxu0 0.0
    %4208 = vmatprep.subr.mxu0 0.0
    %4209 = vmatpush1.msra.mxu0 0.0
    %4210 = vmatprep.subr.mxu0 0.0
    %4211 = vmatpush1.msra.mxu0 0.0
    %4212 = vmatprep.subr.mxu0 0.0
    %4213 = vmatpush1.msra.mxu0 0.0
    %4214 = vmatprep.subr.mxu0 0.0
    %4215 = vmatpush1.msra.mxu0 0.0
    %4216 = vmatprep.subr.mxu0 0.0
    %4217 = vmatpush1.msra.mxu0 0.0
    %4218 = vmatprep.subr.mxu0 0.0
    %4219 = vmatpush1.msra.mxu0 0.0
    %4220 = vmatprep.subr.mxu0 0.0
    %4221 = vmatpush1.msra.mxu0 0.0
    %4222 = vmatprep.subr.mxu0 0.0
    %4223 = vmatpush1.msra.mxu0 0.0
    %4224 = vmatprep.mubr.f32.mxu0 0.0
    %4225 = vmatmul.mubr.f32.gmra.mrb[0].mxu0 %v4158
    %v4226 = vpop.f32.mrb[0].mxu0
    %v4227 = vadd.f32 0.0, %v4226
    %v4228 = vpop.f32.mrb[0].mxu0
    %4229 = vdwg.mxu0
    %v4231 = vmul.f32 %v1636, %v4050
    %v4232 = vmul.f32 %v1637, %v4050
    %v4233 = vmul.f32 %v1638, %v4050
    %v4234 = vmul.f32 %v1639, %v4050
    %v4235 = vmul.f32 %v1640, %v4050
    %v4236 = vmul.f32 %v1641, %v4050
    %v4237 = vmul.f32 %v1642, %v4050
    %v4238 = vmul.f32 %v1643, %v4050
    %v4239 = vsel %vm381, %v4231, 0.0
    %4240 = vadd.xlane.f32.xlu0 %v4239
    %v4241 = vpop.xlane.xlu0 %4240
    %v4242 = vsel %vm381, %v4232, 0.0
    %4243 = vadd.xlane.f32.xlu0 %v4242
    %v4244 = vpop.xlane.xlu0 %4243
    %v4245 = vsel %vm381, %v4233, 0.0
    %4246 = vadd.xlane.f32.xlu0 %v4245
    %v4247 = vpop.xlane.xlu0 %4246
    %v4248 = vsel %vm381, %v4234, 0.0
    %4249 = vadd.xlane.f32.xlu0 %v4248
    %v4250 = vpop.xlane.xlu0 %4249
    %v4251 = vsel %vm381, %v4235, 0.0
    %4252 = vadd.xlane.f32.xlu0 %v4251
    %v4253 = vpop.xlane.xlu0 %4252
    %v4254 = vsel %vm381, %v4236, 0.0
    %4255 = vadd.xlane.f32.xlu0 %v4254
    %v4256 = vpop.xlane.xlu0 %4255
    %v4257 = vsel %vm381, %v4237, 0.0
    %4258 = vadd.xlane.f32.xlu0 %v4257
    %v4259 = vpop.xlane.xlu0 %4258
    %v4260 = vsel %vm381, %v4238, 0.0
    %4261 = vadd.xlane.f32.xlu0 %v4260
    %v4262 = vpop.xlane.xlu0 %4261
    %v4263 = vsel %vm1786, %v4241, -inf
    %v4264 = vsel %vm1786, %v4244, -inf
    %v4265 = vsel %vm1786, %v4247, -inf
    %v4266 = vsel %vm1786, %v4250, -inf
    %v4267 = vsel %vm1786, %v4253, -inf
    %v4268 = vmax.f32 %v4263, %v4267
    %v4269 = vsel %vm1786, %v4256, -inf
    %v4270 = vmax.f32 %v4264, %v4269
    %v4271 = vsel %vm1786, %v4259, -inf
    %v4272 = vmax.f32 %v4265, %v4271
    %v4273 = vsel %vm1786, %v4262, -inf
    %v4274 = vmax.f32 %v4266, %v4273
    %v4275 = vmax.f32 %v4268, %v4270
    %v4276 = vmax.f32 %v4272, %v4274
    %v4277 = vmax.f32 %v4275, %v4276
    %v4278 = vsub.f32 %v4241, %v4277
    %v4279 = vsub.f32 %v4244, %v4277
    %v4280 = vsub.f32 %v4247, %v4277
    %v4281 = vsub.f32 %v4250, %v4277
    %v4282 = vsub.f32 %v4253, %v4277
    %v4283 = vsub.f32 %v4256, %v4277
    %v4284 = vsub.f32 %v4259, %v4277
    %v4285 = vsub.f32 %v4262, %v4277
    %v4286 = vmul.f32 %v4278, 1.442695
    %v4287 = vpow.pop %v4286
    %v4288 = vmul.f32 %v4279, 1.442695
    %v4289 = vpow.pop %v4288
    %v4290 = vmul.f32 %v4280, 1.442695
    %v4291 = vpow.pop %v4290
    %v4292 = vmul.f32 %v4281, 1.442695
    %v4293 = vpow.pop %v4292
    %v4294 = vmul.f32 %v4282, 1.442695
    %v4295 = vpow.pop %v4294
    %v4296 = vmul.f32 %v4283, 1.442695
    %v4297 = vpow.pop %v4296
    %v4298 = vmul.f32 %v4284, 1.442695
    %v4299 = vpow.pop %v4298
    %v4300 = vmul.f32 %v4285, 1.442695
    %v4301 = vpow.pop %v4300
    %v4302 = vsel %vm1786, %v4287, 0.0
    %v4303 = vsel %vm1786, %v4289, 0.0
    %v4304 = vadd.f32 %v4302, %v4303
    %v4305 = vsel %vm1786, %v4291, 0.0
    %v4306 = vadd.f32 %v4304, %v4305
    %v4307 = vsel %vm1786, %v4293, 0.0
    %v4308 = vadd.f32 %v4306, %v4307
    %v4309 = vsel %vm1786, %v4295, 0.0
    %v4310 = vadd.f32 %v4308, %v4309
    %v4311 = vsel %vm1786, %v4297, 0.0
    %v4312 = vadd.f32 %v4310, %v4311
    %v4313 = vsel %vm1786, %v4299, 0.0
    %v4314 = vadd.f32 %v4312, %v4313
    %v4315 = vsel %vm1786, %v4301, 0.0
    %v4316 = vadd.f32 %v4314, %v4315
    %v4317 = vrcp.pop %v4316
    %v4318 = vmul.f32 %v4287, %v4317
    %v4319 = vmul.f32 %v4289, %v4317
    %v4320 = vmul.f32 %v4291, %v4317
    %v4321 = vmul.f32 %v4293, %v4317
    %v4322 = vmul.f32 %v4295, %v4317
    %v4323 = vmul.f32 %v4297, %v4317
    %v4324 = vmul.f32 %v4299, %v4317
    %v4325 = vmul.f32 %v4301, %v4317
    %v4326 = vmul.f32 %v4318, %v1636
    %v4327 = vmul.f32 %v4319, %v1637
    %v4328 = vmul.f32 %v4320, %v1638
    %v4329 = vmul.f32 %v4321, %v1639
    %v4330 = vmul.f32 %v4322, %v1640
    %v4331 = vmul.f32 %v4323, %v1641
    %v4332 = vmul.f32 %v4324, %v1642
    %v4333 = vmul.f32 %v4325, %v1643
    %v4334 = vsel %vm381, %v4326, 0.0
    %v4335 = vsel %vm381, %v4327, 0.0
    %v4336 = vadd.f32 %v4334, %v4335
    %v4337 = vsel %vm381, %v4328, 0.0
    %v4338 = vadd.f32 %v4336, %v4337
    %v4339 = vsel %vm381, %v4329, 0.0
    %v4340 = vadd.f32 %v4338, %v4339
    %v4341 = vsel %vm381, %v4330, 0.0
    %v4342 = vadd.f32 %v4340, %v4341
    %v4343 = vsel %vm381, %v4331, 0.0
    %v4344 = vadd.f32 %v4342, %v4343
    %v4345 = vsel %vm381, %v4332, 0.0
    %v4346 = vadd.f32 %v4344, %v4345
    %v4347 = vsel %vm381, %v4333, 0.0
    %v4348 = vadd.f32 %v4346, %v4347
    %v4350 = vsel %vm198, %v4348, 0
    %4352 = vmatprep.subr.mxu0 0.0
    %4353 = vmatpush1.msra.mxu0 %v1650
    %4354 = vmatprep.subr.mxu0 0.0
    %4355 = vmatpush1.msra.mxu0 %v1651
    %4356 = vmatprep.subr.mxu0 0.0
    %4357 = vmatpush1.msra.mxu0 %v1652
    %4358 = vmatprep.subr.mxu0 0.0
    %4359 = vmatpush1.msra.mxu0 %v1653
    %4360 = vmatprep.subr.mxu0 0.0
    %4361 = vmatpush1.msra.mxu0 0.0
    %4362 = vmatprep.subr.mxu0 0.0
    %4363 = vmatpush1.msra.mxu0 0.0
    %4364 = vmatprep.subr.mxu0 0.0
    %4365 = vmatpush1.msra.mxu0 0.0
    %4366 = vmatprep.subr.mxu0 0.0
    %4367 = vmatpush1.msra.mxu0 0.0
    %4368 = vmatprep.subr.mxu0 0.0
    %4369 = vmatpush1.msra.mxu0 0.0
    %4370 = vmatprep.subr.mxu0 0.0
    %4371 = vmatpush1.msra.mxu0 0.0
    %4372 = vmatprep.subr.mxu0 0.0
    %4373 = vmatpush1.msra.mxu0 0.0
    %4374 = vmatprep.subr.mxu0 0.0
    %4375 = vmatpush1.msra.mxu0 0.0
    %4376 = vmatprep.subr.mxu0 0.0
    %4377 = vmatpush1.msra.mxu0 0.0
    %4378 = vmatprep.subr.mxu0 0.0
    %4379 = vmatpush1.msra.mxu0 0.0
    %4380 = vmatprep.subr.mxu0 0.0
    %4381 = vmatpush1.msra.mxu0 0.0
    %4382 = vmatprep.subr.mxu0 0.0
    %4383 = vmatpush1.msra.mxu0 0.0
    %4384 = vmatprep.subr.mxu0 0.0
    %4385 = vmatpush1.msra.mxu0 0.0
    %4386 = vmatprep.subr.mxu0 0.0
    %4387 = vmatpush1.msra.mxu0 0.0
    %4388 = vmatprep.subr.mxu0 0.0
    %4389 = vmatpush1.msra.mxu0 0.0
    %4390 = vmatprep.subr.mxu0 0.0
    %4391 = vmatpush1.msra.mxu0 0.0
    %4392 = vmatprep.subr.mxu0 0.0
    %4393 = vmatpush1.msra.mxu0 0.0
    %4394 = vmatprep.subr.mxu0 0.0
    %4395 = vmatpush1.msra.mxu0 0.0
    %4396 = vmatprep.subr.mxu0 0.0
    %4397 = vmatpush1.msra.mxu0 0.0
    %4398 = vmatprep.subr.mxu0 0.0
    %4399 = vmatpush1.msra.mxu0 0.0
    %4400 = vmatprep.subr.mxu0 0.0
    %4401 = vmatpush1.msra.mxu0 0.0
    %4402 = vmatprep.subr.mxu0 0.0
    %4403 = vmatpush1.msra.mxu0 0.0
    %4404 = vmatprep.subr.mxu0 0.0
    %4405 = vmatpush1.msra.mxu0 0.0
    %4406 = vmatprep.subr.mxu0 0.0
    %4407 = vmatpush1.msra.mxu0 0.0
    %4408 = vmatprep.subr.mxu0 0.0
    %4409 = vmatpush1.msra.mxu0 0.0
    %4410 = vmatprep.subr.mxu0 0.0
    %4411 = vmatpush1.msra.mxu0 0.0
    %4412 = vmatprep.subr.mxu0 0.0
    %4413 = vmatpush1.msra.mxu0 0.0
    %4414 = vmatprep.subr.mxu0 0.0
    %4415 = vmatpush1.msra.mxu0 0.0
    %4416 = vmatprep.mubr.f32.mxu0 0.0
    %4417 = vmatmul.mubr.f32.gmra.mrb[0].mxu0 %v4350
    %v4418 = vpop.f32.mrb[0].mxu0
    %v4419 = vadd.f32 0.0, %v4418
    %v4420 = vpop.f32.mrb[0].mxu0
    %4421 = vdwg.mxu0
    %v4423 = vsel %vm198, %v4227, 0
    %4425 = vmatprep.subr.mxu0 0.0
    %4426 = vmatpush1.msra.mxu0 %v1646
    %4427 = vmatprep.subr.mxu0 0.0
    %4428 = vmatpush1.msra.mxu0 %v1647
    %4429 = vmatprep.subr.mxu0 0.0
    %4430 = vmatpush1.msra.mxu0 %v1648
    %4431 = vmatprep.subr.mxu0 0.0
    %4432 = vmatpush1.msra.mxu0 %v1649
    %4433 = vmatprep.subr.mxu0 0.0
    %4434 = vmatpush1.msra.mxu0 0.0
    %4435 = vmatprep.subr.mxu0 0.0
    %4436 = vmatpush1.msra.mxu0 0.0
    %4437 = vmatprep.subr.mxu0 0.0
    %4438 = vmatpush1.msra.mxu0 0.0
    %4439 = vmatprep.subr.mxu0 0.0
    %4440 = vmatpush1.msra.mxu0 0.0
    %4441 = vmatprep.subr.mxu0 0.0
    %4442 = vmatpush1.msra.mxu0 0.0
    %4443 = vmatprep.subr.mxu0 0.0
    %4444 = vmatpush1.msra.mxu0 0.0
    %4445 = vmatprep.subr.mxu0 0.0
    %4446 = vmatpush1.msra.mxu0 0.0
    %4447 = vmatprep.subr.mxu0 0.0
    %4448 = vmatpush1.msra.mxu0 0.0
    %4449 = vmatprep.subr.mxu0 0.0
    %4450 = vmatpush1.msra.mxu0 0.0
    %4451 = vmatprep.subr.mxu0 0.0
    %4452 = vmatpush1.msra.mxu0 0.0
    %4453 = vmatprep.subr.mxu0 0.0
    %4454 = vmatpush1.msra.mxu0 0.0
    %4455 = vmatprep.subr.mxu0 0.0
    %4456 = vmatpush1.msra.mxu0 0.0
    %4457 = vmatprep.subr.mxu0 0.0
    %4458 = vmatpush1.msra.mxu0 0.0
    %4459 = vmatprep.subr.mxu0 0.0
    %4460 = vmatpush1.msra.mxu0 0.0
    %4461 = vmatprep.subr.mxu0 0.0
    %4462 = vmatpush1.msra.mxu0 0.0
    %4463 = vmatprep.subr.mxu0 0.0
    %4464 = vmatpush1.msra.mxu0 0.0
    %4465 = vmatprep.subr.mxu0 0.0
    %4466 = vmatpush1.msra.mxu0 0.0
    %4467 = vmatprep.subr.mxu0 0.0
    %4468 = vmatpush1.msra.mxu0 0.0
    %4469 = vmatprep.subr.mxu0 0.0
    %4470 = vmatpush1.msra.mxu0 0.0
    %4471 = vmatprep.subr.mxu0 0.0
    %4472 = vmatpush1.msra.mxu0 0.0
    %4473 = vmatprep.subr.mxu0 0.0
    %4474 = vmatpush1.msra.mxu0 0.0
    %4475 = vmatprep.subr.mxu0 0.0
    %4476 = vmatpush1.msra.mxu0 0.0
    %4477 = vmatprep.subr.mxu0 0.0
    %4478 = vmatpush1.msra.mxu0 0.0
    %4479 = vmatprep.subr.mxu0 0.0
    %4480 = vmatpush1.msra.mxu0 0.0
    %4481 = vmatprep.subr.mxu0 0.0
    %4482 = vmatpush1.msra.mxu0 0.0
    %4483 = vmatprep.subr.mxu0 0.0
    %4484 = vmatpush1.msra.mxu0 0.0
    %4485 = vmatprep.subr.mxu0 0.0
    %4486 = vmatpush1.msra.mxu0 0.0
    %4487 = vmatprep.subr.mxu0 0.0
    %4488 = vmatpush1.msra.mxu0 0.0
    %4489 = vmatprep.mubr.f32.mxu0 0.0
    %4490 = vmatmul.mubr.f32.gmra.mrb[0].mxu0 %v4423
    %v4491 = vpop.f32.mrb[0].mxu0
    %v4492 = vadd.f32 %v4419, %v4491
    %v4493 = vpop.f32.mrb[0].mxu0
    %4494 = vdwg.mxu0
    %v4495 = vadd.f32 %v4492, %v2023
    %4496 = vmatprep.subr.mxu0 0.0
    %4497 = vmatpush1.msra.mxu0 %v1654
    %4498 = vmatprep.subr.mxu0 0.0
    %4499 = vmatpush1.msra.mxu0 %v1655
    %4500 = vmatprep.subr.mxu0 0.0
    %4501 = vmatpush1.msra.mxu0 %v1656
    %4502 = vmatprep.subr.mxu0 0.0
    %4503 = vmatpush1.msra.mxu0 %v1657
    %4504 = vmatprep.subr.mxu0 0.0
    %4505 = vmatpush1.msra.mxu0 0.0
    %4506 = vmatprep.subr.mxu0 0.0
    %4507 = vmatpush1.msra.mxu0 0.0
    %4508 = vmatprep.subr.mxu0 0.0
    %4509 = vmatpush1.msra.mxu0 0.0
    %4510 = vmatprep.subr.mxu0 0.0
    %4511 = vmatpush1.msra.mxu0 0.0
    %4512 = vmatprep.subr.mxu0 0.0
    %4513 = vmatpush1.msra.mxu0 0.0
    %4514 = vmatprep.subr.mxu0 0.0
    %4515 = vmatpush1.msra.mxu0 0.0
    %4516 = vmatprep.subr.mxu0 0.0
    %4517 = vmatpush1.msra.mxu0 0.0
    %4518 = vmatprep.subr.mxu0 0.0
    %4519 = vmatpush1.msra.mxu0 0.0
    %4520 = vmatprep.subr.mxu0 0.0
    %4521 = vmatpush1.msra.mxu0 0.0
    %4522 = vmatprep.subr.mxu0 0.0
    %4523 = vmatpush1.msra.mxu0 0.0
    %4524 = vmatprep.subr.mxu0 0.0
    %4525 = vmatpush1.msra.mxu0 0.0
    %4526 = vmatprep.subr.mxu0 0.0
    %4527 = vmatpush1.msra.mxu0 0.0
    %4528 = vmatprep.subr.mxu0 0.0
    %4529 = vmatpush1.msra.mxu0 0.0
    %4530 = vmatprep.subr.mxu0 0.0
    %4531 = vmatpush1.msra.mxu0 0.0
    %4532 = vmatprep.subr.mxu0 0.0
    %4533 = vmatpush1.msra.mxu0 0.0
    %4534 = vmatprep.subr.mxu0 0.0
    %4535 = vmatpush1.msra.mxu0 0.0
    %4536 = vmatprep.subr.mxu0 0.0
    %4537 = vmatpush1.msra.mxu0 0.0
    %4538 = vmatprep.subr.mxu0 0.0
    %4539 = vmatpush1.msra.mxu0 0.0
    %4540 = vmatprep.subr.mxu0 0.0
    %4541 = vmatpush1.msra.mxu0 0.0
    %4542 = vmatprep.subr.mxu0 0.0
    %4543 = vmatpush1.msra.mxu0 0.0
    %4544 = vmatprep.subr.mxu0 0.0
    %4545 = vmatpush1.msra.mxu0 0.0
    %4546 = vmatprep.subr.mxu0 0.0
    %4547 = vmatpush1.msra.mxu0 0.0
    %4548 = vmatprep.subr.mxu0 0.0
    %4549 = vmatpush1.msra.mxu0 0.0
    %4550 = vmatprep.subr.mxu0 0.0
    %4551 = vmatpush1.msra.mxu0 0.0
    %4552 = vmatprep.subr.mxu0 0.0
    %4553 = vmatpush1.msra.mxu0 0.0
    %4554 = vmatprep.subr.mxu0 0.0
    %4555 = vmatpush1.msra.mxu0 0.0
    %4556 = vmatprep.subr.mxu0 0.0
    %4557 = vmatpush1.msra.mxu0 0.0
    %4558 = vmatprep.subr.mxu0 0.0
    %4559 = vmatpush1.msra.mxu0 0.0
    %4560 = vmatprep.mubr.f32.mxu0 0.0
    %4561 = vmatmul.mubr.f32.gmra.mrb[0].mxu0 %v4051
    %v4562 = vpop.f32.mrb[0].mxu0
    %v4563 = vadd.f32 %v2030, %v4562
    %v4564 = vpop.f32.mrb[0].mxu0
    %4565 = vdwg.mxu0
    %v4566 = vadd.f32 %v4495, %v4563
    %v4567 = vxor.u32 %v4566, 2147483648
    %v4568 = vmul.f32 %v4567, 1.442695
    %v4569 = vpow.pop %v4568
    %v4570 = vadd.f32 %v4569, 1.0
    %v4571 = vrcp.pop %v4570
    %v4572 = vmul.f32 1.0, %v4571
    %4574 = vrot.lane.b32.xlu0 %v4563, 64
    %v4575 = vpop.permute.xlu0 %4574
    %v4577 = vmul.f32 %v4572, %v4575
    %4579 = vrot.lane.b32.xlu0 %v4577, 64
    %v4580 = vpop.permute.xlu0 %4579
    %v4582 = vadd.f32 %v4495, %v4580
    %v4583 = vtanh.pop %v4582
    %v4584 = vsub.f32 1.0, %v4572
    %4586 = vrot.lane.b32.xlu0 %v4583, 96
    %v4587 = vpop.permute.xlu0 %4586
    %v4589 = vmul.f32 %v4584, %v4587
    %v4590 = vmul.f32 %v4572, %v3977
    %v4591 = vadd.f32 %v4589, %v4590
    %4592 = vmatprep.subr.mxu0 0.0
    %4593 = vmatpush1.msra.mxu0 %v1664
    %4594 = vmatprep.subr.mxu0 0.0
    %4595 = vmatpush1.msra.mxu0 %v1665
    %4596 = vmatprep.subr.mxu0 0.0
    %4597 = vmatpush1.msra.mxu0 %v1666
    %4598 = vmatprep.subr.mxu0 0.0
    %4599 = vmatpush1.msra.mxu0 %v1667
    %4600 = vmatprep.subr.mxu0 0.0
    %4601 = vmatpush1.msra.mxu0 0.0
    %4602 = vmatprep.subr.mxu0 0.0
    %4603 = vmatpush1.msra.mxu0 0.0
    %4604 = vmatprep.subr.mxu0 0.0
    %4605 = vmatpush1.msra.mxu0 0.0
    %4606 = vmatprep.subr.mxu0 0.0
    %4607 = vmatpush1.msra.mxu0 0.0
    %4608 = vmatprep.subr.mxu0 0.0
    %4609 = vmatpush1.msra.mxu0 0.0
    %4610 = vmatprep.subr.mxu0 0.0
    %4611 = vmatpush1.msra.mxu0 0.0
    %4612 = vmatprep.subr.mxu0 0.0
    %4613 = vmatpush1.msra.mxu0 0.0
    %4614 = vmatprep.subr.mxu0 0.0
    %4615 = vmatpush1.msra.mxu0 0.0
    %4616 = vmatprep.subr.mxu0 0.0
    %4617 = vmatpush1.msra.mxu0 0.0
    %4618 = vmatprep.subr.mxu0 0.0
    %4619 = vmatpush1.msra.mxu0 0.0
    %4620 = vmatprep.subr.mxu0 0.0
    %4621 = vmatpush1.msra.mxu0 0.0
    %4622 = vmatprep.subr.mxu0 0.0
    %4623 = vmatpush1.msra.mxu0 0.0
    %4624 = vmatprep.subr.mxu0 0.0
    %4625 = vmatpush1.msra.mxu0 0.0
    %4626 = vmatprep.subr.mxu0 0.0
    %4627 = vmatpush1.msra.mxu0 0.0
    %4628 = vmatprep.subr.mxu0 0.0
    %4629 = vmatpush1.msra.mxu0 0.0
    %4630 = vmatprep.subr.mxu0 0.0
    %4631 = vmatpush1.msra.mxu0 0.0
    %4632 = vmatprep.subr.mxu0 0.0
    %4633 = vmatpush1.msra.mxu0 0.0
    %4634 = vmatprep.subr.mxu0 0.0
    %4635 = vmatpush1.msra.mxu0 0.0
    %4636 = vmatprep.subr.mxu0 0.0
    %4637 = vmatpush1.msra.mxu0 0.0
    %4638 = vmatprep.subr.mxu0 0.0
    %4639 = vmatpush1.msra.mxu0 0.0
    %4640 = vmatprep.subr.mxu0 0.0
    %4641 = vmatpush1.msra.mxu0 0.0
    %4642 = vmatprep.subr.mxu0 0.0
    %4643 = vmatpush1.msra.mxu0 0.0
    %4644 = vmatprep.subr.mxu0 0.0
    %4645 = vmatpush1.msra.mxu0 0.0
    %4646 = vmatprep.subr.mxu0 0.0
    %4647 = vmatpush1.msra.mxu0 0.0
    %4648 = vmatprep.subr.mxu0 0.0
    %4649 = vmatpush1.msra.mxu0 0.0
    %4650 = vmatprep.subr.mxu0 0.0
    %4651 = vmatpush1.msra.mxu0 0.0
    %4652 = vmatprep.subr.mxu0 0.0
    %4653 = vmatpush1.msra.mxu0 0.0
    %4654 = vmatprep.subr.mxu0 0.0
    %4655 = vmatpush1.msra.mxu0 0.0
    %4656 = vmatprep.mubr.f32.mxu0 0.0
    %4657 = vmatmul.mubr.f32.gmra.mrb[0].mxu0 %v4350
    %v4658 = vpop.f32.mrb[0].mxu0
    %v4659 = vadd.f32 0.0, %v4658
    %v4660 = vpop.f32.mrb[0].mxu0
    %4661 = vdwg.mxu0
    %4663 = vrot.lane.b32.xlu0 %v4591, 96
    %v4664 = vpop.permute.xlu0 %4663
    %v4665 = vsel %vm198, %v4664, 0
    %4667 = vmatprep.subr.mxu0 0.0
    %4668 = vmatpush1.msra.mxu0 %v1660
    %4669 = vmatprep.subr.mxu0 0.0
    %4670 = vmatpush1.msra.mxu0 %v1661
    %4671 = vmatprep.subr.mxu0 0.0
    %4672 = vmatpush1.msra.mxu0 %v1662
    %4673 = vmatprep.subr.mxu0 0.0
    %4674 = vmatpush1.msra.mxu0 %v1663
    %4675 = vmatprep.subr.mxu0 0.0
    %4676 = vmatpush1.msra.mxu0 0.0
    %4677 = vmatprep.subr.mxu0 0.0
    %4678 = vmatpush1.msra.mxu0 0.0
    %4679 = vmatprep.subr.mxu0 0.0
    %4680 = vmatpush1.msra.mxu0 0.0
    %4681 = vmatprep.subr.mxu0 0.0
    %4682 = vmatpush1.msra.mxu0 0.0
    %4683 = vmatprep.subr.mxu0 0.0
    %4684 = vmatpush1.msra.mxu0 0.0
    %4685 = vmatprep.subr.mxu0 0.0
    %4686 = vmatpush1.msra.mxu0 0.0
    %4687 = vmatprep.subr.mxu0 0.0
    %4688 = vmatpush1.msra.mxu0 0.0
    %4689 = vmatprep.subr.mxu0 0.0
    %4690 = vmatpush1.msra.mxu0 0.0
    %4691 = vmatprep.subr.mxu0 0.0
    %4692 = vmatpush1.msra.mxu0 0.0
    %4693 = vmatprep.subr.mxu0 0.0
    %4694 = vmatpush1.msra.mxu0 0.0
    %4695 = vmatprep.subr.mxu0 0.0
    %4696 = vmatpush1.msra.mxu0 0.0
    %4697 = vmatprep.subr.mxu0 0.0
    %4698 = vmatpush1.msra.mxu0 0.0
    %4699 = vmatprep.subr.mxu0 0.0
    %4700 = vmatpush1.msra.mxu0 0.0
    %4701 = vmatprep.subr.mxu0 0.0
    %4702 = vmatpush1.msra.mxu0 0.0
    %4703 = vmatprep.subr.mxu0 0.0
    %4704 = vmatpush1.msra.mxu0 0.0
    %4705 = vmatprep.subr.mxu0 0.0
    %4706 = vmatpush1.msra.mxu0 0.0
    %4707 = vmatprep.subr.mxu0 0.0
    %4708 = vmatpush1.msra.mxu0 0.0
    %4709 = vmatprep.subr.mxu0 0.0
    %4710 = vmatpush1.msra.mxu0 0.0
    %4711 = vmatprep.subr.mxu0 0.0
    %4712 = vmatpush1.msra.mxu0 0.0
    %4713 = vmatprep.subr.mxu0 0.0
    %4714 = vmatpush1.msra.mxu0 0.0
    %4715 = vmatprep.subr.mxu0 0.0
    %4716 = vmatpush1.msra.mxu0 0.0
    %4717 = vmatprep.subr.mxu0 0.0
    %4718 = vmatpush1.msra.mxu0 0.0
    %4719 = vmatprep.subr.mxu0 0.0
    %4720 = vmatpush1.msra.mxu0 0.0
    %4721 = vmatprep.subr.mxu0 0.0
    %4722 = vmatpush1.msra.mxu0 0.0
    %4723 = vmatprep.subr.mxu0 0.0
    %4724 = vmatpush1.msra.mxu0 0.0
    %4725 = vmatprep.subr.mxu0 0.0
    %4726 = vmatpush1.msra.mxu0 0.0
    %4727 = vmatprep.subr.mxu0 0.0
    %4728 = vmatpush1.msra.mxu0 0.0
    %4729 = vmatprep.subr.mxu0 0.0
    %4730 = vmatpush1.msra.mxu0 0.0
    %4731 = vmatprep.mubr.f32.mxu0 0.0
    %4732 = vmatmul.mubr.f32.gmra.mrb[0].mxu0 %v4665
    %v4733 = vpop.f32.mrb[0].mxu0
    %v4734 = vadd.f32 %v4659, %v4733
    %v4735 = vpop.f32.mrb[0].mxu0
    %4736 = vdwg.mxu0
    %v4737 = vadd.f32 %v4734, %v2279
    %s4738 = scalar_lea.vmem [#allocation20], 8
    %4739 = vst [vmem:[%s4738] sm:$0x3] %v4737
    %v4740 = vsel %vm2283, %v4737, -1e+30
    %v4741 = vsel %vm1786, %v4740, -inf
    %4742 = vmax.xlane.f32.xlu0 %v4741
    %v4743 = vpop.xlane.xlu0 %4742
    %vm4744 = vcmp.eq.f32.partialorder %v4740, %v4743
    %v4745 = vsel %vm4744, %v1670, 128
    %v4746 = vsel %vm1786, %v4745, 2147483647
    %v4747 = vand.u32 %v4746, 65535
    %v4748 = vshra.s32 %v4746, 16
    %v4749 = vcvt.s32.f32 %v4747
    %v4750 = vcvt.s32.f32 %v4748
    %4751 = vmin.xlane.f32.xlu0 %v4750
    %v4752 = vpop.xlane.xlu0 %4751
    %vm4753 = vcmp.eq.f32.partialorder %v4750, %v4752
    %v4754 = vsel %vm4753, %v4749, inf
    %4755 = vmin.xlane.f32.xlu0 %v4754
    %v4756 = vpop.xlane.xlu0 %4755
    %v4757 = vcvt.f32.s32 %v4756
    %v4758 = vcvt.f32.s32 %v4752
    %v4759 = vshll.u32 %v4758, 16
    %v4760 = vadd.s32 %v4759, %v4757
    %s4761 = scalar_lea.vmem %s0, 10
    %v4762 = vld [vmem:[%s4761] sm:$0x3]
    %vm4763 = vcmp.ge.s32.totalorder %v4762, 0
    %v4764 = vsel %vm4763, %v4762, %v4760
    %4765 = vset.pattern.permute.xlu0 0
    %4766 = vperm.xlu0 %4765, %v4764
    %v4767 = vpop.permute.xlu0 %4766
    %vm4768 = vcmp.eq.s32.totalorder %v1670, %v4767
    %v4769 = vsel %vm4768, 1, 0
    %v4770 = vcvt.s32.f32 %v4769
    %v4772 = vsel %vm1680, %v4770, 0
    %4774 = vmatprep.subr.mxu0 0.0
    %4775 = vmatpush1.msra.mxu0 %v1644
    %4776 = vmatprep.subr.mxu0 0.0
    %4777 = vmatpush1.msra.mxu0 %v1645
    %4778 = vmatprep.subr.mxu0 0.0
    %4779 = vmatpush1.msra.mxu0 0.0
    %4780 = vmatprep.subr.mxu0 0.0
    %4781 = vmatpush1.msra.mxu0 0.0
    %4782 = vmatprep.subr.mxu0 0.0
    %4783 = vmatpush1.msra.mxu0 0.0
    %4784 = vmatprep.subr.mxu0 0.0
    %4785 = vmatpush1.msra.mxu0 0.0
    %4786 = vmatprep.subr.mxu0 0.0
    %4787 = vmatpush1.msra.mxu0 0.0
    %4788 = vmatprep.subr.mxu0 0.0
    %4789 = vmatpush1.msra.mxu0 0.0
    %4790 = vmatprep.subr.mxu0 0.0
    %4791 = vmatpush1.msra.mxu0 0.0
    %4792 = vmatprep.subr.mxu0 0.0
    %4793 = vmatpush1.msra.mxu0 0.0
    %4794 = vmatprep.subr.mxu0 0.0
    %4795 = vmatpush1.msra.mxu0 0.0
    %4796 = vmatprep.subr.mxu0 0.0
    %4797 = vmatpush1.msra.mxu0 0.0
    %4798 = vmatprep.subr.mxu0 0.0
    %4799 = vmatpush1.msra.mxu0 0.0
    %4800 = vmatprep.subr.mxu0 0.0
    %4801 = vmatpush1.msra.mxu0 0.0
    %4802 = vmatprep.subr.mxu0 0.0
    %4803 = vmatpush1.msra.mxu0 0.0
    %4804 = vmatprep.subr.mxu0 0.0
    %4805 = vmatpush1.msra.mxu0 0.0
    %4806 = vmatprep.subr.mxu0 0.0
    %4807 = vmatpush1.msra.mxu0 0.0
    %4808 = vmatprep.subr.mxu0 0.0
    %4809 = vmatpush1.msra.mxu0 0.0
    %4810 = vmatprep.subr.mxu0 0.0
    %4811 = vmatpush1.msra.mxu0 0.0
    %4812 = vmatprep.subr.mxu0 0.0
    %4813 = vmatpush1.msra.mxu0 0.0
    %4814 = vmatprep.subr.mxu0 0.0
    %4815 = vmatpush1.msra.mxu0 0.0
    %4816 = vmatprep.subr.mxu0 0.0
    %4817 = vmatpush1.msra.mxu0 0.0
    %4818 = vmatprep.subr.mxu0 0.0
    %4819 = vmatpush1.msra.mxu0 0.0
    %4820 = vmatprep.subr.mxu0 0.0
    %4821 = vmatpush1.msra.mxu0 0.0
    %4822 = vmatprep.subr.mxu0 0.0
    %4823 = vmatpush1.msra.mxu0 0.0
    %4824 = vmatprep.subr.mxu0 0.0
    %4825 = vmatpush1.msra.mxu0 0.0
    %4826 = vmatprep.subr.mxu0 0.0
    %4827 = vmatpush1.msra.mxu0 0.0
    %4828 = vmatprep.subr.mxu0 0.0
    %4829 = vmatpush1.msra.mxu0 0.0
    %4830 = vmatprep.subr.mxu0 0.0
    %4831 = vmatpush1.msra.mxu0 0.0
    %4832 = vmatprep.subr.mxu0 0.0
    %4833 = vmatpush1.msra.mxu0 0.0
    %4834 = vmatprep.subr.mxu0 0.0
    %4835 = vmatpush1.msra.mxu0 0.0
    %4836 = vmatprep.subr.mxu0 0.0
    %4837 = vmatpush1.msra.mxu0 0.0
    %4838 = vmatprep.mubr.f32.mxu0 0.0
    %4839 = vmatmul.mubr.f32.gmra.mrb[0].mxu0 %v4772
    %v4840 = vpop.f32.mrb[0].mxu0
    %v4841 = vadd.f32 0.0, %v4840
    %v4842 = vpop.f32.mrb[0].mxu0
    %4843 = vdwg.mxu0
    %v4845 = vmul.f32 %v1636, %v4664
    %v4846 = vmul.f32 %v1637, %v4664
    %v4847 = vmul.f32 %v1638, %v4664
    %v4848 = vmul.f32 %v1639, %v4664
    %v4849 = vmul.f32 %v1640, %v4664
    %v4850 = vmul.f32 %v1641, %v4664
    %v4851 = vmul.f32 %v1642, %v4664
    %v4852 = vmul.f32 %v1643, %v4664
    %v4853 = vsel %vm381, %v4845, 0.0
    %4854 = vadd.xlane.f32.xlu0 %v4853
    %v4855 = vpop.xlane.xlu0 %4854
    %v4856 = vsel %vm381, %v4846, 0.0
    %4857 = vadd.xlane.f32.xlu0 %v4856
    %v4858 = vpop.xlane.xlu0 %4857
    %v4859 = vsel %vm381, %v4847, 0.0
    %4860 = vadd.xlane.f32.xlu0 %v4859
    %v4861 = vpop.xlane.xlu0 %4860
    %v4862 = vsel %vm381, %v4848, 0.0
    %4863 = vadd.xlane.f32.xlu0 %v4862
    %v4864 = vpop.xlane.xlu0 %4863
    %v4865 = vsel %vm381, %v4849, 0.0
    %4866 = vadd.xlane.f32.xlu0 %v4865
    %v4867 = vpop.xlane.xlu0 %4866
    %v4868 = vsel %vm381, %v4850, 0.0
    %4869 = vadd.xlane.f32.xlu0 %v4868
    %v4870 = vpop.xlane.xlu0 %4869
    %v4871 = vsel %vm381, %v4851, 0.0
    %4872 = vadd.xlane.f32.xlu0 %v4871
    %v4873 = vpop.xlane.xlu0 %4872
    %v4874 = vsel %vm381, %v4852, 0.0
    %4875 = vadd.xlane.f32.xlu0 %v4874
    %v4876 = vpop.xlane.xlu0 %4875
    %v4877 = vsel %vm1786, %v4855, -inf
    %v4878 = vsel %vm1786, %v4858, -inf
    %v4879 = vsel %vm1786, %v4861, -inf
    %v4880 = vsel %vm1786, %v4864, -inf
    %v4881 = vsel %vm1786, %v4867, -inf
    %v4882 = vmax.f32 %v4877, %v4881
    %v4883 = vsel %vm1786, %v4870, -inf
    %v4884 = vmax.f32 %v4878, %v4883
    %v4885 = vsel %vm1786, %v4873, -inf
    %v4886 = vmax.f32 %v4879, %v4885
    %v4887 = vsel %vm1786, %v4876, -inf
    %v4888 = vmax.f32 %v4880, %v4887
    %v4889 = vmax.f32 %v4882, %v4884
    %v4890 = vmax.f32 %v4886, %v4888
    %v4891 = vmax.f32 %v4889, %v4890
    %v4892 = vsub.f32 %v4855, %v4891
    %v4893 = vsub.f32 %v4858, %v4891
    %v4894 = vsub.f32 %v4861, %v4891
    %v4895 = vsub.f32 %v4864, %v4891
    %v4896 = vsub.f32 %v4867, %v4891
    %v4897 = vsub.f32 %v4870, %v4891
    %v4898 = vsub.f32 %v4873, %v4891
    %v4899 = vsub.f32 %v4876, %v4891
    %v4900 = vmul.f32 %v4892, 1.442695
    %v4901 = vpow.pop %v4900
    %v4902 = vmul.f32 %v4893, 1.442695
    %v4903 = vpow.pop %v4902
    %v4904 = vmul.f32 %v4894, 1.442695
    %v4905 = vpow.pop %v4904
    %v4906 = vmul.f32 %v4895, 1.442695
    %v4907 = vpow.pop %v4906
    %v4908 = vmul.f32 %v4896, 1.442695
    %v4909 = vpow.pop %v4908
    %v4910 = vmul.f32 %v4897, 1.442695
    %v4911 = vpow.pop %v4910
    %v4912 = vmul.f32 %v4898, 1.442695
    %v4913 = vpow.pop %v4912
    %v4914 = vmul.f32 %v4899, 1.442695
    %v4915 = vpow.pop %v4914
    %v4916 = vsel %vm1786, %v4901, 0.0
    %v4917 = vsel %vm1786, %v4903, 0.0
    %v4918 = vadd.f32 %v4916, %v4917
    %v4919 = vsel %vm1786, %v4905, 0.0
    %v4920 = vadd.f32 %v4918, %v4919
    %v4921 = vsel %vm1786, %v4907, 0.0
    %v4922 = vadd.f32 %v4920, %v4921
    %v4923 = vsel %vm1786, %v4909, 0.0
    %v4924 = vadd.f32 %v4922, %v4923
    %v4925 = vsel %vm1786, %v4911, 0.0
    %v4926 = vadd.f32 %v4924, %v4925
    %v4927 = vsel %vm1786, %v4913, 0.0
    %v4928 = vadd.f32 %v4926, %v4927
    %v4929 = vsel %vm1786, %v4915, 0.0
    %v4930 = vadd.f32 %v4928, %v4929
    %v4931 = vrcp.pop %v4930
    %v4932 = vmul.f32 %v4901, %v4931
    %v4933 = vmul.f32 %v4903, %v4931
    %v4934 = vmul.f32 %v4905, %v4931
    %v4935 = vmul.f32 %v4907, %v4931
    %v4936 = vmul.f32 %v4909, %v4931
    %v4937 = vmul.f32 %v4911, %v4931
    %v4938 = vmul.f32 %v4913, %v4931
    %v4939 = vmul.f32 %v4915, %v4931
    %v4940 = vmul.f32 %v4932, %v1636
    %v4941 = vmul.f32 %v4933, %v1637
    %v4942 = vmul.f32 %v4934, %v1638
    %v4943 = vmul.f32 %v4935, %v1639
    %v4944 = vmul.f32 %v4936, %v1640
    %v4945 = vmul.f32 %v4937, %v1641
    %v4946 = vmul.f32 %v4938, %v1642
    %v4947 = vmul.f32 %v4939, %v1643
    %v4948 = vsel %vm381, %v4940, 0.0
    %v4949 = vsel %vm381, %v4941, 0.0
    %v4950 = vadd.f32 %v4948, %v4949
    %v4951 = vsel %vm381, %v4942, 0.0
    %v4952 = vadd.f32 %v4950, %v4951
    %v4953 = vsel %vm381, %v4943, 0.0
    %v4954 = vadd.f32 %v4952, %v4953
    %v4955 = vsel %vm381, %v4944, 0.0
    %v4956 = vadd.f32 %v4954, %v4955
    %v4957 = vsel %vm381, %v4945, 0.0
    %v4958 = vadd.f32 %v4956, %v4957
    %v4959 = vsel %vm381, %v4946, 0.0
    %v4960 = vadd.f32 %v4958, %v4959
    %v4961 = vsel %vm381, %v4947, 0.0
    %v4962 = vadd.f32 %v4960, %v4961
    %v4964 = vsel %vm198, %v4962, 0
    %4966 = vmatprep.subr.mxu0 0.0
    %4967 = vmatpush1.msra.mxu0 %v1650
    %4968 = vmatprep.subr.mxu0 0.0
    %4969 = vmatpush1.msra.mxu0 %v1651
    %4970 = vmatprep.subr.mxu0 0.0
    %4971 = vmatpush1.msra.mxu0 %v1652
    %4972 = vmatprep.subr.mxu0 0.0
    %4973 = vmatpush1.msra.mxu0 %v1653
    %4974 = vmatprep.subr.mxu0 0.0
    %4975 = vmatpush1.msra.mxu0 0.0
    %4976 = vmatprep.subr.mxu0 0.0
    %4977 = vmatpush1.msra.mxu0 0.0
    %4978 = vmatprep.subr.mxu0 0.0
    %4979 = vmatpush1.msra.mxu0 0.0
    %4980 = vmatprep.subr.mxu0 0.0
    %4981 = vmatpush1.msra.mxu0 0.0
    %4982 = vmatprep.subr.mxu0 0.0
    %4983 = vmatpush1.msra.mxu0 0.0
    %4984 = vmatprep.subr.mxu0 0.0
    %4985 = vmatpush1.msra.mxu0 0.0
    %4986 = vmatprep.subr.mxu0 0.0
    %4987 = vmatpush1.msra.mxu0 0.0
    %4988 = vmatprep.subr.mxu0 0.0
    %4989 = vmatpush1.msra.mxu0 0.0
    %4990 = vmatprep.subr.mxu0 0.0
    %4991 = vmatpush1.msra.mxu0 0.0
    %4992 = vmatprep.subr.mxu0 0.0
    %4993 = vmatpush1.msra.mxu0 0.0
    %4994 = vmatprep.subr.mxu0 0.0
    %4995 = vmatpush1.msra.mxu0 0.0
    %4996 = vmatprep.subr.mxu0 0.0
    %4997 = vmatpush1.msra.mxu0 0.0
    %4998 = vmatprep.subr.mxu0 0.0
    %4999 = vmatpush1.msra.mxu0 0.0
    %5000 = vmatprep.subr.mxu0 0.0
    %5001 = vmatpush1.msra.mxu0 0.0
    %5002 = vmatprep.subr.mxu0 0.0
    %5003 = vmatpush1.msra.mxu0 0.0
    %5004 = vmatprep.subr.mxu0 0.0
    %5005 = vmatpush1.msra.mxu0 0.0
    %5006 = vmatprep.subr.mxu0 0.0
    %5007 = vmatpush1.msra.mxu0 0.0
    %5008 = vmatprep.subr.mxu0 0.0
    %5009 = vmatpush1.msra.mxu0 0.0
    %5010 = vmatprep.subr.mxu0 0.0
    %5011 = vmatpush1.msra.mxu0 0.0
    %5012 = vmatprep.subr.mxu0 0.0
    %5013 = vmatpush1.msra.mxu0 0.0
    %5014 = vmatprep.subr.mxu0 0.0
    %5015 = vmatpush1.msra.mxu0 0.0
    %5016 = vmatprep.subr.mxu0 0.0
    %5017 = vmatpush1.msra.mxu0 0.0
    %5018 = vmatprep.subr.mxu0 0.0
    %5019 = vmatpush1.msra.mxu0 0.0
    %5020 = vmatprep.subr.mxu0 0.0
    %5021 = vmatpush1.msra.mxu0 0.0
    %5022 = vmatprep.subr.mxu0 0.0
    %5023 = vmatpush1.msra.mxu0 0.0
    %5024 = vmatprep.subr.mxu0 0.0
    %5025 = vmatpush1.msra.mxu0 0.0
    %5026 = vmatprep.subr.mxu0 0.0
    %5027 = vmatpush1.msra.mxu0 0.0
    %5028 = vmatprep.subr.mxu0 0.0
    %5029 = vmatpush1.msra.mxu0 0.0
    %5030 = vmatprep.mubr.f32.mxu0 0.0
    %5031 = vmatmul.mubr.f32.gmra.mrb[0].mxu0 %v4964
    %v5032 = vpop.f32.mrb[0].mxu0
    %v5033 = vadd.f32 0.0, %v5032
    %v5034 = vpop.f32.mrb[0].mxu0
    %5035 = vdwg.mxu0
    %v5037 = vsel %vm198, %v4841, 0
    %5039 = vmatprep.subr.mxu0 0.0
    %5040 = vmatpush1.msra.mxu0 %v1646
    %5041 = vmatprep.subr.mxu0 0.0
    %5042 = vmatpush1.msra.mxu0 %v1647
    %5043 = vmatprep.subr.mxu0 0.0
    %5044 = vmatpush1.msra.mxu0 %v1648
    %5045 = vmatprep.subr.mxu0 0.0
    %5046 = vmatpush1.msra.mxu0 %v1649
    %5047 = vmatprep.subr.mxu0 0.0
    %5048 = vmatpush1.msra.mxu0 0.0
    %5049 = vmatprep.subr.mxu0 0.0
    %5050 = vmatpush1.msra.mxu0 0.0
    %5051 = vmatprep.subr.mxu0 0.0
    %5052 = vmatpush1.msra.mxu0 0.0
    %5053 = vmatprep.subr.mxu0 0.0
    %5054 = vmatpush1.msra.mxu0 0.0
    %5055 = vmatprep.subr.mxu0 0.0
    %5056 = vmatpush1.msra.mxu0 0.0
    %5057 = vmatprep.subr.mxu0 0.0
    %5058 = vmatpush1.msra.mxu0 0.0
    %5059 = vmatprep.subr.mxu0 0.0
    %5060 = vmatpush1.msra.mxu0 0.0
    %5061 = vmatprep.subr.mxu0 0.0
    %5062 = vmatpush1.msra.mxu0 0.0
    %5063 = vmatprep.subr.mxu0 0.0
    %5064 = vmatpush1.msra.mxu0 0.0
    %5065 = vmatprep.subr.mxu0 0.0
    %5066 = vmatpush1.msra.mxu0 0.0
    %5067 = vmatprep.subr.mxu0 0.0
    %5068 = vmatpush1.msra.mxu0 0.0
    %5069 = vmatprep.subr.mxu0 0.0
    %5070 = vmatpush1.msra.mxu0 0.0
    %5071 = vmatprep.subr.mxu0 0.0
    %5072 = vmatpush1.msra.mxu0 0.0
    %5073 = vmatprep.subr.mxu0 0.0
    %5074 = vmatpush1.msra.mxu0 0.0
    %5075 = vmatprep.subr.mxu0 0.0
    %5076 = vmatpush1.msra.mxu0 0.0
    %5077 = vmatprep.subr.mxu0 0.0
    %5078 = vmatpush1.msra.mxu0 0.0
    %5079 = vmatprep.subr.mxu0 0.0
    %5080 = vmatpush1.msra.mxu0 0.0
    %5081 = vmatprep.subr.mxu0 0.0
    %5082 = vmatpush1.msra.mxu0 0.0
    %5083 = vmatprep.subr.mxu0 0.0
    %5084 = vmatpush1.msra.mxu0 0.0
    %5085 = vmatprep.subr.mxu0 0.0
    %5086 = vmatpush1.msra.mxu0 0.0
    %5087 = vmatprep.subr.mxu0 0.0
    %5088 = vmatpush1.msra.mxu0 0.0
    %5089 = vmatprep.subr.mxu0 0.0
    %5090 = vmatpush1.msra.mxu0 0.0
    %5091 = vmatprep.subr.mxu0 0.0
    %5092 = vmatpush1.msra.mxu0 0.0
    %5093 = vmatprep.subr.mxu0 0.0
    %5094 = vmatpush1.msra.mxu0 0.0
    %5095 = vmatprep.subr.mxu0 0.0
    %5096 = vmatpush1.msra.mxu0 0.0
    %5097 = vmatprep.subr.mxu0 0.0
    %5098 = vmatpush1.msra.mxu0 0.0
    %5099 = vmatprep.subr.mxu0 0.0
    %5100 = vmatpush1.msra.mxu0 0.0
    %5101 = vmatprep.subr.mxu0 0.0
    %5102 = vmatpush1.msra.mxu0 0.0
    %5103 = vmatprep.mubr.f32.mxu0 0.0
    %5104 = vmatmul.mubr.f32.gmra.mrb[0].mxu0 %v5037
    %v5105 = vpop.f32.mrb[0].mxu0
    %v5106 = vadd.f32 %v5033, %v5105
    %v5107 = vpop.f32.mrb[0].mxu0
    %5108 = vdwg.mxu0
    %v5109 = vadd.f32 %v5106, %v2023
    %5110 = vmatprep.subr.mxu0 0.0
    %5111 = vmatpush1.msra.mxu0 %v1654
    %5112 = vmatprep.subr.mxu0 0.0
    %5113 = vmatpush1.msra.mxu0 %v1655
    %5114 = vmatprep.subr.mxu0 0.0
    %5115 = vmatpush1.msra.mxu0 %v1656
    %5116 = vmatprep.subr.mxu0 0.0
    %5117 = vmatpush1.msra.mxu0 %v1657
    %5118 = vmatprep.subr.mxu0 0.0
    %5119 = vmatpush1.msra.mxu0 0.0
    %5120 = vmatprep.subr.mxu0 0.0
    %5121 = vmatpush1.msra.mxu0 0.0
    %5122 = vmatprep.subr.mxu0 0.0
    %5123 = vmatpush1.msra.mxu0 0.0
    %5124 = vmatprep.subr.mxu0 0.0
    %5125 = vmatpush1.msra.mxu0 0.0
    %5126 = vmatprep.subr.mxu0 0.0
    %5127 = vmatpush1.msra.mxu0 0.0
    %5128 = vmatprep.subr.mxu0 0.0
    %5129 = vmatpush1.msra.mxu0 0.0
    %5130 = vmatprep.subr.mxu0 0.0
    %5131 = vmatpush1.msra.mxu0 0.0
    %5132 = vmatprep.subr.mxu0 0.0
    %5133 = vmatpush1.msra.mxu0 0.0
    %5134 = vmatprep.subr.mxu0 0.0
    %5135 = vmatpush1.msra.mxu0 0.0
    %5136 = vmatprep.subr.mxu0 0.0
    %5137 = vmatpush1.msra.mxu0 0.0
    %5138 = vmatprep.subr.mxu0 0.0
    %5139 = vmatpush1.msra.mxu0 0.0
    %5140 = vmatprep.subr.mxu0 0.0
    %5141 = vmatpush1.msra.mxu0 0.0
    %5142 = vmatprep.subr.mxu0 0.0
    %5143 = vmatpush1.msra.mxu0 0.0
    %5144 = vmatprep.subr.mxu0 0.0
    %5145 = vmatpush1.msra.mxu0 0.0
    %5146 = vmatprep.subr.mxu0 0.0
    %5147 = vmatpush1.msra.mxu0 0.0
    %5148 = vmatprep.subr.mxu0 0.0
    %5149 = vmatpush1.msra.mxu0 0.0
    %5150 = vmatprep.subr.mxu0 0.0
    %5151 = vmatpush1.msra.mxu0 0.0
    %5152 = vmatprep.subr.mxu0 0.0
    %5153 = vmatpush1.msra.mxu0 0.0
    %5154 = vmatprep.subr.mxu0 0.0
    %5155 = vmatpush1.msra.mxu0 0.0
    %5156 = vmatprep.subr.mxu0 0.0
    %5157 = vmatpush1.msra.mxu0 0.0
    %5158 = vmatprep.subr.mxu0 0.0
    %5159 = vmatpush1.msra.mxu0 0.0
    %5160 = vmatprep.subr.mxu0 0.0
    %5161 = vmatpush1.msra.mxu0 0.0
    %5162 = vmatprep.subr.mxu0 0.0
    %5163 = vmatpush1.msra.mxu0 0.0
    %5164 = vmatprep.subr.mxu0 0.0
    %5165 = vmatpush1.msra.mxu0 0.0
    %5166 = vmatprep.subr.mxu0 0.0
    %5167 = vmatpush1.msra.mxu0 0.0
    %5168 = vmatprep.subr.mxu0 0.0
    %5169 = vmatpush1.msra.mxu0 0.0
    %5170 = vmatprep.subr.mxu0 0.0
    %5171 = vmatpush1.msra.mxu0 0.0
    %5172 = vmatprep.subr.mxu0 0.0
    %5173 = vmatpush1.msra.mxu0 0.0
    %5174 = vmatprep.mubr.f32.mxu0 0.0
    %5175 = vmatmul.mubr.f32.gmra.mrb[0].mxu0 %v4665
    %v5176 = vpop.f32.mrb[0].mxu0
    %v5177 = vadd.f32 %v2030, %v5176
    %v5178 = vpop.f32.mrb[0].mxu0
    %5179 = vdwg.mxu0
    %v5180 = vadd.f32 %v5109, %v5177
    %v5181 = vxor.u32 %v5180, 2147483648
    %v5182 = vmul.f32 %v5181, 1.442695
    %v5183 = vpow.pop %v5182
    %v5184 = vadd.f32 %v5183, 1.0
    %v5185 = vrcp.pop %v5184
    %v5186 = vmul.f32 1.0, %v5185
    %5188 = vrot.lane.b32.xlu0 %v5177, 64
    %v5189 = vpop.permute.xlu0 %5188
    %v5191 = vmul.f32 %v5186, %v5189
    %5193 = vrot.lane.b32.xlu0 %v5191, 64
    %v5194 = vpop.permute.xlu0 %5193
    %v5196 = vadd.f32 %v5109, %v5194
    %v5197 = vtanh.pop %v5196
    %v5198 = vsub.f32 1.0, %v5186
    %5200 = vrot.lane.b32.xlu0 %v5197, 96
    %v5201 = vpop.permute.xlu0 %5200
    %v5203 = vmul.f32 %v5198, %v5201
    %v5204 = vmul.f32 %v5186, %v4591
    %v5205 = vadd.f32 %v5203, %v5204
    %5206 = vmatprep.subr.mxu0 0.0
    %5207 = vmatpush1.msra.mxu0 %v1664
    %5208 = vmatprep.subr.mxu0 0.0
    %5209 = vmatpush1.msra.mxu0 %v1665
    %5210 = vmatprep.subr.mxu0 0.0
    %5211 = vmatpush1.msra.mxu0 %v1666
    %5212 = vmatprep.subr.mxu0 0.0
    %5213 = vmatpush1.msra.mxu0 %v1667
    %5214 = vmatprep.subr.mxu0 0.0
    %5215 = vmatpush1.msra.mxu0 0.0
    %5216 = vmatprep.subr.mxu0 0.0
    %5217 = vmatpush1.msra.mxu0 0.0
    %5218 = vmatprep.subr.mxu0 0.0
    %5219 = vmatpush1.msra.mxu0 0.0
    %5220 = vmatprep.subr.mxu0 0.0
    %5221 = vmatpush1.msra.mxu0 0.0
    %5222 = vmatprep.subr.mxu0 0.0
    %5223 = vmatpush1.msra.mxu0 0.0
    %5224 = vmatprep.subr.mxu0 0.0
    %5225 = vmatpush1.msra.mxu0 0.0
    %5226 = vmatprep.subr.mxu0 0.0
    %5227 = vmatpush1.msra.mxu0 0.0
    %5228 = vmatprep.subr.mxu0 0.0
    %5229 = vmatpush1.msra.mxu0 0.0
    %5230 = vmatprep.subr.mxu0 0.0
    %5231 = vmatpush1.msra.mxu0 0.0
    %5232 = vmatprep.subr.mxu0 0.0
    %5233 = vmatpush1.msra.mxu0 0.0
    %5234 = vmatprep.subr.mxu0 0.0
    %5235 = vmatpush1.msra.mxu0 0.0
    %5236 = vmatprep.subr.mxu0 0.0
    %5237 = vmatpush1.msra.mxu0 0.0
    %5238 = vmatprep.subr.mxu0 0.0
    %5239 = vmatpush1.msra.mxu0 0.0
    %5240 = vmatprep.subr.mxu0 0.0
    %5241 = vmatpush1.msra.mxu0 0.0
    %5242 = vmatprep.subr.mxu0 0.0
    %5243 = vmatpush1.msra.mxu0 0.0
    %5244 = vmatprep.subr.mxu0 0.0
    %5245 = vmatpush1.msra.mxu0 0.0
    %5246 = vmatprep.subr.mxu0 0.0
    %5247 = vmatpush1.msra.mxu0 0.0
    %5248 = vmatprep.subr.mxu0 0.0
    %5249 = vmatpush1.msra.mxu0 0.0
    %5250 = vmatprep.subr.mxu0 0.0
    %5251 = vmatpush1.msra.mxu0 0.0
    %5252 = vmatprep.subr.mxu0 0.0
    %5253 = vmatpush1.msra.mxu0 0.0
    %5254 = vmatprep.subr.mxu0 0.0
    %5255 = vmatpush1.msra.mxu0 0.0
    %5256 = vmatprep.subr.mxu0 0.0
    %5257 = vmatpush1.msra.mxu0 0.0
    %5258 = vmatprep.subr.mxu0 0.0
    %5259 = vmatpush1.msra.mxu0 0.0
    %5260 = vmatprep.subr.mxu0 0.0
    %5261 = vmatpush1.msra.mxu0 0.0
    %5262 = vmatprep.subr.mxu0 0.0
    %5263 = vmatpush1.msra.mxu0 0.0
    %5264 = vmatprep.subr.mxu0 0.0
    %5265 = vmatpush1.msra.mxu0 0.0
    %5266 = vmatprep.subr.mxu0 0.0
    %5267 = vmatpush1.msra.mxu0 0.0
    %5268 = vmatprep.subr.mxu0 0.0
    %5269 = vmatpush1.msra.mxu0 0.0
    %5270 = vmatprep.mubr.f32.mxu0 0.0
    %5271 = vmatmul.mubr.f32.gmra.mrb[0].mxu0 %v4964
    %v5272 = vpop.f32.mrb[0].mxu0
    %v5273 = vadd.f32 0.0, %v5272
    %v5274 = vpop.f32.mrb[0].mxu0
    %5275 = vdwg.mxu0
    %5277 = vrot.lane.b32.xlu0 %v5205, 96
    %v5278 = vpop.permute.xlu0 %5277
    %v5279 = vsel %vm198, %v5278, 0
    %5281 = vmatprep.subr.mxu0 0.0
    %5282 = vmatpush1.msra.mxu0 %v1660
    %5283 = vmatprep.subr.mxu0 0.0
    %5284 = vmatpush1.msra.mxu0 %v1661
    %5285 = vmatprep.subr.mxu0 0.0
    %5286 = vmatpush1.msra.mxu0 %v1662
    %5287 = vmatprep.subr.mxu0 0.0
    %5288 = vmatpush1.msra.mxu0 %v1663
    %5289 = vmatprep.subr.mxu0 0.0
    %5290 = vmatpush1.msra.mxu0 0.0
    %5291 = vmatprep.subr.mxu0 0.0
    %5292 = vmatpush1.msra.mxu0 0.0
    %5293 = vmatprep.subr.mxu0 0.0
    %5294 = vmatpush1.msra.mxu0 0.0
    %5295 = vmatprep.subr.mxu0 0.0
    %5296 = vmatpush1.msra.mxu0 0.0
    %5297 = vmatprep.subr.mxu0 0.0
    %5298 = vmatpush1.msra.mxu0 0.0
    %5299 = vmatprep.subr.mxu0 0.0
    %5300 = vmatpush1.msra.mxu0 0.0
    %5301 = vmatprep.subr.mxu0 0.0
    %5302 = vmatpush1.msra.mxu0 0.0
    %5303 = vmatprep.subr.mxu0 0.0
    %5304 = vmatpush1.msra.mxu0 0.0
    %5305 = vmatprep.subr.mxu0 0.0
    %5306 = vmatpush1.msra.mxu0 0.0
    %5307 = vmatprep.subr.mxu0 0.0
    %5308 = vmatpush1.msra.mxu0 0.0
    %5309 = vmatprep.subr.mxu0 0.0
    %5310 = vmatpush1.msra.mxu0 0.0
    %5311 = vmatprep.subr.mxu0 0.0
    %5312 = vmatpush1.msra.mxu0 0.0
    %5313 = vmatprep.subr.mxu0 0.0
    %5314 = vmatpush1.msra.mxu0 0.0
    %5315 = vmatprep.subr.mxu0 0.0
    %5316 = vmatpush1.msra.mxu0 0.0
    %5317 = vmatprep.subr.mxu0 0.0
    %5318 = vmatpush1.msra.mxu0 0.0
    %5319 = vmatprep.subr.mxu0 0.0
    %5320 = vmatpush1.msra.mxu0 0.0
    %5321 = vmatprep.subr.mxu0 0.0
    %5322 = vmatpush1.msra.mxu0 0.0
    %5323 = vmatprep.subr.mxu0 0.0
    %5324 = vmatpush1.msra.mxu0 0.0
    %5325 = vmatprep.subr.mxu0 0.0
    %5326 = vmatpush1.msra.mxu0 0.0
    %5327 = vmatprep.subr.mxu0 0.0
    %5328 = vmatpush1.msra.mxu0 0.0
    %5329 = vmatprep.subr.mxu0 0.0
    %5330 = vmatpush1.msra.mxu0 0.0
    %5331 = vmatprep.subr.mxu0 0.0
    %5332 = vmatpush1.msra.mxu0 0.0
    %5333 = vmatprep.subr.mxu0 0.0
    %5334 = vmatpush1.msra.mxu0 0.0
    %5335 = vmatprep.subr.mxu0 0.0
    %5336 = vmatpush1.msra.mxu0 0.0
    %5337 = vmatprep.subr.mxu0 0.0
    %5338 = vmatpush1.msra.mxu0 0.0
    %5339 = vmatprep.subr.mxu0 0.0
    %5340 = vmatpush1.msra.mxu0 0.0
    %5341 = vmatprep.subr.mxu0 0.0
    %5342 = vmatpush1.msra.mxu0 0.0
    %5343 = vmatprep.subr.mxu0 0.0
    %5344 = vmatpush1.msra.mxu0 0.0
    %5345 = vmatprep.mubr.f32.mxu0 0.0
    %5346 = vmatmul.mubr.f32.gmra.mrb[0].mxu0 %v5279
    %v5347 = vpop.f32.mrb[0].mxu0
    %v5348 = vadd.f32 %v5273, %v5347
    %v5349 = vpop.f32.mrb[0].mxu0
    %5350 = vdwg.mxu0
    %v5351 = vadd.f32 %v5348, %v2279
    %s5352 = scalar_lea.vmem [#allocation20], 10
    %5353 = vst [vmem:[%s5352] sm:$0x3] %v5351
    %v5354 = vsel %vm2283, %v5351, -1e+30
    %v5355 = vsel %vm1786, %v5354, -inf
    %5356 = vmax.xlane.f32.xlu0 %v5355
    %v5357 = vpop.xlane.xlu0 %5356
    %vm5358 = vcmp.eq.f32.partialorder %v5354, %v5357
    %v5359 = vsel %vm5358, %v1670, 128
    %v5360 = vsel %vm1786, %v5359, 2147483647
    %v5361 = vand.u32 %v5360, 65535
    %v5362 = vshra.s32 %v5360, 16
    %v5363 = vcvt.s32.f32 %v5361
    %v5364 = vcvt.s32.f32 %v5362
    %5365 = vmin.xlane.f32.xlu0 %v5364
    %v5366 = vpop.xlane.xlu0 %5365
    %vm5367 = vcmp.eq.f32.partialorder %v5364, %v5366
    %v5368 = vsel %vm5367, %v5363, inf
    %5369 = vmin.xlane.f32.xlu0 %v5368
    %v5370 = vpop.xlane.xlu0 %5369
    %v5371 = vcvt.f32.s32 %v5370
    %v5372 = vcvt.f32.s32 %v5366
    %v5373 = vshll.u32 %v5372, 16
    %v5374 = vadd.s32 %v5373, %v5371
    %s5375 = scalar_lea.vmem %s0, 12
    %v5376 = vld [vmem:[%s5375] sm:$0x3]
    %vm5377 = vcmp.ge.s32.totalorder %v5376, 0
    %v5378 = vsel %vm5377, %v5376, %v5374
    %5379 = vset.pattern.permute.xlu0 0
    %5380 = vperm.xlu0 %5379, %v5378
    %v5381 = vpop.permute.xlu0 %5380
    %vm5382 = vcmp.eq.s32.totalorder %v1670, %v5381
    %v5383 = vsel %vm5382, 1, 0
    %v5384 = vcvt.s32.f32 %v5383
    %v5386 = vsel %vm1680, %v5384, 0
    %5388 = vmatprep.subr.mxu0 0.0
    %5389 = vmatpush1.msra.mxu0 %v1644
    %5390 = vmatprep.subr.mxu0 0.0
    %5391 = vmatpush1.msra.mxu0 %v1645
    %5392 = vmatprep.subr.mxu0 0.0
    %5393 = vmatpush1.msra.mxu0 0.0
    %5394 = vmatprep.subr.mxu0 0.0
    %5395 = vmatpush1.msra.mxu0 0.0
    %5396 = vmatprep.subr.mxu0 0.0
    %5397 = vmatpush1.msra.mxu0 0.0
    %5398 = vmatprep.subr.mxu0 0.0
    %5399 = vmatpush1.msra.mxu0 0.0
    %5400 = vmatprep.subr.mxu0 0.0
    %5401 = vmatpush1.msra.mxu0 0.0
    %5402 = vmatprep.subr.mxu0 0.0
    %5403 = vmatpush1.msra.mxu0 0.0
    %5404 = vmatprep.subr.mxu0 0.0
    %5405 = vmatpush1.msra.mxu0 0.0
    %5406 = vmatprep.subr.mxu0 0.0
    %5407 = vmatpush1.msra.mxu0 0.0
    %5408 = vmatprep.subr.mxu0 0.0
    %5409 = vmatpush1.msra.mxu0 0.0
    %5410 = vmatprep.subr.mxu0 0.0
    %5411 = vmatpush1.msra.mxu0 0.0
    %5412 = vmatprep.subr.mxu0 0.0
    %5413 = vmatpush1.msra.mxu0 0.0
    %5414 = vmatprep.subr.mxu0 0.0
    %5415 = vmatpush1.msra.mxu0 0.0
    %5416 = vmatprep.subr.mxu0 0.0
    %5417 = vmatpush1.msra.mxu0 0.0
    %5418 = vmatprep.subr.mxu0 0.0
    %5419 = vmatpush1.msra.mxu0 0.0
    %5420 = vmatprep.subr.mxu0 0.0
    %5421 = vmatpush1.msra.mxu0 0.0
    %5422 = vmatprep.subr.mxu0 0.0
    %5423 = vmatpush1.msra.mxu0 0.0
    %5424 = vmatprep.subr.mxu0 0.0
    %5425 = vmatpush1.msra.mxu0 0.0
    %5426 = vmatprep.subr.mxu0 0.0
    %5427 = vmatpush1.msra.mxu0 0.0
    %5428 = vmatprep.subr.mxu0 0.0
    %5429 = vmatpush1.msra.mxu0 0.0
    %5430 = vmatprep.subr.mxu0 0.0
    %5431 = vmatpush1.msra.mxu0 0.0
    %5432 = vmatprep.subr.mxu0 0.0
    %5433 = vmatpush1.msra.mxu0 0.0
    %5434 = vmatprep.subr.mxu0 0.0
    %5435 = vmatpush1.msra.mxu0 0.0
    %5436 = vmatprep.subr.mxu0 0.0
    %5437 = vmatpush1.msra.mxu0 0.0
    %5438 = vmatprep.subr.mxu0 0.0
    %5439 = vmatpush1.msra.mxu0 0.0
    %5440 = vmatprep.subr.mxu0 0.0
    %5441 = vmatpush1.msra.mxu0 0.0
    %5442 = vmatprep.subr.mxu0 0.0
    %5443 = vmatpush1.msra.mxu0 0.0
    %5444 = vmatprep.subr.mxu0 0.0
    %5445 = vmatpush1.msra.mxu0 0.0
    %5446 = vmatprep.subr.mxu0 0.0
    %5447 = vmatpush1.msra.mxu0 0.0
    %5448 = vmatprep.subr.mxu0 0.0
    %5449 = vmatpush1.msra.mxu0 0.0
    %5450 = vmatprep.subr.mxu0 0.0
    %5451 = vmatpush1.msra.mxu0 0.0
    %5452 = vmatprep.mubr.f32.mxu0 0.0
    %5453 = vmatmul.mubr.f32.gmra.mrb[0].mxu0 %v5386
    %v5454 = vpop.f32.mrb[0].mxu0
    %v5455 = vadd.f32 0.0, %v5454
    %v5456 = vpop.f32.mrb[0].mxu0
    %5457 = vdwg.mxu0
    %v5459 = vmul.f32 %v1636, %v5278
    %v5460 = vmul.f32 %v1637, %v5278
    %v5461 = vmul.f32 %v1638, %v5278
    %v5462 = vmul.f32 %v1639, %v5278
    %v5463 = vmul.f32 %v1640, %v5278
    %v5464 = vmul.f32 %v1641, %v5278
    %v5465 = vmul.f32 %v1642, %v5278
    %v5466 = vmul.f32 %v1643, %v5278
    %v5467 = vsel %vm381, %v5459, 0.0
    %5468 = vadd.xlane.f32.xlu0 %v5467
    %v5469 = vpop.xlane.xlu0 %5468
    %v5470 = vsel %vm381, %v5460, 0.0
    %5471 = vadd.xlane.f32.xlu0 %v5470
    %v5472 = vpop.xlane.xlu0 %5471
    %v5473 = vsel %vm381, %v5461, 0.0
    %5474 = vadd.xlane.f32.xlu0 %v5473
    %v5475 = vpop.xlane.xlu0 %5474
    %v5476 = vsel %vm381, %v5462, 0.0
    %5477 = vadd.xlane.f32.xlu0 %v5476
    %v5478 = vpop.xlane.xlu0 %5477
    %v5479 = vsel %vm381, %v5463, 0.0
    %5480 = vadd.xlane.f32.xlu0 %v5479
    %v5481 = vpop.xlane.xlu0 %5480
    %v5482 = vsel %vm381, %v5464, 0.0
    %5483 = vadd.xlane.f32.xlu0 %v5482
    %v5484 = vpop.xlane.xlu0 %5483
    %v5485 = vsel %vm381, %v5465, 0.0
    %5486 = vadd.xlane.f32.xlu0 %v5485
    %v5487 = vpop.xlane.xlu0 %5486
    %v5488 = vsel %vm381, %v5466, 0.0
    %5489 = vadd.xlane.f32.xlu0 %v5488
    %v5490 = vpop.xlane.xlu0 %5489
    %v5491 = vsel %vm1786, %v5469, -inf
    %v5492 = vsel %vm1786, %v5472, -inf
    %v5493 = vsel %vm1786, %v5475, -inf
    %v5494 = vsel %vm1786, %v5478, -inf
    %v5495 = vsel %vm1786, %v5481, -inf
    %v5496 = vmax.f32 %v5491, %v5495
    %v5497 = vsel %vm1786, %v5484, -inf
    %v5498 = vmax.f32 %v5492, %v5497
    %v5499 = vsel %vm1786, %v5487, -inf
    %v5500 = vmax.f32 %v5493, %v5499
    %v5501 = vsel %vm1786, %v5490, -inf
    %v5502 = vmax.f32 %v5494, %v5501
    %v5503 = vmax.f32 %v5496, %v5498
    %v5504 = vmax.f32 %v5500, %v5502
    %v5505 = vmax.f32 %v5503, %v5504
    %v5506 = vsub.f32 %v5469, %v5505
    %v5507 = vsub.f32 %v5472, %v5505
    %v5508 = vsub.f32 %v5475, %v5505
    %v5509 = vsub.f32 %v5478, %v5505
    %v5510 = vsub.f32 %v5481, %v5505
    %v5511 = vsub.f32 %v5484, %v5505
    %v5512 = vsub.f32 %v5487, %v5505
    %v5513 = vsub.f32 %v5490, %v5505
    %v5514 = vmul.f32 %v5506, 1.442695
    %v5515 = vpow.pop %v5514
    %v5516 = vmul.f32 %v5507, 1.442695
    %v5517 = vpow.pop %v5516
    %v5518 = vmul.f32 %v5508, 1.442695
    %v5519 = vpow.pop %v5518
    %v5520 = vmul.f32 %v5509, 1.442695
    %v5521 = vpow.pop %v5520
    %v5522 = vmul.f32 %v5510, 1.442695
    %v5523 = vpow.pop %v5522
    %v5524 = vmul.f32 %v5511, 1.442695
    %v5525 = vpow.pop %v5524
    %v5526 = vmul.f32 %v5512, 1.442695
    %v5527 = vpow.pop %v5526
    %v5528 = vmul.f32 %v5513, 1.442695
    %v5529 = vpow.pop %v5528
    %v5530 = vsel %vm1786, %v5515, 0.0
    %v5531 = vsel %vm1786, %v5517, 0.0
    %v5532 = vadd.f32 %v5530, %v5531
    %v5533 = vsel %vm1786, %v5519, 0.0
    %v5534 = vadd.f32 %v5532, %v5533
    %v5535 = vsel %vm1786, %v5521, 0.0
    %v5536 = vadd.f32 %v5534, %v5535
    %v5537 = vsel %vm1786, %v5523, 0.0
    %v5538 = vadd.f32 %v5536, %v5537
    %v5539 = vsel %vm1786, %v5525, 0.0
    %v5540 = vadd.f32 %v5538, %v5539
    %v5541 = vsel %vm1786, %v5527, 0.0
    %v5542 = vadd.f32 %v5540, %v5541
    %v5543 = vsel %vm1786, %v5529, 0.0
    %v5544 = vadd.f32 %v5542, %v5543
    %v5545 = vrcp.pop %v5544
    %v5546 = vmul.f32 %v5515, %v5545
    %v5547 = vmul.f32 %v5517, %v5545
    %v5548 = vmul.f32 %v5519, %v5545
    %v5549 = vmul.f32 %v5521, %v5545
    %v5550 = vmul.f32 %v5523, %v5545
    %v5551 = vmul.f32 %v5525, %v5545
    %v5552 = vmul.f32 %v5527, %v5545
    %v5553 = vmul.f32 %v5529, %v5545
    %v5554 = vmul.f32 %v5546, %v1636
    %v5555 = vmul.f32 %v5547, %v1637
    %v5556 = vmul.f32 %v5548, %v1638
    %v5557 = vmul.f32 %v5549, %v1639
    %v5558 = vmul.f32 %v5550, %v1640
    %v5559 = vmul.f32 %v5551, %v1641
    %v5560 = vmul.f32 %v5552, %v1642
    %v5561 = vmul.f32 %v5553, %v1643
    %v5562 = vsel %vm381, %v5554, 0.0
    %v5563 = vsel %vm381, %v5555, 0.0
    %v5564 = vadd.f32 %v5562, %v5563
    %v5565 = vsel %vm381, %v5556, 0.0
    %v5566 = vadd.f32 %v5564, %v5565
    %v5567 = vsel %vm381, %v5557, 0.0
    %v5568 = vadd.f32 %v5566, %v5567
    %v5569 = vsel %vm381, %v5558, 0.0
    %v5570 = vadd.f32 %v5568, %v5569
    %v5571 = vsel %vm381, %v5559, 0.0
    %v5572 = vadd.f32 %v5570, %v5571
    %v5573 = vsel %vm381, %v5560, 0.0
    %v5574 = vadd.f32 %v5572, %v5573
    %v5575 = vsel %vm381, %v5561, 0.0
    %v5576 = vadd.f32 %v5574, %v5575
    %v5578 = vsel %vm198, %v5576, 0
    %5580 = vmatprep.subr.mxu0 0.0
    %5581 = vmatpush1.msra.mxu0 %v1650
    %5582 = vmatprep.subr.mxu0 0.0
    %5583 = vmatpush1.msra.mxu0 %v1651
    %5584 = vmatprep.subr.mxu0 0.0
    %5585 = vmatpush1.msra.mxu0 %v1652
    %5586 = vmatprep.subr.mxu0 0.0
    %5587 = vmatpush1.msra.mxu0 %v1653
    %5588 = vmatprep.subr.mxu0 0.0
    %5589 = vmatpush1.msra.mxu0 0.0
    %5590 = vmatprep.subr.mxu0 0.0
    %5591 = vmatpush1.msra.mxu0 0.0
    %5592 = vmatprep.subr.mxu0 0.0
    %5593 = vmatpush1.msra.mxu0 0.0
    %5594 = vmatprep.subr.mxu0 0.0
    %5595 = vmatpush1.msra.mxu0 0.0
    %5596 = vmatprep.subr.mxu0 0.0
    %5597 = vmatpush1.msra.mxu0 0.0
    %5598 = vmatprep.subr.mxu0 0.0
    %5599 = vmatpush1.msra.mxu0 0.0
    %5600 = vmatprep.subr.mxu0 0.0
    %5601 = vmatpush1.msra.mxu0 0.0
    %5602 = vmatprep.subr.mxu0 0.0
    %5603 = vmatpush1.msra.mxu0 0.0
    %5604 = vmatprep.subr.mxu0 0.0
    %5605 = vmatpush1.msra.mxu0 0.0
    %5606 = vmatprep.subr.mxu0 0.0
    %5607 = vmatpush1.msra.mxu0 0.0
    %5608 = vmatprep.subr.mxu0 0.0
    %5609 = vmatpush1.msra.mxu0 0.0
    %5610 = vmatprep.subr.mxu0 0.0
    %5611 = vmatpush1.msra.mxu0 0.0
    %5612 = vmatprep.subr.mxu0 0.0
    %5613 = vmatpush1.msra.mxu0 0.0
    %5614 = vmatprep.subr.mxu0 0.0
    %5615 = vmatpush1.msra.mxu0 0.0
    %5616 = vmatprep.subr.mxu0 0.0
    %5617 = vmatpush1.msra.mxu0 0.0
    %5618 = vmatprep.subr.mxu0 0.0
    %5619 = vmatpush1.msra.mxu0 0.0
    %5620 = vmatprep.subr.mxu0 0.0
    %5621 = vmatpush1.msra.mxu0 0.0
    %5622 = vmatprep.subr.mxu0 0.0
    %5623 = vmatpush1.msra.mxu0 0.0
    %5624 = vmatprep.subr.mxu0 0.0
    %5625 = vmatpush1.msra.mxu0 0.0
    %5626 = vmatprep.subr.mxu0 0.0
    %5627 = vmatpush1.msra.mxu0 0.0
    %5628 = vmatprep.subr.mxu0 0.0
    %5629 = vmatpush1.msra.mxu0 0.0
    %5630 = vmatprep.subr.mxu0 0.0
    %5631 = vmatpush1.msra.mxu0 0.0
    %5632 = vmatprep.subr.mxu0 0.0
    %5633 = vmatpush1.msra.mxu0 0.0
    %5634 = vmatprep.subr.mxu0 0.0
    %5635 = vmatpush1.msra.mxu0 0.0
    %5636 = vmatprep.subr.mxu0 0.0
    %5637 = vmatpush1.msra.mxu0 0.0
    %5638 = vmatprep.subr.mxu0 0.0
    %5639 = vmatpush1.msra.mxu0 0.0
    %5640 = vmatprep.subr.mxu0 0.0
    %5641 = vmatpush1.msra.mxu0 0.0
    %5642 = vmatprep.subr.mxu0 0.0
    %5643 = vmatpush1.msra.mxu0 0.0
    %5644 = vmatprep.mubr.f32.mxu0 0.0
    %5645 = vmatmul.mubr.f32.gmra.mrb[0].mxu0 %v5578
    %v5646 = vpop.f32.mrb[0].mxu0
    %v5647 = vadd.f32 0.0, %v5646
    %v5648 = vpop.f32.mrb[0].mxu0
    %5649 = vdwg.mxu0
    %v5651 = vsel %vm198, %v5455, 0
    %5653 = vmatprep.subr.mxu0 0.0
    %5654 = vmatpush1.msra.mxu0 %v1646
    %5655 = vmatprep.subr.mxu0 0.0
    %5656 = vmatpush1.msra.mxu0 %v1647
    %5657 = vmatprep.subr.mxu0 0.0
    %5658 = vmatpush1.msra.mxu0 %v1648
    %5659 = vmatprep.subr.mxu0 0.0
    %5660 = vmatpush1.msra.mxu0 %v1649
    %5661 = vmatprep.subr.mxu0 0.0
    %5662 = vmatpush1.msra.mxu0 0.0
    %5663 = vmatprep.subr.mxu0 0.0
    %5664 = vmatpush1.msra.mxu0 0.0
    %5665 = vmatprep.subr.mxu0 0.0
    %5666 = vmatpush1.msra.mxu0 0.0
    %5667 = vmatprep.subr.mxu0 0.0
    %5668 = vmatpush1.msra.mxu0 0.0
    %5669 = vmatprep.subr.mxu0 0.0
    %5670 = vmatpush1.msra.mxu0 0.0
    %5671 = vmatprep.subr.mxu0 0.0
    %5672 = vmatpush1.msra.mxu0 0.0
    %5673 = vmatprep.subr.mxu0 0.0
    %5674 = vmatpush1.msra.mxu0 0.0
    %5675 = vmatprep.subr.mxu0 0.0
    %5676 = vmatpush1.msra.mxu0 0.0
    %5677 = vmatprep.subr.mxu0 0.0
    %5678 = vmatpush1.msra.mxu0 0.0
    %5679 = vmatprep.subr.mxu0 0.0
    %5680 = vmatpush1.msra.mxu0 0.0
    %5681 = vmatprep.subr.mxu0 0.0
    %5682 = vmatpush1.msra.mxu0 0.0
    %5683 = vmatprep.subr.mxu0 0.0
    %5684 = vmatpush1.msra.mxu0 0.0
    %5685 = vmatprep.subr.mxu0 0.0
    %5686 = vmatpush1.msra.mxu0 0.0
    %5687 = vmatprep.subr.mxu0 0.0
    %5688 = vmatpush1.msra.mxu0 0.0
    %5689 = vmatprep.subr.mxu0 0.0
    %5690 = vmatpush1.msra.mxu0 0.0
    %5691 = vmatprep.subr.mxu0 0.0
    %5692 = vmatpush1.msra.mxu0 0.0
    %5693 = vmatprep.subr.mxu0 0.0
    %5694 = vmatpush1.msra.mxu0 0.0
    %5695 = vmatprep.subr.mxu0 0.0
    %5696 = vmatpush1.msra.mxu0 0.0
    %5697 = vmatprep.subr.mxu0 0.0
    %5698 = vmatpush1.msra.mxu0 0.0
    %5699 = vmatprep.subr.mxu0 0.0
    %5700 = vmatpush1.msra.mxu0 0.0
    %5701 = vmatprep.subr.mxu0 0.0
    %5702 = vmatpush1.msra.mxu0 0.0
    %5703 = vmatprep.subr.mxu0 0.0
    %5704 = vmatpush1.msra.mxu0 0.0
    %5705 = vmatprep.subr.mxu0 0.0
    %5706 = vmatpush1.msra.mxu0 0.0
    %5707 = vmatprep.subr.mxu0 0.0
    %5708 = vmatpush1.msra.mxu0 0.0
    %5709 = vmatprep.subr.mxu0 0.0
    %5710 = vmatpush1.msra.mxu0 0.0
    %5711 = vmatprep.subr.mxu0 0.0
    %5712 = vmatpush1.msra.mxu0 0.0
    %5713 = vmatprep.subr.mxu0 0.0
    %5714 = vmatpush1.msra.mxu0 0.0
    %5715 = vmatprep.subr.mxu0 0.0
    %5716 = vmatpush1.msra.mxu0 0.0
    %5717 = vmatprep.mubr.f32.mxu0 0.0
    %5718 = vmatmul.mubr.f32.gmra.mrb[0].mxu0 %v5651
    %v5719 = vpop.f32.mrb[0].mxu0
    %v5720 = vadd.f32 %v5647, %v5719
    %v5721 = vpop.f32.mrb[0].mxu0
    %5722 = vdwg.mxu0
    %v5723 = vadd.f32 %v5720, %v2023
    %5724 = vmatprep.subr.mxu0 0.0
    %5725 = vmatpush1.msra.mxu0 %v1654
    %5726 = vmatprep.subr.mxu0 0.0
    %5727 = vmatpush1.msra.mxu0 %v1655
    %5728 = vmatprep.subr.mxu0 0.0
    %5729 = vmatpush1.msra.mxu0 %v1656
    %5730 = vmatprep.subr.mxu0 0.0
    %5731 = vmatpush1.msra.mxu0 %v1657
    %5732 = vmatprep.subr.mxu0 0.0
    %5733 = vmatpush1.msra.mxu0 0.0
    %5734 = vmatprep.subr.mxu0 0.0
    %5735 = vmatpush1.msra.mxu0 0.0
    %5736 = vmatprep.subr.mxu0 0.0
    %5737 = vmatpush1.msra.mxu0 0.0
    %5738 = vmatprep.subr.mxu0 0.0
    %5739 = vmatpush1.msra.mxu0 0.0
    %5740 = vmatprep.subr.mxu0 0.0
    %5741 = vmatpush1.msra.mxu0 0.0
    %5742 = vmatprep.subr.mxu0 0.0
    %5743 = vmatpush1.msra.mxu0 0.0
    %5744 = vmatprep.subr.mxu0 0.0
    %5745 = vmatpush1.msra.mxu0 0.0
    %5746 = vmatprep.subr.mxu0 0.0
    %5747 = vmatpush1.msra.mxu0 0.0
    %5748 = vmatprep.subr.mxu0 0.0
    %5749 = vmatpush1.msra.mxu0 0.0
    %5750 = vmatprep.subr.mxu0 0.0
    %5751 = vmatpush1.msra.mxu0 0.0
    %5752 = vmatprep.subr.mxu0 0.0
    %5753 = vmatpush1.msra.mxu0 0.0
    %5754 = vmatprep.subr.mxu0 0.0
    %5755 = vmatpush1.msra.mxu0 0.0
    %5756 = vmatprep.subr.mxu0 0.0
    %5757 = vmatpush1.msra.mxu0 0.0
    %5758 = vmatprep.subr.mxu0 0.0
    %5759 = vmatpush1.msra.mxu0 0.0
    %5760 = vmatprep.subr.mxu0 0.0
    %5761 = vmatpush1.msra.mxu0 0.0
    %5762 = vmatprep.subr.mxu0 0.0
    %5763 = vmatpush1.msra.mxu0 0.0
    %5764 = vmatprep.subr.mxu0 0.0
    %5765 = vmatpush1.msra.mxu0 0.0
    %5766 = vmatprep.subr.mxu0 0.0
    %5767 = vmatpush1.msra.mxu0 0.0
    %5768 = vmatprep.subr.mxu0 0.0
    %5769 = vmatpush1.msra.mxu0 0.0
    %5770 = vmatprep.subr.mxu0 0.0
    %5771 = vmatpush1.msra.mxu0 0.0
    %5772 = vmatprep.subr.mxu0 0.0
    %5773 = vmatpush1.msra.mxu0 0.0
    %5774 = vmatprep.subr.mxu0 0.0
    %5775 = vmatpush1.msra.mxu0 0.0
    %5776 = vmatprep.subr.mxu0 0.0
    %5777 = vmatpush1.msra.mxu0 0.0
    %5778 = vmatprep.subr.mxu0 0.0
    %5779 = vmatpush1.msra.mxu0 0.0
    %5780 = vmatprep.subr.mxu0 0.0
    %5781 = vmatpush1.msra.mxu0 0.0
    %5782 = vmatprep.subr.mxu0 0.0
    %5783 = vmatpush1.msra.mxu0 0.0
    %5784 = vmatprep.subr.mxu0 0.0
    %5785 = vmatpush1.msra.mxu0 0.0
    %5786 = vmatprep.subr.mxu0 0.0
    %5787 = vmatpush1.msra.mxu0 0.0
    %5788 = vmatprep.mubr.f32.mxu0 0.0
    %5789 = vmatmul.mubr.f32.gmra.mrb[0].mxu0 %v5279
    %v5790 = vpop.f32.mrb[0].mxu0
    %v5791 = vadd.f32 %v2030, %v5790
    %v5792 = vpop.f32.mrb[0].mxu0
    %5793 = vdwg.mxu0
    %v5794 = vadd.f32 %v5723, %v5791
    %v5795 = vxor.u32 %v5794, 2147483648
    %v5796 = vmul.f32 %v5795, 1.442695
    %v5797 = vpow.pop %v5796
    %v5798 = vadd.f32 %v5797, 1.0
    %v5799 = vrcp.pop %v5798
    %v5800 = vmul.f32 1.0, %v5799
    %5802 = vrot.lane.b32.xlu0 %v5791, 64
    %v5803 = vpop.permute.xlu0 %5802
    %v5805 = vmul.f32 %v5800, %v5803
    %5807 = vrot.lane.b32.xlu0 %v5805, 64
    %v5808 = vpop.permute.xlu0 %5807
    %v5810 = vadd.f32 %v5723, %v5808
    %v5811 = vtanh.pop %v5810
    %v5812 = vsub.f32 1.0, %v5800
    %5814 = vrot.lane.b32.xlu0 %v5811, 96
    %v5815 = vpop.permute.xlu0 %5814
    %v5817 = vmul.f32 %v5812, %v5815
    %v5818 = vmul.f32 %v5800, %v5205
    %v5819 = vadd.f32 %v5817, %v5818
    %5820 = vmatprep.subr.mxu0 0.0
    %5821 = vmatpush1.msra.mxu0 %v1664
    %5822 = vmatprep.subr.mxu0 0.0
    %5823 = vmatpush1.msra.mxu0 %v1665
    %5824 = vmatprep.subr.mxu0 0.0
    %5825 = vmatpush1.msra.mxu0 %v1666
    %5826 = vmatprep.subr.mxu0 0.0
    %5827 = vmatpush1.msra.mxu0 %v1667
    %5828 = vmatprep.subr.mxu0 0.0
    %5829 = vmatpush1.msra.mxu0 0.0
    %5830 = vmatprep.subr.mxu0 0.0
    %5831 = vmatpush1.msra.mxu0 0.0
    %5832 = vmatprep.subr.mxu0 0.0
    %5833 = vmatpush1.msra.mxu0 0.0
    %5834 = vmatprep.subr.mxu0 0.0
    %5835 = vmatpush1.msra.mxu0 0.0
    %5836 = vmatprep.subr.mxu0 0.0
    %5837 = vmatpush1.msra.mxu0 0.0
    %5838 = vmatprep.subr.mxu0 0.0
    %5839 = vmatpush1.msra.mxu0 0.0
    %5840 = vmatprep.subr.mxu0 0.0
    %5841 = vmatpush1.msra.mxu0 0.0
    %5842 = vmatprep.subr.mxu0 0.0
    %5843 = vmatpush1.msra.mxu0 0.0
    %5844 = vmatprep.subr.mxu0 0.0
    %5845 = vmatpush1.msra.mxu0 0.0
    %5846 = vmatprep.subr.mxu0 0.0
    %5847 = vmatpush1.msra.mxu0 0.0
    %5848 = vmatprep.subr.mxu0 0.0
    %5849 = vmatpush1.msra.mxu0 0.0
    %5850 = vmatprep.subr.mxu0 0.0
    %5851 = vmatpush1.msra.mxu0 0.0
    %5852 = vmatprep.subr.mxu0 0.0
    %5853 = vmatpush1.msra.mxu0 0.0
    %5854 = vmatprep.subr.mxu0 0.0
    %5855 = vmatpush1.msra.mxu0 0.0
    %5856 = vmatprep.subr.mxu0 0.0
    %5857 = vmatpush1.msra.mxu0 0.0
    %5858 = vmatprep.subr.mxu0 0.0
    %5859 = vmatpush1.msra.mxu0 0.0
    %5860 = vmatprep.subr.mxu0 0.0
    %5861 = vmatpush1.msra.mxu0 0.0
    %5862 = vmatprep.subr.mxu0 0.0
    %5863 = vmatpush1.msra.mxu0 0.0
    %5864 = vmatprep.subr.mxu0 0.0
    %5865 = vmatpush1.msra.mxu0 0.0
    %5866 = vmatprep.subr.mxu0 0.0
    %5867 = vmatpush1.msra.mxu0 0.0
    %5868 = vmatprep.subr.mxu0 0.0
    %5869 = vmatpush1.msra.mxu0 0.0
    %5870 = vmatprep.subr.mxu0 0.0
    %5871 = vmatpush1.msra.mxu0 0.0
    %5872 = vmatprep.subr.mxu0 0.0
    %5873 = vmatpush1.msra.mxu0 0.0
    %5874 = vmatprep.subr.mxu0 0.0
    %5875 = vmatpush1.msra.mxu0 0.0
    %5876 = vmatprep.subr.mxu0 0.0
    %5877 = vmatpush1.msra.mxu0 0.0
    %5878 = vmatprep.subr.mxu0 0.0
    %5879 = vmatpush1.msra.mxu0 0.0
    %5880 = vmatprep.subr.mxu0 0.0
    %5881 = vmatpush1.msra.mxu0 0.0
    %5882 = vmatprep.subr.mxu0 0.0
    %5883 = vmatpush1.msra.mxu0 0.0
    %5884 = vmatprep.mubr.f32.mxu0 0.0
    %5885 = vmatmul.mubr.f32.gmra.mrb[0].mxu0 %v5578
    %v5886 = vpop.f32.mrb[0].mxu0
    %v5887 = vadd.f32 0.0, %v5886
    %v5888 = vpop.f32.mrb[0].mxu0
    %5889 = vdwg.mxu0
    %5891 = vrot.lane.b32.xlu0 %v5819, 96
    %v5892 = vpop.permute.xlu0 %5891
    %v5893 = vsel %vm198, %v5892, 0
    %5895 = vmatprep.subr.mxu0 0.0
    %5896 = vmatpush1.msra.mxu0 %v1660
    %5897 = vmatprep.subr.mxu0 0.0
    %5898 = vmatpush1.msra.mxu0 %v1661
    %5899 = vmatprep.subr.mxu0 0.0
    %5900 = vmatpush1.msra.mxu0 %v1662
    %5901 = vmatprep.subr.mxu0 0.0
    %5902 = vmatpush1.msra.mxu0 %v1663
    %5903 = vmatprep.subr.mxu0 0.0
    %5904 = vmatpush1.msra.mxu0 0.0
    %5905 = vmatprep.subr.mxu0 0.0
    %5906 = vmatpush1.msra.mxu0 0.0
    %5907 = vmatprep.subr.mxu0 0.0
    %5908 = vmatpush1.msra.mxu0 0.0
    %5909 = vmatprep.subr.mxu0 0.0
    %5910 = vmatpush1.msra.mxu0 0.0
    %5911 = vmatprep.subr.mxu0 0.0
    %5912 = vmatpush1.msra.mxu0 0.0
    %5913 = vmatprep.subr.mxu0 0.0
    %5914 = vmatpush1.msra.mxu0 0.0
    %5915 = vmatprep.subr.mxu0 0.0
    %5916 = vmatpush1.msra.mxu0 0.0
    %5917 = vmatprep.subr.mxu0 0.0
    %5918 = vmatpush1.msra.mxu0 0.0
    %5919 = vmatprep.subr.mxu0 0.0
    %5920 = vmatpush1.msra.mxu0 0.0
    %5921 = vmatprep.subr.mxu0 0.0
    %5922 = vmatpush1.msra.mxu0 0.0
    %5923 = vmatprep.subr.mxu0 0.0
    %5924 = vmatpush1.msra.mxu0 0.0
    %5925 = vmatprep.subr.mxu0 0.0
    %5926 = vmatpush1.msra.mxu0 0.0
    %5927 = vmatprep.subr.mxu0 0.0
    %5928 = vmatpush1.msra.mxu0 0.0
    %5929 = vmatprep.subr.mxu0 0.0
    %5930 = vmatpush1.msra.mxu0 0.0
    %5931 = vmatprep.subr.mxu0 0.0
    %5932 = vmatpush1.msra.mxu0 0.0
    %5933 = vmatprep.subr.mxu0 0.0
    %5934 = vmatpush1.msra.mxu0 0.0
    %5935 = vmatprep.subr.mxu0 0.0
    %5936 = vmatpush1.msra.mxu0 0.0
    %5937 = vmatprep.subr.mxu0 0.0
    %5938 = vmatpush1.msra.mxu0 0.0
    %5939 = vmatprep.subr.mxu0 0.0
    %5940 = vmatpush1.msra.mxu0 0.0
    %5941 = vmatprep.subr.mxu0 0.0
    %5942 = vmatpush1.msra.mxu0 0.0
    %5943 = vmatprep.subr.mxu0 0.0
    %5944 = vmatpush1.msra.mxu0 0.0
    %5945 = vmatprep.subr.mxu0 0.0
    %5946 = vmatpush1.msra.mxu0 0.0
    %5947 = vmatprep.subr.mxu0 0.0
    %5948 = vmatpush1.msra.mxu0 0.0
    %5949 = vmatprep.subr.mxu0 0.0
    %5950 = vmatpush1.msra.mxu0 0.0
    %5951 = vmatprep.subr.mxu0 0.0
    %5952 = vmatpush1.msra.mxu0 0.0
    %5953 = vmatprep.subr.mxu0 0.0
    %5954 = vmatpush1.msra.mxu0 0.0
    %5955 = vmatprep.subr.mxu0 0.0
    %5956 = vmatpush1.msra.mxu0 0.0
    %5957 = vmatprep.subr.mxu0 0.0
    %5958 = vmatpush1.msra.mxu0 0.0
    %5959 = vmatprep.mubr.f32.mxu0 0.0
    %5960 = vmatmul.mubr.f32.gmra.mrb[0].mxu0 %v5893
    %v5961 = vpop.f32.mrb[0].mxu0
    %v5962 = vadd.f32 %v5887, %v5961
    %v5963 = vpop.f32.mrb[0].mxu0
    %5964 = vdwg.mxu0
    %v5965 = vadd.f32 %v5962, %v2279
    %s5966 = scalar_lea.vmem [#allocation20], 12
    %5967 = vst [vmem:[%s5966] sm:$0x3] %v5965
    // Predicated region
    $region102: #{tpu_custom_call.1} parent=1 // pred_check
      _
    $region103: #{tpu_custom_call.1} parent=1 // pred_check_branch
      %5969 = sbr.rel (0) target = $region105
    $region104: #{tpu_custom_call.1} parent=1 // pred_region
      %s5971 = ssub.s32 224, 224
      %5972 = vsyncadd [#allocation5], %s5971
      %s5973 = sshll.u32 [#allocation20], 4
      %s5974 = int_to_ptr.vmem [resolvable:$true] %s5973
      %5979 = dma.vmem_to_hbm [thread:$0]  %s5974, 224, %s15, [#allocation5], 32, 32, 2
    $region105: #{tpu_custom_call.1} parent=1 // pred_fallthru
      _
    // Predicated region
    $region106: #{tpu_custom_call.1} parent=1 // pred_check
      _
    $region107: #{tpu_custom_call.1} parent=1 // pred_check_branch
      %5981 = sbr.rel (0) target = $region109
    $region108: #{tpu_custom_call.1} parent=1 // pred_region
      %5982 = dma.done [#allocation5], 224
    $region109: #{tpu_custom_call.1} parent=1 // pred_fallthru
      _
    %5983 = vsyncpa [#allocation4], 1
    %5984 = vsyncpa [#allocation7], 1
    %5985 = vsyncpa [#allocation10], 1
    %5986 = vsyncpa [#allocation13], 1
    %5987 = vsyncpa [#allocation16], 1
    %5988 = vsyncpa [#allocation19], 1
    %5989 = vsyncpa [#allocation5], 1

</llo_original>
